<compile_context>
chip_gen: v7x
topology: tpu7x:2x2x1
jax: 0.10.0
libtpu: 0.0.40
codegen_flags: <defaults>
</compile_context>

<pallas_src>
import jax
import jax.numpy as jnp
from jax import lax
from jax.experimental import pallas as pl
from jax.experimental.pallas import tpu as pltpu


# ----------------------------------------------------------------------------
# Kernel 1: fused conv stack (per batch element), output (c_out, L) lane-dense
# ----------------------------------------------------------------------------
def _conv_stack_kernel(x_ref, w1, b1, w3, b3, w4, b4, w2, b2, o_ref):
    x = x_ref[0]                                                   # (C_in, L) f32
    h = jnp.maximum(jnp.dot(w1[...], x, preferred_element_type=jnp.float32) + b1[...], 0.0)
    h = jnp.maximum(jnp.dot(w3[...], h, preferred_element_type=jnp.float32) + b3[...], 0.0)
    h = jnp.maximum(jnp.dot(w4[...], h, preferred_element_type=jnp.float32) + b4[...], 0.0)
    h = jnp.maximum(jnp.dot(w2[...], h, preferred_element_type=jnp.float32) + b2[...], 0.0)
    o_ref[0] = h.astype(o_ref.dtype)


def conv_stack(x, params):
    B, c_in, L = x.shape
    (w1, b1) = params["conv1"]
    (w3, b3) = params["conv3"]
    (w4, b4) = params["conv4"]
    (w2, b2) = params["conv2"]
    c_out = w2.shape[0]

    resident = lambda shape: pl.BlockSpec(shape, lambda b: (0, 0))  # stays in VMEM
    return pl.pallas_call(
        _conv_stack_kernel,
        out_shape=jax.ShapeDtypeStruct((B, c_out, L), jnp.float32),
        grid_spec=pltpu.PrefetchScalarGridSpec(
            num_scalar_prefetch=0,
            grid=(B,),
            in_specs=[
                pl.BlockSpec((1, c_in, L), lambda b: (b, 0, 0)),
                resident(w1.shape), resident(b1.shape),
                resident(w3.shape), resident(b3.shape),
                resident(w4.shape), resident(b4.shape),
                resident(w2.shape), resident(b2.shape),
            ],
            out_specs=pl.BlockSpec((1, c_out, L), lambda b: (b, 0, 0)),
        ),
        compiler_params=pltpu.CompilerParams(
            dimension_semantics=("parallel",)),       # batch splits across TCs on v7x
    )(x, w1, b1, w3, b3, w4, b4, w2, b2)


# ----------------------------------------------------------------------------
# Kernel 2: fused FC stack.  K-tiled fc1 (bf16 weight stream, f32 accumulate),
# then fc4/fc2/fc3 in the last-step epilogue with VMEM-resident weights.
# ----------------------------------------------------------------------------
def _fc_stack_kernel(h_ref, w1_ref, b1_ref, w4_ref, b4_ref,
                     w2_ref, b2_ref, w3_ref, b3_ref, o_ref, acc_ref):
    k = pl.program_id(0)

    @pl.when(k == 0)
    def _():
        acc_ref[...] = jnp.zeros_like(acc_ref)

    # fc1 partial product for this K tile: bf16 operands, f32 accumulation.
    acc_ref[...] += jnp.dot(h_ref[...].astype(jnp.bfloat16), w1_ref[...],
                            preferred_element_type=jnp.float32)

    @pl.when(k == pl.num_programs(0) - 1)
    def _():
        y = jnp.maximum(acc_ref[...] + b1_ref[...], 0.0)                    # fc1+bnm3+relu
        y = jnp.maximum(jnp.dot(y.astype(jnp.bfloat16), w4_ref[...],
                                preferred_element_type=jnp.float32) + b4_ref[...], 0.0)
        y = jnp.maximum(jnp.dot(y.astype(jnp.bfloat16), w2_ref[...],
                                preferred_element_type=jnp.float32) + b2_ref[...], 0.0)
        o_ref[...] = (jnp.dot(y, w3_ref[...],
                              preferred_element_type=jnp.float32)
                      + b3_ref[...]).astype(o_ref.dtype)


def _pick_tile_k(K, cap=4096):
    """Largest 128-multiple divisor of K, capped so a (tile_k, 512) bf16 weight
    block double-buffers comfortably inside every generation's scoped VMEM."""
    best, t = 0, 128
    while t <= min(K, cap):
        if K % t == 0:
            best = t
        t += 128
    if best == 0:
        # TODO(synk): pad K to a 128 multiple for out_channels values where
        # 2000*out_channels has no 128-divisor (never a full-K block on v7x).
        return K
    return best


def fc_stack(h, params):
    B, K = h.shape
    w1, b1 = params["fc1"]
    w4, b4 = params["fc4"]
    w2, b2 = params["fc2"]
    w3, b3 = params["fc3"]
    N = w1.shape[1]
    tile_k = _pick_tile_k(K)
    assert K % tile_k == 0

    resident = lambda shape: pl.BlockSpec(shape, lambda k: (0, 0))
    return pl.pallas_call(
        _fc_stack_kernel,
        out_shape=jax.ShapeDtypeStruct((B, 1), jnp.float32),
        grid_spec=pltpu.PrefetchScalarGridSpec(
            num_scalar_prefetch=0,
            grid=(K // tile_k,),
            in_specs=[
                pl.BlockSpec((B, tile_k), lambda k: (0, k)),   # activations
                pl.BlockSpec((tile_k, N), lambda k: (k, 0)),   # fc1 bf16 weight stream
                resident(b1.shape),
                resident(w4.shape), resident(b4.shape),
                resident(w2.shape), resident(b2.shape),
                resident(w3.shape), resident(b3.shape),
            ],
            out_specs=pl.BlockSpec((B, 1), lambda k: (0, 0)),
            scratch_shapes=[pltpu.VMEM((B, N), jnp.float32)],
        ),
        compiler_params=pltpu.CompilerParams(
            dimension_semantics=("arbitrary",)),
    )(h, w1, b1, w4, b4, w2, b2, w3, b3)


# ----------------------------------------------------------------------------
# Parameter init (deterministic, synthetic) with inference-BN folding
# ----------------------------------------------------------------------------
def init_params(key, in_ch, out_ch, L):
    eps = 1e-5

    def bn_scale(k, n):
        k1, k2, k3, k4 = jax.random.split(k, 4)
        gamma = 1.0 + 0.1 * jax.random.normal(k1, (n,), jnp.float32)
        beta = 0.1 * jax.random.normal(k2, (n,), jnp.float32)
        mean = 0.1 * jax.random.normal(k3, (n,), jnp.float32)
        var = jax.random.uniform(k4, (n,), jnp.float32, minval=0.5, maxval=1.5)
        s = gamma / jnp.sqrt(var + eps)
        return s, beta - mean * s            # y = s*x + shift

    # Conv weights stored (c_out, c_in) for the W @ x orientation; BN folded.
    def conv_bn(k, cin, cout):
        k1, k2, k3 = jax.random.split(k, 3)
        w = jax.random.normal(k1, (cout, cin), jnp.float32) / jnp.sqrt(float(cin))
        b = 0.1 * jax.random.normal(k2, (cout,), jnp.float32)
        s, shift = bn_scale(k3, cout)
        return w * s[:, None], (b * s + shift).reshape(cout, 1)

    # FC weights stored (K, N); BN folded; bf16 to halve the dominant HBM traffic.
    def fc_bn(k, cin, cout):
        k1, k2, k3 = jax.random.split(k, 3)
        w = jax.random.normal(k1, (cin, cout), jnp.float32) / jnp.sqrt(float(cin))
        b = 0.1 * jax.random.normal(k2, (cout,), jnp.float32)
        s, shift = bn_scale(k3, cout)
        return (w * s[None, :]).astype(jnp.bfloat16), (b * s + shift).reshape(1, cout)

    def fc_plain(k, cin, cout):
        k1, k2 = jax.random.split(k)
        w = jax.random.normal(k1, (cin, cout), jnp.float32) / jnp.sqrt(float(cin))
        b = 0.1 * jax.random.normal(k2, (cout,), jnp.float32)
        return w, b.reshape(1, cout)

    ks = jax.random.split(key, 8)
    return {
        "conv1": conv_bn(ks[0], in_ch, 16),        # conv1 + bn1
        "conv3": conv_bn(ks[1], 16, 32),           # conv3 + bn3
        "conv4": conv_bn(ks[2], 32, 64),           # conv4 + bn4
        "conv2": conv_bn(ks[3], 64, out_ch),       # conv2 + bn2
        "fc1":   fc_bn(ks[4], L * out_ch, 512),    # fc1 + bnm3
        "fc4":   fc_bn(ks[5], 512, 256),           # fc4 + bnm1
        "fc2":   fc_bn(ks[6], 256, 128),           # fc2 + bnm2
        "fc3":   fc_plain(ks[7], 128, 1),
    }


# ----------------------------------------------------------------------------
# Forward pass: exactly two pallas_calls, one free reshape in between
# ----------------------------------------------------------------------------
def net_forward(params, x):
    B = x.shape[0]
    h = conv_stack(x, params)          # (B, c_out, L), lane-dense along L
    h = h.reshape(B, -1)               # channel-major flatten == PyTorch reshape(B,-1)
    return fc_stack(h, params)         # (B, 1): fc1+fc4+fc2+fc3 fused


# Plain-JAX reference (same eval-mode math, bf16 FC weights, f32 accumulation).
def net_reference(params, x):
    B = x.shape[0]
    h = x
    for name in ("conv1", "conv3", "conv4", "conv2"):
        w, b = params[name]
        h = jnp.maximum(
            jnp.einsum("oc,bcl->bol", w, h,
                       preferred_element_type=jnp.float32,
                       precision=lax.Precision.HIGHEST) + b[None, :, :], 0.0)
    h = h.reshape(B, -1)
    for name in ("fc1", "fc4", "fc2"):
        w, b = params[name]
        h = jnp.maximum(
            jnp.dot(h.astype(jnp.bfloat16), w,
                    preferred_element_type=jnp.float32) + b, 0.0)
    w, b = params["fc3"]
    return jnp.dot(h, w, preferred_element_type=jnp.float32,
                   precision=lax.Precision.HIGHEST) + b


if __name__ == "__main__":
    # fc1 = Linear(2000*out_channels, 512) requires L == 2000; out_channels=8
    # makes the fc1 reduction 128-tileable.
    B, IN_CH, OUT_CH, L = 2, 4, 8, 2000

    key = jax.random.PRNGKey(0)
    k_x, k_p = jax.random.split(key)
    x = jax.random.normal(k_x, (B, IN_CH, L), dtype=jnp.float32)
    params = init_params(k_p, IN_CH, OUT_CH, L)

    out = jax.jit(net_forward)(params, x)
    out = jax.block_until_ready(out)

    ref = net_reference(params, x)
    assert out.shape == (B, 1), out.shape
    assert jnp.allclose(out, ref, atol=5e-2, rtol=5e-2), (out, ref)

    print("KERNEL_OK")
</pallas_src>

<mosaic_0001>
module attributes {stable_mosaic.version = 11 : i64} {
  func.func @_conv_stack_kernel(%arg0: i32, %arg1: memref<1x4x2000xf32, #tpu.memory_space<vmem>>, %arg2: memref<16x4xf32, #tpu.memory_space<vmem>>, %arg3: memref<16x1xf32, #tpu.memory_space<vmem>>, %arg4: memref<32x16xf32, #tpu.memory_space<vmem>>, %arg5: memref<32x1xf32, #tpu.memory_space<vmem>>, %arg6: memref<64x32xf32, #tpu.memory_space<vmem>>, %arg7: memref<64x1xf32, #tpu.memory_space<vmem>>, %arg8: memref<8x64xf32, #tpu.memory_space<vmem>>, %arg9: memref<8x1xf32, #tpu.memory_space<vmem>>, %arg10: memref<1x8x2000xf32, #tpu.memory_space<vmem>>) attributes {dimension_semantics = [#tpu.dimension_semantics<parallel>], iteration_bounds = array<i64: 2>, scalar_prefetch = 0 : i64, scratch_operands = 0 : i64, tpu.core_type = #tpu.core_type<tc>, window_params = [{transform_indices = @transform_0, window_bounds = array<i64: 1, 4, 2000>}, {pipeline_mode = #tpu.pipeline_mode<synchronous>, transform_indices = @transform_1, window_bounds = array<i64: 16, 4>}, {pipeline_mode = #tpu.pipeline_mode<synchronous>, transform_indices = @transform_2, window_bounds = array<i64: 16, 1>}, {pipeline_mode = #tpu.pipeline_mode<synchronous>, transform_indices = @transform_3, window_bounds = array<i64: 32, 16>}, {pipeline_mode = #tpu.pipeline_mode<synchronous>, transform_indices = @transform_4, window_bounds = array<i64: 32, 1>}, {pipeline_mode = #tpu.pipeline_mode<synchronous>, transform_indices = @transform_5, window_bounds = array<i64: 64, 32>}, {pipeline_mode = #tpu.pipeline_mode<synchronous>, transform_indices = @transform_6, window_bounds = array<i64: 64, 1>}, {pipeline_mode = #tpu.pipeline_mode<synchronous>, transform_indices = @transform_7, window_bounds = array<i64: 8, 64>}, {pipeline_mode = #tpu.pipeline_mode<synchronous>, transform_indices = @transform_8, window_bounds = array<i64: 8, 1>}, {transform_indices = @transform_9, window_bounds = array<i64: 1, 8, 2000>}]} {
    %c0 = arith.constant 0 : index
    %c0_0 = arith.constant 0 : index
    %c0_1 = arith.constant 0 : index
    %0 = vector.load %arg1[%c0, %c0_0, %c0_1] : memref<1x4x2000xf32, #tpu.memory_space<vmem>>, vector<1x4x2000xf32>
    %1 = vector.shape_cast %0 : vector<1x4x2000xf32> to vector<4x2000xf32>
    %c0_2 = arith.constant 0 : index
    %c0_3 = arith.constant 0 : index
    %2 = vector.load %arg2[%c0_2, %c0_3] : memref<16x4xf32, #tpu.memory_space<vmem>>, vector<16x4xf32>
    %cst = arith.constant dense<0.000000e+00> : vector<16x2000xf32>
    %3 = tpu.matmul %2, %1, %cst {dimension_numbers = #tpu.dot_dimension_numbers<[1], [0], [0], [1], [0, 0, 1, 1], [], []>} : vector<16x4xf32>, vector<4x2000xf32>, vector<16x2000xf32> -> vector<16x2000xf32>
    %c0_4 = arith.constant 0 : index
    %c0_5 = arith.constant 0 : index
    %4 = vector.load %arg3[%c0_4, %c0_5] : memref<16x1xf32, #tpu.memory_space<vmem>>, vector<16x1xf32>
    %5 = vector.broadcast %4 : vector<16x1xf32> to vector<16x2000xf32>
    %6 = arith.addf %3, %5 : vector<16x2000xf32>
    %cst_6 = arith.constant 0.000000e+00 : f32
    %7 = vector.broadcast %cst_6 : f32 to vector<16x2000xf32>
    %8 = arith.maximumf %6, %7 : vector<16x2000xf32>
    %c0_7 = arith.constant 0 : index
    %c0_8 = arith.constant 0 : index
    %9 = vector.load %arg4[%c0_7, %c0_8] : memref<32x16xf32, #tpu.memory_space<vmem>>, vector<32x16xf32>
    %cst_9 = arith.constant dense<0.000000e+00> : vector<32x2000xf32>
    %10 = tpu.matmul %9, %8, %cst_9 {dimension_numbers = #tpu.dot_dimension_numbers<[1], [0], [0], [1], [0, 0, 1, 1], [], []>} : vector<32x16xf32>, vector<16x2000xf32>, vector<32x2000xf32> -> vector<32x2000xf32>
    %c0_10 = arith.constant 0 : index
    %c0_11 = arith.constant 0 : index
    %11 = vector.load %arg5[%c0_10, %c0_11] : memref<32x1xf32, #tpu.memory_space<vmem>>, vector<32x1xf32>
    %12 = vector.broadcast %11 : vector<32x1xf32> to vector<32x2000xf32>
    %13 = arith.addf %10, %12 : vector<32x2000xf32>
    %cst_12 = arith.constant 0.000000e+00 : f32
    %14 = vector.broadcast %cst_12 : f32 to vector<32x2000xf32>
    %15 = arith.maximumf %13, %14 : vector<32x2000xf32>
    %c0_13 = arith.constant 0 : index
    %c0_14 = arith.constant 0 : index
    %16 = vector.load %arg6[%c0_13, %c0_14] : memref<64x32xf32, #tpu.memory_space<vmem>>, vector<64x32xf32>
    %cst_15 = arith.constant dense<0.000000e+00> : vector<64x2000xf32>
    %17 = tpu.matmul %16, %15, %cst_15 {dimension_numbers = #tpu.dot_dimension_numbers<[1], [0], [0], [1], [0, 0, 1, 1], [], []>} : vector<64x32xf32>, vector<32x2000xf32>, vector<64x2000xf32> -> vector<64x2000xf32>
    %c0_16 = arith.constant 0 : index
    %c0_17 = arith.constant 0 : index
    %18 = vector.load %arg7[%c0_16, %c0_17] : memref<64x1xf32, #tpu.memory_space<vmem>>, vector<64x1xf32>
    %19 = vector.broadcast %18 : vector<64x1xf32> to vector<64x2000xf32>
    %20 = arith.addf %17, %19 : vector<64x2000xf32>
    %cst_18 = arith.constant 0.000000e+00 : f32
    %21 = vector.broadcast %cst_18 : f32 to vector<64x2000xf32>
    %22 = arith.maximumf %20, %21 : vector<64x2000xf32>
    %c0_19 = arith.constant 0 : index
    %c0_20 = arith.constant 0 : index
    %23 = vector.load %arg8[%c0_19, %c0_20] : memref<8x64xf32, #tpu.memory_space<vmem>>, vector<8x64xf32>
    %cst_21 = arith.constant dense<0.000000e+00> : vector<8x2000xf32>
    %24 = tpu.matmul %23, %22, %cst_21 {dimension_numbers = #tpu.dot_dimension_numbers<[1], [0], [0], [1], [0, 0, 1, 1], [], []>} : vector<8x64xf32>, vector<64x2000xf32>, vector<8x2000xf32> -> vector<8x2000xf32>
    %c0_22 = arith.constant 0 : index
    %c0_23 = arith.constant 0 : index
    %25 = vector.load %arg9[%c0_22, %c0_23] : memref<8x1xf32, #tpu.memory_space<vmem>>, vector<8x1xf32>
    %26 = vector.broadcast %25 : vector<8x1xf32> to vector<8x2000xf32>
    %27 = arith.addf %24, %26 : vector<8x2000xf32>
    %cst_24 = arith.constant 0.000000e+00 : f32
    %28 = vector.broadcast %cst_24 : f32 to vector<8x2000xf32>
    %29 = arith.maximumf %27, %28 : vector<8x2000xf32>
    %c0_25 = arith.constant 0 : index
    %c0_26 = arith.constant 0 : index
    %c0_27 = arith.constant 0 : index
    %30 = vector.load %arg10[%c0_25, %c0_26, %c0_27] : memref<1x8x2000xf32, #tpu.memory_space<vmem>>, vector<1x8x2000xf32>
    %31 = vector.shape_cast %30 : vector<1x8x2000xf32> to vector<8x2000xf32>
    %32 = vector.shape_cast %29 : vector<8x2000xf32> to vector<1x8x2000xf32>
    tpu.vector_store %arg10[%c0_25, %c0_26, %c0_27], %32 {strides = array<i32>} : memref<1x8x2000xf32, #tpu.memory_space<vmem>>, vector<1x8x2000xf32>,
    return
  }
  func.func @transform_0(%arg0: i32) -> (i32, i32, i32) {
    %c0_i32 = arith.constant 0 : i32
    %c0_i32_0 = arith.constant 0 : i32
    %c0_i32_1 = arith.constant 0 : i32
    return %arg0, %c0_i32, %c0_i32_0 : i32, i32, i32
  }
  func.func @transform_1(%arg0: i32) -> (i32, i32) {
    %c0_i32 = arith.constant 0 : i32
    %c0_i32_0 = arith.constant 0 : i32
    %c0_i32_1 = arith.constant 0 : i32
    return %c0_i32, %c0_i32_0 : i32, i32
  }
  func.func @transform_2(%arg0: i32) -> (i32, i32) {
    %c0_i32 = arith.constant 0 : i32
    %c0_i32_0 = arith.constant 0 : i32
    %c0_i32_1 = arith.constant 0 : i32
    return %c0_i32, %c0_i32_0 : i32, i32
  }
  func.func @transform_3(%arg0: i32) -> (i32, i32) {
    %c0_i32 = arith.constant 0 : i32
    %c0_i32_0 = arith.constant 0 : i32
    %c0_i32_1 = arith.constant 0 : i32
    return %c0_i32, %c0_i32_0 : i32, i32
  }
  func.func @transform_4(%arg0: i32) -> (i32, i32) {
    %c0_i32 = arith.constant 0 : i32
    %c0_i32_0 = arith.constant 0 : i32
    %c0_i32_1 = arith.constant 0 : i32
    return %c0_i32, %c0_i32_0 : i32, i32
  }
  func.func @transform_5(%arg0: i32) -> (i32, i32) {
    %c0_i32 = arith.constant 0 : i32
    %c0_i32_0 = arith.constant 0 : i32
    %c0_i32_1 = arith.constant 0 : i32
    return %c0_i32, %c0_i32_0 : i32, i32
  }
  func.func @transform_6(%arg0: i32) -> (i32, i32) {
    %c0_i32 = arith.constant 0 : i32
    %c0_i32_0 = arith.constant 0 : i32
    %c0_i32_1 = arith.constant 0 : i32
    return %c0_i32, %c0_i32_0 : i32, i32
  }
  func.func @transform_7(%arg0: i32) -> (i32, i32) {
    %c0_i32 = arith.constant 0 : i32
    %c0_i32_0 = arith.constant 0 : i32
    %c0_i32_1 = arith.constant 0 : i32
    return %c0_i32, %c0_i32_0 : i32, i32
  }
  func.func @transform_8(%arg0: i32) -> (i32, i32) {
    %c0_i32 = arith.constant 0 : i32
    %c0_i32_0 = arith.constant 0 : i32
    %c0_i32_1 = arith.constant 0 : i32
    return %c0_i32, %c0_i32_0 : i32, i32
  }
  func.func @transform_9(%arg0: i32) -> (i32, i32, i32) {
    %c0_i32 = arith.constant 0 : i32
    %c0_i32_0 = arith.constant 0 : i32
    %c0_i32_1 = arith.constant 0 : i32
    return %arg0, %c0_i32, %c0_i32_0 : i32, i32, i32
  }
}

module attributes {stable_mosaic.version = 11 : i64} {
  func.func @_fc_stack_kernel(%arg0: i32, %arg1: memref<2x3200xf32, #tpu.memory_space<vmem>>, %arg2: memref<3200x512xbf16, #tpu.memory_space<vmem>>, %arg3: memref<1x512xf32, #tpu.memory_space<vmem>>, %arg4: memref<512x256xbf16, #tpu.memory_space<vmem>>, %arg5: memref<1x256xf32, #tpu.memory_space<vmem>>, %arg6: memref<256x128xbf16, #tpu.memory_space<vmem>>, %arg7: memref<1x128xf32, #tpu.memory_space<vmem>>, %arg8: memref<128x1xf32, #tpu.memory_space<vmem>>, %arg9: memref<1x1xf32, #tpu.memory_space<vmem>>, %arg10: memref<2x1xf32, #tpu.memory_space<vmem>>, %arg11: memref<2x512xf32, #tpu.memory_space<vmem>>) attributes {dimension_semantics = [#tpu.dimension_semantics<arbitrary>], iteration_bounds = array<i64: 5>, scalar_prefetch = 0 : i64, scratch_operands = 1 : i64, tpu.core_type = #tpu.core_type<tc>, window_params = [{transform_indices = @transform_0, window_bounds = array<i64: 2, 3200>}, {transform_indices = @transform_1, window_bounds = array<i64: 3200, 512>}, {pipeline_mode = #tpu.pipeline_mode<synchronous>, transform_indices = @transform_2, window_bounds = array<i64: 1, 512>}, {pipeline_mode = #tpu.pipeline_mode<synchronous>, transform_indices = @transform_3, window_bounds = array<i64: 512, 256>}, {pipeline_mode = #tpu.pipeline_mode<synchronous>, transform_indices = @transform_4, window_bounds = array<i64: 1, 256>}, {pipeline_mode = #tpu.pipeline_mode<synchronous>, transform_indices = @transform_5, window_bounds = array<i64: 256, 128>}, {pipeline_mode = #tpu.pipeline_mode<synchronous>, transform_indices = @transform_6, window_bounds = array<i64: 1, 128>}, {pipeline_mode = #tpu.pipeline_mode<synchronous>, transform_indices = @transform_7, window_bounds = array<i64: 128, 1>}, {pipeline_mode = #tpu.pipeline_mode<synchronous>, transform_indices = @transform_8, window_bounds = array<i64: 1, 1>}, {pipeline_mode = #tpu.pipeline_mode<synchronous>, transform_indices = @transform_9, window_bounds = array<i64: 2, 1>}]} {
    %c0_i32 = arith.constant 0 : i32
    %0 = arith.cmpi eq, %arg0, %c0_i32 : i32
    %1 = arith.extui %0 : i1 to i32
    %c0_i32_0 = arith.constant 0 : i32
    %2 = arith.cmpi ne, %1, %c0_i32_0 : i32
    scf.if %2 {
      %cst_9 = arith.constant 0.000000e+00 : f32
      %13 = vector.broadcast %cst_9 : f32 to vector<2x512xf32>
      %c0_10 = arith.constant 0 : index
      %c0_11 = arith.constant 0 : index
      %14 = vector.load %arg11[%c0_10, %c0_11] : memref<2x512xf32, #tpu.memory_space<vmem>>, vector<2x512xf32>
      tpu.vector_store %arg11[%c0_10, %c0_11], %13 {strides = array<i32>} : memref<2x512xf32, #tpu.memory_space<vmem>>, vector<2x512xf32>,
    } else {
    }
    %c0 = arith.constant 0 : index
    %c0_1 = arith.constant 0 : index
    %3 = vector.load %arg11[%c0, %c0_1] : memref<2x512xf32, #tpu.memory_space<vmem>>, vector<2x512xf32>
    %c0_2 = arith.constant 0 : index
    %c0_3 = arith.constant 0 : index
    %4 = vector.load %arg1[%c0_2, %c0_3] : memref<2x3200xf32, #tpu.memory_space<vmem>>, vector<2x3200xf32>
    %5 = arith.truncf %4 : vector<2x3200xf32> to vector<2x3200xbf16>
    %c0_4 = arith.constant 0 : index
    %c0_5 = arith.constant 0 : index
    %6 = vector.load %arg2[%c0_4, %c0_5] : memref<3200x512xbf16, #tpu.memory_space<vmem>>, vector<3200x512xbf16>
    %cst = arith.constant dense<0.000000e+00> : vector<2x512xf32>
    %7 = tpu.matmul %5, %6, %cst {dimension_numbers = #tpu.dot_dimension_numbers<[1], [0], [0], [1], [0, 0, 1, 1], [], []>} : vector<2x3200xbf16>, vector<3200x512xbf16>, vector<2x512xf32> -> vector<2x512xf32>
    %8 = arith.addf %3, %7 : vector<2x512xf32>
    %c0_6 = arith.constant 0 : index
    %c0_7 = arith.constant 0 : index
    %9 = vector.load %arg11[%c0_6, %c0_7] : memref<2x512xf32, #tpu.memory_space<vmem>>, vector<2x512xf32>
    tpu.vector_store %arg11[%c0_6, %c0_7], %8 {strides = array<i32>} : memref<2x512xf32, #tpu.memory_space<vmem>>, vector<2x512xf32>,
    %c4_i32 = arith.constant 4 : i32
    %10 = arith.cmpi eq, %arg0, %c4_i32 : i32
    %11 = arith.extui %10 : i1 to i32
    %c0_i32_8 = arith.constant 0 : i32
    %12 = arith.cmpi ne, %11, %c0_i32_8 : i32
    scf.if %12 {
      %c0_9 = arith.constant 0 : index
      %c0_10 = arith.constant 0 : index
      %13 = vector.load %arg11[%c0_9, %c0_10] : memref<2x512xf32, #tpu.memory_space<vmem>>, vector<2x512xf32>
      %c0_11 = arith.constant 0 : index
      %c0_12 = arith.constant 0 : index
      %14 = vector.load %arg3[%c0_11, %c0_12] : memref<1x512xf32, #tpu.memory_space<vmem>>, vector<1x512xf32>
      %15 = vector.broadcast %14 : vector<1x512xf32> to vector<2x512xf32>
      %16 = arith.addf %13, %15 : vector<2x512xf32>
      %cst_13 = arith.constant 0.000000e+00 : f32
      %17 = vector.broadcast %cst_13 : f32 to vector<2x512xf32>
      %18 = arith.maximumf %16, %17 : vector<2x512xf32>
      %19 = arith.truncf %18 : vector<2x512xf32> to vector<2x512xbf16>
      %c0_14 = arith.constant 0 : index
      %c0_15 = arith.constant 0 : index
      %20 = vector.load %arg4[%c0_14, %c0_15] : memref<512x256xbf16, #tpu.memory_space<vmem>>, vector<512x256xbf16>
      %cst_16 = arith.constant dense<0.000000e+00> : vector<2x256xf32>
      %21 = tpu.matmul %19, %20, %cst_16 {dimension_numbers = #tpu.dot_dimension_numbers<[1], [0], [0], [1], [0, 0, 1, 1], [], []>} : vector<2x512xbf16>, vector<512x256xbf16>, vector<2x256xf32> -> vector<2x256xf32>
      %c0_17 = arith.constant 0 : index
      %c0_18 = arith.constant 0 : index
      %22 = vector.load %arg5[%c0_17, %c0_18] : memref<1x256xf32, #tpu.memory_space<vmem>>, vector<1x256xf32>
      %23 = vector.broadcast %22 : vector<1x256xf32> to vector<2x256xf32>
      %24 = arith.addf %21, %23 : vector<2x256xf32>
      %cst_19 = arith.constant 0.000000e+00 : f32
      %25 = vector.broadcast %cst_19 : f32 to vector<2x256xf32>
      %26 = arith.maximumf %24, %25 : vector<2x256xf32>
      %27 = arith.truncf %26 : vector<2x256xf32> to vector<2x256xbf16>
      %c0_20 = arith.constant 0 : index
      %c0_21 = arith.constant 0 : index
      %28 = vector.load %arg6[%c0_20, %c0_21] : memref<256x128xbf16, #tpu.memory_space<vmem>>, vector<256x128xbf16>
      %cst_22 = arith.constant dense<0.000000e+00> : vector<2x128xf32>
      %29 = tpu.matmul %27, %28, %cst_22 {dimension_numbers = #tpu.dot_dimension_numbers<[1], [0], [0], [1], [0, 0, 1, 1], [], []>} : vector<2x256xbf16>, vector<256x128xbf16>, vector<2x128xf32> -> vector<2x128xf32>
      %c0_23 = arith.constant 0 : index
      %c0_24 = arith.constant 0 : index
      %30 = vector.load %arg7[%c0_23, %c0_24] : memref<1x128xf32, #tpu.memory_space<vmem>>, vector<1x128xf32>
      %31 = vector.broadcast %30 : vector<1x128xf32> to vector<2x128xf32>
      %32 = arith.addf %29, %31 : vector<2x128xf32>
      %cst_25 = arith.constant 0.000000e+00 : f32
      %33 = vector.broadcast %cst_25 : f32 to vector<2x128xf32>
      %34 = arith.maximumf %32, %33 : vector<2x128xf32>
      %c0_26 = arith.constant 0 : index
      %c0_27 = arith.constant 0 : index
      %35 = vector.load %arg8[%c0_26, %c0_27] : memref<128x1xf32, #tpu.memory_space<vmem>>, vector<128x1xf32>
      %cst_28 = arith.constant dense<0.000000e+00> : vector<2x1xf32>
      %36 = tpu.matmul %34, %35, %cst_28 {dimension_numbers = #tpu.dot_dimension_numbers<[1], [0], [0], [1], [0, 0, 1, 1], [], []>} : vector<2x128xf32>, vector<128x1xf32>, vector<2x1xf32> -> vector<2x1xf32>
      %c0_29 = arith.constant 0 : index
      %c0_30 = arith.constant 0 : index
      %37 = vector.load %arg9[%c0_29, %c0_30] : memref<1x1xf32, #tpu.memory_space<vmem>>, vector<1x1xf32>
      %38 = vector.broadcast %37 : vector<1x1xf32> to vector<2x1xf32>
      %39 = arith.addf %36, %38 : vector<2x1xf32>
      %c0_31 = arith.constant 0 : index
      %c0_32 = arith.constant 0 : index
      %40 = vector.load %arg10[%c0_31, %c0_32] : memref<2x1xf32, #tpu.memory_space<vmem>>, vector<2x1xf32>
      tpu.vector_store %arg10[%c0_31, %c0_32], %39 {strides = array<i32>} : memref<2x1xf32, #tpu.memory_space<vmem>>, vector<2x1xf32>,
    } else {
    }
    return
  }
  func.func @transform_0(%arg0: i32) -> (i32, i32) {
    %c0_i32 = arith.constant 0 : i32
    %c0_i32_0 = arith.constant 0 : i32
    return %c0_i32, %arg0 : i32, i32
  }
  func.func @transform_1(%arg0: i32) -> (i32, i32) {
    %c0_i32 = arith.constant 0 : i32
    %c0_i32_0 = arith.constant 0 : i32
    return %arg0, %c0_i32 : i32, i32
  }
  func.func @transform_2(%arg0: i32) -> (i32, i32) {
    %c0_i32 = arith.constant 0 : i32
    %c0_i32_0 = arith.constant 0 : i32
    %c0_i32_1 = arith.constant 0 : i32
    return %c0_i32, %c0_i32_0 : i32, i32
  }
  func.func @transform_3(%arg0: i32) -> (i32, i32) {
    %c0_i32 = arith.constant 0 : i32
    %c0_i32_0 = arith.constant 0 : i32
    %c0_i32_1 = arith.constant 0 : i32
    return %c0_i32, %c0_i32_0 : i32, i32
  }
  func.func @transform_4(%arg0: i32) -> (i32, i32) {
    %c0_i32 = arith.constant 0 : i32
    %c0_i32_0 = arith.constant 0 : i32
    %c0_i32_1 = arith.constant 0 : i32
    return %c0_i32, %c0_i32_0 : i32, i32
  }
  func.func @transform_5(%arg0: i32) -> (i32, i32) {
    %c0_i32 = arith.constant 0 : i32
    %c0_i32_0 = arith.constant 0 : i32
    %c0_i32_1 = arith.constant 0 : i32
    return %c0_i32, %c0_i32_0 : i32, i32
  }
  func.func @transform_6(%arg0: i32) -> (i32, i32) {
    %c0_i32 = arith.constant 0 : i32
    %c0_i32_0 = arith.constant 0 : i32
    %c0_i32_1 = arith.constant 0 : i32
    return %c0_i32, %c0_i32_0 : i32, i32
  }
  func.func @transform_7(%arg0: i32) -> (i32, i32) {
    %c0_i32 = arith.constant 0 : i32
    %c0_i32_0 = arith.constant 0 : i32
    %c0_i32_1 = arith.constant 0 : i32
    return %c0_i32, %c0_i32_0 : i32, i32
  }
  func.func @transform_8(%arg0: i32) -> (i32, i32) {
    %c0_i32 = arith.constant 0 : i32
    %c0_i32_0 = arith.constant 0 : i32
    %c0_i32_1 = arith.constant 0 : i32
    return %c0_i32, %c0_i32_0 : i32, i32
  }
  func.func @transform_9(%arg0: i32) -> (i32, i32) {
    %c0_i32 = arith.constant 0 : i32
    %c0_i32_0 = arith.constant 0 : i32
    %c0_i32_1 = arith.constant 0 : i32
    return %c0_i32, %c0_i32_0 : i32, i32
  }
}

</mosaic_0001>

<llo_original>
// kernel: net_forward.2
$region0: #{net_forward.2}
  #allocation0 [shape = 'u32[]', space=smem, size = 0x4, offset = 0x4, fixed_abs, tag = 'smem constant byte address 0x4 - core index']
  #allocation1 [shape = 'u32[144,128]{1,0:T(1,128)}', space=vmem, size = 0x12000, scoped, tag = 'internal scratch']
  %s0 = inlined_call_operand.hbm [shape: f32[2,4,2000], index: 0, kind: input, shape index: {}]
  %s1 = inlined_call_operand.vmem [shape: f32[16,4], index: 1, kind: input, shape index: {}]
  %s2 = inlined_call_operand.vmem [shape: f32[16,1], index: 2, kind: input, shape index: {}]
  %s3 = inlined_call_operand.vmem [shape: f32[32,16], index: 3, kind: input, shape index: {}]
  %s4 = inlined_call_operand.vmem [shape: f32[32,1], index: 4, kind: input, shape index: {}]
  %s5 = inlined_call_operand.vmem [shape: f32[64,32], index: 5, kind: input, shape index: {}]
  %s6 = inlined_call_operand.vmem [shape: f32[64,1], index: 6, kind: input, shape index: {}]
  %s7 = inlined_call_operand.hbm [shape: f32[8,64], index: 7, kind: input, shape index: {}]
  %s8 = inlined_call_operand.vmem [shape: f32[8,1], index: 8, kind: input, shape index: {}]
  %s9 = inlined_call_operand.vmem [shape: f32[2,8,2000], index: 9, kind: output, shape index: {}]
  %s10 = sld [smem:[#allocation0]]
  $region77: #{net_forward.2} parent=0
    _
  %s12 = ssub.s32 1, %s10
  %s13 = scalar_select 0, %s12, %s10
  $region1: #{net_forward.2} parent=0
    #allocation2 [shape = 'u8[65536]{0}', space=vmem, size = 0x10000, scoped, tag = 'input window, operand 0']
    #allocation3 [shape = 's32[2]{0}', space=sflag, size = 0x8, scoped, tag = 'scoped memory for net_forward.2']
    #allocation4 [shape = 'u8[4096]{0}', space=vmem, size = 0x1000, scoped, tag = 'input window, operand 7, single buffered']
    #allocation5 [shape = 's32[1]{0}', space=sflag, size = 0x4, scoped, tag = 'scoped memory for net_forward.2']
    %14 = vsyncpa [#allocation3], 0
    %s15 = scalar_lea.sflag [#allocation3], 1
    %16 = vsyncpa %s15, 0
    %17 = vsyncpa [#allocation5], 0
    loop: start=0, step=1, limit=4
    $region2: #{net_forward.2} parent=1 // loop_pre_header
      _
    $region3: #{net_forward.2} parent=1 // loop_header
      %s19 = sphi 0, %s23
      %p20 = scmp.ge.s32.totalorder %s19, 4
      %s29 = sphi 0, %s31
      %s32 = sphi 0, %s29
      %s33 = sphi 0, %s32
      %s49 = sphi 0, %s33
      %s53 = sphi 0, %s53
      %s55 = sphi 0, %s53
      %s56 = sphi 0, %s55
      %s70 = sphi 0, %s56
      %s74 = sphi 0, %s74
      %s76 = sphi 0, %s74
      %s77 = sphi 0, %s76
      %s91 = sphi 0, %s77
      %s95 = sphi 0, %s95
      %s97 = sphi 0, %s95
      %s98 = sphi 0, %s97
      %s112 = sphi 0, %s98
      %s116 = sphi 0, %s116
      %s118 = sphi 0, %s116
      %s119 = sphi 0, %s118
      %s133 = sphi 0, %s119
      %s137 = sphi 0, %s137
      %s139 = sphi 0, %s137
      %s140 = sphi 0, %s139
      %s154 = sphi 0, %s140
      %s158 = sphi 0, %s158
      %s160 = sphi 0, %s158
      %s161 = sphi 0, %s160
      %s175 = sphi 0, %s161
      %s179 = sphi 0, %s179
      %s181 = sphi 0, %s179
      %s182 = sphi 0, %s181
      %s196 = sphi 0, %s182
      %s200 = sphi 0, %s200
      %s202 = sphi 0, %s200
      %s203 = sphi 0, %s202
      %s217 = sphi 0, %s203
      %s223 = sphi 0, %s225
      %s226 = sphi 0, %s223
      %s227 = sphi 0, %s226
      %s243 = sphi 0, %s227
    $region4: #{net_forward.2} parent=1 // loop_header_branch
      %22 = sbr.rel (%p20) target = $region8
    $region5: #{net_forward.2} parent=1 // loop_body
      %s24 = ssub.s32 %s19, 1
      %s25 = ssub.s32 %s19, 2
      %s26 = sadd.s32 %s19, 1
      %s27 = ssub.s32 %s19, %s26
      %p28 = scmp.eq.s32.totalorder %s27, 0
      %s30 = sadd.s32 %s29, 1
      %s31 = scalar_select %p28, %s29, %s30
      %p34 = pneg %p28
      %p35 = scmp.eq.s32.totalorder %s19, 1
      %p36 = por %p34, %p35
      %p37 = scmp.ne.s32.totalorder %s29, %s32
      %p38 = scmp.eq.s32.totalorder %s19, 0
      %p39 = por %p37, %p38
      %p40 = scmp.ne.s32.totalorder %s29, %s32
      %p41 = scmp.eq.s32.totalorder %s24, 1
      %p42 = por %p40, %p41
      %p43 = scmp.ne.s32.totalorder %s32, %s33
      %p44 = scmp.eq.s32.totalorder %s24, 0
      %p45 = por %p43, %p44
      %p46 = scmp.ne.s32.totalorder %s32, %s33
      %p47 = scmp.eq.s32.totalorder %s25, 1
      %p48 = por %p46, %p47
      %p50 = scmp.ne.s32.totalorder %s33, %s49
      %p51 = scmp.eq.s32.totalorder %s25, 0
      %p52 = por %p50, %p51
      %s54 = sadd.s32 %s53, 1
      %p57 = scmp.eq.s32.totalorder %s19, 1
      %p58 = scmp.ne.s32.totalorder %s53, %s55
      %p59 = scmp.eq.s32.totalorder %s19, 0
      %p60 = por %p58, %p59
      %p61 = scmp.ne.s32.totalorder %s53, %s55
      %p62 = scmp.eq.s32.totalorder %s24, 1
      %p63 = por %p61, %p62
      %p64 = scmp.ne.s32.totalorder %s55, %s56
      %p65 = scmp.eq.s32.totalorder %s24, 0
      %p66 = por %p64, %p65
      %p67 = scmp.ne.s32.totalorder %s55, %s56
      %p68 = scmp.eq.s32.totalorder %s25, 1
      %p69 = por %p67, %p68
      %p71 = scmp.ne.s32.totalorder %s56, %s70
      %p72 = scmp.eq.s32.totalorder %s25, 0
      %p73 = por %p71, %p72
      %s75 = sadd.s32 %s74, 1
      %p78 = scmp.eq.s32.totalorder %s19, 1
      %p79 = scmp.ne.s32.totalorder %s74, %s76
      %p80 = scmp.eq.s32.totalorder %s19, 0
      %p81 = por %p79, %p80
      %p82 = scmp.ne.s32.totalorder %s74, %s76
      %p83 = scmp.eq.s32.totalorder %s24, 1
      %p84 = por %p82, %p83
      %p85 = scmp.ne.s32.totalorder %s76, %s77
      %p86 = scmp.eq.s32.totalorder %s24, 0
      %p87 = por %p85, %p86
      %p88 = scmp.ne.s32.totalorder %s76, %s77
      %p89 = scmp.eq.s32.totalorder %s25, 1
      %p90 = por %p88, %p89
      %p92 = scmp.ne.s32.totalorder %s77, %s91
      %p93 = scmp.eq.s32.totalorder %s25, 0
      %p94 = por %p92, %p93
      %s96 = sadd.s32 %s95, 1
      %p99 = scmp.eq.s32.totalorder %s19, 1
      %p100 = scmp.ne.s32.totalorder %s95, %s97
      %p101 = scmp.eq.s32.totalorder %s19, 0
      %p102 = por %p100, %p101
      %p103 = scmp.ne.s32.totalorder %s95, %s97
      %p104 = scmp.eq.s32.totalorder %s24, 1
      %p105 = por %p103, %p104
      %p106 = scmp.ne.s32.totalorder %s97, %s98
      %p107 = scmp.eq.s32.totalorder %s24, 0
      %p108 = por %p106, %p107
      %p109 = scmp.ne.s32.totalorder %s97, %s98
      %p110 = scmp.eq.s32.totalorder %s25, 1
      %p111 = por %p109, %p110
      %p113 = scmp.ne.s32.totalorder %s98, %s112
      %p114 = scmp.eq.s32.totalorder %s25, 0
      %p115 = por %p113, %p114
      %s117 = sadd.s32 %s116, 1
      %p120 = scmp.eq.s32.totalorder %s19, 1
      %p121 = scmp.ne.s32.totalorder %s116, %s118
      %p122 = scmp.eq.s32.totalorder %s19, 0
      %p123 = por %p121, %p122
      %p124 = scmp.ne.s32.totalorder %s116, %s118
      %p125 = scmp.eq.s32.totalorder %s24, 1
      %p126 = por %p124, %p125
      %p127 = scmp.ne.s32.totalorder %s118, %s119
      %p128 = scmp.eq.s32.totalorder %s24, 0
      %p129 = por %p127, %p128
      %p130 = scmp.ne.s32.totalorder %s118, %s119
      %p131 = scmp.eq.s32.totalorder %s25, 1
      %p132 = por %p130, %p131
      %p134 = scmp.ne.s32.totalorder %s119, %s133
      %p135 = scmp.eq.s32.totalorder %s25, 0
      %p136 = por %p134, %p135
      %s138 = sadd.s32 %s137, 1
      %p141 = scmp.eq.s32.totalorder %s19, 1
      %p142 = scmp.ne.s32.totalorder %s137, %s139
      %p143 = scmp.eq.s32.totalorder %s19, 0
      %p144 = por %p142, %p143
      %p145 = scmp.ne.s32.totalorder %s137, %s139
      %p146 = scmp.eq.s32.totalorder %s24, 1
      %p147 = por %p145, %p146
      %p148 = scmp.ne.s32.totalorder %s139, %s140
      %p149 = scmp.eq.s32.totalorder %s24, 0
      %p150 = por %p148, %p149
      %p151 = scmp.ne.s32.totalorder %s139, %s140
      %p152 = scmp.eq.s32.totalorder %s25, 1
      %p153 = por %p151, %p152
      %p155 = scmp.ne.s32.totalorder %s140, %s154
      %p156 = scmp.eq.s32.totalorder %s25, 0
      %p157 = por %p155, %p156
      %s159 = sadd.s32 %s158, 1
      %p162 = scmp.eq.s32.totalorder %s19, 1
      %p163 = scmp.ne.s32.totalorder %s158, %s160
      %p164 = scmp.eq.s32.totalorder %s19, 0
      %p165 = por %p163, %p164
      %p166 = scmp.ne.s32.totalorder %s158, %s160
      %p167 = scmp.eq.s32.totalorder %s24, 1
      %p168 = por %p166, %p167
      %p169 = scmp.ne.s32.totalorder %s160, %s161
      %p170 = scmp.eq.s32.totalorder %s24, 0
      %p171 = por %p169, %p170
      %p172 = scmp.ne.s32.totalorder %s160, %s161
      %p173 = scmp.eq.s32.totalorder %s25, 1
      %p174 = por %p172, %p173
      %p176 = scmp.ne.s32.totalorder %s161, %s175
      %p177 = scmp.eq.s32.totalorder %s25, 0
      %p178 = por %p176, %p177
      %s180 = sadd.s32 %s179, 1
      %p183 = scmp.eq.s32.totalorder %s19, 1
      %p184 = scmp.ne.s32.totalorder %s179, %s181
      %p185 = scmp.eq.s32.totalorder %s19, 0
      %p186 = por %p184, %p185
      %p187 = scmp.ne.s32.totalorder %s179, %s181
      %p188 = scmp.eq.s32.totalorder %s24, 1
      %p189 = por %p187, %p188
      %p190 = scmp.ne.s32.totalorder %s181, %s182
      %p191 = scmp.eq.s32.totalorder %s24, 0
      %p192 = por %p190, %p191
      %p193 = scmp.ne.s32.totalorder %s181, %s182
      %p194 = scmp.eq.s32.totalorder %s25, 1
      %p195 = por %p193, %p194
      %p197 = scmp.ne.s32.totalorder %s182, %s196
      %p198 = scmp.eq.s32.totalorder %s25, 0
      %p199 = por %p197, %p198
      %s201 = sadd.s32 %s200, 1
      %p204 = scmp.eq.s32.totalorder %s19, 1
      %p205 = scmp.ne.s32.totalorder %s200, %s202
      %p206 = scmp.eq.s32.totalorder %s19, 0
      %p207 = por %p205, %p206
      %p208 = scmp.ne.s32.totalorder %s200, %s202
      %p209 = scmp.eq.s32.totalorder %s24, 1
      %p210 = por %p208, %p209
      %p211 = scmp.ne.s32.totalorder %s202, %s203
      %p212 = scmp.eq.s32.totalorder %s24, 0
      %p213 = por %p211, %p212
      %p214 = scmp.ne.s32.totalorder %s202, %s203
      %p215 = scmp.eq.s32.totalorder %s25, 1
      %p216 = por %p214, %p215
      %p218 = scmp.ne.s32.totalorder %s203, %s217
      %p219 = scmp.eq.s32.totalorder %s25, 0
      %p220 = por %p218, %p219
      %s221 = ssub.s32 %s19, %s26
      %p222 = scmp.eq.s32.totalorder %s221, 0
      %s224 = sadd.s32 %s223, 1
      %s225 = scalar_select %p222, %s223, %s224
      %p228 = pneg %p222
      %p229 = scmp.eq.s32.totalorder %s19, 1
      %p230 = por %p228, %p229
      %p231 = scmp.ne.s32.totalorder %s223, %s226
      %p232 = scmp.eq.s32.totalorder %s19, 0
      %p233 = por %p231, %p232
      %p234 = scmp.ne.s32.totalorder %s223, %s226
      %p235 = scmp.eq.s32.totalorder %s24, 1
      %p236 = por %p234, %p235
      %p237 = scmp.ne.s32.totalorder %s226, %s227
      %p238 = scmp.eq.s32.totalorder %s24, 0
      %p239 = por %p237, %p238
      %p240 = scmp.ne.s32.totalorder %s226, %s227
      %p241 = scmp.eq.s32.totalorder %s25, 1
      %p242 = por %p240, %p241
      %p244 = scmp.ne.s32.totalorder %s227, %s243
      %p245 = scmp.eq.s32.totalorder %s25, 0
      %p246 = por %p244, %p245
      %p247 = scmp.le.s32.totalorder 1, %s19
      %p248 = scmp.lt.s32.totalorder %s19, 3
      %p249 = pnand %p247, %p248
      %p250 = pneg %p249
      // Predicated region
      $region9: #{net_forward.2} parent=5 // pred_check
        _
      $region10: #{net_forward.2} parent=5 // pred_check_branch
        %252 = sbr.rel (%p249) target = $region12
      $region11: #{net_forward.2} parent=5 // pred_region
        %s253 = ssub.s32 %s19, 1
        // Predicated region
        $region13: #{net_forward.2} parent=11 // pred_check
          %p254 = pneg %p66
        $region14: #{net_forward.2} parent=11 // pred_check_branch
          %256 = sbr.rel (%p254) target = $region16
        $region15: #{net_forward.2} parent=11 // pred_region
          _
        $region16: #{net_forward.2} parent=11 // pred_fallthru
          _
        // Predicated region
        $region17: #{net_forward.2} parent=11 // pred_check
          %p257 = pneg %p87
        $region18: #{net_forward.2} parent=11 // pred_check_branch
          %259 = sbr.rel (%p257) target = $region20
        $region19: #{net_forward.2} parent=11 // pred_region
          _
        $region20: #{net_forward.2} parent=11 // pred_fallthru
          _
        // Predicated region
        $region21: #{net_forward.2} parent=11 // pred_check
          %p260 = pneg %p108
        $region22: #{net_forward.2} parent=11 // pred_check_branch
          %262 = sbr.rel (%p260) target = $region24
        $region23: #{net_forward.2} parent=11 // pred_region
          _
        $region24: #{net_forward.2} parent=11 // pred_fallthru
          _
        // Predicated region
        $region25: #{net_forward.2} parent=11 // pred_check
          %p263 = pneg %p129
        $region26: #{net_forward.2} parent=11 // pred_check_branch
          %265 = sbr.rel (%p263) target = $region28
        $region27: #{net_forward.2} parent=11 // pred_region
          _
        $region28: #{net_forward.2} parent=11 // pred_fallthru
          _
        // Predicated region
        $region29: #{net_forward.2} parent=11 // pred_check
          %p266 = pneg %p150
        $region30: #{net_forward.2} parent=11 // pred_check_branch
          %268 = sbr.rel (%p266) target = $region32
        $region31: #{net_forward.2} parent=11 // pred_region
          _
        $region32: #{net_forward.2} parent=11 // pred_fallthru
          _
        // Predicated region
        $region33: #{net_forward.2} parent=11 // pred_check
          %p269 = pneg %p171
        $region34: #{net_forward.2} parent=11 // pred_check_branch
          %271 = sbr.rel (%p269) target = $region36
        $region35: #{net_forward.2} parent=11 // pred_region
          _
        $region36: #{net_forward.2} parent=11 // pred_fallthru
          _
        // Predicated region
        $region37: #{net_forward.2} parent=11 // pred_check
          %p272 = pneg %p192
        $region38: #{net_forward.2} parent=11 // pred_check_branch
          %274 = sbr.rel (%p272) target = $region40
        $region39: #{net_forward.2} parent=11 // pred_region
          %s276 = ssub.s32 128, 128
          %277 = vsyncadd [#allocation5], %s276
          %s279 = sshll.u32 [#allocation4], 4
          %s280 = int_to_ptr.vmem [resolvable:$true] %s279
          %282 = dma.hbm_to_vmem [thread:$0]  %s7, 128, %s280, [#allocation5]
        $region40: #{net_forward.2} parent=11 // pred_fallthru
          _
        // Predicated region
        $region41: #{net_forward.2} parent=11 // pred_check
          %p283 = pneg %p213
        $region42: #{net_forward.2} parent=11 // pred_check_branch
          %285 = sbr.rel (%p283) target = $region44
        $region43: #{net_forward.2} parent=11 // pred_region
          _
        $region44: #{net_forward.2} parent=11 // pred_fallthru
          _
      $region12: #{net_forward.2} parent=5 // pred_fallthru
        _
      %p286 = scmp.lt.s32.totalorder %s19, 2
      // Predicated region
      $region45: #{net_forward.2} parent=5 // pred_check
        %p287 = pneg %p286
      $region46: #{net_forward.2} parent=5 // pred_check_branch
        %289 = sbr.rel (%p287) target = $region48
      $region47: #{net_forward.2} parent=5 // pred_region
        // Predicated region
        $region49: #{net_forward.2} parent=47 // pred_check
          %p290 = pneg %p39
        $region50: #{net_forward.2} parent=47 // pred_check_branch
          %292 = sbr.rel (%p290) target = $region52
        $region51: #{net_forward.2} parent=47 // pred_region
          %s293 = sand.u32 %s29, 1
          %s294 = scalar_lea.sflag [#allocation3], %s293
          %s295 = sand.u32 %s29, 1
          %s296 = smul.addr %s295, 64
          %s297 = scalar_lea.vmem [#allocation2], %s296
          %s299 = ssub.s32 1024, 1024
          %300 = vsyncadd %s294, %s299
          %s301 = smul.addr %s19, 16
          %s302 = smul.addr %s301, 64
          %s303 = scalar_lea.hbm %s0, %s302
          %s305 = sshll.u32 %s297, 4
          %s306 = int_to_ptr.vmem [resolvable:$true] %s305
          %308 = dma.hbm_to_vmem [thread:$0]  %s303, 1024, %s306, %s294
        $region52: #{net_forward.2} parent=47 // pred_fallthru
          _
      $region48: #{net_forward.2} parent=5 // pred_fallthru
        _
      %p309 = scmp.le.s32.totalorder 1, %s19
      %p310 = scmp.lt.s32.totalorder %s19, 3
      %p311 = pnand %p309, %p310
      %p312 = pneg %p311
      // Predicated region
      $region53: #{net_forward.2} parent=5 // pred_check
        _
      $region54: #{net_forward.2} parent=5 // pred_check_branch
        %314 = sbr.rel (%p311) target = $region56
      $region55: #{net_forward.2} parent=5 // pred_region
        %s315 = ssub.s32 %s19, 1
        %s316 = sand.u32 %s32, 1
        %s317 = scalar_lea.sflag [#allocation3], %s316
        %s318 = sand.u32 %s32, 1
        %s319 = smul.addr %s318, 64
        %s320 = scalar_lea.vmem [#allocation2], %s319
        // Predicated region
        $region57: #{net_forward.2} parent=55 // pred_check
          %p321 = pneg %p45
        $region58: #{net_forward.2} parent=55 // pred_check_branch
          %323 = sbr.rel (%p321) target = $region60
        $region59: #{net_forward.2} parent=55 // pred_region
          %324 = dma.done %s317, 1024
        $region60: #{net_forward.2} parent=55 // pred_fallthru
          _
        // Predicated region
        $region61: #{net_forward.2} parent=55 // pred_check
          %p325 = pneg %p192
        $region62: #{net_forward.2} parent=55 // pred_check_branch
          %327 = sbr.rel (%p325) target = $region64
        $region63: #{net_forward.2} parent=55 // pred_region
          %328 = dma.done [#allocation5], 128
        $region64: #{net_forward.2} parent=55 // pred_fallthru
          _
        %s329 = sand.u32 %s32, 1
        %s330 = scalar_lea.sflag [#allocation3], %s329
        %s331 = sand.u32 %s32, 1
        %s332 = smul.addr %s331, 64
        %s333 = scalar_lea.vmem [#allocation2], %s332
        %p334 = pneg %p45
        %p335 = pneg %p42
        %p336 = pneg %p66
        %p337 = pneg %p63
        %p338 = pneg %p87
        %p339 = pneg %p84
        %p340 = pneg %p108
        %p341 = pneg %p105
        %p342 = pneg %p129
        %p343 = pneg %p126
        %p344 = pneg %p150
        %p345 = pneg %p147
        %p346 = pneg %p171
        %p347 = pneg %p168
        %p348 = pneg %p192
        %p349 = pneg %p189
        %p350 = pneg %p213
        %p351 = pneg %p210
        %p352 = pneg %p239
        %p353 = pneg %p236
        %p354 = scmp.lt.s32.totalorder %s24, 1
        %s355 = scalar_select %p354, %s24, 1
        %s356 = smul.addr %s355, 16
        %s357 = smul.addr %s356, 8
        %s358 = scalar_lea.vmem %s9, %s357
        %p359 = scmp.lt.s32.totalorder %s24, 1
        %s360 = scalar_select %p359, %s24, 1
        %s361 = smul.addr %s360, 16
        %s362 = smul.addr %s361, 8
        %s363 = scalar_lea.vmem %s9, %s362
        %v364 = vld [vmem:[%s320] sm:$0xff]
        %v365 = vld [vmem:[%s320 + $0x8] sm:$0xff]
        %v366 = vld [vmem:[%s320 + $0x10] sm:$0xff]
        %v367 = vld [vmem:[%s320 + $0x18] sm:$0xff]
        %v368 = vld [vmem:[%s320 + $0x20] sm:$0xff]
        %v369 = vld [vmem:[%s320 + $0x28] sm:$0xff]
        %v370 = vld [vmem:[%s320 + $0x30] sm:$0xff]
        %v371 = vld [vmem:[%s320 + $0x38] sm:$0xff]
        %v372 = vld [vmem:[%s1] sm:$0xff]
        %v373 = vld [vmem:[%s1 + $0x8] sm:$0xff]
        %v374 = vld [vmem:[%s2] sm:$0xff]
        %v375 = vld [vmem:[%s2 + $0x8] sm:$0xff]
        %377 = vset.pattern.permute.xlu0 0
        %378 = vperm.xlu0 %377, %v374
        %v379 = vpop.permute.xlu0 %378
        %382 = vset.pattern.permute.xlu0 0
        %383 = vperm.xlu0 %382, %v375
        %v384 = vpop.permute.xlu0 %383
        %v394 = vcombine.high %v364, %v364
        %v395 = vcombine.high %v365, %v365
        %v396 = vcombine.high %v366, %v366
        %v397 = vcombine.high %v367, %v367
        %v398 = vcombine.high %v368, %v368
        %v399 = vcombine.high %v369, %v369
        %v400 = vcombine.high %v370, %v370
        %v401 = vcombine.high %v371, %v371
        %vm402 = vcmask 31744
        %v404 = vsel %vm402, %v372, 0
        %v407 = vsel %vm402, %v373, 0
        %vm409 = vcmask 1043456
        %v410 = vsel %vm409, %v364, 0
        %v412 = vsel %vm409, %v394, 0
        %v414 = vsel %vm409, %v365, 0
        %v416 = vsel %vm409, %v395, 0
        %v418 = vsel %vm409, %v366, 0
        %v420 = vsel %vm409, %v396, 0
        %v422 = vsel %vm409, %v367, 0
        %v424 = vsel %vm409, %v397, 0
        %v426 = vsel %vm409, %v368, 0
        %v428 = vsel %vm409, %v398, 0
        %v430 = vsel %vm409, %v369, 0
        %v432 = vsel %vm409, %v399, 0
        %v434 = vsel %vm409, %v370, 0
        %v436 = vsel %vm409, %v400, 0
        %v438 = vsel %vm409, %v371, 0
        %v440 = vsel %vm409, %v401, 0
        %442 = vmatprep.subr.mxu0 %v412
        %443 = vmatpush1.msra.mxu0 %v410
        %444 = vmatprep.subr.mxu0 0.0
        %445 = vmatpush1.msra.mxu0 0.0
        %446 = vmatprep.subr.mxu0 0.0
        %447 = vmatpush1.msra.mxu0 0.0
        %448 = vmatprep.subr.mxu0 0.0
        %449 = vmatpush1.msra.mxu0 0.0
        %450 = vmatprep.subr.mxu0 0.0
        %451 = vmatpush1.msra.mxu0 0.0
        %452 = vmatprep.subr.mxu0 0.0
        %453 = vmatpush1.msra.mxu0 0.0
        %454 = vmatprep.subr.mxu0 0.0
        %455 = vmatpush1.msra.mxu0 0.0
        %456 = vmatprep.subr.mxu0 0.0
        %457 = vmatpush1.msra.mxu0 0.0
        %458 = vmatprep.subr.mxu0 0.0
        %459 = vmatpush1.msra.mxu0 0.0
        %460 = vmatprep.subr.mxu0 0.0
        %461 = vmatpush1.msra.mxu0 0.0
        %462 = vmatprep.subr.mxu0 0.0
        %463 = vmatpush1.msra.mxu0 0.0
        %464 = vmatprep.subr.mxu0 0.0
        %465 = vmatpush1.msra.mxu0 0.0
        %466 = vmatprep.subr.mxu0 0.0
        %467 = vmatpush1.msra.mxu0 0.0
        %468 = vmatprep.subr.mxu0 0.0
        %469 = vmatpush1.msra.mxu0 0.0
        %470 = vmatprep.subr.mxu0 0.0
        %471 = vmatpush1.msra.mxu0 0.0
        %472 = vmatprep.subr.mxu0 0.0
        %473 = vmatpush1.msra.mxu0 0.0
        %474 = vmatprep.subr.mxu0 0.0
        %475 = vmatpush1.msra.mxu0 0.0
        %476 = vmatprep.subr.mxu0 0.0
        %477 = vmatpush1.msra.mxu0 0.0
        %478 = vmatprep.subr.mxu0 0.0
        %479 = vmatpush1.msra.mxu0 0.0
        %480 = vmatprep.subr.mxu0 0.0
        %481 = vmatpush1.msra.mxu0 0.0
        %482 = vmatprep.subr.mxu0 0.0
        %483 = vmatpush1.msra.mxu0 0.0
        %484 = vmatprep.subr.mxu0 0.0
        %485 = vmatpush1.msra.mxu0 0.0
        %486 = vmatprep.subr.mxu0 0.0
        %487 = vmatpush1.msra.mxu0 0.0
        %488 = vmatprep.subr.mxu0 0.0
        %489 = vmatpush1.msra.mxu0 0.0
        %490 = vmatprep.subr.mxu0 0.0
        %491 = vmatpush1.msra.mxu0 0.0
        %492 = vmatprep.subr.mxu0 0.0
        %493 = vmatpush1.msra.mxu0 0.0
        %494 = vmatprep.subr.mxu0 0.0
        %495 = vmatpush1.msra.mxu0 0.0
        %496 = vmatprep.subr.mxu0 0.0
        %497 = vmatpush1.msra.mxu0 0.0
        %498 = vmatprep.subr.mxu0 0.0
        %499 = vmatpush1.msra.mxu0 0.0
        %500 = vmatprep.subr.mxu0 0.0
        %501 = vmatpush1.msra.mxu0 0.0
        %502 = vmatprep.subr.mxu0 0.0
        %503 = vmatpush1.msra.mxu0 0.0
        %504 = vmatprep.subr.mxu0 0.0
        %505 = vmatpush1.msra.mxu0 0.0
        %506 = vmatprep.mubr.f32.mxu0 0.0
        %507 = vmatmul.mubr.f32.gmra.mrb[0].mxu0 %v404
        %v508 = vpop.f32.mrb[0].mxu0
        %v509 = vadd.f32 %v379, %v508
        %v510 = vpop.f32.mrb[0].mxu0
        %v511 = vadd.f32 %v379, %v510
        %512 = vmatprep.mubr.f32.mxu0 0.0
        %513 = vmatmul.mubr.f32.gmra.mrb[0].mxu0 %v407
        %v514 = vpop.f32.mrb[0].mxu0
        %v515 = vadd.f32 %v384, %v514
        %v516 = vpop.f32.mrb[0].mxu0
        %v517 = vadd.f32 %v384, %v516
        %518 = vdwg.mxu0
        %519 = vmatprep.subr.mxu0 %v416
        %520 = vmatpush1.msra.mxu0 %v414
        %521 = vmatprep.subr.mxu0 0.0
        %522 = vmatpush1.msra.mxu0 0.0
        %523 = vmatprep.subr.mxu0 0.0
        %524 = vmatpush1.msra.mxu0 0.0
        %525 = vmatprep.subr.mxu0 0.0
        %526 = vmatpush1.msra.mxu0 0.0
        %527 = vmatprep.subr.mxu0 0.0
        %528 = vmatpush1.msra.mxu0 0.0
        %529 = vmatprep.subr.mxu0 0.0
        %530 = vmatpush1.msra.mxu0 0.0
        %531 = vmatprep.subr.mxu0 0.0
        %532 = vmatpush1.msra.mxu0 0.0
        %533 = vmatprep.subr.mxu0 0.0
        %534 = vmatpush1.msra.mxu0 0.0
        %535 = vmatprep.subr.mxu0 0.0
        %536 = vmatpush1.msra.mxu0 0.0
        %537 = vmatprep.subr.mxu0 0.0
        %538 = vmatpush1.msra.mxu0 0.0
        %539 = vmatprep.subr.mxu0 0.0
        %540 = vmatpush1.msra.mxu0 0.0
        %541 = vmatprep.subr.mxu0 0.0
        %542 = vmatpush1.msra.mxu0 0.0
        %543 = vmatprep.subr.mxu0 0.0
        %544 = vmatpush1.msra.mxu0 0.0
        %545 = vmatprep.subr.mxu0 0.0
        %546 = vmatpush1.msra.mxu0 0.0
        %547 = vmatprep.subr.mxu0 0.0
        %548 = vmatpush1.msra.mxu0 0.0
        %549 = vmatprep.subr.mxu0 0.0
        %550 = vmatpush1.msra.mxu0 0.0
        %551 = vmatprep.subr.mxu0 0.0
        %552 = vmatpush1.msra.mxu0 0.0
        %553 = vmatprep.subr.mxu0 0.0
        %554 = vmatpush1.msra.mxu0 0.0
        %555 = vmatprep.subr.mxu0 0.0
        %556 = vmatpush1.msra.mxu0 0.0
        %557 = vmatprep.subr.mxu0 0.0
        %558 = vmatpush1.msra.mxu0 0.0
        %559 = vmatprep.subr.mxu0 0.0
        %560 = vmatpush1.msra.mxu0 0.0
        %561 = vmatprep.subr.mxu0 0.0
        %562 = vmatpush1.msra.mxu0 0.0
        %563 = vmatprep.subr.mxu0 0.0
        %564 = vmatpush1.msra.mxu0 0.0
        %565 = vmatprep.subr.mxu0 0.0
        %566 = vmatpush1.msra.mxu0 0.0
        %567 = vmatprep.subr.mxu0 0.0
        %568 = vmatpush1.msra.mxu0 0.0
        %569 = vmatprep.subr.mxu0 0.0
        %570 = vmatpush1.msra.mxu0 0.0
        %571 = vmatprep.subr.mxu0 0.0
        %572 = vmatpush1.msra.mxu0 0.0
        %573 = vmatprep.subr.mxu0 0.0
        %574 = vmatpush1.msra.mxu0 0.0
        %575 = vmatprep.subr.mxu0 0.0
        %576 = vmatpush1.msra.mxu0 0.0
        %577 = vmatprep.subr.mxu0 0.0
        %578 = vmatpush1.msra.mxu0 0.0
        %579 = vmatprep.subr.mxu0 0.0
        %580 = vmatpush1.msra.mxu0 0.0
        %581 = vmatprep.subr.mxu0 0.0
        %582 = vmatpush1.msra.mxu0 0.0
        %583 = vmatprep.mubr.f32.mxu0 0.0
        %584 = vmatmul.mubr.f32.gmra.mrb[0].mxu0 %v404
        %v585 = vpop.f32.mrb[0].mxu0
        %v586 = vadd.f32 %v379, %v585
        %v587 = vpop.f32.mrb[0].mxu0
        %v588 = vadd.f32 %v379, %v587
        %589 = vmatprep.mubr.f32.mxu0 0.0
        %590 = vmatmul.mubr.f32.gmra.mrb[0].mxu0 %v407
        %v591 = vpop.f32.mrb[0].mxu0
        %v592 = vadd.f32 %v384, %v591
        %v593 = vpop.f32.mrb[0].mxu0
        %v594 = vadd.f32 %v384, %v593
        %595 = vdwg.mxu0
        %596 = vmatprep.subr.mxu0 %v420
        %597 = vmatpush1.msra.mxu0 %v418
        %598 = vmatprep.subr.mxu0 0.0
        %599 = vmatpush1.msra.mxu0 0.0
        %600 = vmatprep.subr.mxu0 0.0
        %601 = vmatpush1.msra.mxu0 0.0
        %602 = vmatprep.subr.mxu0 0.0
        %603 = vmatpush1.msra.mxu0 0.0
        %604 = vmatprep.subr.mxu0 0.0
        %605 = vmatpush1.msra.mxu0 0.0
        %606 = vmatprep.subr.mxu0 0.0
        %607 = vmatpush1.msra.mxu0 0.0
        %608 = vmatprep.subr.mxu0 0.0
        %609 = vmatpush1.msra.mxu0 0.0
        %610 = vmatprep.subr.mxu0 0.0
        %611 = vmatpush1.msra.mxu0 0.0
        %612 = vmatprep.subr.mxu0 0.0
        %613 = vmatpush1.msra.mxu0 0.0
        %614 = vmatprep.subr.mxu0 0.0
        %615 = vmatpush1.msra.mxu0 0.0
        %616 = vmatprep.subr.mxu0 0.0
        %617 = vmatpush1.msra.mxu0 0.0
        %618 = vmatprep.subr.mxu0 0.0
        %619 = vmatpush1.msra.mxu0 0.0
        %620 = vmatprep.subr.mxu0 0.0
        %621 = vmatpush1.msra.mxu0 0.0
        %622 = vmatprep.subr.mxu0 0.0
        %623 = vmatpush1.msra.mxu0 0.0
        %624 = vmatprep.subr.mxu0 0.0
        %625 = vmatpush1.msra.mxu0 0.0
        %626 = vmatprep.subr.mxu0 0.0
        %627 = vmatpush1.msra.mxu0 0.0
        %628 = vmatprep.subr.mxu0 0.0
        %629 = vmatpush1.msra.mxu0 0.0
        %630 = vmatprep.subr.mxu0 0.0
        %631 = vmatpush1.msra.mxu0 0.0
        %632 = vmatprep.subr.mxu0 0.0
        %633 = vmatpush1.msra.mxu0 0.0
        %634 = vmatprep.subr.mxu0 0.0
        %635 = vmatpush1.msra.mxu0 0.0
        %636 = vmatprep.subr.mxu0 0.0
        %637 = vmatpush1.msra.mxu0 0.0
        %638 = vmatprep.subr.mxu0 0.0
        %639 = vmatpush1.msra.mxu0 0.0
        %640 = vmatprep.subr.mxu0 0.0
        %641 = vmatpush1.msra.mxu0 0.0
        %642 = vmatprep.subr.mxu0 0.0
        %643 = vmatpush1.msra.mxu0 0.0
        %644 = vmatprep.subr.mxu0 0.0
        %645 = vmatpush1.msra.mxu0 0.0
        %646 = vmatprep.subr.mxu0 0.0
        %647 = vmatpush1.msra.mxu0 0.0
        %648 = vmatprep.subr.mxu0 0.0
        %649 = vmatpush1.msra.mxu0 0.0
        %650 = vmatprep.subr.mxu0 0.0
        %651 = vmatpush1.msra.mxu0 0.0
        %652 = vmatprep.subr.mxu0 0.0
        %653 = vmatpush1.msra.mxu0 0.0
        %654 = vmatprep.subr.mxu0 0.0
        %655 = vmatpush1.msra.mxu0 0.0
        %656 = vmatprep.subr.mxu0 0.0
        %657 = vmatpush1.msra.mxu0 0.0
        %658 = vmatprep.subr.mxu0 0.0
        %659 = vmatpush1.msra.mxu0 0.0
        %660 = vmatprep.mubr.f32.mxu0 0.0
        %661 = vmatmul.mubr.f32.gmra.mrb[0].mxu0 %v404
        %v662 = vpop.f32.mrb[0].mxu0
        %v663 = vadd.f32 %v379, %v662
        %v664 = vpop.f32.mrb[0].mxu0
        %v665 = vadd.f32 %v379, %v664
        %666 = vmatprep.mubr.f32.mxu0 0.0
        %667 = vmatmul.mubr.f32.gmra.mrb[0].mxu0 %v407
        %v668 = vpop.f32.mrb[0].mxu0
        %v669 = vadd.f32 %v384, %v668
        %v670 = vpop.f32.mrb[0].mxu0
        %v671 = vadd.f32 %v384, %v670
        %672 = vdwg.mxu0
        %673 = vmatprep.subr.mxu0 %v424
        %674 = vmatpush1.msra.mxu0 %v422
        %675 = vmatprep.subr.mxu0 0.0
        %676 = vmatpush1.msra.mxu0 0.0
        %677 = vmatprep.subr.mxu0 0.0
        %678 = vmatpush1.msra.mxu0 0.0
        %679 = vmatprep.subr.mxu0 0.0
        %680 = vmatpush1.msra.mxu0 0.0
        %681 = vmatprep.subr.mxu0 0.0
        %682 = vmatpush1.msra.mxu0 0.0
        %683 = vmatprep.subr.mxu0 0.0
        %684 = vmatpush1.msra.mxu0 0.0
        %685 = vmatprep.subr.mxu0 0.0
        %686 = vmatpush1.msra.mxu0 0.0
        %687 = vmatprep.subr.mxu0 0.0
        %688 = vmatpush1.msra.mxu0 0.0
        %689 = vmatprep.subr.mxu0 0.0
        %690 = vmatpush1.msra.mxu0 0.0
        %691 = vmatprep.subr.mxu0 0.0
        %692 = vmatpush1.msra.mxu0 0.0
        %693 = vmatprep.subr.mxu0 0.0
        %694 = vmatpush1.msra.mxu0 0.0
        %695 = vmatprep.subr.mxu0 0.0
        %696 = vmatpush1.msra.mxu0 0.0
        %697 = vmatprep.subr.mxu0 0.0
        %698 = vmatpush1.msra.mxu0 0.0
        %699 = vmatprep.subr.mxu0 0.0
        %700 = vmatpush1.msra.mxu0 0.0
        %701 = vmatprep.subr.mxu0 0.0
        %702 = vmatpush1.msra.mxu0 0.0
        %703 = vmatprep.subr.mxu0 0.0
        %704 = vmatpush1.msra.mxu0 0.0
        %705 = vmatprep.subr.mxu0 0.0
        %706 = vmatpush1.msra.mxu0 0.0
        %707 = vmatprep.subr.mxu0 0.0
        %708 = vmatpush1.msra.mxu0 0.0
        %709 = vmatprep.subr.mxu0 0.0
        %710 = vmatpush1.msra.mxu0 0.0
        %711 = vmatprep.subr.mxu0 0.0
        %712 = vmatpush1.msra.mxu0 0.0
        %713 = vmatprep.subr.mxu0 0.0
        %714 = vmatpush1.msra.mxu0 0.0
        %715 = vmatprep.subr.mxu0 0.0
        %716 = vmatpush1.msra.mxu0 0.0
        %717 = vmatprep.subr.mxu0 0.0
        %718 = vmatpush1.msra.mxu0 0.0
        %719 = vmatprep.subr.mxu0 0.0
        %720 = vmatpush1.msra.mxu0 0.0
        %721 = vmatprep.subr.mxu0 0.0
        %722 = vmatpush1.msra.mxu0 0.0
        %723 = vmatprep.subr.mxu0 0.0
        %724 = vmatpush1.msra.mxu0 0.0
        %725 = vmatprep.subr.mxu0 0.0
        %726 = vmatpush1.msra.mxu0 0.0
        %727 = vmatprep.subr.mxu0 0.0
        %728 = vmatpush1.msra.mxu0 0.0
        %729 = vmatprep.subr.mxu0 0.0
        %730 = vmatpush1.msra.mxu0 0.0
        %731 = vmatprep.subr.mxu0 0.0
        %732 = vmatpush1.msra.mxu0 0.0
        %733 = vmatprep.subr.mxu0 0.0
        %734 = vmatpush1.msra.mxu0 0.0
        %735 = vmatprep.subr.mxu0 0.0
        %736 = vmatpush1.msra.mxu0 0.0
        %737 = vmatprep.mubr.f32.mxu0 0.0
        %738 = vmatmul.mubr.f32.gmra.mrb[0].mxu0 %v404
        %v739 = vpop.f32.mrb[0].mxu0
        %v740 = vadd.f32 %v379, %v739
        %v741 = vpop.f32.mrb[0].mxu0
        %v742 = vadd.f32 %v379, %v741
        %743 = vmatprep.mubr.f32.mxu0 0.0
        %744 = vmatmul.mubr.f32.gmra.mrb[0].mxu0 %v407
        %v745 = vpop.f32.mrb[0].mxu0
        %v746 = vadd.f32 %v384, %v745
        %v747 = vpop.f32.mrb[0].mxu0
        %v748 = vadd.f32 %v384, %v747
        %749 = vdwg.mxu0
        %750 = vmatprep.subr.mxu0 %v428
        %751 = vmatpush1.msra.mxu0 %v426
        %752 = vmatprep.subr.mxu0 0.0
        %753 = vmatpush1.msra.mxu0 0.0
        %754 = vmatprep.subr.mxu0 0.0
        %755 = vmatpush1.msra.mxu0 0.0
        %756 = vmatprep.subr.mxu0 0.0
        %757 = vmatpush1.msra.mxu0 0.0
        %758 = vmatprep.subr.mxu0 0.0
        %759 = vmatpush1.msra.mxu0 0.0
        %760 = vmatprep.subr.mxu0 0.0
        %761 = vmatpush1.msra.mxu0 0.0
        %762 = vmatprep.subr.mxu0 0.0
        %763 = vmatpush1.msra.mxu0 0.0
        %764 = vmatprep.subr.mxu0 0.0
        %765 = vmatpush1.msra.mxu0 0.0
        %766 = vmatprep.subr.mxu0 0.0
        %767 = vmatpush1.msra.mxu0 0.0
        %768 = vmatprep.subr.mxu0 0.0
        %769 = vmatpush1.msra.mxu0 0.0
        %770 = vmatprep.subr.mxu0 0.0
        %771 = vmatpush1.msra.mxu0 0.0
        %772 = vmatprep.subr.mxu0 0.0
        %773 = vmatpush1.msra.mxu0 0.0
        %774 = vmatprep.subr.mxu0 0.0
        %775 = vmatpush1.msra.mxu0 0.0
        %776 = vmatprep.subr.mxu0 0.0
        %777 = vmatpush1.msra.mxu0 0.0
        %778 = vmatprep.subr.mxu0 0.0
        %779 = vmatpush1.msra.mxu0 0.0
        %780 = vmatprep.subr.mxu0 0.0
        %781 = vmatpush1.msra.mxu0 0.0
        %782 = vmatprep.subr.mxu0 0.0
        %783 = vmatpush1.msra.mxu0 0.0
        %784 = vmatprep.subr.mxu0 0.0
        %785 = vmatpush1.msra.mxu0 0.0
        %786 = vmatprep.subr.mxu0 0.0
        %787 = vmatpush1.msra.mxu0 0.0
        %788 = vmatprep.subr.mxu0 0.0
        %789 = vmatpush1.msra.mxu0 0.0
        %790 = vmatprep.subr.mxu0 0.0
        %791 = vmatpush1.msra.mxu0 0.0
        %792 = vmatprep.subr.mxu0 0.0
        %793 = vmatpush1.msra.mxu0 0.0
        %794 = vmatprep.subr.mxu0 0.0
        %795 = vmatpush1.msra.mxu0 0.0
        %796 = vmatprep.subr.mxu0 0.0
        %797 = vmatpush1.msra.mxu0 0.0
        %798 = vmatprep.subr.mxu0 0.0
        %799 = vmatpush1.msra.mxu0 0.0
        %800 = vmatprep.subr.mxu0 0.0
        %801 = vmatpush1.msra.mxu0 0.0
        %802 = vmatprep.subr.mxu0 0.0
        %803 = vmatpush1.msra.mxu0 0.0
        %804 = vmatprep.subr.mxu0 0.0
        %805 = vmatpush1.msra.mxu0 0.0
        %806 = vmatprep.subr.mxu0 0.0
        %807 = vmatpush1.msra.mxu0 0.0
        %808 = vmatprep.subr.mxu0 0.0
        %809 = vmatpush1.msra.mxu0 0.0
        %810 = vmatprep.subr.mxu0 0.0
        %811 = vmatpush1.msra.mxu0 0.0
        %812 = vmatprep.subr.mxu0 0.0
        %813 = vmatpush1.msra.mxu0 0.0
        %814 = vmatprep.mubr.f32.mxu0 0.0
        %815 = vmatmul.mubr.f32.gmra.mrb[0].mxu0 %v404
        %v816 = vpop.f32.mrb[0].mxu0
        %v817 = vadd.f32 %v379, %v816
        %v818 = vpop.f32.mrb[0].mxu0
        %v819 = vadd.f32 %v379, %v818
        %820 = vmatprep.mubr.f32.mxu0 0.0
        %821 = vmatmul.mubr.f32.gmra.mrb[0].mxu0 %v407
        %v822 = vpop.f32.mrb[0].mxu0
        %v823 = vadd.f32 %v384, %v822
        %v824 = vpop.f32.mrb[0].mxu0
        %v825 = vadd.f32 %v384, %v824
        %826 = vdwg.mxu0
        %827 = vmatprep.subr.mxu0 %v432
        %828 = vmatpush1.msra.mxu0 %v430
        %829 = vmatprep.subr.mxu0 0.0
        %830 = vmatpush1.msra.mxu0 0.0
        %831 = vmatprep.subr.mxu0 0.0
        %832 = vmatpush1.msra.mxu0 0.0
        %833 = vmatprep.subr.mxu0 0.0
        %834 = vmatpush1.msra.mxu0 0.0
        %835 = vmatprep.subr.mxu0 0.0
        %836 = vmatpush1.msra.mxu0 0.0
        %837 = vmatprep.subr.mxu0 0.0
        %838 = vmatpush1.msra.mxu0 0.0
        %839 = vmatprep.subr.mxu0 0.0
        %840 = vmatpush1.msra.mxu0 0.0
        %841 = vmatprep.subr.mxu0 0.0
        %842 = vmatpush1.msra.mxu0 0.0
        %843 = vmatprep.subr.mxu0 0.0
        %844 = vmatpush1.msra.mxu0 0.0
        %845 = vmatprep.subr.mxu0 0.0
        %846 = vmatpush1.msra.mxu0 0.0
        %847 = vmatprep.subr.mxu0 0.0
        %848 = vmatpush1.msra.mxu0 0.0
        %849 = vmatprep.subr.mxu0 0.0
        %850 = vmatpush1.msra.mxu0 0.0
        %851 = vmatprep.subr.mxu0 0.0
        %852 = vmatpush1.msra.mxu0 0.0
        %853 = vmatprep.subr.mxu0 0.0
        %854 = vmatpush1.msra.mxu0 0.0
        %855 = vmatprep.subr.mxu0 0.0
        %856 = vmatpush1.msra.mxu0 0.0
        %857 = vmatprep.subr.mxu0 0.0
        %858 = vmatpush1.msra.mxu0 0.0
        %859 = vmatprep.subr.mxu0 0.0
        %860 = vmatpush1.msra.mxu0 0.0
        %861 = vmatprep.subr.mxu0 0.0
        %862 = vmatpush1.msra.mxu0 0.0
        %863 = vmatprep.subr.mxu0 0.0
        %864 = vmatpush1.msra.mxu0 0.0
        %865 = vmatprep.subr.mxu0 0.0
        %866 = vmatpush1.msra.mxu0 0.0
        %867 = vmatprep.subr.mxu0 0.0
        %868 = vmatpush1.msra.mxu0 0.0
        %869 = vmatprep.subr.mxu0 0.0
        %870 = vmatpush1.msra.mxu0 0.0
        %871 = vmatprep.subr.mxu0 0.0
        %872 = vmatpush1.msra.mxu0 0.0
        %873 = vmatprep.subr.mxu0 0.0
        %874 = vmatpush1.msra.mxu0 0.0
        %875 = vmatprep.subr.mxu0 0.0
        %876 = vmatpush1.msra.mxu0 0.0
        %877 = vmatprep.subr.mxu0 0.0
        %878 = vmatpush1.msra.mxu0 0.0
        %879 = vmatprep.subr.mxu0 0.0
        %880 = vmatpush1.msra.mxu0 0.0
        %881 = vmatprep.subr.mxu0 0.0
        %882 = vmatpush1.msra.mxu0 0.0
        %883 = vmatprep.subr.mxu0 0.0
        %884 = vmatpush1.msra.mxu0 0.0
        %885 = vmatprep.subr.mxu0 0.0
        %886 = vmatpush1.msra.mxu0 0.0
        %887 = vmatprep.subr.mxu0 0.0
        %888 = vmatpush1.msra.mxu0 0.0
        %889 = vmatprep.subr.mxu0 0.0
        %890 = vmatpush1.msra.mxu0 0.0
        %891 = vmatprep.mubr.f32.mxu0 0.0
        %892 = vmatmul.mubr.f32.gmra.mrb[0].mxu0 %v404
        %v893 = vpop.f32.mrb[0].mxu0
        %v894 = vadd.f32 %v379, %v893
        %v895 = vpop.f32.mrb[0].mxu0
        %v896 = vadd.f32 %v379, %v895
        %897 = vmatprep.mubr.f32.mxu0 0.0
        %898 = vmatmul.mubr.f32.gmra.mrb[0].mxu0 %v407
        %v899 = vpop.f32.mrb[0].mxu0
        %v900 = vadd.f32 %v384, %v899
        %v901 = vpop.f32.mrb[0].mxu0
        %v902 = vadd.f32 %v384, %v901
        %903 = vdwg.mxu0
        %904 = vmatprep.subr.mxu0 %v436
        %905 = vmatpush1.msra.mxu0 %v434
        %906 = vmatprep.subr.mxu0 0.0
        %907 = vmatpush1.msra.mxu0 0.0
        %908 = vmatprep.subr.mxu0 0.0
        %909 = vmatpush1.msra.mxu0 0.0
        %910 = vmatprep.subr.mxu0 0.0
        %911 = vmatpush1.msra.mxu0 0.0
        %912 = vmatprep.subr.mxu0 0.0
        %913 = vmatpush1.msra.mxu0 0.0
        %914 = vmatprep.subr.mxu0 0.0
        %915 = vmatpush1.msra.mxu0 0.0
        %916 = vmatprep.subr.mxu0 0.0
        %917 = vmatpush1.msra.mxu0 0.0
        %918 = vmatprep.subr.mxu0 0.0
        %919 = vmatpush1.msra.mxu0 0.0
        %920 = vmatprep.subr.mxu0 0.0
        %921 = vmatpush1.msra.mxu0 0.0
        %922 = vmatprep.subr.mxu0 0.0
        %923 = vmatpush1.msra.mxu0 0.0
        %924 = vmatprep.subr.mxu0 0.0
        %925 = vmatpush1.msra.mxu0 0.0
        %926 = vmatprep.subr.mxu0 0.0
        %927 = vmatpush1.msra.mxu0 0.0
        %928 = vmatprep.subr.mxu0 0.0
        %929 = vmatpush1.msra.mxu0 0.0
        %930 = vmatprep.subr.mxu0 0.0
        %931 = vmatpush1.msra.mxu0 0.0
        %932 = vmatprep.subr.mxu0 0.0
        %933 = vmatpush1.msra.mxu0 0.0
        %934 = vmatprep.subr.mxu0 0.0
        %935 = vmatpush1.msra.mxu0 0.0
        %936 = vmatprep.subr.mxu0 0.0
        %937 = vmatpush1.msra.mxu0 0.0
        %938 = vmatprep.subr.mxu0 0.0
        %939 = vmatpush1.msra.mxu0 0.0
        %940 = vmatprep.subr.mxu0 0.0
        %941 = vmatpush1.msra.mxu0 0.0
        %942 = vmatprep.subr.mxu0 0.0
        %943 = vmatpush1.msra.mxu0 0.0
        %944 = vmatprep.subr.mxu0 0.0
        %945 = vmatpush1.msra.mxu0 0.0
        %946 = vmatprep.subr.mxu0 0.0
        %947 = vmatpush1.msra.mxu0 0.0
        %948 = vmatprep.subr.mxu0 0.0
        %949 = vmatpush1.msra.mxu0 0.0
        %950 = vmatprep.subr.mxu0 0.0
        %951 = vmatpush1.msra.mxu0 0.0
        %952 = vmatprep.subr.mxu0 0.0
        %953 = vmatpush1.msra.mxu0 0.0
        %954 = vmatprep.subr.mxu0 0.0
        %955 = vmatpush1.msra.mxu0 0.0
        %956 = vmatprep.subr.mxu0 0.0
        %957 = vmatpush1.msra.mxu0 0.0
        %958 = vmatprep.subr.mxu0 0.0
        %959 = vmatpush1.msra.mxu0 0.0
        %960 = vmatprep.subr.mxu0 0.0
        %961 = vmatpush1.msra.mxu0 0.0
        %962 = vmatprep.subr.mxu0 0.0
        %963 = vmatpush1.msra.mxu0 0.0
        %964 = vmatprep.subr.mxu0 0.0
        %965 = vmatpush1.msra.mxu0 0.0
        %966 = vmatprep.subr.mxu0 0.0
        %967 = vmatpush1.msra.mxu0 0.0
        %968 = vmatprep.mubr.f32.mxu0 0.0
        %969 = vmatmul.mubr.f32.gmra.mrb[0].mxu0 %v404
        %v970 = vpop.f32.mrb[0].mxu0
        %v971 = vadd.f32 %v379, %v970
        %v972 = vpop.f32.mrb[0].mxu0
        %v973 = vadd.f32 %v379, %v972
        %974 = vmatprep.mubr.f32.mxu0 0.0
        %975 = vmatmul.mubr.f32.gmra.mrb[0].mxu0 %v407
        %v976 = vpop.f32.mrb[0].mxu0
        %v977 = vadd.f32 %v384, %v976
        %v978 = vpop.f32.mrb[0].mxu0
        %v979 = vadd.f32 %v384, %v978
        %980 = vdwg.mxu0
        %981 = vmatprep.subr.mxu0 %v440
        %982 = vmatpush1.msra.mxu0 %v438
        %983 = vmatprep.subr.mxu0 0.0
        %984 = vmatpush1.msra.mxu0 0.0
        %985 = vmatprep.subr.mxu0 0.0
        %986 = vmatpush1.msra.mxu0 0.0
        %987 = vmatprep.subr.mxu0 0.0
        %988 = vmatpush1.msra.mxu0 0.0
        %989 = vmatprep.subr.mxu0 0.0
        %990 = vmatpush1.msra.mxu0 0.0
        %991 = vmatprep.subr.mxu0 0.0
        %992 = vmatpush1.msra.mxu0 0.0
        %993 = vmatprep.subr.mxu0 0.0
        %994 = vmatpush1.msra.mxu0 0.0
        %995 = vmatprep.subr.mxu0 0.0
        %996 = vmatpush1.msra.mxu0 0.0
        %997 = vmatprep.subr.mxu0 0.0
        %998 = vmatpush1.msra.mxu0 0.0
        %999 = vmatprep.subr.mxu0 0.0
        %1000 = vmatpush1.msra.mxu0 0.0
        %1001 = vmatprep.subr.mxu0 0.0
        %1002 = vmatpush1.msra.mxu0 0.0
        %1003 = vmatprep.subr.mxu0 0.0
        %1004 = vmatpush1.msra.mxu0 0.0
        %1005 = vmatprep.subr.mxu0 0.0
        %1006 = vmatpush1.msra.mxu0 0.0
        %1007 = vmatprep.subr.mxu0 0.0
        %1008 = vmatpush1.msra.mxu0 0.0
        %1009 = vmatprep.subr.mxu0 0.0
        %1010 = vmatpush1.msra.mxu0 0.0
        %1011 = vmatprep.subr.mxu0 0.0
        %1012 = vmatpush1.msra.mxu0 0.0
        %1013 = vmatprep.subr.mxu0 0.0
        %1014 = vmatpush1.msra.mxu0 0.0
        %1015 = vmatprep.subr.mxu0 0.0
        %1016 = vmatpush1.msra.mxu0 0.0
        %1017 = vmatprep.subr.mxu0 0.0
        %1018 = vmatpush1.msra.mxu0 0.0
        %1019 = vmatprep.subr.mxu0 0.0
        %1020 = vmatpush1.msra.mxu0 0.0
        %1021 = vmatprep.subr.mxu0 0.0
        %1022 = vmatpush1.msra.mxu0 0.0
        %1023 = vmatprep.subr.mxu0 0.0
        %1024 = vmatpush1.msra.mxu0 0.0
        %1025 = vmatprep.subr.mxu0 0.0
        %1026 = vmatpush1.msra.mxu0 0.0
        %1027 = vmatprep.subr.mxu0 0.0
        %1028 = vmatpush1.msra.mxu0 0.0
        %1029 = vmatprep.subr.mxu0 0.0
        %1030 = vmatpush1.msra.mxu0 0.0
        %1031 = vmatprep.subr.mxu0 0.0
        %1032 = vmatpush1.msra.mxu0 0.0
        %1033 = vmatprep.subr.mxu0 0.0
        %1034 = vmatpush1.msra.mxu0 0.0
        %1035 = vmatprep.subr.mxu0 0.0
        %1036 = vmatpush1.msra.mxu0 0.0
        %1037 = vmatprep.subr.mxu0 0.0
        %1038 = vmatpush1.msra.mxu0 0.0
        %1039 = vmatprep.subr.mxu0 0.0
        %1040 = vmatpush1.msra.mxu0 0.0
        %1041 = vmatprep.subr.mxu0 0.0
        %1042 = vmatpush1.msra.mxu0 0.0
        %1043 = vmatprep.subr.mxu0 0.0
        %1044 = vmatpush1.msra.mxu0 0.0
        %1045 = vmatprep.mubr.f32.mxu0 0.0
        %1046 = vmatmul.mubr.f32.gmra.mrb[0].mxu0 %v404
        %v1047 = vpop.f32.mrb[0].mxu0
        %v1048 = vadd.f32 %v379, %v1047
        %v1049 = vpop.f32.mrb[0].mxu0
        %v1050 = vadd.f32 %v379, %v1049
        %1051 = vmatprep.mubr.f32.mxu0 0.0
        %1052 = vmatmul.mubr.f32.gmra.mrb[0].mxu0 %v407
        %v1053 = vpop.f32.mrb[0].mxu0
        %v1054 = vadd.f32 %v384, %v1053
        %v1055 = vpop.f32.mrb[0].mxu0
        %v1056 = vadd.f32 %v384, %v1055
        %1057 = vdwg.mxu0
        %v1058 = vmax.f32 %v509, 0.0
        %v1059 = vmax.f32 %v511, 0.0
        %v1060 = vmax.f32 %v586, 0.0
        %v1061 = vmax.f32 %v588, 0.0
        %v1062 = vmax.f32 %v663, 0.0
        %v1063 = vmax.f32 %v665, 0.0
        %v1064 = vmax.f32 %v740, 0.0
        %v1065 = vmax.f32 %v742, 0.0
        %v1066 = vmax.f32 %v817, 0.0
        %v1067 = vmax.f32 %v819, 0.0
        %v1068 = vmax.f32 %v894, 0.0
        %v1069 = vmax.f32 %v896, 0.0
        %v1070 = vmax.f32 %v971, 0.0
        %v1071 = vmax.f32 %v973, 0.0
        %v1072 = vmax.f32 %v1048, 0.0
        %v1073 = vmax.f32 %v1050, 0.0
        %v1074 = vmax.f32 %v515, 0.0
        %v1075 = vmax.f32 %v517, 0.0
        %v1076 = vmax.f32 %v592, 0.0
        %v1077 = vmax.f32 %v594, 0.0
        %v1078 = vmax.f32 %v669, 0.0
        %v1079 = vmax.f32 %v671, 0.0
        %v1080 = vmax.f32 %v746, 0.0
        %v1081 = vmax.f32 %v748, 0.0
        %v1082 = vmax.f32 %v823, 0.0
        %v1083 = vmax.f32 %v825, 0.0
        %v1084 = vmax.f32 %v900, 0.0
        %v1085 = vmax.f32 %v902, 0.0
        %v1086 = vmax.f32 %v977, 0.0
        %v1087 = vmax.f32 %v979, 0.0
        %v1088 = vmax.f32 %v1054, 0.0
        %v1089 = vmax.f32 %v1056, 0.0
        %v1090 = vld [vmem:[%s3] sm:$0xff]
        %v1091 = vld [vmem:[%s3 + $0x8] sm:$0xff]
        %v1092 = vld [vmem:[%s3 + $0x10] sm:$0xff]
        %v1093 = vld [vmem:[%s3 + $0x18] sm:$0xff]
        %v1094 = vld [vmem:[%s4] sm:$0xff]
        %v1095 = vld [vmem:[%s4 + $0x8] sm:$0xff]
        %v1096 = vld [vmem:[%s4 + $0x10] sm:$0xff]
        %v1097 = vld [vmem:[%s4 + $0x18] sm:$0xff]
        %1099 = vset.pattern.permute.xlu0 0
        %1100 = vperm.xlu0 %1099, %v1094
        %v1101 = vpop.permute.xlu0 %1100
        %1104 = vset.pattern.permute.xlu0 0
        %1105 = vperm.xlu0 %1104, %v1095
        %v1106 = vpop.permute.xlu0 %1105
        %1109 = vset.pattern.permute.xlu0 0
        %1110 = vperm.xlu0 %1109, %v1096
        %v1111 = vpop.permute.xlu0 %1110
        %1114 = vset.pattern.permute.xlu0 0
        %1115 = vperm.xlu0 %1114, %v1097
        %v1116 = vpop.permute.xlu0 %1115
        %vm1118 = vcmask 130048
        %v1120 = vsel %vm1118, %v1090, 0
        %v1123 = vsel %vm1118, %v1091, 0
        %v1126 = vsel %vm1118, %v1092, 0
        %v1129 = vsel %vm1118, %v1093, 0
        %1131 = vmatprep.subr.mxu0 %v1059
        %1132 = vmatpush1.msra.mxu0 %v1058
        %1133 = vmatprep.subr.mxu0 %v1075
        %1134 = vmatpush1.msra.mxu0 %v1074
        %1135 = vmatprep.subr.mxu0 0.0
        %1136 = vmatpush1.msra.mxu0 0.0
        %1137 = vmatprep.subr.mxu0 0.0
        %1138 = vmatpush1.msra.mxu0 0.0
        %1139 = vmatprep.subr.mxu0 0.0
        %1140 = vmatpush1.msra.mxu0 0.0
        %1141 = vmatprep.subr.mxu0 0.0
        %1142 = vmatpush1.msra.mxu0 0.0
        %1143 = vmatprep.subr.mxu0 0.0
        %1144 = vmatpush1.msra.mxu0 0.0
        %1145 = vmatprep.subr.mxu0 0.0
        %1146 = vmatpush1.msra.mxu0 0.0
        %1147 = vmatprep.subr.mxu0 0.0
        %1148 = vmatpush1.msra.mxu0 0.0
        %1149 = vmatprep.subr.mxu0 0.0
        %1150 = vmatpush1.msra.mxu0 0.0
        %1151 = vmatprep.subr.mxu0 0.0
        %1152 = vmatpush1.msra.mxu0 0.0
        %1153 = vmatprep.subr.mxu0 0.0
        %1154 = vmatpush1.msra.mxu0 0.0
        %1155 = vmatprep.subr.mxu0 0.0
        %1156 = vmatpush1.msra.mxu0 0.0
        %1157 = vmatprep.subr.mxu0 0.0
        %1158 = vmatpush1.msra.mxu0 0.0
        %1159 = vmatprep.subr.mxu0 0.0
        %1160 = vmatpush1.msra.mxu0 0.0
        %1161 = vmatprep.subr.mxu0 0.0
        %1162 = vmatpush1.msra.mxu0 0.0
        %1163 = vmatprep.subr.mxu0 0.0
        %1164 = vmatpush1.msra.mxu0 0.0
        %1165 = vmatprep.subr.mxu0 0.0
        %1166 = vmatpush1.msra.mxu0 0.0
        %1167 = vmatprep.subr.mxu0 0.0
        %1168 = vmatpush1.msra.mxu0 0.0
        %1169 = vmatprep.subr.mxu0 0.0
        %1170 = vmatpush1.msra.mxu0 0.0
        %1171 = vmatprep.subr.mxu0 0.0
        %1172 = vmatpush1.msra.mxu0 0.0
        %1173 = vmatprep.subr.mxu0 0.0
        %1174 = vmatpush1.msra.mxu0 0.0
        %1175 = vmatprep.subr.mxu0 0.0
        %1176 = vmatpush1.msra.mxu0 0.0
        %1177 = vmatprep.subr.mxu0 0.0
        %1178 = vmatpush1.msra.mxu0 0.0
        %1179 = vmatprep.subr.mxu0 0.0
        %1180 = vmatpush1.msra.mxu0 0.0
        %1181 = vmatprep.subr.mxu0 0.0
        %1182 = vmatpush1.msra.mxu0 0.0
        %1183 = vmatprep.subr.mxu0 0.0
        %1184 = vmatpush1.msra.mxu0 0.0
        %1185 = vmatprep.subr.mxu0 0.0
        %1186 = vmatpush1.msra.mxu0 0.0
        %1187 = vmatprep.subr.mxu0 0.0
        %1188 = vmatpush1.msra.mxu0 0.0
        %1189 = vmatprep.subr.mxu0 0.0
        %1190 = vmatpush1.msra.mxu0 0.0
        %1191 = vmatprep.subr.mxu0 0.0
        %1192 = vmatpush1.msra.mxu0 0.0
        %1193 = vmatprep.subr.mxu0 0.0
        %1194 = vmatpush1.msra.mxu0 0.0
        %1195 = vmatprep.mubr.f32.mxu0 0.0
        %1196 = vmatmul.mubr.f32.gmra.mrb[0].mxu0 %v1120
        %v1197 = vpop.f32.mrb[0].mxu0
        %v1198 = vadd.f32 %v1101, %v1197
        %v1199 = vpop.f32.mrb[0].mxu0
        %v1200 = vadd.f32 %v1101, %v1199
        %1201 = vmatprep.mubr.f32.mxu0 0.0
        %1202 = vmatmul.mubr.f32.gmra.mrb[0].mxu0 %v1123
        %v1203 = vpop.f32.mrb[0].mxu0
        %v1204 = vadd.f32 %v1106, %v1203
        %v1205 = vpop.f32.mrb[0].mxu0
        %v1206 = vadd.f32 %v1106, %v1205
        %1207 = vmatprep.mubr.f32.mxu0 0.0
        %1208 = vmatmul.mubr.f32.gmra.mrb[0].mxu0 %v1126
        %v1209 = vpop.f32.mrb[0].mxu0
        %v1210 = vadd.f32 %v1111, %v1209
        %v1211 = vpop.f32.mrb[0].mxu0
        %v1212 = vadd.f32 %v1111, %v1211
        %1213 = vmatprep.mubr.f32.mxu0 0.0
        %1214 = vmatmul.mubr.f32.gmra.mrb[0].mxu0 %v1129
        %v1215 = vpop.f32.mrb[0].mxu0
        %v1216 = vadd.f32 %v1116, %v1215
        %v1217 = vpop.f32.mrb[0].mxu0
        %v1218 = vadd.f32 %v1116, %v1217
        %1219 = vdwg.mxu0
        %1220 = vmatprep.subr.mxu0 %v1061
        %1221 = vmatpush1.msra.mxu0 %v1060
        %1222 = vmatprep.subr.mxu0 %v1077
        %1223 = vmatpush1.msra.mxu0 %v1076
        %1224 = vmatprep.subr.mxu0 0.0
        %1225 = vmatpush1.msra.mxu0 0.0
        %1226 = vmatprep.subr.mxu0 0.0
        %1227 = vmatpush1.msra.mxu0 0.0
        %1228 = vmatprep.subr.mxu0 0.0
        %1229 = vmatpush1.msra.mxu0 0.0
        %1230 = vmatprep.subr.mxu0 0.0
        %1231 = vmatpush1.msra.mxu0 0.0
        %1232 = vmatprep.subr.mxu0 0.0
        %1233 = vmatpush1.msra.mxu0 0.0
        %1234 = vmatprep.subr.mxu0 0.0
        %1235 = vmatpush1.msra.mxu0 0.0
        %1236 = vmatprep.subr.mxu0 0.0
        %1237 = vmatpush1.msra.mxu0 0.0
        %1238 = vmatprep.subr.mxu0 0.0
        %1239 = vmatpush1.msra.mxu0 0.0
        %1240 = vmatprep.subr.mxu0 0.0
        %1241 = vmatpush1.msra.mxu0 0.0
        %1242 = vmatprep.subr.mxu0 0.0
        %1243 = vmatpush1.msra.mxu0 0.0
        %1244 = vmatprep.subr.mxu0 0.0
        %1245 = vmatpush1.msra.mxu0 0.0
        %1246 = vmatprep.subr.mxu0 0.0
        %1247 = vmatpush1.msra.mxu0 0.0
        %1248 = vmatprep.subr.mxu0 0.0
        %1249 = vmatpush1.msra.mxu0 0.0
        %1250 = vmatprep.subr.mxu0 0.0
        %1251 = vmatpush1.msra.mxu0 0.0
        %1252 = vmatprep.subr.mxu0 0.0
        %1253 = vmatpush1.msra.mxu0 0.0
        %1254 = vmatprep.subr.mxu0 0.0
        %1255 = vmatpush1.msra.mxu0 0.0
        %1256 = vmatprep.subr.mxu0 0.0
        %1257 = vmatpush1.msra.mxu0 0.0
        %1258 = vmatprep.subr.mxu0 0.0
        %1259 = vmatpush1.msra.mxu0 0.0
        %1260 = vmatprep.subr.mxu0 0.0
        %1261 = vmatpush1.msra.mxu0 0.0
        %1262 = vmatprep.subr.mxu0 0.0
        %1263 = vmatpush1.msra.mxu0 0.0
        %1264 = vmatprep.subr.mxu0 0.0
        %1265 = vmatpush1.msra.mxu0 0.0
        %1266 = vmatprep.subr.mxu0 0.0
        %1267 = vmatpush1.msra.mxu0 0.0
        %1268 = vmatprep.subr.mxu0 0.0
        %1269 = vmatpush1.msra.mxu0 0.0
        %1270 = vmatprep.subr.mxu0 0.0
        %1271 = vmatpush1.msra.mxu0 0.0
        %1272 = vmatprep.subr.mxu0 0.0
        %1273 = vmatpush1.msra.mxu0 0.0
        %1274 = vmatprep.subr.mxu0 0.0
        %1275 = vmatpush1.msra.mxu0 0.0
        %1276 = vmatprep.subr.mxu0 0.0
        %1277 = vmatpush1.msra.mxu0 0.0
        %1278 = vmatprep.subr.mxu0 0.0
        %1279 = vmatpush1.msra.mxu0 0.0
        %1280 = vmatprep.subr.mxu0 0.0
        %1281 = vmatpush1.msra.mxu0 0.0
        %1282 = vmatprep.subr.mxu0 0.0
        %1283 = vmatpush1.msra.mxu0 0.0
        %1284 = vmatprep.mubr.f32.mxu0 0.0
        %1285 = vmatmul.mubr.f32.gmra.mrb[0].mxu0 %v1120
        %v1286 = vpop.f32.mrb[0].mxu0
        %v1287 = vadd.f32 %v1101, %v1286
        %v1288 = vpop.f32.mrb[0].mxu0
        %v1289 = vadd.f32 %v1101, %v1288
        %1290 = vmatprep.mubr.f32.mxu0 0.0
        %1291 = vmatmul.mubr.f32.gmra.mrb[0].mxu0 %v1123
        %v1292 = vpop.f32.mrb[0].mxu0
        %v1293 = vadd.f32 %v1106, %v1292
        %v1294 = vpop.f32.mrb[0].mxu0
        %v1295 = vadd.f32 %v1106, %v1294
        %1296 = vmatprep.mubr.f32.mxu0 0.0
        %1297 = vmatmul.mubr.f32.gmra.mrb[0].mxu0 %v1126
        %v1298 = vpop.f32.mrb[0].mxu0
        %v1299 = vadd.f32 %v1111, %v1298
        %v1300 = vpop.f32.mrb[0].mxu0
        %v1301 = vadd.f32 %v1111, %v1300
        %1302 = vmatprep.mubr.f32.mxu0 0.0
        %1303 = vmatmul.mubr.f32.gmra.mrb[0].mxu0 %v1129
        %v1304 = vpop.f32.mrb[0].mxu0
        %v1305 = vadd.f32 %v1116, %v1304
        %v1306 = vpop.f32.mrb[0].mxu0
        %v1307 = vadd.f32 %v1116, %v1306
        %1308 = vdwg.mxu0
        %1309 = vmatprep.subr.mxu0 %v1063
        %1310 = vmatpush1.msra.mxu0 %v1062
        %1311 = vmatprep.subr.mxu0 %v1079
        %1312 = vmatpush1.msra.mxu0 %v1078
        %1313 = vmatprep.subr.mxu0 0.0
        %1314 = vmatpush1.msra.mxu0 0.0
        %1315 = vmatprep.subr.mxu0 0.0
        %1316 = vmatpush1.msra.mxu0 0.0
        %1317 = vmatprep.subr.mxu0 0.0
        %1318 = vmatpush1.msra.mxu0 0.0
        %1319 = vmatprep.subr.mxu0 0.0
        %1320 = vmatpush1.msra.mxu0 0.0
        %1321 = vmatprep.subr.mxu0 0.0
        %1322 = vmatpush1.msra.mxu0 0.0
        %1323 = vmatprep.subr.mxu0 0.0
        %1324 = vmatpush1.msra.mxu0 0.0
        %1325 = vmatprep.subr.mxu0 0.0
        %1326 = vmatpush1.msra.mxu0 0.0
        %1327 = vmatprep.subr.mxu0 0.0
        %1328 = vmatpush1.msra.mxu0 0.0
        %1329 = vmatprep.subr.mxu0 0.0
        %1330 = vmatpush1.msra.mxu0 0.0
        %1331 = vmatprep.subr.mxu0 0.0
        %1332 = vmatpush1.msra.mxu0 0.0
        %1333 = vmatprep.subr.mxu0 0.0
        %1334 = vmatpush1.msra.mxu0 0.0
        %1335 = vmatprep.subr.mxu0 0.0
        %1336 = vmatpush1.msra.mxu0 0.0
        %1337 = vmatprep.subr.mxu0 0.0
        %1338 = vmatpush1.msra.mxu0 0.0
        %1339 = vmatprep.subr.mxu0 0.0
        %1340 = vmatpush1.msra.mxu0 0.0
        %1341 = vmatprep.subr.mxu0 0.0
        %1342 = vmatpush1.msra.mxu0 0.0
        %1343 = vmatprep.subr.mxu0 0.0
        %1344 = vmatpush1.msra.mxu0 0.0
        %1345 = vmatprep.subr.mxu0 0.0
        %1346 = vmatpush1.msra.mxu0 0.0
        %1347 = vmatprep.subr.mxu0 0.0
        %1348 = vmatpush1.msra.mxu0 0.0
        %1349 = vmatprep.subr.mxu0 0.0
        %1350 = vmatpush1.msra.mxu0 0.0
        %1351 = vmatprep.subr.mxu0 0.0
        %1352 = vmatpush1.msra.mxu0 0.0
        %1353 = vmatprep.subr.mxu0 0.0
        %1354 = vmatpush1.msra.mxu0 0.0
        %1355 = vmatprep.subr.mxu0 0.0
        %1356 = vmatpush1.msra.mxu0 0.0
        %1357 = vmatprep.subr.mxu0 0.0
        %1358 = vmatpush1.msra.mxu0 0.0
        %1359 = vmatprep.subr.mxu0 0.0
        %1360 = vmatpush1.msra.mxu0 0.0
        %1361 = vmatprep.subr.mxu0 0.0
        %1362 = vmatpush1.msra.mxu0 0.0
        %1363 = vmatprep.subr.mxu0 0.0
        %1364 = vmatpush1.msra.mxu0 0.0
        %1365 = vmatprep.subr.mxu0 0.0
        %1366 = vmatpush1.msra.mxu0 0.0
        %1367 = vmatprep.subr.mxu0 0.0
        %1368 = vmatpush1.msra.mxu0 0.0
        %1369 = vmatprep.subr.mxu0 0.0
        %1370 = vmatpush1.msra.mxu0 0.0
        %1371 = vmatprep.subr.mxu0 0.0
        %1372 = vmatpush1.msra.mxu0 0.0
        %1373 = vmatprep.mubr.f32.mxu0 0.0
        %1374 = vmatmul.mubr.f32.gmra.mrb[0].mxu0 %v1120
        %v1375 = vpop.f32.mrb[0].mxu0
        %v1376 = vadd.f32 %v1101, %v1375
        %v1377 = vpop.f32.mrb[0].mxu0
        %v1378 = vadd.f32 %v1101, %v1377
        %1379 = vmatprep.mubr.f32.mxu0 0.0
        %1380 = vmatmul.mubr.f32.gmra.mrb[0].mxu0 %v1123
        %v1381 = vpop.f32.mrb[0].mxu0
        %v1382 = vadd.f32 %v1106, %v1381
        %v1383 = vpop.f32.mrb[0].mxu0
        %v1384 = vadd.f32 %v1106, %v1383
        %1385 = vmatprep.mubr.f32.mxu0 0.0
        %1386 = vmatmul.mubr.f32.gmra.mrb[0].mxu0 %v1126
        %v1387 = vpop.f32.mrb[0].mxu0
        %v1388 = vadd.f32 %v1111, %v1387
        %v1389 = vpop.f32.mrb[0].mxu0
        %v1390 = vadd.f32 %v1111, %v1389
        %1391 = vmatprep.mubr.f32.mxu0 0.0
        %1392 = vmatmul.mubr.f32.gmra.mrb[0].mxu0 %v1129
        %v1393 = vpop.f32.mrb[0].mxu0
        %v1394 = vadd.f32 %v1116, %v1393
        %v1395 = vpop.f32.mrb[0].mxu0
        %v1396 = vadd.f32 %v1116, %v1395
        %1397 = vdwg.mxu0
        %1398 = vmatprep.subr.mxu0 %v1065
        %1399 = vmatpush1.msra.mxu0 %v1064
        %1400 = vmatprep.subr.mxu0 %v1081
        %1401 = vmatpush1.msra.mxu0 %v1080
        %1402 = vmatprep.subr.mxu0 0.0
        %1403 = vmatpush1.msra.mxu0 0.0
        %1404 = vmatprep.subr.mxu0 0.0
        %1405 = vmatpush1.msra.mxu0 0.0
        %1406 = vmatprep.subr.mxu0 0.0
        %1407 = vmatpush1.msra.mxu0 0.0
        %1408 = vmatprep.subr.mxu0 0.0
        %1409 = vmatpush1.msra.mxu0 0.0
        %1410 = vmatprep.subr.mxu0 0.0
        %1411 = vmatpush1.msra.mxu0 0.0
        %1412 = vmatprep.subr.mxu0 0.0
        %1413 = vmatpush1.msra.mxu0 0.0
        %1414 = vmatprep.subr.mxu0 0.0
        %1415 = vmatpush1.msra.mxu0 0.0
        %1416 = vmatprep.subr.mxu0 0.0
        %1417 = vmatpush1.msra.mxu0 0.0
        %1418 = vmatprep.subr.mxu0 0.0
        %1419 = vmatpush1.msra.mxu0 0.0
        %1420 = vmatprep.subr.mxu0 0.0
        %1421 = vmatpush1.msra.mxu0 0.0
        %1422 = vmatprep.subr.mxu0 0.0
        %1423 = vmatpush1.msra.mxu0 0.0
        %1424 = vmatprep.subr.mxu0 0.0
        %1425 = vmatpush1.msra.mxu0 0.0
        %1426 = vmatprep.subr.mxu0 0.0
        %1427 = vmatpush1.msra.mxu0 0.0
        %1428 = vmatprep.subr.mxu0 0.0
        %1429 = vmatpush1.msra.mxu0 0.0
        %1430 = vmatprep.subr.mxu0 0.0
        %1431 = vmatpush1.msra.mxu0 0.0
        %1432 = vmatprep.subr.mxu0 0.0
        %1433 = vmatpush1.msra.mxu0 0.0
        %1434 = vmatprep.subr.mxu0 0.0
        %1435 = vmatpush1.msra.mxu0 0.0
        %1436 = vmatprep.subr.mxu0 0.0
        %1437 = vmatpush1.msra.mxu0 0.0
        %1438 = vmatprep.subr.mxu0 0.0
        %1439 = vmatpush1.msra.mxu0 0.0
        %1440 = vmatprep.subr.mxu0 0.0
        %1441 = vmatpush1.msra.mxu0 0.0
        %1442 = vmatprep.subr.mxu0 0.0
        %1443 = vmatpush1.msra.mxu0 0.0
        %1444 = vmatprep.subr.mxu0 0.0
        %1445 = vmatpush1.msra.mxu0 0.0
        %1446 = vmatprep.subr.mxu0 0.0
        %1447 = vmatpush1.msra.mxu0 0.0
        %1448 = vmatprep.subr.mxu0 0.0
        %1449 = vmatpush1.msra.mxu0 0.0
        %1450 = vmatprep.subr.mxu0 0.0
        %1451 = vmatpush1.msra.mxu0 0.0
        %1452 = vmatprep.subr.mxu0 0.0
        %1453 = vmatpush1.msra.mxu0 0.0
        %1454 = vmatprep.subr.mxu0 0.0
        %1455 = vmatpush1.msra.mxu0 0.0
        %1456 = vmatprep.subr.mxu0 0.0
        %1457 = vmatpush1.msra.mxu0 0.0
        %1458 = vmatprep.subr.mxu0 0.0
        %1459 = vmatpush1.msra.mxu0 0.0
        %1460 = vmatprep.subr.mxu0 0.0
        %1461 = vmatpush1.msra.mxu0 0.0
        %1462 = vmatprep.mubr.f32.mxu0 0.0
        %1463 = vmatmul.mubr.f32.gmra.mrb[0].mxu0 %v1120
        %v1464 = vpop.f32.mrb[0].mxu0
        %v1465 = vadd.f32 %v1101, %v1464
        %v1466 = vpop.f32.mrb[0].mxu0
        %v1467 = vadd.f32 %v1101, %v1466
        %1468 = vmatprep.mubr.f32.mxu0 0.0
        %1469 = vmatmul.mubr.f32.gmra.mrb[0].mxu0 %v1123
        %v1470 = vpop.f32.mrb[0].mxu0
        %v1471 = vadd.f32 %v1106, %v1470
        %v1472 = vpop.f32.mrb[0].mxu0
        %v1473 = vadd.f32 %v1106, %v1472
        %1474 = vmatprep.mubr.f32.mxu0 0.0
        %1475 = vmatmul.mubr.f32.gmra.mrb[0].mxu0 %v1126
        %v1476 = vpop.f32.mrb[0].mxu0
        %v1477 = vadd.f32 %v1111, %v1476
        %v1478 = vpop.f32.mrb[0].mxu0
        %v1479 = vadd.f32 %v1111, %v1478
        %1480 = vmatprep.mubr.f32.mxu0 0.0
        %1481 = vmatmul.mubr.f32.gmra.mrb[0].mxu0 %v1129
        %v1482 = vpop.f32.mrb[0].mxu0
        %v1483 = vadd.f32 %v1116, %v1482
        %v1484 = vpop.f32.mrb[0].mxu0
        %v1485 = vadd.f32 %v1116, %v1484
        %1486 = vdwg.mxu0
        %1487 = vmatprep.subr.mxu0 %v1067
        %1488 = vmatpush1.msra.mxu0 %v1066
        %1489 = vmatprep.subr.mxu0 %v1083
        %1490 = vmatpush1.msra.mxu0 %v1082
        %1491 = vmatprep.subr.mxu0 0.0
        %1492 = vmatpush1.msra.mxu0 0.0
        %1493 = vmatprep.subr.mxu0 0.0
        %1494 = vmatpush1.msra.mxu0 0.0
        %1495 = vmatprep.subr.mxu0 0.0
        %1496 = vmatpush1.msra.mxu0 0.0
        %1497 = vmatprep.subr.mxu0 0.0
        %1498 = vmatpush1.msra.mxu0 0.0
        %1499 = vmatprep.subr.mxu0 0.0
        %1500 = vmatpush1.msra.mxu0 0.0
        %1501 = vmatprep.subr.mxu0 0.0
        %1502 = vmatpush1.msra.mxu0 0.0
        %1503 = vmatprep.subr.mxu0 0.0
        %1504 = vmatpush1.msra.mxu0 0.0
        %1505 = vmatprep.subr.mxu0 0.0
        %1506 = vmatpush1.msra.mxu0 0.0
        %1507 = vmatprep.subr.mxu0 0.0
        %1508 = vmatpush1.msra.mxu0 0.0
        %1509 = vmatprep.subr.mxu0 0.0
        %1510 = vmatpush1.msra.mxu0 0.0
        %1511 = vmatprep.subr.mxu0 0.0
        %1512 = vmatpush1.msra.mxu0 0.0
        %1513 = vmatprep.subr.mxu0 0.0
        %1514 = vmatpush1.msra.mxu0 0.0
        %1515 = vmatprep.subr.mxu0 0.0
        %1516 = vmatpush1.msra.mxu0 0.0
        %1517 = vmatprep.subr.mxu0 0.0
        %1518 = vmatpush1.msra.mxu0 0.0
        %1519 = vmatprep.subr.mxu0 0.0
        %1520 = vmatpush1.msra.mxu0 0.0
        %1521 = vmatprep.subr.mxu0 0.0
        %1522 = vmatpush1.msra.mxu0 0.0
        %1523 = vmatprep.subr.mxu0 0.0
        %1524 = vmatpush1.msra.mxu0 0.0
        %1525 = vmatprep.subr.mxu0 0.0
        %1526 = vmatpush1.msra.mxu0 0.0
        %1527 = vmatprep.subr.mxu0 0.0
        %1528 = vmatpush1.msra.mxu0 0.0
        %1529 = vmatprep.subr.mxu0 0.0
        %1530 = vmatpush1.msra.mxu0 0.0
        %1531 = vmatprep.subr.mxu0 0.0
        %1532 = vmatpush1.msra.mxu0 0.0
        %1533 = vmatprep.subr.mxu0 0.0
        %1534 = vmatpush1.msra.mxu0 0.0
        %1535 = vmatprep.subr.mxu0 0.0
        %1536 = vmatpush1.msra.mxu0 0.0
        %1537 = vmatprep.subr.mxu0 0.0
        %1538 = vmatpush1.msra.mxu0 0.0
        %1539 = vmatprep.subr.mxu0 0.0
        %1540 = vmatpush1.msra.mxu0 0.0
        %1541 = vmatprep.subr.mxu0 0.0
        %1542 = vmatpush1.msra.mxu0 0.0
        %1543 = vmatprep.subr.mxu0 0.0
        %1544 = vmatpush1.msra.mxu0 0.0
        %1545 = vmatprep.subr.mxu0 0.0
        %1546 = vmatpush1.msra.mxu0 0.0
        %1547 = vmatprep.subr.mxu0 0.0
        %1548 = vmatpush1.msra.mxu0 0.0
        %1549 = vmatprep.subr.mxu0 0.0
        %1550 = vmatpush1.msra.mxu0 0.0
        %1551 = vmatprep.mubr.f32.mxu0 0.0
        %1552 = vmatmul.mubr.f32.gmra.mrb[0].mxu0 %v1120
        %v1553 = vpop.f32.mrb[0].mxu0
        %v1554 = vadd.f32 %v1101, %v1553
        %v1555 = vpop.f32.mrb[0].mxu0
        %v1556 = vadd.f32 %v1101, %v1555
        %1557 = vmatprep.mubr.f32.mxu0 0.0
        %1558 = vmatmul.mubr.f32.gmra.mrb[0].mxu0 %v1123
        %v1559 = vpop.f32.mrb[0].mxu0
        %v1560 = vadd.f32 %v1106, %v1559
        %v1561 = vpop.f32.mrb[0].mxu0
        %v1562 = vadd.f32 %v1106, %v1561
        %1563 = vmatprep.mubr.f32.mxu0 0.0
        %1564 = vmatmul.mubr.f32.gmra.mrb[0].mxu0 %v1126
        %v1565 = vpop.f32.mrb[0].mxu0
        %v1566 = vadd.f32 %v1111, %v1565
        %v1567 = vpop.f32.mrb[0].mxu0
        %v1568 = vadd.f32 %v1111, %v1567
        %1569 = vmatprep.mubr.f32.mxu0 0.0
        %1570 = vmatmul.mubr.f32.gmra.mrb[0].mxu0 %v1129
        %v1571 = vpop.f32.mrb[0].mxu0
        %v1572 = vadd.f32 %v1116, %v1571
        %v1573 = vpop.f32.mrb[0].mxu0
        %v1574 = vadd.f32 %v1116, %v1573
        %1575 = vdwg.mxu0
        %1576 = vmatprep.subr.mxu0 %v1069
        %1577 = vmatpush1.msra.mxu0 %v1068
        %1578 = vmatprep.subr.mxu0 %v1085
        %1579 = vmatpush1.msra.mxu0 %v1084
        %1580 = vmatprep.subr.mxu0 0.0
        %1581 = vmatpush1.msra.mxu0 0.0
        %1582 = vmatprep.subr.mxu0 0.0
        %1583 = vmatpush1.msra.mxu0 0.0
        %1584 = vmatprep.subr.mxu0 0.0
        %1585 = vmatpush1.msra.mxu0 0.0
        %1586 = vmatprep.subr.mxu0 0.0
        %1587 = vmatpush1.msra.mxu0 0.0
        %1588 = vmatprep.subr.mxu0 0.0
        %1589 = vmatpush1.msra.mxu0 0.0
        %1590 = vmatprep.subr.mxu0 0.0
        %1591 = vmatpush1.msra.mxu0 0.0
        %1592 = vmatprep.subr.mxu0 0.0
        %1593 = vmatpush1.msra.mxu0 0.0
        %1594 = vmatprep.subr.mxu0 0.0
        %1595 = vmatpush1.msra.mxu0 0.0
        %1596 = vmatprep.subr.mxu0 0.0
        %1597 = vmatpush1.msra.mxu0 0.0
        %1598 = vmatprep.subr.mxu0 0.0
        %1599 = vmatpush1.msra.mxu0 0.0
        %1600 = vmatprep.subr.mxu0 0.0
        %1601 = vmatpush1.msra.mxu0 0.0
        %1602 = vmatprep.subr.mxu0 0.0
        %1603 = vmatpush1.msra.mxu0 0.0
        %1604 = vmatprep.subr.mxu0 0.0
        %1605 = vmatpush1.msra.mxu0 0.0
        %1606 = vmatprep.subr.mxu0 0.0
        %1607 = vmatpush1.msra.mxu0 0.0
        %1608 = vmatprep.subr.mxu0 0.0
        %1609 = vmatpush1.msra.mxu0 0.0
        %1610 = vmatprep.subr.mxu0 0.0
        %1611 = vmatpush1.msra.mxu0 0.0
        %1612 = vmatprep.subr.mxu0 0.0
        %1613 = vmatpush1.msra.mxu0 0.0
        %1614 = vmatprep.subr.mxu0 0.0
        %1615 = vmatpush1.msra.mxu0 0.0
        %1616 = vmatprep.subr.mxu0 0.0
        %1617 = vmatpush1.msra.mxu0 0.0
        %1618 = vmatprep.subr.mxu0 0.0
        %1619 = vmatpush1.msra.mxu0 0.0
        %1620 = vmatprep.subr.mxu0 0.0
        %1621 = vmatpush1.msra.mxu0 0.0
        %1622 = vmatprep.subr.mxu0 0.0
        %1623 = vmatpush1.msra.mxu0 0.0
        %1624 = vmatprep.subr.mxu0 0.0
        %1625 = vmatpush1.msra.mxu0 0.0
        %1626 = vmatprep.subr.mxu0 0.0
        %1627 = vmatpush1.msra.mxu0 0.0
        %1628 = vmatprep.subr.mxu0 0.0
        %1629 = vmatpush1.msra.mxu0 0.0
        %1630 = vmatprep.subr.mxu0 0.0
        %1631 = vmatpush1.msra.mxu0 0.0
        %1632 = vmatprep.subr.mxu0 0.0
        %1633 = vmatpush1.msra.mxu0 0.0
        %1634 = vmatprep.subr.mxu0 0.0
        %1635 = vmatpush1.msra.mxu0 0.0
        %1636 = vmatprep.subr.mxu0 0.0
        %1637 = vmatpush1.msra.mxu0 0.0
        %1638 = vmatprep.subr.mxu0 0.0
        %1639 = vmatpush1.msra.mxu0 0.0
        %1640 = vmatprep.mubr.f32.mxu0 0.0
        %1641 = vmatmul.mubr.f32.gmra.mrb[0].mxu0 %v1120
        %v1642 = vpop.f32.mrb[0].mxu0
        %v1643 = vadd.f32 %v1101, %v1642
        %v1644 = vpop.f32.mrb[0].mxu0
        %v1645 = vadd.f32 %v1101, %v1644
        %1646 = vmatprep.mubr.f32.mxu0 0.0
        %1647 = vmatmul.mubr.f32.gmra.mrb[0].mxu0 %v1123
        %v1648 = vpop.f32.mrb[0].mxu0
        %v1649 = vadd.f32 %v1106, %v1648
        %v1650 = vpop.f32.mrb[0].mxu0
        %v1651 = vadd.f32 %v1106, %v1650
        %1652 = vmatprep.mubr.f32.mxu0 0.0
        %1653 = vmatmul.mubr.f32.gmra.mrb[0].mxu0 %v1126
        %v1654 = vpop.f32.mrb[0].mxu0
        %v1655 = vadd.f32 %v1111, %v1654
        %v1656 = vpop.f32.mrb[0].mxu0
        %v1657 = vadd.f32 %v1111, %v1656
        %1658 = vmatprep.mubr.f32.mxu0 0.0
        %1659 = vmatmul.mubr.f32.gmra.mrb[0].mxu0 %v1129
        %v1660 = vpop.f32.mrb[0].mxu0
        %v1661 = vadd.f32 %v1116, %v1660
        %v1662 = vpop.f32.mrb[0].mxu0
        %v1663 = vadd.f32 %v1116, %v1662
        %1664 = vdwg.mxu0
        %1665 = vmatprep.subr.mxu0 %v1071
        %1666 = vmatpush1.msra.mxu0 %v1070
        %1667 = vmatprep.subr.mxu0 %v1087
        %1668 = vmatpush1.msra.mxu0 %v1086
        %1669 = vmatprep.subr.mxu0 0.0
        %1670 = vmatpush1.msra.mxu0 0.0
        %1671 = vmatprep.subr.mxu0 0.0
        %1672 = vmatpush1.msra.mxu0 0.0
        %1673 = vmatprep.subr.mxu0 0.0
        %1674 = vmatpush1.msra.mxu0 0.0
        %1675 = vmatprep.subr.mxu0 0.0
        %1676 = vmatpush1.msra.mxu0 0.0
        %1677 = vmatprep.subr.mxu0 0.0
        %1678 = vmatpush1.msra.mxu0 0.0
        %1679 = vmatprep.subr.mxu0 0.0
        %1680 = vmatpush1.msra.mxu0 0.0
        %1681 = vmatprep.subr.mxu0 0.0
        %1682 = vmatpush1.msra.mxu0 0.0
        %1683 = vmatprep.subr.mxu0 0.0
        %1684 = vmatpush1.msra.mxu0 0.0
        %1685 = vmatprep.subr.mxu0 0.0
        %1686 = vmatpush1.msra.mxu0 0.0
        %1687 = vmatprep.subr.mxu0 0.0
        %1688 = vmatpush1.msra.mxu0 0.0
        %1689 = vmatprep.subr.mxu0 0.0
        %1690 = vmatpush1.msra.mxu0 0.0
        %1691 = vmatprep.subr.mxu0 0.0
        %1692 = vmatpush1.msra.mxu0 0.0
        %1693 = vmatprep.subr.mxu0 0.0
        %1694 = vmatpush1.msra.mxu0 0.0
        %1695 = vmatprep.subr.mxu0 0.0
        %1696 = vmatpush1.msra.mxu0 0.0
        %1697 = vmatprep.subr.mxu0 0.0
        %1698 = vmatpush1.msra.mxu0 0.0
        %1699 = vmatprep.subr.mxu0 0.0
        %1700 = vmatpush1.msra.mxu0 0.0
        %1701 = vmatprep.subr.mxu0 0.0
        %1702 = vmatpush1.msra.mxu0 0.0
        %1703 = vmatprep.subr.mxu0 0.0
        %1704 = vmatpush1.msra.mxu0 0.0
        %1705 = vmatprep.subr.mxu0 0.0
        %1706 = vmatpush1.msra.mxu0 0.0
        %1707 = vmatprep.subr.mxu0 0.0
        %1708 = vmatpush1.msra.mxu0 0.0
        %1709 = vmatprep.subr.mxu0 0.0
        %1710 = vmatpush1.msra.mxu0 0.0
        %1711 = vmatprep.subr.mxu0 0.0
        %1712 = vmatpush1.msra.mxu0 0.0
        %1713 = vmatprep.subr.mxu0 0.0
        %1714 = vmatpush1.msra.mxu0 0.0
        %1715 = vmatprep.subr.mxu0 0.0
        %1716 = vmatpush1.msra.mxu0 0.0
        %1717 = vmatprep.subr.mxu0 0.0
        %1718 = vmatpush1.msra.mxu0 0.0
        %1719 = vmatprep.subr.mxu0 0.0
        %1720 = vmatpush1.msra.mxu0 0.0
        %1721 = vmatprep.subr.mxu0 0.0
        %1722 = vmatpush1.msra.mxu0 0.0
        %1723 = vmatprep.subr.mxu0 0.0
        %1724 = vmatpush1.msra.mxu0 0.0
        %1725 = vmatprep.subr.mxu0 0.0
        %1726 = vmatpush1.msra.mxu0 0.0
        %1727 = vmatprep.subr.mxu0 0.0
        %1728 = vmatpush1.msra.mxu0 0.0
        %1729 = vmatprep.mubr.f32.mxu0 0.0
        %1730 = vmatmul.mubr.f32.gmra.mrb[0].mxu0 %v1120
        %v1731 = vpop.f32.mrb[0].mxu0
        %v1732 = vadd.f32 %v1101, %v1731
        %v1733 = vpop.f32.mrb[0].mxu0
        %v1734 = vadd.f32 %v1101, %v1733
        %1735 = vmatprep.mubr.f32.mxu0 0.0
        %1736 = vmatmul.mubr.f32.gmra.mrb[0].mxu0 %v1123
        %v1737 = vpop.f32.mrb[0].mxu0
        %v1738 = vadd.f32 %v1106, %v1737
        %v1739 = vpop.f32.mrb[0].mxu0
        %v1740 = vadd.f32 %v1106, %v1739
        %1741 = vmatprep.mubr.f32.mxu0 0.0
        %1742 = vmatmul.mubr.f32.gmra.mrb[0].mxu0 %v1126
        %v1743 = vpop.f32.mrb[0].mxu0
        %v1744 = vadd.f32 %v1111, %v1743
        %v1745 = vpop.f32.mrb[0].mxu0
        %v1746 = vadd.f32 %v1111, %v1745
        %1747 = vmatprep.mubr.f32.mxu0 0.0
        %1748 = vmatmul.mubr.f32.gmra.mrb[0].mxu0 %v1129
        %v1749 = vpop.f32.mrb[0].mxu0
        %v1750 = vadd.f32 %v1116, %v1749
        %v1751 = vpop.f32.mrb[0].mxu0
        %v1752 = vadd.f32 %v1116, %v1751
        %1753 = vdwg.mxu0
        %1754 = vmatprep.subr.mxu0 %v1073
        %1755 = vmatpush1.msra.mxu0 %v1072
        %1756 = vmatprep.subr.mxu0 %v1089
        %1757 = vmatpush1.msra.mxu0 %v1088
        %1758 = vmatprep.subr.mxu0 0.0
        %1759 = vmatpush1.msra.mxu0 0.0
        %1760 = vmatprep.subr.mxu0 0.0
        %1761 = vmatpush1.msra.mxu0 0.0
        %1762 = vmatprep.subr.mxu0 0.0
        %1763 = vmatpush1.msra.mxu0 0.0
        %1764 = vmatprep.subr.mxu0 0.0
        %1765 = vmatpush1.msra.mxu0 0.0
        %1766 = vmatprep.subr.mxu0 0.0
        %1767 = vmatpush1.msra.mxu0 0.0
        %1768 = vmatprep.subr.mxu0 0.0
        %1769 = vmatpush1.msra.mxu0 0.0
        %1770 = vmatprep.subr.mxu0 0.0
        %1771 = vmatpush1.msra.mxu0 0.0
        %1772 = vmatprep.subr.mxu0 0.0
        %1773 = vmatpush1.msra.mxu0 0.0
        %1774 = vmatprep.subr.mxu0 0.0
        %1775 = vmatpush1.msra.mxu0 0.0
        %1776 = vmatprep.subr.mxu0 0.0
        %1777 = vmatpush1.msra.mxu0 0.0
        %1778 = vmatprep.subr.mxu0 0.0
        %1779 = vmatpush1.msra.mxu0 0.0
        %1780 = vmatprep.subr.mxu0 0.0
        %1781 = vmatpush1.msra.mxu0 0.0
        %1782 = vmatprep.subr.mxu0 0.0
        %1783 = vmatpush1.msra.mxu0 0.0
        %1784 = vmatprep.subr.mxu0 0.0
        %1785 = vmatpush1.msra.mxu0 0.0
        %1786 = vmatprep.subr.mxu0 0.0
        %1787 = vmatpush1.msra.mxu0 0.0
        %1788 = vmatprep.subr.mxu0 0.0
        %1789 = vmatpush1.msra.mxu0 0.0
        %1790 = vmatprep.subr.mxu0 0.0
        %1791 = vmatpush1.msra.mxu0 0.0
        %1792 = vmatprep.subr.mxu0 0.0
        %1793 = vmatpush1.msra.mxu0 0.0
        %1794 = vmatprep.subr.mxu0 0.0
        %1795 = vmatpush1.msra.mxu0 0.0
        %1796 = vmatprep.subr.mxu0 0.0
        %1797 = vmatpush1.msra.mxu0 0.0
        %1798 = vmatprep.subr.mxu0 0.0
        %1799 = vmatpush1.msra.mxu0 0.0
        %1800 = vmatprep.subr.mxu0 0.0
        %1801 = vmatpush1.msra.mxu0 0.0
        %1802 = vmatprep.subr.mxu0 0.0
        %1803 = vmatpush1.msra.mxu0 0.0
        %1804 = vmatprep.subr.mxu0 0.0
        %1805 = vmatpush1.msra.mxu0 0.0
        %1806 = vmatprep.subr.mxu0 0.0
        %1807 = vmatpush1.msra.mxu0 0.0
        %1808 = vmatprep.subr.mxu0 0.0
        %1809 = vmatpush1.msra.mxu0 0.0
        %1810 = vmatprep.subr.mxu0 0.0
        %1811 = vmatpush1.msra.mxu0 0.0
        %1812 = vmatprep.subr.mxu0 0.0
        %1813 = vmatpush1.msra.mxu0 0.0
        %1814 = vmatprep.subr.mxu0 0.0
        %1815 = vmatpush1.msra.mxu0 0.0
        %1816 = vmatprep.subr.mxu0 0.0
        %1817 = vmatpush1.msra.mxu0 0.0
        %1818 = vmatprep.mubr.f32.mxu0 0.0
        %1819 = vmatmul.mubr.f32.gmra.mrb[0].mxu0 %v1120
        %v1820 = vpop.f32.mrb[0].mxu0
        %v1821 = vadd.f32 %v1101, %v1820
        %v1822 = vpop.f32.mrb[0].mxu0
        %v1823 = vadd.f32 %v1101, %v1822
        %1824 = vmatprep.mubr.f32.mxu0 0.0
        %1825 = vmatmul.mubr.f32.gmra.mrb[0].mxu0 %v1123
        %v1826 = vpop.f32.mrb[0].mxu0
        %v1827 = vadd.f32 %v1106, %v1826
        %v1828 = vpop.f32.mrb[0].mxu0
        %v1829 = vadd.f32 %v1106, %v1828
        %1830 = vmatprep.mubr.f32.mxu0 0.0
        %1831 = vmatmul.mubr.f32.gmra.mrb[0].mxu0 %v1126
        %v1832 = vpop.f32.mrb[0].mxu0
        %v1833 = vadd.f32 %v1111, %v1832
        %v1834 = vpop.f32.mrb[0].mxu0
        %v1835 = vadd.f32 %v1111, %v1834
        %1836 = vmatprep.mubr.f32.mxu0 0.0
        %1837 = vmatmul.mubr.f32.gmra.mrb[0].mxu0 %v1129
        %v1838 = vpop.f32.mrb[0].mxu0
        %v1839 = vadd.f32 %v1116, %v1838
        %v1840 = vpop.f32.mrb[0].mxu0
        %v1841 = vadd.f32 %v1116, %v1840
        %1842 = vdwg.mxu0
        %v1843 = vmax.f32 %v1198, 0.0
        %v1844 = vmax.f32 %v1200, 0.0
        %v1845 = vmax.f32 %v1287, 0.0
        %v1846 = vmax.f32 %v1289, 0.0
        %v1847 = vmax.f32 %v1376, 0.0
        %v1848 = vmax.f32 %v1378, 0.0
        %v1849 = vmax.f32 %v1465, 0.0
        %v1850 = vmax.f32 %v1467, 0.0
        %v1851 = vmax.f32 %v1554, 0.0
        %v1852 = vmax.f32 %v1556, 0.0
        %v1853 = vmax.f32 %v1643, 0.0
        %v1854 = vmax.f32 %v1645, 0.0
        %v1855 = vmax.f32 %v1732, 0.0
        %v1856 = vmax.f32 %v1734, 0.0
        %v1857 = vmax.f32 %v1821, 0.0
        %v1858 = vmax.f32 %v1823, 0.0
        %v1859 = vmax.f32 %v1204, 0.0
        %v1860 = vmax.f32 %v1206, 0.0
        %v1861 = vmax.f32 %v1293, 0.0
        %v1862 = vmax.f32 %v1295, 0.0
        %v1863 = vmax.f32 %v1382, 0.0
        %v1864 = vmax.f32 %v1384, 0.0
        %v1865 = vmax.f32 %v1471, 0.0
        %v1866 = vmax.f32 %v1473, 0.0
        %v1867 = vmax.f32 %v1560, 0.0
        %v1868 = vmax.f32 %v1562, 0.0
        %v1869 = vmax.f32 %v1649, 0.0
        %v1870 = vmax.f32 %v1651, 0.0
        %v1871 = vmax.f32 %v1738, 0.0
        %v1872 = vmax.f32 %v1740, 0.0
        %v1873 = vmax.f32 %v1827, 0.0
        %v1874 = vmax.f32 %v1829, 0.0
        %v1875 = vmax.f32 %v1210, 0.0
        %v1876 = vmax.f32 %v1212, 0.0
        %v1877 = vmax.f32 %v1299, 0.0
        %v1878 = vmax.f32 %v1301, 0.0
        %v1879 = vmax.f32 %v1388, 0.0
        %v1880 = vmax.f32 %v1390, 0.0
        %v1881 = vmax.f32 %v1477, 0.0
        %v1882 = vmax.f32 %v1479, 0.0
        %v1883 = vmax.f32 %v1566, 0.0
        %v1884 = vmax.f32 %v1568, 0.0
        %v1885 = vmax.f32 %v1655, 0.0
        %v1886 = vmax.f32 %v1657, 0.0
        %v1887 = vmax.f32 %v1744, 0.0
        %v1888 = vmax.f32 %v1746, 0.0
        %v1889 = vmax.f32 %v1833, 0.0
        %v1890 = vmax.f32 %v1835, 0.0
        %v1891 = vmax.f32 %v1216, 0.0
        %v1892 = vmax.f32 %v1218, 0.0
        %v1893 = vmax.f32 %v1305, 0.0
        %v1894 = vmax.f32 %v1307, 0.0
        %v1895 = vmax.f32 %v1394, 0.0
        %v1896 = vmax.f32 %v1396, 0.0
        %v1897 = vmax.f32 %v1483, 0.0
        %v1898 = vmax.f32 %v1485, 0.0
        %v1899 = vmax.f32 %v1572, 0.0
        %v1900 = vmax.f32 %v1574, 0.0
        %v1901 = vmax.f32 %v1661, 0.0
        %v1902 = vmax.f32 %v1663, 0.0
        %v1903 = vmax.f32 %v1750, 0.0
        %v1904 = vmax.f32 %v1752, 0.0
        %v1905 = vmax.f32 %v1839, 0.0
        %v1906 = vmax.f32 %v1841, 0.0
        %v1907 = vld [vmem:[%s5] sm:$0xff]
        %v1908 = vld [vmem:[%s5 + $0x8] sm:$0xff]
        %v1909 = vld [vmem:[%s5 + $0x10] sm:$0xff]
        %v1910 = vld [vmem:[%s5 + $0x18] sm:$0xff]
        %v1911 = vld [vmem:[%s5 + $0x20] sm:$0xff]
        %v1912 = vld [vmem:[%s5 + $0x28] sm:$0xff]
        %v1913 = vld [vmem:[%s5 + $0x30] sm:$0xff]
        %v1914 = vld [vmem:[%s5 + $0x38] sm:$0xff]
        %v1915 = vld [vmem:[%s6] sm:$0xff]
        %v1916 = vld [vmem:[%s6 + $0x8] sm:$0xff]
        %v1917 = vld [vmem:[%s6 + $0x10] sm:$0xff]
        %v1918 = vld [vmem:[%s6 + $0x18] sm:$0xff]
        %v1919 = vld [vmem:[%s6 + $0x20] sm:$0xff]
        %v1920 = vld [vmem:[%s6 + $0x28] sm:$0xff]
        %v1921 = vld [vmem:[%s6 + $0x30] sm:$0xff]
        %v1922 = vld [vmem:[%s6 + $0x38] sm:$0xff]
        %1924 = vset.pattern.permute.xlu0 0
        %1925 = vperm.xlu0 %1924, %v1915
        %v1926 = vpop.permute.xlu0 %1925
        %1929 = vset.pattern.permute.xlu0 0
        %1930 = vperm.xlu0 %1929, %v1916
        %v1931 = vpop.permute.xlu0 %1930
        %1934 = vset.pattern.permute.xlu0 0
        %1935 = vperm.xlu0 %1934, %v1917
        %v1936 = vpop.permute.xlu0 %1935
        %1939 = vset.pattern.permute.xlu0 0
        %1940 = vperm.xlu0 %1939, %v1918
        %v1941 = vpop.permute.xlu0 %1940
        %1944 = vset.pattern.permute.xlu0 0
        %1945 = vperm.xlu0 %1944, %v1919
        %v1946 = vpop.permute.xlu0 %1945
        %1949 = vset.pattern.permute.xlu0 0
        %1950 = vperm.xlu0 %1949, %v1920
        %v1951 = vpop.permute.xlu0 %1950
        %1954 = vset.pattern.permute.xlu0 0
        %1955 = vperm.xlu0 %1954, %v1921
        %v1956 = vpop.permute.xlu0 %1955
        %1959 = vset.pattern.permute.xlu0 0
        %1960 = vperm.xlu0 %1959, %v1922
        %v1961 = vpop.permute.xlu0 %1960
        %vm1963 = vcmask 261120
        %v1965 = vsel %vm1963, %v1907, 0
        %v1968 = vsel %vm1963, %v1908, 0
        %v1971 = vsel %vm1963, %v1909, 0
        %v1974 = vsel %vm1963, %v1910, 0
        %v1977 = vsel %vm1963, %v1911, 0
        %v1980 = vsel %vm1963, %v1912, 0
        %v1983 = vsel %vm1963, %v1913, 0
        %v1986 = vsel %vm1963, %v1914, 0
        %1988 = vmatprep.subr.mxu0 %v1844
        %1989 = vmatpush1.msra.mxu0 %v1843
        %1990 = vmatprep.subr.mxu0 %v1860
        %1991 = vmatpush1.msra.mxu0 %v1859
        %1992 = vmatprep.subr.mxu0 %v1876
        %1993 = vmatpush1.msra.mxu0 %v1875
        %1994 = vmatprep.subr.mxu0 %v1892
        %1995 = vmatpush1.msra.mxu0 %v1891
        %1996 = vmatprep.subr.mxu0 0.0
        %1997 = vmatpush1.msra.mxu0 0.0
        %1998 = vmatprep.subr.mxu0 0.0
        %1999 = vmatpush1.msra.mxu0 0.0
        %2000 = vmatprep.subr.mxu0 0.0
        %2001 = vmatpush1.msra.mxu0 0.0
        %2002 = vmatprep.subr.mxu0 0.0
        %2003 = vmatpush1.msra.mxu0 0.0
        %2004 = vmatprep.subr.mxu0 0.0
        %2005 = vmatpush1.msra.mxu0 0.0
        %2006 = vmatprep.subr.mxu0 0.0
        %2007 = vmatpush1.msra.mxu0 0.0
        %2008 = vmatprep.subr.mxu0 0.0
        %2009 = vmatpush1.msra.mxu0 0.0
        %2010 = vmatprep.subr.mxu0 0.0
        %2011 = vmatpush1.msra.mxu0 0.0
        %2012 = vmatprep.subr.mxu0 0.0
        %2013 = vmatpush1.msra.mxu0 0.0
        %2014 = vmatprep.subr.mxu0 0.0
        %2015 = vmatpush1.msra.mxu0 0.0
        %2016 = vmatprep.subr.mxu0 0.0
        %2017 = vmatpush1.msra.mxu0 0.0
        %2018 = vmatprep.subr.mxu0 0.0
        %2019 = vmatpush1.msra.mxu0 0.0
        %2020 = vmatprep.subr.mxu0 0.0
        %2021 = vmatpush1.msra.mxu0 0.0
        %2022 = vmatprep.subr.mxu0 0.0
        %2023 = vmatpush1.msra.mxu0 0.0
        %2024 = vmatprep.subr.mxu0 0.0
        %2025 = vmatpush1.msra.mxu0 0.0
        %2026 = vmatprep.subr.mxu0 0.0
        %2027 = vmatpush1.msra.mxu0 0.0
        %2028 = vmatprep.subr.mxu0 0.0
        %2029 = vmatpush1.msra.mxu0 0.0
        %2030 = vmatprep.subr.mxu0 0.0
        %2031 = vmatpush1.msra.mxu0 0.0
        %2032 = vmatprep.subr.mxu0 0.0
        %2033 = vmatpush1.msra.mxu0 0.0
        %2034 = vmatprep.subr.mxu0 0.0
        %2035 = vmatpush1.msra.mxu0 0.0
        %2036 = vmatprep.subr.mxu0 0.0
        %2037 = vmatpush1.msra.mxu0 0.0
        %2038 = vmatprep.subr.mxu0 0.0
        %2039 = vmatpush1.msra.mxu0 0.0
        %2040 = vmatprep.subr.mxu0 0.0
        %2041 = vmatpush1.msra.mxu0 0.0
        %2042 = vmatprep.subr.mxu0 0.0
        %2043 = vmatpush1.msra.mxu0 0.0
        %2044 = vmatprep.subr.mxu0 0.0
        %2045 = vmatpush1.msra.mxu0 0.0
        %2046 = vmatprep.subr.mxu0 0.0
        %2047 = vmatpush1.msra.mxu0 0.0
        %2048 = vmatprep.subr.mxu0 0.0
        %2049 = vmatpush1.msra.mxu0 0.0
        %2050 = vmatprep.subr.mxu0 0.0
        %2051 = vmatpush1.msra.mxu0 0.0
        %2052 = vmatprep.mubr.f32.mxu0 0.0
        %2053 = vmatmul.mubr.f32.gmra.mrb[0].mxu0 %v1965
        %v2054 = vpop.f32.mrb[0].mxu0
        %v2055 = vadd.f32 %v1926, %v2054
        %v2056 = vpop.f32.mrb[0].mxu0
        %v2057 = vadd.f32 %v1926, %v2056
        %2058 = vmatprep.mubr.f32.mxu0 0.0
        %2059 = vmatmul.mubr.f32.gmra.mrb[0].mxu0 %v1968
        %v2060 = vpop.f32.mrb[0].mxu0
        %v2061 = vadd.f32 %v1931, %v2060
        %v2062 = vpop.f32.mrb[0].mxu0
        %v2063 = vadd.f32 %v1931, %v2062
        %2064 = vmatprep.mubr.f32.mxu0 0.0
        %2065 = vmatmul.mubr.f32.gmra.mrb[0].mxu0 %v1971
        %v2066 = vpop.f32.mrb[0].mxu0
        %v2067 = vadd.f32 %v1936, %v2066
        %v2068 = vpop.f32.mrb[0].mxu0
        %v2069 = vadd.f32 %v1936, %v2068
        %2070 = vmatprep.mubr.f32.mxu0 0.0
        %2071 = vmatmul.mubr.f32.gmra.mrb[0].mxu0 %v1974
        %v2072 = vpop.f32.mrb[0].mxu0
        %v2073 = vadd.f32 %v1941, %v2072
        %v2074 = vpop.f32.mrb[0].mxu0
        %v2075 = vadd.f32 %v1941, %v2074
        %2076 = vmatprep.mubr.f32.mxu0 0.0
        %2077 = vmatmul.mubr.f32.gmra.mrb[0].mxu0 %v1977
        %v2078 = vpop.f32.mrb[0].mxu0
        %v2079 = vadd.f32 %v1946, %v2078
        %v2080 = vpop.f32.mrb[0].mxu0
        %v2081 = vadd.f32 %v1946, %v2080
        %2082 = vmatprep.mubr.f32.mxu0 0.0
        %2083 = vmatmul.mubr.f32.gmra.mrb[0].mxu0 %v1980
        %v2084 = vpop.f32.mrb[0].mxu0
        %v2085 = vadd.f32 %v1951, %v2084
        %v2086 = vpop.f32.mrb[0].mxu0
        %v2087 = vadd.f32 %v1951, %v2086
        %2088 = vmatprep.mubr.f32.mxu0 0.0
        %2089 = vmatmul.mubr.f32.gmra.mrb[0].mxu0 %v1983
        %v2090 = vpop.f32.mrb[0].mxu0
        %v2091 = vadd.f32 %v1956, %v2090
        %v2092 = vpop.f32.mrb[0].mxu0
        %v2093 = vadd.f32 %v1956, %v2092
        %2094 = vmatprep.mubr.f32.mxu0 0.0
        %2095 = vmatmul.mubr.f32.gmra.mrb[0].mxu0 %v1986
        %v2096 = vpop.f32.mrb[0].mxu0
        %v2097 = vadd.f32 %v1961, %v2096
        %v2098 = vpop.f32.mrb[0].mxu0
        %v2099 = vadd.f32 %v1961, %v2098
        %2100 = vdwg.mxu0
        %2101 = vmatprep.subr.mxu0 %v1846
        %2102 = vmatpush1.msra.mxu0 %v1845
        %2103 = vmatprep.subr.mxu0 %v1862
        %2104 = vmatpush1.msra.mxu0 %v1861
        %2105 = vmatprep.subr.mxu0 %v1878
        %2106 = vmatpush1.msra.mxu0 %v1877
        %2107 = vmatprep.subr.mxu0 %v1894
        %2108 = vmatpush1.msra.mxu0 %v1893
        %2109 = vmatprep.subr.mxu0 0.0
        %2110 = vmatpush1.msra.mxu0 0.0
        %2111 = vmatprep.subr.mxu0 0.0
        %2112 = vmatpush1.msra.mxu0 0.0
        %2113 = vmatprep.subr.mxu0 0.0
        %2114 = vmatpush1.msra.mxu0 0.0
        %2115 = vmatprep.subr.mxu0 0.0
        %2116 = vmatpush1.msra.mxu0 0.0
        %2117 = vmatprep.subr.mxu0 0.0
        %2118 = vmatpush1.msra.mxu0 0.0
        %2119 = vmatprep.subr.mxu0 0.0
        %2120 = vmatpush1.msra.mxu0 0.0
        %2121 = vmatprep.subr.mxu0 0.0
        %2122 = vmatpush1.msra.mxu0 0.0
        %2123 = vmatprep.subr.mxu0 0.0
        %2124 = vmatpush1.msra.mxu0 0.0
        %2125 = vmatprep.subr.mxu0 0.0
        %2126 = vmatpush1.msra.mxu0 0.0
        %2127 = vmatprep.subr.mxu0 0.0
        %2128 = vmatpush1.msra.mxu0 0.0
        %2129 = vmatprep.subr.mxu0 0.0
        %2130 = vmatpush1.msra.mxu0 0.0
        %2131 = vmatprep.subr.mxu0 0.0
        %2132 = vmatpush1.msra.mxu0 0.0
        %2133 = vmatprep.subr.mxu0 0.0
        %2134 = vmatpush1.msra.mxu0 0.0
        %2135 = vmatprep.subr.mxu0 0.0
        %2136 = vmatpush1.msra.mxu0 0.0
        %2137 = vmatprep.subr.mxu0 0.0
        %2138 = vmatpush1.msra.mxu0 0.0
        %2139 = vmatprep.subr.mxu0 0.0
        %2140 = vmatpush1.msra.mxu0 0.0
        %2141 = vmatprep.subr.mxu0 0.0
        %2142 = vmatpush1.msra.mxu0 0.0
        %2143 = vmatprep.subr.mxu0 0.0
        %2144 = vmatpush1.msra.mxu0 0.0
        %2145 = vmatprep.subr.mxu0 0.0
        %2146 = vmatpush1.msra.mxu0 0.0
        %2147 = vmatprep.subr.mxu0 0.0
        %2148 = vmatpush1.msra.mxu0 0.0
        %2149 = vmatprep.subr.mxu0 0.0
        %2150 = vmatpush1.msra.mxu0 0.0
        %2151 = vmatprep.subr.mxu0 0.0
        %2152 = vmatpush1.msra.mxu0 0.0
        %2153 = vmatprep.subr.mxu0 0.0
        %2154 = vmatpush1.msra.mxu0 0.0
        %2155 = vmatprep.subr.mxu0 0.0
        %2156 = vmatpush1.msra.mxu0 0.0
        %2157 = vmatprep.subr.mxu0 0.0
        %2158 = vmatpush1.msra.mxu0 0.0
        %2159 = vmatprep.subr.mxu0 0.0
        %2160 = vmatpush1.msra.mxu0 0.0
        %2161 = vmatprep.subr.mxu0 0.0
        %2162 = vmatpush1.msra.mxu0 0.0
        %2163 = vmatprep.subr.mxu0 0.0
        %2164 = vmatpush1.msra.mxu0 0.0
        %2165 = vmatprep.mubr.f32.mxu0 0.0
        %2166 = vmatmul.mubr.f32.gmra.mrb[0].mxu0 %v1965
        %v2167 = vpop.f32.mrb[0].mxu0
        %v2168 = vadd.f32 %v1926, %v2167
        %v2169 = vpop.f32.mrb[0].mxu0
        %v2170 = vadd.f32 %v1926, %v2169
        %2171 = vmatprep.mubr.f32.mxu0 0.0
        %2172 = vmatmul.mubr.f32.gmra.mrb[0].mxu0 %v1968
        %v2173 = vpop.f32.mrb[0].mxu0
        %v2174 = vadd.f32 %v1931, %v2173
        %v2175 = vpop.f32.mrb[0].mxu0
        %v2176 = vadd.f32 %v1931, %v2175
        %2177 = vmatprep.mubr.f32.mxu0 0.0
        %2178 = vmatmul.mubr.f32.gmra.mrb[0].mxu0 %v1971
        %v2179 = vpop.f32.mrb[0].mxu0
        %v2180 = vadd.f32 %v1936, %v2179
        %v2181 = vpop.f32.mrb[0].mxu0
        %v2182 = vadd.f32 %v1936, %v2181
        %2183 = vmatprep.mubr.f32.mxu0 0.0
        %2184 = vmatmul.mubr.f32.gmra.mrb[0].mxu0 %v1974
        %v2185 = vpop.f32.mrb[0].mxu0
        %v2186 = vadd.f32 %v1941, %v2185
        %v2187 = vpop.f32.mrb[0].mxu0
        %v2188 = vadd.f32 %v1941, %v2187
        %2189 = vmatprep.mubr.f32.mxu0 0.0
        %2190 = vmatmul.mubr.f32.gmra.mrb[0].mxu0 %v1977
        %v2191 = vpop.f32.mrb[0].mxu0
        %v2192 = vadd.f32 %v1946, %v2191
        %v2193 = vpop.f32.mrb[0].mxu0
        %v2194 = vadd.f32 %v1946, %v2193
        %2195 = vmatprep.mubr.f32.mxu0 0.0
        %2196 = vmatmul.mubr.f32.gmra.mrb[0].mxu0 %v1980
        %v2197 = vpop.f32.mrb[0].mxu0
        %v2198 = vadd.f32 %v1951, %v2197
        %v2199 = vpop.f32.mrb[0].mxu0
        %v2200 = vadd.f32 %v1951, %v2199
        %2201 = vmatprep.mubr.f32.mxu0 0.0
        %2202 = vmatmul.mubr.f32.gmra.mrb[0].mxu0 %v1983
        %v2203 = vpop.f32.mrb[0].mxu0
        %v2204 = vadd.f32 %v1956, %v2203
        %v2205 = vpop.f32.mrb[0].mxu0
        %v2206 = vadd.f32 %v1956, %v2205
        %2207 = vmatprep.mubr.f32.mxu0 0.0
        %2208 = vmatmul.mubr.f32.gmra.mrb[0].mxu0 %v1986
        %v2209 = vpop.f32.mrb[0].mxu0
        %v2210 = vadd.f32 %v1961, %v2209
        %v2211 = vpop.f32.mrb[0].mxu0
        %v2212 = vadd.f32 %v1961, %v2211
        %2213 = vdwg.mxu0
        %2214 = vmatprep.subr.mxu0 %v1848
        %2215 = vmatpush1.msra.mxu0 %v1847
        %2216 = vmatprep.subr.mxu0 %v1864
        %2217 = vmatpush1.msra.mxu0 %v1863
        %2218 = vmatprep.subr.mxu0 %v1880
        %2219 = vmatpush1.msra.mxu0 %v1879
        %2220 = vmatprep.subr.mxu0 %v1896
        %2221 = vmatpush1.msra.mxu0 %v1895
        %2222 = vmatprep.subr.mxu0 0.0
        %2223 = vmatpush1.msra.mxu0 0.0
        %2224 = vmatprep.subr.mxu0 0.0
        %2225 = vmatpush1.msra.mxu0 0.0
        %2226 = vmatprep.subr.mxu0 0.0
        %2227 = vmatpush1.msra.mxu0 0.0
        %2228 = vmatprep.subr.mxu0 0.0
        %2229 = vmatpush1.msra.mxu0 0.0
        %2230 = vmatprep.subr.mxu0 0.0
        %2231 = vmatpush1.msra.mxu0 0.0
        %2232 = vmatprep.subr.mxu0 0.0
        %2233 = vmatpush1.msra.mxu0 0.0
        %2234 = vmatprep.subr.mxu0 0.0
        %2235 = vmatpush1.msra.mxu0 0.0
        %2236 = vmatprep.subr.mxu0 0.0
        %2237 = vmatpush1.msra.mxu0 0.0
        %2238 = vmatprep.subr.mxu0 0.0
        %2239 = vmatpush1.msra.mxu0 0.0
        %2240 = vmatprep.subr.mxu0 0.0
        %2241 = vmatpush1.msra.mxu0 0.0
        %2242 = vmatprep.subr.mxu0 0.0
        %2243 = vmatpush1.msra.mxu0 0.0
        %2244 = vmatprep.subr.mxu0 0.0
        %2245 = vmatpush1.msra.mxu0 0.0
        %2246 = vmatprep.subr.mxu0 0.0
        %2247 = vmatpush1.msra.mxu0 0.0
        %2248 = vmatprep.subr.mxu0 0.0
        %2249 = vmatpush1.msra.mxu0 0.0
        %2250 = vmatprep.subr.mxu0 0.0
        %2251 = vmatpush1.msra.mxu0 0.0
        %2252 = vmatprep.subr.mxu0 0.0
        %2253 = vmatpush1.msra.mxu0 0.0
        %2254 = vmatprep.subr.mxu0 0.0
        %2255 = vmatpush1.msra.mxu0 0.0
        %2256 = vmatprep.subr.mxu0 0.0
        %2257 = vmatpush1.msra.mxu0 0.0
        %2258 = vmatprep.subr.mxu0 0.0
        %2259 = vmatpush1.msra.mxu0 0.0
        %2260 = vmatprep.subr.mxu0 0.0
        %2261 = vmatpush1.msra.mxu0 0.0
        %2262 = vmatprep.subr.mxu0 0.0
        %2263 = vmatpush1.msra.mxu0 0.0
        %2264 = vmatprep.subr.mxu0 0.0
        %2265 = vmatpush1.msra.mxu0 0.0
        %2266 = vmatprep.subr.mxu0 0.0
        %2267 = vmatpush1.msra.mxu0 0.0
        %2268 = vmatprep.subr.mxu0 0.0
        %2269 = vmatpush1.msra.mxu0 0.0
        %2270 = vmatprep.subr.mxu0 0.0
        %2271 = vmatpush1.msra.mxu0 0.0
        %2272 = vmatprep.subr.mxu0 0.0
        %2273 = vmatpush1.msra.mxu0 0.0
        %2274 = vmatprep.subr.mxu0 0.0
        %2275 = vmatpush1.msra.mxu0 0.0
        %2276 = vmatprep.subr.mxu0 0.0
        %2277 = vmatpush1.msra.mxu0 0.0
        %2278 = vmatprep.mubr.f32.mxu0 0.0
        %2279 = vmatmul.mubr.f32.gmra.mrb[0].mxu0 %v1965
        %v2280 = vpop.f32.mrb[0].mxu0
        %v2281 = vadd.f32 %v1926, %v2280
        %v2282 = vpop.f32.mrb[0].mxu0
        %v2283 = vadd.f32 %v1926, %v2282
        %2284 = vmatprep.mubr.f32.mxu0 0.0
        %2285 = vmatmul.mubr.f32.gmra.mrb[0].mxu0 %v1968
        %v2286 = vpop.f32.mrb[0].mxu0
        %v2287 = vadd.f32 %v1931, %v2286
        %v2288 = vpop.f32.mrb[0].mxu0
        %v2289 = vadd.f32 %v1931, %v2288
        %2290 = vmatprep.mubr.f32.mxu0 0.0
        %2291 = vmatmul.mubr.f32.gmra.mrb[0].mxu0 %v1971
        %v2292 = vpop.f32.mrb[0].mxu0
        %v2293 = vadd.f32 %v1936, %v2292
        %v2294 = vpop.f32.mrb[0].mxu0
        %v2295 = vadd.f32 %v1936, %v2294
        %2296 = vmatprep.mubr.f32.mxu0 0.0
        %2297 = vmatmul.mubr.f32.gmra.mrb[0].mxu0 %v1974
        %v2298 = vpop.f32.mrb[0].mxu0
        %v2299 = vadd.f32 %v1941, %v2298
        %v2300 = vpop.f32.mrb[0].mxu0
        %v2301 = vadd.f32 %v1941, %v2300
        %2302 = vmatprep.mubr.f32.mxu0 0.0
        %2303 = vmatmul.mubr.f32.gmra.mrb[0].mxu0 %v1977
        %v2304 = vpop.f32.mrb[0].mxu0
        %v2305 = vadd.f32 %v1946, %v2304
        %v2306 = vpop.f32.mrb[0].mxu0
        %v2307 = vadd.f32 %v1946, %v2306
        %2308 = vmatprep.mubr.f32.mxu0 0.0
        %2309 = vmatmul.mubr.f32.gmra.mrb[0].mxu0 %v1980
        %v2310 = vpop.f32.mrb[0].mxu0
        %v2311 = vadd.f32 %v1951, %v2310
        %v2312 = vpop.f32.mrb[0].mxu0
        %v2313 = vadd.f32 %v1951, %v2312
        %2314 = vmatprep.mubr.f32.mxu0 0.0
        %2315 = vmatmul.mubr.f32.gmra.mrb[0].mxu0 %v1983
        %v2316 = vpop.f32.mrb[0].mxu0
        %v2317 = vadd.f32 %v1956, %v2316
        %v2318 = vpop.f32.mrb[0].mxu0
        %v2319 = vadd.f32 %v1956, %v2318
        %2320 = vmatprep.mubr.f32.mxu0 0.0
        %2321 = vmatmul.mubr.f32.gmra.mrb[0].mxu0 %v1986
        %v2322 = vpop.f32.mrb[0].mxu0
        %v2323 = vadd.f32 %v1961, %v2322
        %v2324 = vpop.f32.mrb[0].mxu0
        %v2325 = vadd.f32 %v1961, %v2324
        %2326 = vdwg.mxu0
        %2327 = vmatprep.subr.mxu0 %v1850
        %2328 = vmatpush1.msra.mxu0 %v1849
        %2329 = vmatprep.subr.mxu0 %v1866
        %2330 = vmatpush1.msra.mxu0 %v1865
        %2331 = vmatprep.subr.mxu0 %v1882
        %2332 = vmatpush1.msra.mxu0 %v1881
        %2333 = vmatprep.subr.mxu0 %v1898
        %2334 = vmatpush1.msra.mxu0 %v1897
        %2335 = vmatprep.subr.mxu0 0.0
        %2336 = vmatpush1.msra.mxu0 0.0
        %2337 = vmatprep.subr.mxu0 0.0
        %2338 = vmatpush1.msra.mxu0 0.0
        %2339 = vmatprep.subr.mxu0 0.0
        %2340 = vmatpush1.msra.mxu0 0.0
        %2341 = vmatprep.subr.mxu0 0.0
        %2342 = vmatpush1.msra.mxu0 0.0
        %2343 = vmatprep.subr.mxu0 0.0
        %2344 = vmatpush1.msra.mxu0 0.0
        %2345 = vmatprep.subr.mxu0 0.0
        %2346 = vmatpush1.msra.mxu0 0.0
        %2347 = vmatprep.subr.mxu0 0.0
        %2348 = vmatpush1.msra.mxu0 0.0
        %2349 = vmatprep.subr.mxu0 0.0
        %2350 = vmatpush1.msra.mxu0 0.0
        %2351 = vmatprep.subr.mxu0 0.0
        %2352 = vmatpush1.msra.mxu0 0.0
        %2353 = vmatprep.subr.mxu0 0.0
        %2354 = vmatpush1.msra.mxu0 0.0
        %2355 = vmatprep.subr.mxu0 0.0
        %2356 = vmatpush1.msra.mxu0 0.0
        %2357 = vmatprep.subr.mxu0 0.0
        %2358 = vmatpush1.msra.mxu0 0.0
        %2359 = vmatprep.subr.mxu0 0.0
        %2360 = vmatpush1.msra.mxu0 0.0
        %2361 = vmatprep.subr.mxu0 0.0
        %2362 = vmatpush1.msra.mxu0 0.0
        %2363 = vmatprep.subr.mxu0 0.0
        %2364 = vmatpush1.msra.mxu0 0.0
        %2365 = vmatprep.subr.mxu0 0.0
        %2366 = vmatpush1.msra.mxu0 0.0
        %2367 = vmatprep.subr.mxu0 0.0
        %2368 = vmatpush1.msra.mxu0 0.0
        %2369 = vmatprep.subr.mxu0 0.0
        %2370 = vmatpush1.msra.mxu0 0.0
        %2371 = vmatprep.subr.mxu0 0.0
        %2372 = vmatpush1.msra.mxu0 0.0
        %2373 = vmatprep.subr.mxu0 0.0
        %2374 = vmatpush1.msra.mxu0 0.0
        %2375 = vmatprep.subr.mxu0 0.0
        %2376 = vmatpush1.msra.mxu0 0.0
        %2377 = vmatprep.subr.mxu0 0.0
        %2378 = vmatpush1.msra.mxu0 0.0
        %2379 = vmatprep.subr.mxu0 0.0
        %2380 = vmatpush1.msra.mxu0 0.0
        %2381 = vmatprep.subr.mxu0 0.0
        %2382 = vmatpush1.msra.mxu0 0.0
        %2383 = vmatprep.subr.mxu0 0.0
        %2384 = vmatpush1.msra.mxu0 0.0
        %2385 = vmatprep.subr.mxu0 0.0
        %2386 = vmatpush1.msra.mxu0 0.0
        %2387 = vmatprep.subr.mxu0 0.0
        %2388 = vmatpush1.msra.mxu0 0.0
        %2389 = vmatprep.subr.mxu0 0.0
        %2390 = vmatpush1.msra.mxu0 0.0
        %2391 = vmatprep.mubr.f32.mxu0 0.0
        %2392 = vmatmul.mubr.f32.gmra.mrb[0].mxu0 %v1965
        %v2393 = vpop.f32.mrb[0].mxu0
        %v2394 = vadd.f32 %v1926, %v2393
        %v2395 = vpop.f32.mrb[0].mxu0
        %v2396 = vadd.f32 %v1926, %v2395
        %2397 = vmatprep.mubr.f32.mxu0 0.0
        %2398 = vmatmul.mubr.f32.gmra.mrb[0].mxu0 %v1968
        %v2399 = vpop.f32.mrb[0].mxu0
        %v2400 = vadd.f32 %v1931, %v2399
        %v2401 = vpop.f32.mrb[0].mxu0
        %v2402 = vadd.f32 %v1931, %v2401
        %2403 = vmatprep.mubr.f32.mxu0 0.0
        %2404 = vmatmul.mubr.f32.gmra.mrb[0].mxu0 %v1971
        %v2405 = vpop.f32.mrb[0].mxu0
        %v2406 = vadd.f32 %v1936, %v2405
        %v2407 = vpop.f32.mrb[0].mxu0
        %v2408 = vadd.f32 %v1936, %v2407
        %2409 = vmatprep.mubr.f32.mxu0 0.0
        %2410 = vmatmul.mubr.f32.gmra.mrb[0].mxu0 %v1974
        %v2411 = vpop.f32.mrb[0].mxu0
        %v2412 = vadd.f32 %v1941, %v2411
        %v2413 = vpop.f32.mrb[0].mxu0
        %v2414 = vadd.f32 %v1941, %v2413
        %2415 = vmatprep.mubr.f32.mxu0 0.0
        %2416 = vmatmul.mubr.f32.gmra.mrb[0].mxu0 %v1977
        %v2417 = vpop.f32.mrb[0].mxu0
        %v2418 = vadd.f32 %v1946, %v2417
        %v2419 = vpop.f32.mrb[0].mxu0
        %v2420 = vadd.f32 %v1946, %v2419
        %2421 = vmatprep.mubr.f32.mxu0 0.0
        %2422 = vmatmul.mubr.f32.gmra.mrb[0].mxu0 %v1980
        %v2423 = vpop.f32.mrb[0].mxu0
        %v2424 = vadd.f32 %v1951, %v2423
        %v2425 = vpop.f32.mrb[0].mxu0
        %v2426 = vadd.f32 %v1951, %v2425
        %2427 = vmatprep.mubr.f32.mxu0 0.0
        %2428 = vmatmul.mubr.f32.gmra.mrb[0].mxu0 %v1983
        %v2429 = vpop.f32.mrb[0].mxu0
        %v2430 = vadd.f32 %v1956, %v2429
        %v2431 = vpop.f32.mrb[0].mxu0
        %v2432 = vadd.f32 %v1956, %v2431
        %2433 = vmatprep.mubr.f32.mxu0 0.0
        %2434 = vmatmul.mubr.f32.gmra.mrb[0].mxu0 %v1986
        %v2435 = vpop.f32.mrb[0].mxu0
        %v2436 = vadd.f32 %v1961, %v2435
        %v2437 = vpop.f32.mrb[0].mxu0
        %v2438 = vadd.f32 %v1961, %v2437
        %2439 = vdwg.mxu0
        %2440 = vmatprep.subr.mxu0 %v1852
        %2441 = vmatpush1.msra.mxu0 %v1851
        %2442 = vmatprep.subr.mxu0 %v1868
        %2443 = vmatpush1.msra.mxu0 %v1867
        %2444 = vmatprep.subr.mxu0 %v1884
        %2445 = vmatpush1.msra.mxu0 %v1883
        %2446 = vmatprep.subr.mxu0 %v1900
        %2447 = vmatpush1.msra.mxu0 %v1899
        %2448 = vmatprep.subr.mxu0 0.0
        %2449 = vmatpush1.msra.mxu0 0.0
        %2450 = vmatprep.subr.mxu0 0.0
        %2451 = vmatpush1.msra.mxu0 0.0
        %2452 = vmatprep.subr.mxu0 0.0
        %2453 = vmatpush1.msra.mxu0 0.0
        %2454 = vmatprep.subr.mxu0 0.0
        %2455 = vmatpush1.msra.mxu0 0.0
        %2456 = vmatprep.subr.mxu0 0.0
        %2457 = vmatpush1.msra.mxu0 0.0
        %2458 = vmatprep.subr.mxu0 0.0
        %2459 = vmatpush1.msra.mxu0 0.0
        %2460 = vmatprep.subr.mxu0 0.0
        %2461 = vmatpush1.msra.mxu0 0.0
        %2462 = vmatprep.subr.mxu0 0.0
        %2463 = vmatpush1.msra.mxu0 0.0
        %2464 = vmatprep.subr.mxu0 0.0
        %2465 = vmatpush1.msra.mxu0 0.0
        %2466 = vmatprep.subr.mxu0 0.0
        %2467 = vmatpush1.msra.mxu0 0.0
        %2468 = vmatprep.subr.mxu0 0.0
        %2469 = vmatpush1.msra.mxu0 0.0
        %2470 = vmatprep.subr.mxu0 0.0
        %2471 = vmatpush1.msra.mxu0 0.0
        %2472 = vmatprep.subr.mxu0 0.0
        %2473 = vmatpush1.msra.mxu0 0.0
        %2474 = vmatprep.subr.mxu0 0.0
        %2475 = vmatpush1.msra.mxu0 0.0
        %2476 = vmatprep.subr.mxu0 0.0
        %2477 = vmatpush1.msra.mxu0 0.0
        %2478 = vmatprep.subr.mxu0 0.0
        %2479 = vmatpush1.msra.mxu0 0.0
        %2480 = vmatprep.subr.mxu0 0.0
        %2481 = vmatpush1.msra.mxu0 0.0
        %2482 = vmatprep.subr.mxu0 0.0
        %2483 = vmatpush1.msra.mxu0 0.0
        %2484 = vmatprep.subr.mxu0 0.0
        %2485 = vmatpush1.msra.mxu0 0.0
        %2486 = vmatprep.subr.mxu0 0.0
        %2487 = vmatpush1.msra.mxu0 0.0
        %2488 = vmatprep.subr.mxu0 0.0
        %2489 = vmatpush1.msra.mxu0 0.0
        %2490 = vmatprep.subr.mxu0 0.0
        %2491 = vmatpush1.msra.mxu0 0.0
        %2492 = vmatprep.subr.mxu0 0.0
        %2493 = vmatpush1.msra.mxu0 0.0
        %2494 = vmatprep.subr.mxu0 0.0
        %2495 = vmatpush1.msra.mxu0 0.0
        %2496 = vmatprep.subr.mxu0 0.0
        %2497 = vmatpush1.msra.mxu0 0.0
        %2498 = vmatprep.subr.mxu0 0.0
        %2499 = vmatpush1.msra.mxu0 0.0
        %2500 = vmatprep.subr.mxu0 0.0
        %2501 = vmatpush1.msra.mxu0 0.0
        %2502 = vmatprep.subr.mxu0 0.0
        %2503 = vmatpush1.msra.mxu0 0.0
        %2504 = vmatprep.mubr.f32.mxu0 0.0
        %2505 = vmatmul.mubr.f32.gmra.mrb[0].mxu0 %v1965
        %v2506 = vpop.f32.mrb[0].mxu0
        %v2507 = vadd.f32 %v1926, %v2506
        %v2508 = vpop.f32.mrb[0].mxu0
        %v2509 = vadd.f32 %v1926, %v2508
        %2510 = vmatprep.mubr.f32.mxu0 0.0
        %2511 = vmatmul.mubr.f32.gmra.mrb[0].mxu0 %v1968
        %v2512 = vpop.f32.mrb[0].mxu0
        %v2513 = vadd.f32 %v1931, %v2512
        %v2514 = vpop.f32.mrb[0].mxu0
        %v2515 = vadd.f32 %v1931, %v2514
        %2516 = vmatprep.mubr.f32.mxu0 0.0
        %2517 = vmatmul.mubr.f32.gmra.mrb[0].mxu0 %v1971
        %v2518 = vpop.f32.mrb[0].mxu0
        %v2519 = vadd.f32 %v1936, %v2518
        %v2520 = vpop.f32.mrb[0].mxu0
        %v2521 = vadd.f32 %v1936, %v2520
        %2522 = vmatprep.mubr.f32.mxu0 0.0
        %2523 = vmatmul.mubr.f32.gmra.mrb[0].mxu0 %v1974
        %v2524 = vpop.f32.mrb[0].mxu0
        %v2525 = vadd.f32 %v1941, %v2524
        %v2526 = vpop.f32.mrb[0].mxu0
        %v2527 = vadd.f32 %v1941, %v2526
        %2528 = vmatprep.mubr.f32.mxu0 0.0
        %2529 = vmatmul.mubr.f32.gmra.mrb[0].mxu0 %v1977
        %v2530 = vpop.f32.mrb[0].mxu0
        %v2531 = vadd.f32 %v1946, %v2530
        %v2532 = vpop.f32.mrb[0].mxu0
        %v2533 = vadd.f32 %v1946, %v2532
        %2534 = vmatprep.mubr.f32.mxu0 0.0
        %2535 = vmatmul.mubr.f32.gmra.mrb[0].mxu0 %v1980
        %v2536 = vpop.f32.mrb[0].mxu0
        %v2537 = vadd.f32 %v1951, %v2536
        %v2538 = vpop.f32.mrb[0].mxu0
        %v2539 = vadd.f32 %v1951, %v2538
        %2540 = vmatprep.mubr.f32.mxu0 0.0
        %2541 = vmatmul.mubr.f32.gmra.mrb[0].mxu0 %v1983
        %v2542 = vpop.f32.mrb[0].mxu0
        %v2543 = vadd.f32 %v1956, %v2542
        %v2544 = vpop.f32.mrb[0].mxu0
        %v2545 = vadd.f32 %v1956, %v2544
        %2546 = vmatprep.mubr.f32.mxu0 0.0
        %2547 = vmatmul.mubr.f32.gmra.mrb[0].mxu0 %v1986
        %v2548 = vpop.f32.mrb[0].mxu0
        %v2549 = vadd.f32 %v1961, %v2548
        %v2550 = vpop.f32.mrb[0].mxu0
        %v2551 = vadd.f32 %v1961, %v2550
        %2552 = vdwg.mxu0
        %2553 = vmatprep.subr.mxu0 %v1854
        %2554 = vmatpush1.msra.mxu0 %v1853
        %2555 = vmatprep.subr.mxu0 %v1870
        %2556 = vmatpush1.msra.mxu0 %v1869
        %2557 = vmatprep.subr.mxu0 %v1886
        %2558 = vmatpush1.msra.mxu0 %v1885
        %2559 = vmatprep.subr.mxu0 %v1902
        %2560 = vmatpush1.msra.mxu0 %v1901
        %2561 = vmatprep.subr.mxu0 0.0
        %2562 = vmatpush1.msra.mxu0 0.0
        %2563 = vmatprep.subr.mxu0 0.0
        %2564 = vmatpush1.msra.mxu0 0.0
        %2565 = vmatprep.subr.mxu0 0.0
        %2566 = vmatpush1.msra.mxu0 0.0
        %2567 = vmatprep.subr.mxu0 0.0
        %2568 = vmatpush1.msra.mxu0 0.0
        %2569 = vmatprep.subr.mxu0 0.0
        %2570 = vmatpush1.msra.mxu0 0.0
        %2571 = vmatprep.subr.mxu0 0.0
        %2572 = vmatpush1.msra.mxu0 0.0
        %2573 = vmatprep.subr.mxu0 0.0
        %2574 = vmatpush1.msra.mxu0 0.0
        %2575 = vmatprep.subr.mxu0 0.0
        %2576 = vmatpush1.msra.mxu0 0.0
        %2577 = vmatprep.subr.mxu0 0.0
        %2578 = vmatpush1.msra.mxu0 0.0
        %2579 = vmatprep.subr.mxu0 0.0
        %2580 = vmatpush1.msra.mxu0 0.0
        %2581 = vmatprep.subr.mxu0 0.0
        %2582 = vmatpush1.msra.mxu0 0.0
        %2583 = vmatprep.subr.mxu0 0.0
        %2584 = vmatpush1.msra.mxu0 0.0
        %2585 = vmatprep.subr.mxu0 0.0
        %2586 = vmatpush1.msra.mxu0 0.0
        %2587 = vmatprep.subr.mxu0 0.0
        %2588 = vmatpush1.msra.mxu0 0.0
        %2589 = vmatprep.subr.mxu0 0.0
        %2590 = vmatpush1.msra.mxu0 0.0
        %2591 = vmatprep.subr.mxu0 0.0
        %2592 = vmatpush1.msra.mxu0 0.0
        %2593 = vmatprep.subr.mxu0 0.0
        %2594 = vmatpush1.msra.mxu0 0.0
        %2595 = vmatprep.subr.mxu0 0.0
        %2596 = vmatpush1.msra.mxu0 0.0
        %2597 = vmatprep.subr.mxu0 0.0
        %2598 = vmatpush1.msra.mxu0 0.0
        %2599 = vmatprep.subr.mxu0 0.0
        %2600 = vmatpush1.msra.mxu0 0.0
        %2601 = vmatprep.subr.mxu0 0.0
        %2602 = vmatpush1.msra.mxu0 0.0
        %2603 = vmatprep.subr.mxu0 0.0
        %2604 = vmatpush1.msra.mxu0 0.0
        %2605 = vmatprep.subr.mxu0 0.0
        %2606 = vmatpush1.msra.mxu0 0.0
        %2607 = vmatprep.subr.mxu0 0.0
        %2608 = vmatpush1.msra.mxu0 0.0
        %2609 = vmatprep.subr.mxu0 0.0
        %2610 = vmatpush1.msra.mxu0 0.0
        %2611 = vmatprep.subr.mxu0 0.0
        %2612 = vmatpush1.msra.mxu0 0.0
        %2613 = vmatprep.subr.mxu0 0.0
        %2614 = vmatpush1.msra.mxu0 0.0
        %2615 = vmatprep.subr.mxu0 0.0
        %2616 = vmatpush1.msra.mxu0 0.0
        %2617 = vmatprep.mubr.f32.mxu0 0.0
        %2618 = vmatmul.mubr.f32.gmra.mrb[0].mxu0 %v1965
        %v2619 = vpop.f32.mrb[0].mxu0
        %v2620 = vadd.f32 %v1926, %v2619
        %v2621 = vpop.f32.mrb[0].mxu0
        %v2622 = vadd.f32 %v1926, %v2621
        %2623 = vmatprep.mubr.f32.mxu0 0.0
        %2624 = vmatmul.mubr.f32.gmra.mrb[0].mxu0 %v1968
        %v2625 = vpop.f32.mrb[0].mxu0
        %v2626 = vadd.f32 %v1931, %v2625
        %v2627 = vpop.f32.mrb[0].mxu0
        %v2628 = vadd.f32 %v1931, %v2627
        %2629 = vmatprep.mubr.f32.mxu0 0.0
        %2630 = vmatmul.mubr.f32.gmra.mrb[0].mxu0 %v1971
        %v2631 = vpop.f32.mrb[0].mxu0
        %v2632 = vadd.f32 %v1936, %v2631
        %v2633 = vpop.f32.mrb[0].mxu0
        %v2634 = vadd.f32 %v1936, %v2633
        %2635 = vmatprep.mubr.f32.mxu0 0.0
        %2636 = vmatmul.mubr.f32.gmra.mrb[0].mxu0 %v1974
        %v2637 = vpop.f32.mrb[0].mxu0
        %v2638 = vadd.f32 %v1941, %v2637
        %v2639 = vpop.f32.mrb[0].mxu0
        %v2640 = vadd.f32 %v1941, %v2639
        %2641 = vmatprep.mubr.f32.mxu0 0.0
        %2642 = vmatmul.mubr.f32.gmra.mrb[0].mxu0 %v1977
        %v2643 = vpop.f32.mrb[0].mxu0
        %v2644 = vadd.f32 %v1946, %v2643
        %v2645 = vpop.f32.mrb[0].mxu0
        %v2646 = vadd.f32 %v1946, %v2645
        %2647 = vmatprep.mubr.f32.mxu0 0.0
        %2648 = vmatmul.mubr.f32.gmra.mrb[0].mxu0 %v1980
        %v2649 = vpop.f32.mrb[0].mxu0
        %v2650 = vadd.f32 %v1951, %v2649
        %v2651 = vpop.f32.mrb[0].mxu0
        %v2652 = vadd.f32 %v1951, %v2651
        %2653 = vmatprep.mubr.f32.mxu0 0.0
        %2654 = vmatmul.mubr.f32.gmra.mrb[0].mxu0 %v1983
        %v2655 = vpop.f32.mrb[0].mxu0
        %v2656 = vadd.f32 %v1956, %v2655
        %v2657 = vpop.f32.mrb[0].mxu0
        %v2658 = vadd.f32 %v1956, %v2657
        %2659 = vmatprep.mubr.f32.mxu0 0.0
        %2660 = vmatmul.mubr.f32.gmra.mrb[0].mxu0 %v1986
        %v2661 = vpop.f32.mrb[0].mxu0
        %v2662 = vadd.f32 %v1961, %v2661
        %v2663 = vpop.f32.mrb[0].mxu0
        %v2664 = vadd.f32 %v1961, %v2663
        %2665 = vdwg.mxu0
        %2666 = vmatprep.subr.mxu0 %v1856
        %2667 = vmatpush1.msra.mxu0 %v1855
        %2668 = vmatprep.subr.mxu0 %v1872
        %2669 = vmatpush1.msra.mxu0 %v1871
        %2670 = vmatprep.subr.mxu0 %v1888
        %2671 = vmatpush1.msra.mxu0 %v1887
        %2672 = vmatprep.subr.mxu0 %v1904
        %2673 = vmatpush1.msra.mxu0 %v1903
        %2674 = vmatprep.subr.mxu0 0.0
        %2675 = vmatpush1.msra.mxu0 0.0
        %2676 = vmatprep.subr.mxu0 0.0
        %2677 = vmatpush1.msra.mxu0 0.0
        %2678 = vmatprep.subr.mxu0 0.0
        %2679 = vmatpush1.msra.mxu0 0.0
        %2680 = vmatprep.subr.mxu0 0.0
        %2681 = vmatpush1.msra.mxu0 0.0
        %2682 = vmatprep.subr.mxu0 0.0
        %2683 = vmatpush1.msra.mxu0 0.0
        %2684 = vmatprep.subr.mxu0 0.0
        %2685 = vmatpush1.msra.mxu0 0.0
        %2686 = vmatprep.subr.mxu0 0.0
        %2687 = vmatpush1.msra.mxu0 0.0
        %2688 = vmatprep.subr.mxu0 0.0
        %2689 = vmatpush1.msra.mxu0 0.0
        %2690 = vmatprep.subr.mxu0 0.0
        %2691 = vmatpush1.msra.mxu0 0.0
        %2692 = vmatprep.subr.mxu0 0.0
        %2693 = vmatpush1.msra.mxu0 0.0
        %2694 = vmatprep.subr.mxu0 0.0
        %2695 = vmatpush1.msra.mxu0 0.0
        %2696 = vmatprep.subr.mxu0 0.0
        %2697 = vmatpush1.msra.mxu0 0.0
        %2698 = vmatprep.subr.mxu0 0.0
        %2699 = vmatpush1.msra.mxu0 0.0
        %2700 = vmatprep.subr.mxu0 0.0
        %2701 = vmatpush1.msra.mxu0 0.0
        %2702 = vmatprep.subr.mxu0 0.0
        %2703 = vmatpush1.msra.mxu0 0.0
        %2704 = vmatprep.subr.mxu0 0.0
        %2705 = vmatpush1.msra.mxu0 0.0
        %2706 = vmatprep.subr.mxu0 0.0
        %2707 = vmatpush1.msra.mxu0 0.0
        %2708 = vmatprep.subr.mxu0 0.0
        %2709 = vmatpush1.msra.mxu0 0.0
        %2710 = vmatprep.subr.mxu0 0.0
        %2711 = vmatpush1.msra.mxu0 0.0
        %2712 = vmatprep.subr.mxu0 0.0
        %2713 = vmatpush1.msra.mxu0 0.0
        %2714 = vmatprep.subr.mxu0 0.0
        %2715 = vmatpush1.msra.mxu0 0.0
        %2716 = vmatprep.subr.mxu0 0.0
        %2717 = vmatpush1.msra.mxu0 0.0
        %2718 = vmatprep.subr.mxu0 0.0
        %2719 = vmatpush1.msra.mxu0 0.0
        %2720 = vmatprep.subr.mxu0 0.0
        %2721 = vmatpush1.msra.mxu0 0.0
        %2722 = vmatprep.subr.mxu0 0.0
        %2723 = vmatpush1.msra.mxu0 0.0
        %2724 = vmatprep.subr.mxu0 0.0
        %2725 = vmatpush1.msra.mxu0 0.0
        %2726 = vmatprep.subr.mxu0 0.0
        %2727 = vmatpush1.msra.mxu0 0.0
        %2728 = vmatprep.subr.mxu0 0.0
        %2729 = vmatpush1.msra.mxu0 0.0
        %2730 = vmatprep.mubr.f32.mxu0 0.0
        %2731 = vmatmul.mubr.f32.gmra.mrb[0].mxu0 %v1965
        %v2732 = vpop.f32.mrb[0].mxu0
        %v2733 = vadd.f32 %v1926, %v2732
        %v2734 = vpop.f32.mrb[0].mxu0
        %v2735 = vadd.f32 %v1926, %v2734
        %2736 = vmatprep.mubr.f32.mxu0 0.0
        %2737 = vmatmul.mubr.f32.gmra.mrb[0].mxu0 %v1968
        %v2738 = vpop.f32.mrb[0].mxu0
        %v2739 = vadd.f32 %v1931, %v2738
        %v2740 = vpop.f32.mrb[0].mxu0
        %v2741 = vadd.f32 %v1931, %v2740
        %2742 = vmatprep.mubr.f32.mxu0 0.0
        %2743 = vmatmul.mubr.f32.gmra.mrb[0].mxu0 %v1971
        %v2744 = vpop.f32.mrb[0].mxu0
        %v2745 = vadd.f32 %v1936, %v2744
        %v2746 = vpop.f32.mrb[0].mxu0
        %v2747 = vadd.f32 %v1936, %v2746
        %2748 = vmatprep.mubr.f32.mxu0 0.0
        %2749 = vmatmul.mubr.f32.gmra.mrb[0].mxu0 %v1974
        %v2750 = vpop.f32.mrb[0].mxu0
        %v2751 = vadd.f32 %v1941, %v2750
        %v2752 = vpop.f32.mrb[0].mxu0
        %v2753 = vadd.f32 %v1941, %v2752
        %2754 = vmatprep.mubr.f32.mxu0 0.0
        %2755 = vmatmul.mubr.f32.gmra.mrb[0].mxu0 %v1977
        %v2756 = vpop.f32.mrb[0].mxu0
        %v2757 = vadd.f32 %v1946, %v2756
        %v2758 = vpop.f32.mrb[0].mxu0
        %v2759 = vadd.f32 %v1946, %v2758
        %2760 = vmatprep.mubr.f32.mxu0 0.0
        %2761 = vmatmul.mubr.f32.gmra.mrb[0].mxu0 %v1980
        %v2762 = vpop.f32.mrb[0].mxu0
        %v2763 = vadd.f32 %v1951, %v2762
        %v2764 = vpop.f32.mrb[0].mxu0
        %v2765 = vadd.f32 %v1951, %v2764
        %2766 = vmatprep.mubr.f32.mxu0 0.0
        %2767 = vmatmul.mubr.f32.gmra.mrb[0].mxu0 %v1983
        %v2768 = vpop.f32.mrb[0].mxu0
        %v2769 = vadd.f32 %v1956, %v2768
        %v2770 = vpop.f32.mrb[0].mxu0
        %v2771 = vadd.f32 %v1956, %v2770
        %2772 = vmatprep.mubr.f32.mxu0 0.0
        %2773 = vmatmul.mubr.f32.gmra.mrb[0].mxu0 %v1986
        %v2774 = vpop.f32.mrb[0].mxu0
        %v2775 = vadd.f32 %v1961, %v2774
        %v2776 = vpop.f32.mrb[0].mxu0
        %v2777 = vadd.f32 %v1961, %v2776
        %2778 = vdwg.mxu0
        %2779 = vmatprep.subr.mxu0 %v1858
        %2780 = vmatpush1.msra.mxu0 %v1857
        %2781 = vmatprep.subr.mxu0 %v1874
        %2782 = vmatpush1.msra.mxu0 %v1873
        %2783 = vmatprep.subr.mxu0 %v1890
        %2784 = vmatpush1.msra.mxu0 %v1889
        %2785 = vmatprep.subr.mxu0 %v1906
        %2786 = vmatpush1.msra.mxu0 %v1905
        %2787 = vmatprep.subr.mxu0 0.0
        %2788 = vmatpush1.msra.mxu0 0.0
        %2789 = vmatprep.subr.mxu0 0.0
        %2790 = vmatpush1.msra.mxu0 0.0
        %2791 = vmatprep.subr.mxu0 0.0
        %2792 = vmatpush1.msra.mxu0 0.0
        %2793 = vmatprep.subr.mxu0 0.0
        %2794 = vmatpush1.msra.mxu0 0.0
        %2795 = vmatprep.subr.mxu0 0.0
        %2796 = vmatpush1.msra.mxu0 0.0
        %2797 = vmatprep.subr.mxu0 0.0
        %2798 = vmatpush1.msra.mxu0 0.0
        %2799 = vmatprep.subr.mxu0 0.0
        %2800 = vmatpush1.msra.mxu0 0.0
        %2801 = vmatprep.subr.mxu0 0.0
        %2802 = vmatpush1.msra.mxu0 0.0
        %2803 = vmatprep.subr.mxu0 0.0
        %2804 = vmatpush1.msra.mxu0 0.0
        %2805 = vmatprep.subr.mxu0 0.0
        %2806 = vmatpush1.msra.mxu0 0.0
        %2807 = vmatprep.subr.mxu0 0.0
        %2808 = vmatpush1.msra.mxu0 0.0
        %2809 = vmatprep.subr.mxu0 0.0
        %2810 = vmatpush1.msra.mxu0 0.0
        %2811 = vmatprep.subr.mxu0 0.0
        %2812 = vmatpush1.msra.mxu0 0.0
        %2813 = vmatprep.subr.mxu0 0.0
        %2814 = vmatpush1.msra.mxu0 0.0
        %2815 = vmatprep.subr.mxu0 0.0
        %2816 = vmatpush1.msra.mxu0 0.0
        %2817 = vmatprep.subr.mxu0 0.0
        %2818 = vmatpush1.msra.mxu0 0.0
        %2819 = vmatprep.subr.mxu0 0.0
        %2820 = vmatpush1.msra.mxu0 0.0
        %2821 = vmatprep.subr.mxu0 0.0
        %2822 = vmatpush1.msra.mxu0 0.0
        %2823 = vmatprep.subr.mxu0 0.0
        %2824 = vmatpush1.msra.mxu0 0.0
        %2825 = vmatprep.subr.mxu0 0.0
        %2826 = vmatpush1.msra.mxu0 0.0
        %2827 = vmatprep.subr.mxu0 0.0
        %2828 = vmatpush1.msra.mxu0 0.0
        %2829 = vmatprep.subr.mxu0 0.0
        %2830 = vmatpush1.msra.mxu0 0.0
        %2831 = vmatprep.subr.mxu0 0.0
        %2832 = vmatpush1.msra.mxu0 0.0
        %2833 = vmatprep.subr.mxu0 0.0
        %2834 = vmatpush1.msra.mxu0 0.0
        %2835 = vmatprep.subr.mxu0 0.0
        %2836 = vmatpush1.msra.mxu0 0.0
        %2837 = vmatprep.subr.mxu0 0.0
        %2838 = vmatpush1.msra.mxu0 0.0
        %2839 = vmatprep.subr.mxu0 0.0
        %2840 = vmatpush1.msra.mxu0 0.0
        %2841 = vmatprep.subr.mxu0 0.0
        %2842 = vmatpush1.msra.mxu0 0.0
        %2843 = vmatprep.mubr.f32.mxu0 0.0
        %2844 = vmatmul.mubr.f32.gmra.mrb[0].mxu0 %v1965
        %v2845 = vpop.f32.mrb[0].mxu0
        %v2846 = vadd.f32 %v1926, %v2845
        %v2847 = vpop.f32.mrb[0].mxu0
        %v2848 = vadd.f32 %v1926, %v2847
        %2849 = vmatprep.mubr.f32.mxu0 0.0
        %2850 = vmatmul.mubr.f32.gmra.mrb[0].mxu0 %v1968
        %v2851 = vpop.f32.mrb[0].mxu0
        %v2852 = vadd.f32 %v1931, %v2851
        %v2853 = vpop.f32.mrb[0].mxu0
        %v2854 = vadd.f32 %v1931, %v2853
        %2855 = vmatprep.mubr.f32.mxu0 0.0
        %2856 = vmatmul.mubr.f32.gmra.mrb[0].mxu0 %v1971
        %v2857 = vpop.f32.mrb[0].mxu0
        %v2858 = vadd.f32 %v1936, %v2857
        %v2859 = vpop.f32.mrb[0].mxu0
        %v2860 = vadd.f32 %v1936, %v2859
        %2861 = vmatprep.mubr.f32.mxu0 0.0
        %2862 = vmatmul.mubr.f32.gmra.mrb[0].mxu0 %v1974
        %v2863 = vpop.f32.mrb[0].mxu0
        %v2864 = vadd.f32 %v1941, %v2863
        %v2865 = vpop.f32.mrb[0].mxu0
        %v2866 = vadd.f32 %v1941, %v2865
        %2867 = vmatprep.mubr.f32.mxu0 0.0
        %2868 = vmatmul.mubr.f32.gmra.mrb[0].mxu0 %v1977
        %v2869 = vpop.f32.mrb[0].mxu0
        %v2870 = vadd.f32 %v1946, %v2869
        %v2871 = vpop.f32.mrb[0].mxu0
        %v2872 = vadd.f32 %v1946, %v2871
        %2873 = vmatprep.mubr.f32.mxu0 0.0
        %2874 = vmatmul.mubr.f32.gmra.mrb[0].mxu0 %v1980
        %v2875 = vpop.f32.mrb[0].mxu0
        %v2876 = vadd.f32 %v1951, %v2875
        %v2877 = vpop.f32.mrb[0].mxu0
        %v2878 = vadd.f32 %v1951, %v2877
        %2879 = vmatprep.mubr.f32.mxu0 0.0
        %2880 = vmatmul.mubr.f32.gmra.mrb[0].mxu0 %v1983
        %v2881 = vpop.f32.mrb[0].mxu0
        %v2882 = vadd.f32 %v1956, %v2881
        %v2883 = vpop.f32.mrb[0].mxu0
        %v2884 = vadd.f32 %v1956, %v2883
        %2885 = vmatprep.mubr.f32.mxu0 0.0
        %2886 = vmatmul.mubr.f32.gmra.mrb[0].mxu0 %v1986
        %v2887 = vpop.f32.mrb[0].mxu0
        %v2888 = vadd.f32 %v1961, %v2887
        %v2889 = vpop.f32.mrb[0].mxu0
        %v2890 = vadd.f32 %v1961, %v2889
        %2891 = vdwg.mxu0
        %v2892 = vmax.f32 %v2055, 0.0
        %v2893 = vmax.f32 %v2057, 0.0
        %v2894 = vmax.f32 %v2168, 0.0
        %v2895 = vmax.f32 %v2170, 0.0
        %v2896 = vmax.f32 %v2281, 0.0
        %v2897 = vmax.f32 %v2283, 0.0
        %v2898 = vmax.f32 %v2394, 0.0
        %v2899 = vmax.f32 %v2396, 0.0
        %v2900 = vmax.f32 %v2507, 0.0
        %v2901 = vmax.f32 %v2509, 0.0
        %v2902 = vmax.f32 %v2620, 0.0
        %v2903 = vmax.f32 %v2622, 0.0
        %v2904 = vmax.f32 %v2733, 0.0
        %v2905 = vmax.f32 %v2735, 0.0
        %v2906 = vmax.f32 %v2846, 0.0
        %v2907 = vmax.f32 %v2848, 0.0
        %v2908 = vmax.f32 %v2061, 0.0
        %v2909 = vmax.f32 %v2063, 0.0
        %v2910 = vmax.f32 %v2174, 0.0
        %v2911 = vmax.f32 %v2176, 0.0
        %v2912 = vmax.f32 %v2287, 0.0
        %v2913 = vmax.f32 %v2289, 0.0
        %v2914 = vmax.f32 %v2400, 0.0
        %v2915 = vmax.f32 %v2402, 0.0
        %v2916 = vmax.f32 %v2513, 0.0
        %v2917 = vmax.f32 %v2515, 0.0
        %v2918 = vmax.f32 %v2626, 0.0
        %v2919 = vmax.f32 %v2628, 0.0
        %v2920 = vmax.f32 %v2739, 0.0
        %v2921 = vmax.f32 %v2741, 0.0
        %v2922 = vmax.f32 %v2852, 0.0
        %v2923 = vmax.f32 %v2854, 0.0
        %v2924 = vmax.f32 %v2067, 0.0
        %v2925 = vmax.f32 %v2069, 0.0
        %v2926 = vmax.f32 %v2180, 0.0
        %v2927 = vmax.f32 %v2182, 0.0
        %v2928 = vmax.f32 %v2293, 0.0
        %v2929 = vmax.f32 %v2295, 0.0
        %v2930 = vmax.f32 %v2406, 0.0
        %v2931 = vmax.f32 %v2408, 0.0
        %v2932 = vmax.f32 %v2519, 0.0
        %v2933 = vmax.f32 %v2521, 0.0
        %v2934 = vmax.f32 %v2632, 0.0
        %v2935 = vmax.f32 %v2634, 0.0
        %v2936 = vmax.f32 %v2745, 0.0
        %v2937 = vmax.f32 %v2747, 0.0
        %v2938 = vmax.f32 %v2858, 0.0
        %v2939 = vmax.f32 %v2860, 0.0
        %v2940 = vmax.f32 %v2073, 0.0
        %v2941 = vmax.f32 %v2075, 0.0
        %v2942 = vmax.f32 %v2186, 0.0
        %v2943 = vmax.f32 %v2188, 0.0
        %v2944 = vmax.f32 %v2299, 0.0
        %v2945 = vmax.f32 %v2301, 0.0
        %v2946 = vmax.f32 %v2412, 0.0
        %v2947 = vmax.f32 %v2414, 0.0
        %v2948 = vmax.f32 %v2525, 0.0
        %v2949 = vmax.f32 %v2527, 0.0
        %v2950 = vmax.f32 %v2638, 0.0
        %v2951 = vmax.f32 %v2640, 0.0
        %v2952 = vmax.f32 %v2751, 0.0
        %v2953 = vmax.f32 %v2753, 0.0
        %v2954 = vmax.f32 %v2864, 0.0
        %v2955 = vmax.f32 %v2866, 0.0
        %v2956 = vmax.f32 %v2079, 0.0
        %v2957 = vmax.f32 %v2081, 0.0
        %v2958 = vmax.f32 %v2192, 0.0
        %v2959 = vmax.f32 %v2194, 0.0
        %v2960 = vmax.f32 %v2305, 0.0
        %v2961 = vmax.f32 %v2307, 0.0
        %v2962 = vmax.f32 %v2418, 0.0
        %v2963 = vmax.f32 %v2420, 0.0
        %v2964 = vmax.f32 %v2531, 0.0
        %v2965 = vmax.f32 %v2533, 0.0
        %v2966 = vmax.f32 %v2644, 0.0
        %v2967 = vmax.f32 %v2646, 0.0
        %v2968 = vmax.f32 %v2757, 0.0
        %v2969 = vmax.f32 %v2759, 0.0
        %v2970 = vmax.f32 %v2870, 0.0
        %v2971 = vmax.f32 %v2872, 0.0
        %v2972 = vmax.f32 %v2085, 0.0
        %v2973 = vmax.f32 %v2087, 0.0
        %v2974 = vmax.f32 %v2198, 0.0
        %v2975 = vmax.f32 %v2200, 0.0
        %v2976 = vmax.f32 %v2311, 0.0
        %v2977 = vmax.f32 %v2313, 0.0
        %v2978 = vmax.f32 %v2424, 0.0
        %v2979 = vmax.f32 %v2426, 0.0
        %v2980 = vmax.f32 %v2537, 0.0
        %v2981 = vmax.f32 %v2539, 0.0
        %v2982 = vmax.f32 %v2650, 0.0
        %v2983 = vmax.f32 %v2652, 0.0
        %v2984 = vmax.f32 %v2763, 0.0
        %v2985 = vmax.f32 %v2765, 0.0
        %v2986 = vmax.f32 %v2876, 0.0
        %v2987 = vmax.f32 %v2878, 0.0
        %v2988 = vmax.f32 %v2091, 0.0
        %v2989 = vmax.f32 %v2093, 0.0
        %v2990 = vmax.f32 %v2204, 0.0
        %v2991 = vmax.f32 %v2206, 0.0
        %v2992 = vmax.f32 %v2317, 0.0
        %v2993 = vmax.f32 %v2319, 0.0
        %v2994 = vmax.f32 %v2430, 0.0
        %v2995 = vmax.f32 %v2432, 0.0
        %v2996 = vmax.f32 %v2543, 0.0
        %v2997 = vmax.f32 %v2545, 0.0
        %v2998 = vmax.f32 %v2656, 0.0
        %v2999 = vmax.f32 %v2658, 0.0
        %v3000 = vmax.f32 %v2769, 0.0
        %v3001 = vmax.f32 %v2771, 0.0
        %v3002 = vmax.f32 %v2882, 0.0
        %v3003 = vmax.f32 %v2884, 0.0
        %v3004 = vmax.f32 %v2097, 0.0
        %v3005 = vmax.f32 %v2099, 0.0
        %v3006 = vmax.f32 %v2210, 0.0
        %v3007 = vmax.f32 %v2212, 0.0
        %v3008 = vmax.f32 %v2323, 0.0
        %v3009 = vmax.f32 %v2325, 0.0
        %v3010 = vmax.f32 %v2436, 0.0
        %v3011 = vmax.f32 %v2438, 0.0
        %v3012 = vmax.f32 %v2549, 0.0
        %v3013 = vmax.f32 %v2551, 0.0
        %v3014 = vmax.f32 %v2662, 0.0
        %v3015 = vmax.f32 %v2664, 0.0
        %v3016 = vmax.f32 %v2775, 0.0
        %v3017 = vmax.f32 %v2777, 0.0
        %v3018 = vmax.f32 %v2888, 0.0
        %v3019 = vmax.f32 %v2890, 0.0
        %v3020 = vld [vmem:[#allocation4] sm:$0xff]
        %v3021 = vld [vmem:[%s8] sm:$0xff]
        %3023 = vset.pattern.permute.xlu0 0
        %3024 = vperm.xlu0 %3023, %v3021
        %v3025 = vpop.permute.xlu0 %3024
        %vm3027 = vcmask 523264
        %v3029 = vsel %vm3027, %v3020, 0
        %3031 = vmatprep.subr.mxu0 %v2893
        %3032 = vmatpush1.msra.mxu0 %v2892
        %3033 = vmatprep.subr.mxu0 %v2909
        %3034 = vmatpush1.msra.mxu0 %v2908
        %3035 = vmatprep.subr.mxu0 %v2925
        %3036 = vmatpush1.msra.mxu0 %v2924
        %3037 = vmatprep.subr.mxu0 %v2941
        %3038 = vmatpush1.msra.mxu0 %v2940
        %3039 = vmatprep.subr.mxu0 %v2957
        %3040 = vmatpush1.msra.mxu0 %v2956
        %3041 = vmatprep.subr.mxu0 %v2973
        %3042 = vmatpush1.msra.mxu0 %v2972
        %3043 = vmatprep.subr.mxu0 %v2989
        %3044 = vmatpush1.msra.mxu0 %v2988
        %3045 = vmatprep.subr.mxu0 %v3005
        %3046 = vmatpush1.msra.mxu0 %v3004
        %3047 = vmatprep.subr.mxu0 0.0
        %3048 = vmatpush1.msra.mxu0 0.0
        %3049 = vmatprep.subr.mxu0 0.0
        %3050 = vmatpush1.msra.mxu0 0.0
        %3051 = vmatprep.subr.mxu0 0.0
        %3052 = vmatpush1.msra.mxu0 0.0
        %3053 = vmatprep.subr.mxu0 0.0
        %3054 = vmatpush1.msra.mxu0 0.0
        %3055 = vmatprep.subr.mxu0 0.0
        %3056 = vmatpush1.msra.mxu0 0.0
        %3057 = vmatprep.subr.mxu0 0.0
        %3058 = vmatpush1.msra.mxu0 0.0
        %3059 = vmatprep.subr.mxu0 0.0
        %3060 = vmatpush1.msra.mxu0 0.0
        %3061 = vmatprep.subr.mxu0 0.0
        %3062 = vmatpush1.msra.mxu0 0.0
        %3063 = vmatprep.subr.mxu0 0.0
        %3064 = vmatpush1.msra.mxu0 0.0
        %3065 = vmatprep.subr.mxu0 0.0
        %3066 = vmatpush1.msra.mxu0 0.0
        %3067 = vmatprep.subr.mxu0 0.0
        %3068 = vmatpush1.msra.mxu0 0.0
        %3069 = vmatprep.subr.mxu0 0.0
        %3070 = vmatpush1.msra.mxu0 0.0
        %3071 = vmatprep.subr.mxu0 0.0
        %3072 = vmatpush1.msra.mxu0 0.0
        %3073 = vmatprep.subr.mxu0 0.0
        %3074 = vmatpush1.msra.mxu0 0.0
        %3075 = vmatprep.subr.mxu0 0.0
        %3076 = vmatpush1.msra.mxu0 0.0
        %3077 = vmatprep.subr.mxu0 0.0
        %3078 = vmatpush1.msra.mxu0 0.0
        %3079 = vmatprep.subr.mxu0 0.0
        %3080 = vmatpush1.msra.mxu0 0.0
        %3081 = vmatprep.subr.mxu0 0.0
        %3082 = vmatpush1.msra.mxu0 0.0
        %3083 = vmatprep.subr.mxu0 0.0
        %3084 = vmatpush1.msra.mxu0 0.0
        %3085 = vmatprep.subr.mxu0 0.0
        %3086 = vmatpush1.msra.mxu0 0.0
        %3087 = vmatprep.subr.mxu0 0.0
        %3088 = vmatpush1.msra.mxu0 0.0
        %3089 = vmatprep.subr.mxu0 0.0
        %3090 = vmatpush1.msra.mxu0 0.0
        %3091 = vmatprep.subr.mxu0 0.0
        %3092 = vmatpush1.msra.mxu0 0.0
        %3093 = vmatprep.subr.mxu0 0.0
        %3094 = vmatpush1.msra.mxu0 0.0
        %3095 = vmatprep.mubr.f32.mxu0 0.0
        %3096 = vmatmul.mubr.f32.gmra.mrb[0].mxu0 %v3029
        %v3097 = vpop.f32.mrb[0].mxu0
        %v3098 = vadd.f32 %v3025, %v3097
        %v3099 = vpop.f32.mrb[0].mxu0
        %v3100 = vadd.f32 %v3025, %v3099
        %3101 = vdwg.mxu0
        %3102 = vmatprep.subr.mxu0 %v2895
        %3103 = vmatpush1.msra.mxu0 %v2894
        %3104 = vmatprep.subr.mxu0 %v2911
        %3105 = vmatpush1.msra.mxu0 %v2910
        %3106 = vmatprep.subr.mxu0 %v2927
        %3107 = vmatpush1.msra.mxu0 %v2926
        %3108 = vmatprep.subr.mxu0 %v2943
        %3109 = vmatpush1.msra.mxu0 %v2942
        %3110 = vmatprep.subr.mxu0 %v2959
        %3111 = vmatpush1.msra.mxu0 %v2958
        %3112 = vmatprep.subr.mxu0 %v2975
        %3113 = vmatpush1.msra.mxu0 %v2974
        %3114 = vmatprep.subr.mxu0 %v2991
        %3115 = vmatpush1.msra.mxu0 %v2990
        %3116 = vmatprep.subr.mxu0 %v3007
        %3117 = vmatpush1.msra.mxu0 %v3006
        %3118 = vmatprep.subr.mxu0 0.0
        %3119 = vmatpush1.msra.mxu0 0.0
        %3120 = vmatprep.subr.mxu0 0.0
        %3121 = vmatpush1.msra.mxu0 0.0
        %3122 = vmatprep.subr.mxu0 0.0
        %3123 = vmatpush1.msra.mxu0 0.0
        %3124 = vmatprep.subr.mxu0 0.0
        %3125 = vmatpush1.msra.mxu0 0.0
        %3126 = vmatprep.subr.mxu0 0.0
        %3127 = vmatpush1.msra.mxu0 0.0
        %3128 = vmatprep.subr.mxu0 0.0
        %3129 = vmatpush1.msra.mxu0 0.0
        %3130 = vmatprep.subr.mxu0 0.0
        %3131 = vmatpush1.msra.mxu0 0.0
        %3132 = vmatprep.subr.mxu0 0.0
        %3133 = vmatpush1.msra.mxu0 0.0
        %3134 = vmatprep.subr.mxu0 0.0
        %3135 = vmatpush1.msra.mxu0 0.0
        %3136 = vmatprep.subr.mxu0 0.0
        %3137 = vmatpush1.msra.mxu0 0.0
        %3138 = vmatprep.subr.mxu0 0.0
        %3139 = vmatpush1.msra.mxu0 0.0
        %3140 = vmatprep.subr.mxu0 0.0
        %3141 = vmatpush1.msra.mxu0 0.0
        %3142 = vmatprep.subr.mxu0 0.0
        %3143 = vmatpush1.msra.mxu0 0.0
        %3144 = vmatprep.subr.mxu0 0.0
        %3145 = vmatpush1.msra.mxu0 0.0
        %3146 = vmatprep.subr.mxu0 0.0
        %3147 = vmatpush1.msra.mxu0 0.0
        %3148 = vmatprep.subr.mxu0 0.0
        %3149 = vmatpush1.msra.mxu0 0.0
        %3150 = vmatprep.subr.mxu0 0.0
        %3151 = vmatpush1.msra.mxu0 0.0
        %3152 = vmatprep.subr.mxu0 0.0
        %3153 = vmatpush1.msra.mxu0 0.0
        %3154 = vmatprep.subr.mxu0 0.0
        %3155 = vmatpush1.msra.mxu0 0.0
        %3156 = vmatprep.subr.mxu0 0.0
        %3157 = vmatpush1.msra.mxu0 0.0
        %3158 = vmatprep.subr.mxu0 0.0
        %3159 = vmatpush1.msra.mxu0 0.0
        %3160 = vmatprep.subr.mxu0 0.0
        %3161 = vmatpush1.msra.mxu0 0.0
        %3162 = vmatprep.subr.mxu0 0.0
        %3163 = vmatpush1.msra.mxu0 0.0
        %3164 = vmatprep.subr.mxu0 0.0
        %3165 = vmatpush1.msra.mxu0 0.0
        %3166 = vmatprep.mubr.f32.mxu0 0.0
        %3167 = vmatmul.mubr.f32.gmra.mrb[0].mxu0 %v3029
        %v3168 = vpop.f32.mrb[0].mxu0
        %v3169 = vadd.f32 %v3025, %v3168
        %v3170 = vpop.f32.mrb[0].mxu0
        %v3171 = vadd.f32 %v3025, %v3170
        %3172 = vdwg.mxu0
        %3173 = vmatprep.subr.mxu0 %v2897
        %3174 = vmatpush1.msra.mxu0 %v2896
        %3175 = vmatprep.subr.mxu0 %v2913
        %3176 = vmatpush1.msra.mxu0 %v2912
        %3177 = vmatprep.subr.mxu0 %v2929
        %3178 = vmatpush1.msra.mxu0 %v2928
        %3179 = vmatprep.subr.mxu0 %v2945
        %3180 = vmatpush1.msra.mxu0 %v2944
        %3181 = vmatprep.subr.mxu0 %v2961
        %3182 = vmatpush1.msra.mxu0 %v2960
        %3183 = vmatprep.subr.mxu0 %v2977
        %3184 = vmatpush1.msra.mxu0 %v2976
        %3185 = vmatprep.subr.mxu0 %v2993
        %3186 = vmatpush1.msra.mxu0 %v2992
        %3187 = vmatprep.subr.mxu0 %v3009
        %3188 = vmatpush1.msra.mxu0 %v3008
        %3189 = vmatprep.subr.mxu0 0.0
        %3190 = vmatpush1.msra.mxu0 0.0
        %3191 = vmatprep.subr.mxu0 0.0
        %3192 = vmatpush1.msra.mxu0 0.0
        %3193 = vmatprep.subr.mxu0 0.0
        %3194 = vmatpush1.msra.mxu0 0.0
        %3195 = vmatprep.subr.mxu0 0.0
        %3196 = vmatpush1.msra.mxu0 0.0
        %3197 = vmatprep.subr.mxu0 0.0
        %3198 = vmatpush1.msra.mxu0 0.0
        %3199 = vmatprep.subr.mxu0 0.0
        %3200 = vmatpush1.msra.mxu0 0.0
        %3201 = vmatprep.subr.mxu0 0.0
        %3202 = vmatpush1.msra.mxu0 0.0
        %3203 = vmatprep.subr.mxu0 0.0
        %3204 = vmatpush1.msra.mxu0 0.0
        %3205 = vmatprep.subr.mxu0 0.0
        %3206 = vmatpush1.msra.mxu0 0.0
        %3207 = vmatprep.subr.mxu0 0.0
        %3208 = vmatpush1.msra.mxu0 0.0
        %3209 = vmatprep.subr.mxu0 0.0
        %3210 = vmatpush1.msra.mxu0 0.0
        %3211 = vmatprep.subr.mxu0 0.0
        %3212 = vmatpush1.msra.mxu0 0.0
        %3213 = vmatprep.subr.mxu0 0.0
        %3214 = vmatpush1.msra.mxu0 0.0
        %3215 = vmatprep.subr.mxu0 0.0
        %3216 = vmatpush1.msra.mxu0 0.0
        %3217 = vmatprep.subr.mxu0 0.0
        %3218 = vmatpush1.msra.mxu0 0.0
        %3219 = vmatprep.subr.mxu0 0.0
        %3220 = vmatpush1.msra.mxu0 0.0
        %3221 = vmatprep.subr.mxu0 0.0
        %3222 = vmatpush1.msra.mxu0 0.0
        %3223 = vmatprep.subr.mxu0 0.0
        %3224 = vmatpush1.msra.mxu0 0.0
        %3225 = vmatprep.subr.mxu0 0.0
        %3226 = vmatpush1.msra.mxu0 0.0
        %3227 = vmatprep.subr.mxu0 0.0
        %3228 = vmatpush1.msra.mxu0 0.0
        %3229 = vmatprep.subr.mxu0 0.0
        %3230 = vmatpush1.msra.mxu0 0.0
        %3231 = vmatprep.subr.mxu0 0.0
        %3232 = vmatpush1.msra.mxu0 0.0
        %3233 = vmatprep.subr.mxu0 0.0
        %3234 = vmatpush1.msra.mxu0 0.0
        %3235 = vmatprep.subr.mxu0 0.0
        %3236 = vmatpush1.msra.mxu0 0.0
        %3237 = vmatprep.mubr.f32.mxu0 0.0
        %3238 = vmatmul.mubr.f32.gmra.mrb[0].mxu0 %v3029
        %v3239 = vpop.f32.mrb[0].mxu0
        %v3240 = vadd.f32 %v3025, %v3239
        %v3241 = vpop.f32.mrb[0].mxu0
        %v3242 = vadd.f32 %v3025, %v3241
        %3243 = vdwg.mxu0
        %3244 = vmatprep.subr.mxu0 %v2899
        %3245 = vmatpush1.msra.mxu0 %v2898
        %3246 = vmatprep.subr.mxu0 %v2915
        %3247 = vmatpush1.msra.mxu0 %v2914
        %3248 = vmatprep.subr.mxu0 %v2931
        %3249 = vmatpush1.msra.mxu0 %v2930
        %3250 = vmatprep.subr.mxu0 %v2947
        %3251 = vmatpush1.msra.mxu0 %v2946
        %3252 = vmatprep.subr.mxu0 %v2963
        %3253 = vmatpush1.msra.mxu0 %v2962
        %3254 = vmatprep.subr.mxu0 %v2979
        %3255 = vmatpush1.msra.mxu0 %v2978
        %3256 = vmatprep.subr.mxu0 %v2995
        %3257 = vmatpush1.msra.mxu0 %v2994
        %3258 = vmatprep.subr.mxu0 %v3011
        %3259 = vmatpush1.msra.mxu0 %v3010
        %3260 = vmatprep.subr.mxu0 0.0
        %3261 = vmatpush1.msra.mxu0 0.0
        %3262 = vmatprep.subr.mxu0 0.0
        %3263 = vmatpush1.msra.mxu0 0.0
        %3264 = vmatprep.subr.mxu0 0.0
        %3265 = vmatpush1.msra.mxu0 0.0
        %3266 = vmatprep.subr.mxu0 0.0
        %3267 = vmatpush1.msra.mxu0 0.0
        %3268 = vmatprep.subr.mxu0 0.0
        %3269 = vmatpush1.msra.mxu0 0.0
        %3270 = vmatprep.subr.mxu0 0.0
        %3271 = vmatpush1.msra.mxu0 0.0
        %3272 = vmatprep.subr.mxu0 0.0
        %3273 = vmatpush1.msra.mxu0 0.0
        %3274 = vmatprep.subr.mxu0 0.0
        %3275 = vmatpush1.msra.mxu0 0.0
        %3276 = vmatprep.subr.mxu0 0.0
        %3277 = vmatpush1.msra.mxu0 0.0
        %3278 = vmatprep.subr.mxu0 0.0
        %3279 = vmatpush1.msra.mxu0 0.0
        %3280 = vmatprep.subr.mxu0 0.0
        %3281 = vmatpush1.msra.mxu0 0.0
        %3282 = vmatprep.subr.mxu0 0.0
        %3283 = vmatpush1.msra.mxu0 0.0
        %3284 = vmatprep.subr.mxu0 0.0
        %3285 = vmatpush1.msra.mxu0 0.0
        %3286 = vmatprep.subr.mxu0 0.0
        %3287 = vmatpush1.msra.mxu0 0.0
        %3288 = vmatprep.subr.mxu0 0.0
        %3289 = vmatpush1.msra.mxu0 0.0
        %3290 = vmatprep.subr.mxu0 0.0
        %3291 = vmatpush1.msra.mxu0 0.0
        %3292 = vmatprep.subr.mxu0 0.0
        %3293 = vmatpush1.msra.mxu0 0.0
        %3294 = vmatprep.subr.mxu0 0.0
        %3295 = vmatpush1.msra.mxu0 0.0
        %3296 = vmatprep.subr.mxu0 0.0
        %3297 = vmatpush1.msra.mxu0 0.0
        %3298 = vmatprep.subr.mxu0 0.0
        %3299 = vmatpush1.msra.mxu0 0.0
        %3300 = vmatprep.subr.mxu0 0.0
        %3301 = vmatpush1.msra.mxu0 0.0
        %3302 = vmatprep.subr.mxu0 0.0
        %3303 = vmatpush1.msra.mxu0 0.0
        %3304 = vmatprep.subr.mxu0 0.0
        %3305 = vmatpush1.msra.mxu0 0.0
        %3306 = vmatprep.subr.mxu0 0.0
        %3307 = vmatpush1.msra.mxu0 0.0
        %3308 = vmatprep.mubr.f32.mxu0 0.0
        %3309 = vmatmul.mubr.f32.gmra.mrb[0].mxu0 %v3029
        %v3310 = vpop.f32.mrb[0].mxu0
        %v3311 = vadd.f32 %v3025, %v3310
        %v3312 = vpop.f32.mrb[0].mxu0
        %v3313 = vadd.f32 %v3025, %v3312
        %3314 = vdwg.mxu0
        %3315 = vmatprep.subr.mxu0 %v2901
        %3316 = vmatpush1.msra.mxu0 %v2900
        %3317 = vmatprep.subr.mxu0 %v2917
        %3318 = vmatpush1.msra.mxu0 %v2916
        %3319 = vmatprep.subr.mxu0 %v2933
        %3320 = vmatpush1.msra.mxu0 %v2932
        %3321 = vmatprep.subr.mxu0 %v2949
        %3322 = vmatpush1.msra.mxu0 %v2948
        %3323 = vmatprep.subr.mxu0 %v2965
        %3324 = vmatpush1.msra.mxu0 %v2964
        %3325 = vmatprep.subr.mxu0 %v2981
        %3326 = vmatpush1.msra.mxu0 %v2980
        %3327 = vmatprep.subr.mxu0 %v2997
        %3328 = vmatpush1.msra.mxu0 %v2996
        %3329 = vmatprep.subr.mxu0 %v3013
        %3330 = vmatpush1.msra.mxu0 %v3012
        %3331 = vmatprep.subr.mxu0 0.0
        %3332 = vmatpush1.msra.mxu0 0.0
        %3333 = vmatprep.subr.mxu0 0.0
        %3334 = vmatpush1.msra.mxu0 0.0
        %3335 = vmatprep.subr.mxu0 0.0
        %3336 = vmatpush1.msra.mxu0 0.0
        %3337 = vmatprep.subr.mxu0 0.0
        %3338 = vmatpush1.msra.mxu0 0.0
        %3339 = vmatprep.subr.mxu0 0.0
        %3340 = vmatpush1.msra.mxu0 0.0
        %3341 = vmatprep.subr.mxu0 0.0
        %3342 = vmatpush1.msra.mxu0 0.0
        %3343 = vmatprep.subr.mxu0 0.0
        %3344 = vmatpush1.msra.mxu0 0.0
        %3345 = vmatprep.subr.mxu0 0.0
        %3346 = vmatpush1.msra.mxu0 0.0
        %3347 = vmatprep.subr.mxu0 0.0
        %3348 = vmatpush1.msra.mxu0 0.0
        %3349 = vmatprep.subr.mxu0 0.0
        %3350 = vmatpush1.msra.mxu0 0.0
        %3351 = vmatprep.subr.mxu0 0.0
        %3352 = vmatpush1.msra.mxu0 0.0
        %3353 = vmatprep.subr.mxu0 0.0
        %3354 = vmatpush1.msra.mxu0 0.0
        %3355 = vmatprep.subr.mxu0 0.0
        %3356 = vmatpush1.msra.mxu0 0.0
        %3357 = vmatprep.subr.mxu0 0.0
        %3358 = vmatpush1.msra.mxu0 0.0
        %3359 = vmatprep.subr.mxu0 0.0
        %3360 = vmatpush1.msra.mxu0 0.0
        %3361 = vmatprep.subr.mxu0 0.0
        %3362 = vmatpush1.msra.mxu0 0.0
        %3363 = vmatprep.subr.mxu0 0.0
        %3364 = vmatpush1.msra.mxu0 0.0
        %3365 = vmatprep.subr.mxu0 0.0
        %3366 = vmatpush1.msra.mxu0 0.0
        %3367 = vmatprep.subr.mxu0 0.0
        %3368 = vmatpush1.msra.mxu0 0.0
        %3369 = vmatprep.subr.mxu0 0.0
        %3370 = vmatpush1.msra.mxu0 0.0
        %3371 = vmatprep.subr.mxu0 0.0
        %3372 = vmatpush1.msra.mxu0 0.0
        %3373 = vmatprep.subr.mxu0 0.0
        %3374 = vmatpush1.msra.mxu0 0.0
        %3375 = vmatprep.subr.mxu0 0.0
        %3376 = vmatpush1.msra.mxu0 0.0
        %3377 = vmatprep.subr.mxu0 0.0
        %3378 = vmatpush1.msra.mxu0 0.0
        %3379 = vmatprep.mubr.f32.mxu0 0.0
        %3380 = vmatmul.mubr.f32.gmra.mrb[0].mxu0 %v3029
        %v3381 = vpop.f32.mrb[0].mxu0
        %v3382 = vadd.f32 %v3025, %v3381
        %v3383 = vpop.f32.mrb[0].mxu0
        %v3384 = vadd.f32 %v3025, %v3383
        %3385 = vdwg.mxu0
        %3386 = vmatprep.subr.mxu0 %v2903
        %3387 = vmatpush1.msra.mxu0 %v2902
        %3388 = vmatprep.subr.mxu0 %v2919
        %3389 = vmatpush1.msra.mxu0 %v2918
        %3390 = vmatprep.subr.mxu0 %v2935
        %3391 = vmatpush1.msra.mxu0 %v2934
        %3392 = vmatprep.subr.mxu0 %v2951
        %3393 = vmatpush1.msra.mxu0 %v2950
        %3394 = vmatprep.subr.mxu0 %v2967
        %3395 = vmatpush1.msra.mxu0 %v2966
        %3396 = vmatprep.subr.mxu0 %v2983
        %3397 = vmatpush1.msra.mxu0 %v2982
        %3398 = vmatprep.subr.mxu0 %v2999
        %3399 = vmatpush1.msra.mxu0 %v2998
        %3400 = vmatprep.subr.mxu0 %v3015
        %3401 = vmatpush1.msra.mxu0 %v3014
        %3402 = vmatprep.subr.mxu0 0.0
        %3403 = vmatpush1.msra.mxu0 0.0
        %3404 = vmatprep.subr.mxu0 0.0
        %3405 = vmatpush1.msra.mxu0 0.0
        %3406 = vmatprep.subr.mxu0 0.0
        %3407 = vmatpush1.msra.mxu0 0.0
        %3408 = vmatprep.subr.mxu0 0.0
        %3409 = vmatpush1.msra.mxu0 0.0
        %3410 = vmatprep.subr.mxu0 0.0
        %3411 = vmatpush1.msra.mxu0 0.0
        %3412 = vmatprep.subr.mxu0 0.0
        %3413 = vmatpush1.msra.mxu0 0.0
        %3414 = vmatprep.subr.mxu0 0.0
        %3415 = vmatpush1.msra.mxu0 0.0
        %3416 = vmatprep.subr.mxu0 0.0
        %3417 = vmatpush1.msra.mxu0 0.0
        %3418 = vmatprep.subr.mxu0 0.0
        %3419 = vmatpush1.msra.mxu0 0.0
        %3420 = vmatprep.subr.mxu0 0.0
        %3421 = vmatpush1.msra.mxu0 0.0
        %3422 = vmatprep.subr.mxu0 0.0
        %3423 = vmatpush1.msra.mxu0 0.0
        %3424 = vmatprep.subr.mxu0 0.0
        %3425 = vmatpush1.msra.mxu0 0.0
        %3426 = vmatprep.subr.mxu0 0.0
        %3427 = vmatpush1.msra.mxu0 0.0
        %3428 = vmatprep.subr.mxu0 0.0
        %3429 = vmatpush1.msra.mxu0 0.0
        %3430 = vmatprep.subr.mxu0 0.0
        %3431 = vmatpush1.msra.mxu0 0.0
        %3432 = vmatprep.subr.mxu0 0.0
        %3433 = vmatpush1.msra.mxu0 0.0
        %3434 = vmatprep.subr.mxu0 0.0
        %3435 = vmatpush1.msra.mxu0 0.0
        %3436 = vmatprep.subr.mxu0 0.0
        %3437 = vmatpush1.msra.mxu0 0.0
        %3438 = vmatprep.subr.mxu0 0.0
        %3439 = vmatpush1.msra.mxu0 0.0
        %3440 = vmatprep.subr.mxu0 0.0
        %3441 = vmatpush1.msra.mxu0 0.0
        %3442 = vmatprep.subr.mxu0 0.0
        %3443 = vmatpush1.msra.mxu0 0.0
        %3444 = vmatprep.subr.mxu0 0.0
        %3445 = vmatpush1.msra.mxu0 0.0
        %3446 = vmatprep.subr.mxu0 0.0
        %3447 = vmatpush1.msra.mxu0 0.0
        %3448 = vmatprep.subr.mxu0 0.0
        %3449 = vmatpush1.msra.mxu0 0.0
        %3450 = vmatprep.mubr.f32.mxu0 0.0
        %3451 = vmatmul.mubr.f32.gmra.mrb[0].mxu0 %v3029
        %v3452 = vpop.f32.mrb[0].mxu0
        %v3453 = vadd.f32 %v3025, %v3452
        %v3454 = vpop.f32.mrb[0].mxu0
        %v3455 = vadd.f32 %v3025, %v3454
        %3456 = vdwg.mxu0
        %3457 = vmatprep.subr.mxu0 %v2905
        %3458 = vmatpush1.msra.mxu0 %v2904
        %3459 = vmatprep.subr.mxu0 %v2921
        %3460 = vmatpush1.msra.mxu0 %v2920
        %3461 = vmatprep.subr.mxu0 %v2937
        %3462 = vmatpush1.msra.mxu0 %v2936
        %3463 = vmatprep.subr.mxu0 %v2953
        %3464 = vmatpush1.msra.mxu0 %v2952
        %3465 = vmatprep.subr.mxu0 %v2969
        %3466 = vmatpush1.msra.mxu0 %v2968
        %3467 = vmatprep.subr.mxu0 %v2985
        %3468 = vmatpush1.msra.mxu0 %v2984
        %3469 = vmatprep.subr.mxu0 %v3001
        %3470 = vmatpush1.msra.mxu0 %v3000
        %3471 = vmatprep.subr.mxu0 %v3017
        %3472 = vmatpush1.msra.mxu0 %v3016
        %3473 = vmatprep.subr.mxu0 0.0
        %3474 = vmatpush1.msra.mxu0 0.0
        %3475 = vmatprep.subr.mxu0 0.0
        %3476 = vmatpush1.msra.mxu0 0.0
        %3477 = vmatprep.subr.mxu0 0.0
        %3478 = vmatpush1.msra.mxu0 0.0
        %3479 = vmatprep.subr.mxu0 0.0
        %3480 = vmatpush1.msra.mxu0 0.0
        %3481 = vmatprep.subr.mxu0 0.0
        %3482 = vmatpush1.msra.mxu0 0.0
        %3483 = vmatprep.subr.mxu0 0.0
        %3484 = vmatpush1.msra.mxu0 0.0
        %3485 = vmatprep.subr.mxu0 0.0
        %3486 = vmatpush1.msra.mxu0 0.0
        %3487 = vmatprep.subr.mxu0 0.0
        %3488 = vmatpush1.msra.mxu0 0.0
        %3489 = vmatprep.subr.mxu0 0.0
        %3490 = vmatpush1.msra.mxu0 0.0
        %3491 = vmatprep.subr.mxu0 0.0
        %3492 = vmatpush1.msra.mxu0 0.0
        %3493 = vmatprep.subr.mxu0 0.0
        %3494 = vmatpush1.msra.mxu0 0.0
        %3495 = vmatprep.subr.mxu0 0.0
        %3496 = vmatpush1.msra.mxu0 0.0
        %3497 = vmatprep.subr.mxu0 0.0
        %3498 = vmatpush1.msra.mxu0 0.0
        %3499 = vmatprep.subr.mxu0 0.0
        %3500 = vmatpush1.msra.mxu0 0.0
        %3501 = vmatprep.subr.mxu0 0.0
        %3502 = vmatpush1.msra.mxu0 0.0
        %3503 = vmatprep.subr.mxu0 0.0
        %3504 = vmatpush1.msra.mxu0 0.0
        %3505 = vmatprep.subr.mxu0 0.0
        %3506 = vmatpush1.msra.mxu0 0.0
        %3507 = vmatprep.subr.mxu0 0.0
        %3508 = vmatpush1.msra.mxu0 0.0
        %3509 = vmatprep.subr.mxu0 0.0
        %3510 = vmatpush1.msra.mxu0 0.0
        %3511 = vmatprep.subr.mxu0 0.0
        %3512 = vmatpush1.msra.mxu0 0.0
        %3513 = vmatprep.subr.mxu0 0.0
        %3514 = vmatpush1.msra.mxu0 0.0
        %3515 = vmatprep.subr.mxu0 0.0
        %3516 = vmatpush1.msra.mxu0 0.0
        %3517 = vmatprep.subr.mxu0 0.0
        %3518 = vmatpush1.msra.mxu0 0.0
        %3519 = vmatprep.subr.mxu0 0.0
        %3520 = vmatpush1.msra.mxu0 0.0
        %3521 = vmatprep.mubr.f32.mxu0 0.0
        %3522 = vmatmul.mubr.f32.gmra.mrb[0].mxu0 %v3029
        %v3523 = vpop.f32.mrb[0].mxu0
        %v3524 = vadd.f32 %v3025, %v3523
        %v3525 = vpop.f32.mrb[0].mxu0
        %v3526 = vadd.f32 %v3025, %v3525
        %3527 = vdwg.mxu0
        %3528 = vmatprep.subr.mxu0 %v2907
        %3529 = vmatpush1.msra.mxu0 %v2906
        %3530 = vmatprep.subr.mxu0 %v2923
        %3531 = vmatpush1.msra.mxu0 %v2922
        %3532 = vmatprep.subr.mxu0 %v2939
        %3533 = vmatpush1.msra.mxu0 %v2938
        %3534 = vmatprep.subr.mxu0 %v2955
        %3535 = vmatpush1.msra.mxu0 %v2954
        %3536 = vmatprep.subr.mxu0 %v2971
        %3537 = vmatpush1.msra.mxu0 %v2970
        %3538 = vmatprep.subr.mxu0 %v2987
        %3539 = vmatpush1.msra.mxu0 %v2986
        %3540 = vmatprep.subr.mxu0 %v3003
        %3541 = vmatpush1.msra.mxu0 %v3002
        %3542 = vmatprep.subr.mxu0 %v3019
        %3543 = vmatpush1.msra.mxu0 %v3018
        %3544 = vmatprep.subr.mxu0 0.0
        %3545 = vmatpush1.msra.mxu0 0.0
        %3546 = vmatprep.subr.mxu0 0.0
        %3547 = vmatpush1.msra.mxu0 0.0
        %3548 = vmatprep.subr.mxu0 0.0
        %3549 = vmatpush1.msra.mxu0 0.0
        %3550 = vmatprep.subr.mxu0 0.0
        %3551 = vmatpush1.msra.mxu0 0.0
        %3552 = vmatprep.subr.mxu0 0.0
        %3553 = vmatpush1.msra.mxu0 0.0
        %3554 = vmatprep.subr.mxu0 0.0
        %3555 = vmatpush1.msra.mxu0 0.0
        %3556 = vmatprep.subr.mxu0 0.0
        %3557 = vmatpush1.msra.mxu0 0.0
        %3558 = vmatprep.subr.mxu0 0.0
        %3559 = vmatpush1.msra.mxu0 0.0
        %3560 = vmatprep.subr.mxu0 0.0
        %3561 = vmatpush1.msra.mxu0 0.0
        %3562 = vmatprep.subr.mxu0 0.0
        %3563 = vmatpush1.msra.mxu0 0.0
        %3564 = vmatprep.subr.mxu0 0.0
        %3565 = vmatpush1.msra.mxu0 0.0
        %3566 = vmatprep.subr.mxu0 0.0
        %3567 = vmatpush1.msra.mxu0 0.0
        %3568 = vmatprep.subr.mxu0 0.0
        %3569 = vmatpush1.msra.mxu0 0.0
        %3570 = vmatprep.subr.mxu0 0.0
        %3571 = vmatpush1.msra.mxu0 0.0
        %3572 = vmatprep.subr.mxu0 0.0
        %3573 = vmatpush1.msra.mxu0 0.0
        %3574 = vmatprep.subr.mxu0 0.0
        %3575 = vmatpush1.msra.mxu0 0.0
        %3576 = vmatprep.subr.mxu0 0.0
        %3577 = vmatpush1.msra.mxu0 0.0
        %3578 = vmatprep.subr.mxu0 0.0
        %3579 = vmatpush1.msra.mxu0 0.0
        %3580 = vmatprep.subr.mxu0 0.0
        %3581 = vmatpush1.msra.mxu0 0.0
        %3582 = vmatprep.subr.mxu0 0.0
        %3583 = vmatpush1.msra.mxu0 0.0
        %3584 = vmatprep.subr.mxu0 0.0
        %3585 = vmatpush1.msra.mxu0 0.0
        %3586 = vmatprep.subr.mxu0 0.0
        %3587 = vmatpush1.msra.mxu0 0.0
        %3588 = vmatprep.subr.mxu0 0.0
        %3589 = vmatpush1.msra.mxu0 0.0
        %3590 = vmatprep.subr.mxu0 0.0
        %3591 = vmatpush1.msra.mxu0 0.0
        %3592 = vmatprep.mubr.f32.mxu0 0.0
        %3593 = vmatmul.mubr.f32.gmra.mrb[0].mxu0 %v3029
        %v3594 = vpop.f32.mrb[0].mxu0
        %v3595 = vadd.f32 %v3025, %v3594
        %v3596 = vpop.f32.mrb[0].mxu0
        %v3597 = vadd.f32 %v3025, %v3596
        %3598 = vdwg.mxu0
        %v3599 = vmax.f32 %v3098, 0.0
        %v3600 = vmax.f32 %v3100, 0.0
        %v3601 = vmax.f32 %v3169, 0.0
        %v3602 = vmax.f32 %v3171, 0.0
        %v3603 = vmax.f32 %v3240, 0.0
        %v3604 = vmax.f32 %v3242, 0.0
        %v3605 = vmax.f32 %v3311, 0.0
        %v3606 = vmax.f32 %v3313, 0.0
        %v3607 = vmax.f32 %v3382, 0.0
        %v3608 = vmax.f32 %v3384, 0.0
        %v3609 = vmax.f32 %v3453, 0.0
        %v3610 = vmax.f32 %v3455, 0.0
        %v3611 = vmax.f32 %v3524, 0.0
        %v3612 = vmax.f32 %v3526, 0.0
        %v3613 = vmax.f32 %v3595, 0.0
        %v3614 = vmax.f32 %v3597, 0.0
        %3615 = vst [vmem:[%s363] sm:$0xff] %v3599
        %3616 = vst [vmem:[%s363 + $0x8] sm:$0xff] %v3600
        %3617 = vst [vmem:[%s363 + $0x10] sm:$0xff] %v3601
        %3618 = vst [vmem:[%s363 + $0x18] sm:$0xff] %v3602
        %3619 = vst [vmem:[%s363 + $0x20] sm:$0xff] %v3603
        %3620 = vst [vmem:[%s363 + $0x28] sm:$0xff] %v3604
        %3621 = vst [vmem:[%s363 + $0x30] sm:$0xff] %v3605
        %3622 = vst [vmem:[%s363 + $0x38] sm:$0xff] %v3606
        %3623 = vst [vmem:[%s363 + $0x40] sm:$0xff] %v3607
        %3624 = vst [vmem:[%s363 + $0x48] sm:$0xff] %v3608
        %3625 = vst [vmem:[%s363 + $0x50] sm:$0xff] %v3609
        %3626 = vst [vmem:[%s363 + $0x58] sm:$0xff] %v3610
        %3627 = vst [vmem:[%s363 + $0x60] sm:$0xff] %v3611
        %3628 = vst [vmem:[%s363 + $0x68] sm:$0xff] %v3612
        %3629 = vst [vmem:[%s363 + $0x70] sm:$0xff] %v3613
        %vm3630 = vcmask 654336
        %3631 = vst.msk [vmem:[%s363 + $0x78] sm:$0xff] %vm3630, %v3614
        %p3632 = scmp.lt.s32.totalorder %s24, 1
        %s3633 = scalar_select %p3632, %s24, 1
        %s3634 = smul.addr %s3633, 16
        %s3635 = smul.addr %s3634, 8
        %s3636 = scalar_lea.vmem %s9, %s3635
        // Predicated region
        $region65: #{net_forward.2} parent=55 // pred_check
          %p3637 = pneg %p236
        $region66: #{net_forward.2} parent=55 // pred_check_branch
          %3639 = sbr.rel (%p3637) target = $region68
        $region67: #{net_forward.2} parent=55 // pred_region
          _
        $region68: #{net_forward.2} parent=55 // pred_fallthru
          _
      $region56: #{net_forward.2} parent=5 // pred_fallthru
        _
      %p3640 = scmp.le.s32.totalorder 2, %s19
      // Predicated region
      $region69: #{net_forward.2} parent=5 // pred_check
        %p3641 = pneg %p3640
      $region70: #{net_forward.2} parent=5 // pred_check_branch
        %3643 = sbr.rel (%p3641) target = $region72
      $region71: #{net_forward.2} parent=5 // pred_region
        %s3644 = ssub.s32 %s19, 2
        // Predicated region
        $region73: #{net_forward.2} parent=71 // pred_check
          %p3645 = pneg %p242
        $region74: #{net_forward.2} parent=71 // pred_check_branch
          %3647 = sbr.rel (%p3645) target = $region76
        $region75: #{net_forward.2} parent=71 // pred_region
          %p3648 = scmp.lt.s32.totalorder %s25, 1
          %s3649 = scalar_select %p3648, %s25, 1
          %s3650 = smul.addr %s3649, 16
          %s3651 = smul.addr %s3650, 8
          %s3652 = scalar_lea.vmem %s9, %s3651
        $region76: #{net_forward.2} parent=71 // pred_fallthru
          _
      $region72: #{net_forward.2} parent=5 // pred_fallthru
        _
    $region6: #{net_forward.2} parent=1 // loop_footer
      %s23 = sadd.s32 1, %s19
    $region7: #{net_forward.2} parent=1 // loop_footer_branch
      %18 = sbr.rel target = $region3
    $region8: #{net_forward.2} parent=1 // loop_exit
      _
    %3653 = vsyncpa [#allocation3], 1
    %s3654 = scalar_lea.sflag [#allocation3], 1
    %3655 = vsyncpa %s3654, 1
    %3656 = vsyncpa [#allocation5], 1

// kernel: net_forward.3
$region0: #{net_forward.3}
  #allocation0 [shape = 'u32[]', space=smem, size = 0x4, offset = 0x4, fixed_abs, tag = 'smem constant byte address 0x4 - core index']
  #allocation1 [shape = 'u32[144,128]{1,0:T(1,128)}', space=vmem, size = 0x12000, scoped, tag = 'internal scratch']
  #allocation2 [shape = 'f32[2,512]{1,0:T(2,128)}', space=vmem, size = 0x1000, scoped, tag = 'scratch operand']
  #allocation3 [shape = 'f32[1,1]{1,0:T(1,128)S(1)}', space=vmem, size = 0x200, scoped, tag = 'scoped memory for net_forward.3']
  %s0 = inlined_call_operand.vmem [shape: f32[2,16000], index: 0, kind: input, shape index: {}]
  %s1 = inlined_call_operand.hbm [shape: bf16[16000,512], index: 1, kind: input, shape index: {}]
  %s2 = inlined_call_operand.hbm [shape: f32[1,512], index: 2, kind: input, shape index: {}]
  %s3 = inlined_call_operand.hbm [shape: bf16[512,256], index: 3, kind: input, shape index: {}]
  %s4 = inlined_call_operand.hbm [shape: f32[1,256], index: 4, kind: input, shape index: {}]
  %s5 = inlined_call_operand.hbm [shape: bf16[256,128], index: 5, kind: input, shape index: {}]
  %s6 = inlined_call_operand.hbm [shape: f32[1,128], index: 6, kind: input, shape index: {}]
  %s7 = inlined_call_operand.vmem [shape: f32[128,1], index: 7, kind: input, shape index: {}]
  %s8 = inlined_call_operand.<no memory space> [shape: f32[1,1], index: 8, kind: input, shape index: {}]
  %s9 = inlined_call_operand.vmem [shape: f32[2,1], index: 9, kind: output, shape index: {}]
  %s10 = sld [smem:[#allocation0]]
  $region101: #{net_forward.3} parent=0
    _
  %s12 = ssub.s32 1, %s10
  %s13 = scalar_select 0, %s12, %s10
  %v14 = vstv %s8
  %15 = vst [vmem:[#allocation3] sm:$0x1] %v14
  $region1: #{net_forward.3} parent=0
    #allocation4 [shape = 'u8[6553600]{0}', space=vmem, size = 0x640000, scoped, tag = 'input window, operand 1']
    #allocation5 [shape = 's32[2]{0}', space=sflag, size = 0x8, scoped, tag = 'scoped memory for net_forward.3']
    #allocation6 [shape = 'u8[2048]{0}', space=vmem, size = 0x800, scoped, tag = 'input window, operand 2, single buffered']
    #allocation7 [shape = 's32[1]{0}', space=sflag, size = 0x4, scoped, tag = 'scoped memory for net_forward.3']
    #allocation8 [shape = 'u8[262144]{0}', space=vmem, size = 0x40000, scoped, tag = 'input window, operand 3, single buffered']
    #allocation9 [shape = 'u8[1024]{0}', space=vmem, size = 0x400, scoped, tag = 'input window, operand 4, single buffered']
    #allocation10 [shape = 's32[1]{0}', space=sflag, size = 0x4, scoped, tag = 'scoped memory for net_forward.3']
    #allocation11 [shape = 'u8[65536]{0}', space=vmem, size = 0x10000, scoped, tag = 'input window, operand 5, single buffered']
    #allocation12 [shape = 'u8[512]{0}', space=vmem, size = 0x400, scoped, tag = 'input window, operand 6, single buffered']
    #allocation13 [shape = 's32[1]{0}', space=sflag, size = 0x4, scoped, tag = 'scoped memory for net_forward.3']
    %16 = vsyncpa [#allocation5], 0
    %s17 = scalar_lea.sflag [#allocation5], 1
    %18 = vsyncpa %s17, 0
    %19 = vsyncpa [#allocation7], 0
    %20 = vsyncpa [#allocation10], 0
    %21 = vsyncpa [#allocation13], 0
    loop: start=0, step=1, limit=7
    $region2: #{net_forward.3} parent=1 // loop_pre_header
      _
    $region3: #{net_forward.3} parent=1 // loop_header
      %s23 = sphi 0, %s27
      %p24 = scmp.ge.s32.totalorder %s23, 7
      %s33 = sphi 0, %s35
      %s36 = sphi 0, %s33
      %s37 = sphi 0, %s36
      %s53 = sphi 0, %s37
      %s59 = sphi 0, %s61
      %s62 = sphi 0, %s59
      %s63 = sphi 0, %s62
      %s79 = sphi 0, %s63
      %s83 = sphi 0, %s83
      %s85 = sphi 0, %s83
      %s86 = sphi 0, %s85
      %s100 = sphi 0, %s86
      %s104 = sphi 0, %s104
      %s106 = sphi 0, %s104
      %s107 = sphi 0, %s106
      %s121 = sphi 0, %s107
      %s125 = sphi 0, %s125
      %s127 = sphi 0, %s125
      %s128 = sphi 0, %s127
      %s142 = sphi 0, %s128
      %s146 = sphi 0, %s146
      %s148 = sphi 0, %s146
      %s149 = sphi 0, %s148
      %s163 = sphi 0, %s149
      %s167 = sphi 0, %s167
      %s169 = sphi 0, %s167
      %s170 = sphi 0, %s169
      %s184 = sphi 0, %s170
      %s188 = sphi 0, %s188
      %s190 = sphi 0, %s188
      %s191 = sphi 0, %s190
      %s205 = sphi 0, %s191
      %s209 = sphi 0, %s209
      %s211 = sphi 0, %s209
      %s212 = sphi 0, %s211
      %s226 = sphi 0, %s212
      %s230 = sphi 0, %s230
      %s232 = sphi 0, %s230
      %s233 = sphi 0, %s232
      %s247 = sphi 0, %s233
    $region4: #{net_forward.3} parent=1 // loop_header_branch
      %26 = sbr.rel (%p24) target = $region8
    $region5: #{net_forward.3} parent=1 // loop_body
      %s28 = ssub.s32 %s23, 1
      %s29 = ssub.s32 %s23, 2
      %s30 = sadd.s32 %s23, 1
      %s31 = ssub.s32 %s23, %s30
      %p32 = scmp.eq.s32.totalorder %s31, 0
      %s34 = sadd.s32 %s33, 1
      %s35 = scalar_select %p32, %s33, %s34
      %p38 = pneg %p32
      %p39 = scmp.eq.s32.totalorder %s23, 4
      %p40 = por %p38, %p39
      %p41 = scmp.ne.s32.totalorder %s33, %s36
      %p42 = scmp.eq.s32.totalorder %s23, 0
      %p43 = por %p41, %p42
      %p44 = scmp.ne.s32.totalorder %s33, %s36
      %p45 = scmp.eq.s32.totalorder %s28, 4
      %p46 = por %p44, %p45
      %p47 = scmp.ne.s32.totalorder %s36, %s37
      %p48 = scmp.eq.s32.totalorder %s28, 0
      %p49 = por %p47, %p48
      %p50 = scmp.ne.s32.totalorder %s36, %s37
      %p51 = scmp.eq.s32.totalorder %s29, 4
      %p52 = por %p50, %p51
      %p54 = scmp.ne.s32.totalorder %s37, %s53
      %p55 = scmp.eq.s32.totalorder %s29, 0
      %p56 = por %p54, %p55
      %s57 = ssub.s32 %s23, %s30
      %p58 = scmp.eq.s32.totalorder %s57, 0
      %s60 = sadd.s32 %s59, 1
      %s61 = scalar_select %p58, %s59, %s60
      %p64 = pneg %p58
      %p65 = scmp.eq.s32.totalorder %s23, 4
      %p66 = por %p64, %p65
      %p67 = scmp.ne.s32.totalorder %s59, %s62
      %p68 = scmp.eq.s32.totalorder %s23, 0
      %p69 = por %p67, %p68
      %p70 = scmp.ne.s32.totalorder %s59, %s62
      %p71 = scmp.eq.s32.totalorder %s28, 4
      %p72 = por %p70, %p71
      %p73 = scmp.ne.s32.totalorder %s62, %s63
      %p74 = scmp.eq.s32.totalorder %s28, 0
      %p75 = por %p73, %p74
      %p76 = scmp.ne.s32.totalorder %s62, %s63
      %p77 = scmp.eq.s32.totalorder %s29, 4
      %p78 = por %p76, %p77
      %p80 = scmp.ne.s32.totalorder %s63, %s79
      %p81 = scmp.eq.s32.totalorder %s29, 0
      %p82 = por %p80, %p81
      %s84 = sadd.s32 %s83, 1
      %p87 = scmp.eq.s32.totalorder %s23, 4
      %p88 = scmp.ne.s32.totalorder %s83, %s85
      %p89 = scmp.eq.s32.totalorder %s23, 0
      %p90 = por %p88, %p89
      %p91 = scmp.ne.s32.totalorder %s83, %s85
      %p92 = scmp.eq.s32.totalorder %s28, 4
      %p93 = por %p91, %p92
      %p94 = scmp.ne.s32.totalorder %s85, %s86
      %p95 = scmp.eq.s32.totalorder %s28, 0
      %p96 = por %p94, %p95
      %p97 = scmp.ne.s32.totalorder %s85, %s86
      %p98 = scmp.eq.s32.totalorder %s29, 4
      %p99 = por %p97, %p98
      %p101 = scmp.ne.s32.totalorder %s86, %s100
      %p102 = scmp.eq.s32.totalorder %s29, 0
      %p103 = por %p101, %p102
      %s105 = sadd.s32 %s104, 1
      %p108 = scmp.eq.s32.totalorder %s23, 4
      %p109 = scmp.ne.s32.totalorder %s104, %s106
      %p110 = scmp.eq.s32.totalorder %s23, 0
      %p111 = por %p109, %p110
      %p112 = scmp.ne.s32.totalorder %s104, %s106
      %p113 = scmp.eq.s32.totalorder %s28, 4
      %p114 = por %p112, %p113
      %p115 = scmp.ne.s32.totalorder %s106, %s107
      %p116 = scmp.eq.s32.totalorder %s28, 0
      %p117 = por %p115, %p116
      %p118 = scmp.ne.s32.totalorder %s106, %s107
      %p119 = scmp.eq.s32.totalorder %s29, 4
      %p120 = por %p118, %p119
      %p122 = scmp.ne.s32.totalorder %s107, %s121
      %p123 = scmp.eq.s32.totalorder %s29, 0
      %p124 = por %p122, %p123
      %s126 = sadd.s32 %s125, 1
      %p129 = scmp.eq.s32.totalorder %s23, 4
      %p130 = scmp.ne.s32.totalorder %s125, %s127
      %p131 = scmp.eq.s32.totalorder %s23, 0
      %p132 = por %p130, %p131
      %p133 = scmp.ne.s32.totalorder %s125, %s127
      %p134 = scmp.eq.s32.totalorder %s28, 4
      %p135 = por %p133, %p134
      %p136 = scmp.ne.s32.totalorder %s127, %s128
      %p137 = scmp.eq.s32.totalorder %s28, 0
      %p138 = por %p136, %p137
      %p139 = scmp.ne.s32.totalorder %s127, %s128
      %p140 = scmp.eq.s32.totalorder %s29, 4
      %p141 = por %p139, %p140
      %p143 = scmp.ne.s32.totalorder %s128, %s142
      %p144 = scmp.eq.s32.totalorder %s29, 0
      %p145 = por %p143, %p144
      %s147 = sadd.s32 %s146, 1
      %p150 = scmp.eq.s32.totalorder %s23, 4
      %p151 = scmp.ne.s32.totalorder %s146, %s148
      %p152 = scmp.eq.s32.totalorder %s23, 0
      %p153 = por %p151, %p152
      %p154 = scmp.ne.s32.totalorder %s146, %s148
      %p155 = scmp.eq.s32.totalorder %s28, 4
      %p156 = por %p154, %p155
      %p157 = scmp.ne.s32.totalorder %s148, %s149
      %p158 = scmp.eq.s32.totalorder %s28, 0
      %p159 = por %p157, %p158
      %p160 = scmp.ne.s32.totalorder %s148, %s149
      %p161 = scmp.eq.s32.totalorder %s29, 4
      %p162 = por %p160, %p161
      %p164 = scmp.ne.s32.totalorder %s149, %s163
      %p165 = scmp.eq.s32.totalorder %s29, 0
      %p166 = por %p164, %p165
      %s168 = sadd.s32 %s167, 1
      %p171 = scmp.eq.s32.totalorder %s23, 4
      %p172 = scmp.ne.s32.totalorder %s167, %s169
      %p173 = scmp.eq.s32.totalorder %s23, 0
      %p174 = por %p172, %p173
      %p175 = scmp.ne.s32.totalorder %s167, %s169
      %p176 = scmp.eq.s32.totalorder %s28, 4
      %p177 = por %p175, %p176
      %p178 = scmp.ne.s32.totalorder %s169, %s170
      %p179 = scmp.eq.s32.totalorder %s28, 0
      %p180 = por %p178, %p179
      %p181 = scmp.ne.s32.totalorder %s169, %s170
      %p182 = scmp.eq.s32.totalorder %s29, 4
      %p183 = por %p181, %p182
      %p185 = scmp.ne.s32.totalorder %s170, %s184
      %p186 = scmp.eq.s32.totalorder %s29, 0
      %p187 = por %p185, %p186
      %s189 = sadd.s32 %s188, 1
      %p192 = scmp.eq.s32.totalorder %s23, 4
      %p193 = scmp.ne.s32.totalorder %s188, %s190
      %p194 = scmp.eq.s32.totalorder %s23, 0
      %p195 = por %p193, %p194
      %p196 = scmp.ne.s32.totalorder %s188, %s190
      %p197 = scmp.eq.s32.totalorder %s28, 4
      %p198 = por %p196, %p197
      %p199 = scmp.ne.s32.totalorder %s190, %s191
      %p200 = scmp.eq.s32.totalorder %s28, 0
      %p201 = por %p199, %p200
      %p202 = scmp.ne.s32.totalorder %s190, %s191
      %p203 = scmp.eq.s32.totalorder %s29, 4
      %p204 = por %p202, %p203
      %p206 = scmp.ne.s32.totalorder %s191, %s205
      %p207 = scmp.eq.s32.totalorder %s29, 0
      %p208 = por %p206, %p207
      %s210 = sadd.s32 %s209, 1
      %p213 = scmp.eq.s32.totalorder %s23, 4
      %p214 = scmp.ne.s32.totalorder %s209, %s211
      %p215 = scmp.eq.s32.totalorder %s23, 0
      %p216 = por %p214, %p215
      %p217 = scmp.ne.s32.totalorder %s209, %s211
      %p218 = scmp.eq.s32.totalorder %s28, 4
      %p219 = por %p217, %p218
      %p220 = scmp.ne.s32.totalorder %s211, %s212
      %p221 = scmp.eq.s32.totalorder %s28, 0
      %p222 = por %p220, %p221
      %p223 = scmp.ne.s32.totalorder %s211, %s212
      %p224 = scmp.eq.s32.totalorder %s29, 4
      %p225 = por %p223, %p224
      %p227 = scmp.ne.s32.totalorder %s212, %s226
      %p228 = scmp.eq.s32.totalorder %s29, 0
      %p229 = por %p227, %p228
      %s231 = sadd.s32 %s230, 1
      %p234 = scmp.eq.s32.totalorder %s23, 4
      %p235 = scmp.ne.s32.totalorder %s230, %s232
      %p236 = scmp.eq.s32.totalorder %s23, 0
      %p237 = por %p235, %p236
      %p238 = scmp.ne.s32.totalorder %s230, %s232
      %p239 = scmp.eq.s32.totalorder %s28, 4
      %p240 = por %p238, %p239
      %p241 = scmp.ne.s32.totalorder %s232, %s233
      %p242 = scmp.eq.s32.totalorder %s28, 0
      %p243 = por %p241, %p242
      %p244 = scmp.ne.s32.totalorder %s232, %s233
      %p245 = scmp.eq.s32.totalorder %s29, 4
      %p246 = por %p244, %p245
      %p248 = scmp.ne.s32.totalorder %s233, %s247
      %p249 = scmp.eq.s32.totalorder %s29, 0
      %p250 = por %p248, %p249
      %p251 = scmp.le.s32.totalorder 1, %s23
      %p252 = scmp.lt.s32.totalorder %s23, 6
      %p253 = pnand %p251, %p252
      %p254 = pneg %p253
      // Predicated region
      $region9: #{net_forward.3} parent=5 // pred_check
        _
      $region10: #{net_forward.3} parent=5 // pred_check_branch
        %256 = sbr.rel (%p253) target = $region12
      $region11: #{net_forward.3} parent=5 // pred_region
        %s257 = ssub.s32 %s23, 1
        // Predicated region
        $region13: #{net_forward.3} parent=11 // pred_check
          %p258 = pneg %p96
        $region14: #{net_forward.3} parent=11 // pred_check_branch
          %260 = sbr.rel (%p258) target = $region16
        $region15: #{net_forward.3} parent=11 // pred_region
          %s262 = ssub.s32 64, 64
          %263 = vsyncadd [#allocation7], %s262
          %s265 = sshll.u32 [#allocation6], 4
          %s266 = int_to_ptr.vmem [resolvable:$true] %s265
          %268 = dma.hbm_to_vmem [thread:$0]  %s2, 64, %s266, [#allocation7]
        $region16: #{net_forward.3} parent=11 // pred_fallthru
          _
        // Predicated region
        $region17: #{net_forward.3} parent=11 // pred_check
          %p269 = pneg %p117
        $region18: #{net_forward.3} parent=11 // pred_check_branch
          %271 = sbr.rel (%p269) target = $region20
        $region19: #{net_forward.3} parent=11 // pred_region
          %s273 = ssub.s32 8192, 8192
          %274 = vsyncadd [#allocation7], %s273
          %s275 = sshll.u32 [#allocation8], 4
          %s276 = int_to_ptr.vmem [resolvable:$true] %s275
          %281 = dma.hbm_to_vmem [thread:$0]  %s3, 8192, %s276, [#allocation7], 128, 128, 8
        $region20: #{net_forward.3} parent=11 // pred_fallthru
          _
        // Predicated region
        $region21: #{net_forward.3} parent=11 // pred_check
          %p282 = pneg %p138
        $region22: #{net_forward.3} parent=11 // pred_check_branch
          %284 = sbr.rel (%p282) target = $region24
        $region23: #{net_forward.3} parent=11 // pred_region
          %s286 = ssub.s32 32, 32
          %287 = vsyncadd [#allocation10], %s286
          %s289 = sshll.u32 [#allocation9], 4
          %s290 = int_to_ptr.vmem [resolvable:$true] %s289
          %292 = dma.hbm_to_vmem [thread:$0]  %s4, 32, %s290, [#allocation10]
        $region24: #{net_forward.3} parent=11 // pred_fallthru
          _
        // Predicated region
        $region25: #{net_forward.3} parent=11 // pred_check
          %p293 = pneg %p159
        $region26: #{net_forward.3} parent=11 // pred_check_branch
          %295 = sbr.rel (%p293) target = $region28
        $region27: #{net_forward.3} parent=11 // pred_region
          %s297 = ssub.s32 2048, 2048
          %298 = vsyncadd [#allocation10], %s297
          %s299 = sshll.u32 [#allocation11], 4
          %s300 = int_to_ptr.vmem [resolvable:$true] %s299
          %305 = dma.hbm_to_vmem [thread:$0]  %s5, 2048, %s300, [#allocation10], 64, 64, 4
        $region28: #{net_forward.3} parent=11 // pred_fallthru
          _
        // Predicated region
        $region29: #{net_forward.3} parent=11 // pred_check
          %p306 = pneg %p180
        $region30: #{net_forward.3} parent=11 // pred_check_branch
          %308 = sbr.rel (%p306) target = $region32
        $region31: #{net_forward.3} parent=11 // pred_region
          %s310 = ssub.s32 16, 16
          %311 = vsyncadd [#allocation13], %s310
          %s313 = sshll.u32 [#allocation12], 4
          %s314 = int_to_ptr.vmem [resolvable:$true] %s313
          %316 = dma.hbm_to_vmem [thread:$0]  %s6, 16, %s314, [#allocation13]
        $region32: #{net_forward.3} parent=11 // pred_fallthru
          _
        // Predicated region
        $region33: #{net_forward.3} parent=11 // pred_check
          %p317 = pneg %p201
        $region34: #{net_forward.3} parent=11 // pred_check_branch
          %319 = sbr.rel (%p317) target = $region36
        $region35: #{net_forward.3} parent=11 // pred_region
          _
        $region36: #{net_forward.3} parent=11 // pred_fallthru
          _
        // Predicated region
        $region37: #{net_forward.3} parent=11 // pred_check
          %p320 = pneg %p222
        $region38: #{net_forward.3} parent=11 // pred_check_branch
          %322 = sbr.rel (%p320) target = $region40
        $region39: #{net_forward.3} parent=11 // pred_region
          _
        $region40: #{net_forward.3} parent=11 // pred_fallthru
          _
      $region12: #{net_forward.3} parent=5 // pred_fallthru
        _
      %p323 = scmp.lt.s32.totalorder %s23, 5
      // Predicated region
      $region41: #{net_forward.3} parent=5 // pred_check
        %p324 = pneg %p323
      $region42: #{net_forward.3} parent=5 // pred_check_branch
        %326 = sbr.rel (%p324) target = $region44
      $region43: #{net_forward.3} parent=5 // pred_region
        // Predicated region
        $region45: #{net_forward.3} parent=43 // pred_check
          %p327 = pneg %p43
        $region46: #{net_forward.3} parent=43 // pred_check_branch
          %329 = sbr.rel (%p327) target = $region48
        $region47: #{net_forward.3} parent=43 // pred_region
          %s330 = smul.u32 25, %s23
          %p331 = scmp.lt.s32.totalorder %s330, 124
          %s332 = scalar_select %p331, %s330, 124
          %s333 = smul.addr %s332, 2
          %s334 = scalar_lea.vmem %s0, %s333
          %s335 = smul.u32 25, %s23
        $region48: #{net_forward.3} parent=43 // pred_fallthru
          _
        // Predicated region
        $region49: #{net_forward.3} parent=43 // pred_check
          %p336 = pneg %p69
        $region50: #{net_forward.3} parent=43 // pred_check_branch
          %338 = sbr.rel (%p336) target = $region52
        $region51: #{net_forward.3} parent=43 // pred_region
          %s339 = sand.u32 %s59, 1
          %s340 = scalar_lea.sflag [#allocation5], %s339
          %s341 = sand.u32 %s59, 1
          %s342 = smul.addr %s341, 6400
          %s343 = scalar_lea.vmem [#allocation4], %s342
          %s344 = smul.u32 400, %s23
          %s346 = ssub.s32 102400, 102400
          %347 = vsyncadd %s340, %s346
          %s348 = smul.addr %s344, 4
          %s349 = smul.addr %s348, 64
          %s350 = scalar_lea.hbm %s1, %s349
          %s351 = sshll.u32 %s343, 4
          %s352 = int_to_ptr.vmem [resolvable:$true] %s351
          %357 = dma.hbm_to_vmem [thread:$0]  %s350, 102400, %s352, %s340, 256, 256, 16
        $region52: #{net_forward.3} parent=43 // pred_fallthru
          _
      $region44: #{net_forward.3} parent=5 // pred_fallthru
        _
      %p358 = scmp.le.s32.totalorder 1, %s23
      %p359 = scmp.lt.s32.totalorder %s23, 6
      %p360 = pnand %p358, %p359
      %p361 = pneg %p360
      // Predicated region
      $region53: #{net_forward.3} parent=5 // pred_check
        _
      $region54: #{net_forward.3} parent=5 // pred_check_branch
        %363 = sbr.rel (%p360) target = $region56
      $region55: #{net_forward.3} parent=5 // pred_region
        %s364 = ssub.s32 %s23, 1
        %s365 = sand.u32 %s62, 1
        %s366 = scalar_lea.sflag [#allocation5], %s365
        %s367 = sand.u32 %s62, 1
        %s368 = smul.addr %s367, 6400
        %s369 = scalar_lea.vmem [#allocation4], %s368
        // Predicated region
        $region57: #{net_forward.3} parent=55 // pred_check
          %p370 = pneg %p75
        $region58: #{net_forward.3} parent=55 // pred_check_branch
          %372 = sbr.rel (%p370) target = $region60
        $region59: #{net_forward.3} parent=55 // pred_region
          %373 = dma.done %s366, 102400
        $region60: #{net_forward.3} parent=55 // pred_fallthru
          _
        // Predicated region
        $region61: #{net_forward.3} parent=55 // pred_check
          %p374 = pneg %p96
        $region62: #{net_forward.3} parent=55 // pred_check_branch
          %376 = sbr.rel (%p374) target = $region64
        $region63: #{net_forward.3} parent=55 // pred_region
          %377 = dma.done [#allocation7], 64
        $region64: #{net_forward.3} parent=55 // pred_fallthru
          _
        // Predicated region
        $region65: #{net_forward.3} parent=55 // pred_check
          %p378 = pneg %p117
        $region66: #{net_forward.3} parent=55 // pred_check_branch
          %380 = sbr.rel (%p378) target = $region68
        $region67: #{net_forward.3} parent=55 // pred_region
          %381 = dma.done [#allocation7], 8192
        $region68: #{net_forward.3} parent=55 // pred_fallthru
          _
        // Predicated region
        $region69: #{net_forward.3} parent=55 // pred_check
          %p382 = pneg %p138
        $region70: #{net_forward.3} parent=55 // pred_check_branch
          %384 = sbr.rel (%p382) target = $region72
        $region71: #{net_forward.3} parent=55 // pred_region
          %385 = dma.done [#allocation10], 32
        $region72: #{net_forward.3} parent=55 // pred_fallthru
          _
        // Predicated region
        $region73: #{net_forward.3} parent=55 // pred_check
          %p386 = pneg %p159
        $region74: #{net_forward.3} parent=55 // pred_check_branch
          %388 = sbr.rel (%p386) target = $region76
        $region75: #{net_forward.3} parent=55 // pred_region
          %389 = dma.done [#allocation10], 2048
        $region76: #{net_forward.3} parent=55 // pred_fallthru
          _
        // Predicated region
        $region77: #{net_forward.3} parent=55 // pred_check
          %p390 = pneg %p180
        $region78: #{net_forward.3} parent=55 // pred_check_branch
          %392 = sbr.rel (%p390) target = $region80
        $region79: #{net_forward.3} parent=55 // pred_region
          %393 = dma.done [#allocation13], 16
        $region80: #{net_forward.3} parent=55 // pred_fallthru
          _
        %s394 = smul.u32 25, %s28
        %p395 = scmp.lt.s32.totalorder %s394, 124
        %s396 = scalar_select %p395, %s394, 124
        %s397 = smul.addr %s396, 2
        %s398 = scalar_lea.vmem %s0, %s397
        %p399 = pneg %p49
        %p400 = pneg %p46
        %s401 = sand.u32 %s62, 1
        %s402 = scalar_lea.sflag [#allocation5], %s401
        %s403 = sand.u32 %s62, 1
        %s404 = smul.addr %s403, 6400
        %s405 = scalar_lea.vmem [#allocation4], %s404
        %p406 = pneg %p75
        %p407 = pneg %p72
        %p408 = pneg %p96
        %p409 = pneg %p93
        %p410 = pneg %p117
        %p411 = pneg %p114
        %p412 = pneg %p138
        %p413 = pneg %p135
        %p414 = pneg %p159
        %p415 = pneg %p156
        %p416 = pneg %p180
        %p417 = pneg %p177
        %p418 = pneg %p201
        %p419 = pneg %p198
        %p420 = pneg %p222
        %p421 = pneg %p219
        %p422 = pneg %p243
        %p423 = pneg %p240
        %s424 = smul.u32 25, %s28
        %p425 = scmp.lt.s32.totalorder %s424, 124
        %s426 = scalar_select %p425, %s424, 124
        %s427 = smul.addr %s426, 2
        %s428 = scalar_lea.vmem %s0, %s427
        %s429 = smul.u32 25, %s28
        %s430 = smul.u32 400, %s28
        %p432 = scmp.eq.s32.totalorder %s28, 0
        // Predicated region
        $region81: #{net_forward.3} parent=55 // pred_check
          %p433 = pneg %p432
        $region82: #{net_forward.3} parent=55 // pred_check_branch
          %435 = sbr.rel (%p433) target = $region84
        $region83: #{net_forward.3} parent=55 // pred_region
          %436 = vst [vmem:[#allocation2] sm:$0xff] 0.0
        $region84: #{net_forward.3} parent=55 // pred_fallthru
          _
        %v437 = vld [vmem:[#allocation2] sm:$0xff]
        %v438 = vld [vmem:[%s428] sm:$0xff]
        %v439 = vld [vmem:[%s428 + $0x8] sm:$0xff]
        %v440 = vld [vmem:[%s428 + $0x10] sm:$0xff]
        %v441 = vld [vmem:[%s428 + $0x18] sm:$0xff]
        %v442 = vld [vmem:[%s428 + $0x20] sm:$0xff]
        %v443 = vld [vmem:[%s428 + $0x28] sm:$0xff]
        %v444 = vld [vmem:[%s428 + $0x30] sm:$0x3]
        %v452 = vcombine.high %v438, %v438
        %v454 = vunpack.c.l.s4 1983009808
        %v455 = vunpack.c.0.s8 %v454
        %v456 = vlaneseq
        %v457 = vshrl.u32 %v456, 7
        %v458 = vsub.s32 %v455, %v457
        %v459 = vrot.slane %v438, %v458
        %v461 = vunpack.c.l.s4 1983009808
        %v462 = vunpack.c.0.s8 %v461
        %v463 = vlaneseq
        %v464 = vshrl.u32 %v463, 7
        %v465 = vsub.s32 %v462, %v464
        %v466 = vrot.slane %v452, %v465
        %v467 = vcombine.high %v459, %v459
        %v468 = vcombine.high %v466, %v466
        %v469 = vcombine.high %v439, %v439
        %v471 = vunpack.c.l.s4 1983009808
        %v472 = vunpack.c.0.s8 %v471
        %v473 = vlaneseq
        %v474 = vshrl.u32 %v473, 7
        %v475 = vsub.s32 %v472, %v474
        %v476 = vrot.slane %v439, %v475
        %v478 = vunpack.c.l.s4 1983009808
        %v479 = vunpack.c.0.s8 %v478
        %v480 = vlaneseq
        %v481 = vshrl.u32 %v480, 7
        %v482 = vsub.s32 %v479, %v481
        %v483 = vrot.slane %v469, %v482
        %v484 = vcombine.high %v476, %v476
        %v485 = vcombine.high %v483, %v483
        %v486 = vcombine.high %v440, %v440
        %v488 = vunpack.c.l.s4 1983009808
        %v489 = vunpack.c.0.s8 %v488
        %v490 = vlaneseq
        %v491 = vshrl.u32 %v490, 7
        %v492 = vsub.s32 %v489, %v491
        %v493 = vrot.slane %v440, %v492
        %v495 = vunpack.c.l.s4 1983009808
        %v496 = vunpack.c.0.s8 %v495
        %v497 = vlaneseq
        %v498 = vshrl.u32 %v497, 7
        %v499 = vsub.s32 %v496, %v498
        %v500 = vrot.slane %v486, %v499
        %v501 = vcombine.high %v493, %v493
        %v502 = vcombine.high %v500, %v500
        %v503 = vcombine.high %v441, %v441
        %v505 = vunpack.c.l.s4 1983009808
        %v506 = vunpack.c.0.s8 %v505
        %v507 = vlaneseq
        %v508 = vshrl.u32 %v507, 7
        %v509 = vsub.s32 %v506, %v508
        %v510 = vrot.slane %v441, %v509
        %v512 = vunpack.c.l.s4 1983009808
        %v513 = vunpack.c.0.s8 %v512
        %v514 = vlaneseq
        %v515 = vshrl.u32 %v514, 7
        %v516 = vsub.s32 %v513, %v515
        %v517 = vrot.slane %v503, %v516
        %v518 = vcombine.high %v510, %v510
        %v519 = vcombine.high %v517, %v517
        %v520 = vcombine.high %v442, %v442
        %v522 = vunpack.c.l.s4 1983009808
        %v523 = vunpack.c.0.s8 %v522
        %v524 = vlaneseq
        %v525 = vshrl.u32 %v524, 7
        %v526 = vsub.s32 %v523, %v525
        %v527 = vrot.slane %v442, %v526
        %v529 = vunpack.c.l.s4 1983009808
        %v530 = vunpack.c.0.s8 %v529
        %v531 = vlaneseq
        %v532 = vshrl.u32 %v531, 7
        %v533 = vsub.s32 %v530, %v532
        %v534 = vrot.slane %v520, %v533
        %v535 = vcombine.high %v527, %v527
        %v536 = vcombine.high %v534, %v534
        %v537 = vcombine.high %v443, %v443
        %v539 = vunpack.c.l.s4 1983009808
        %v540 = vunpack.c.0.s8 %v539
        %v541 = vlaneseq
        %v542 = vshrl.u32 %v541, 7
        %v543 = vsub.s32 %v540, %v542
        %v544 = vrot.slane %v443, %v543
        %v546 = vunpack.c.l.s4 1983009808
        %v547 = vunpack.c.0.s8 %v546
        %v548 = vlaneseq
        %v549 = vshrl.u32 %v548, 7
        %v550 = vsub.s32 %v547, %v549
        %v551 = vrot.slane %v537, %v550
        %v552 = vcombine.high %v544, %v544
        %v553 = vcombine.high %v551, %v551
        %v555 = vunpack.c.l.s4 1983009808
        %v556 = vunpack.c.0.s8 %v555
        %v557 = vlaneseq
        %v558 = vshrl.u32 %v557, 7
        %v559 = vsub.s32 %v556, %v558
        %v560 = vrot.slane %v444, %v559
        %v586 = vpack.c.bf16 %v459, %v459
        %v587 = vpack.c.bf16 %v467, %v467
        %v588 = vpack.c.bf16 %v466, %v466
        %v589 = vpack.c.bf16 %v468, %v468
        %v590 = vpack.c.bf16 %v476, %v476
        %v591 = vpack.c.bf16 %v484, %v484
        %v592 = vpack.c.bf16 %v483, %v483
        %v593 = vpack.c.bf16 %v485, %v485
        %v594 = vpack.c.bf16 %v493, %v493
        %v595 = vpack.c.bf16 %v501, %v501
        %v596 = vpack.c.bf16 %v500, %v500
        %v597 = vpack.c.bf16 %v502, %v502
        %v598 = vpack.c.bf16 %v510, %v510
        %v599 = vpack.c.bf16 %v518, %v518
        %v600 = vpack.c.bf16 %v517, %v517
        %v601 = vpack.c.bf16 %v519, %v519
        %v602 = vpack.c.bf16 %v527, %v527
        %v603 = vpack.c.bf16 %v535, %v535
        %v604 = vpack.c.bf16 %v534, %v534
        %v605 = vpack.c.bf16 %v536, %v536
        %v606 = vpack.c.bf16 %v544, %v544
        %v607 = vpack.c.bf16 %v552, %v552
        %v608 = vpack.c.bf16 %v551, %v551
        %v609 = vpack.c.bf16 %v553, %v553
        %v610 = vpack.c.bf16 %v560, %v560
        %v611 = vld [vmem:[%s369] sm:$0xff]
        %v612 = vld [vmem:[%s369 + $0x8] sm:$0xff]
        %v613 = vld [vmem:[%s369 + $0x10] sm:$0xff]
        %v614 = vld [vmem:[%s369 + $0x18] sm:$0xff]
        %v615 = vld [vmem:[%s369 + $0x20] sm:$0xff]
        %v616 = vld [vmem:[%s369 + $0x28] sm:$0xff]
        %v617 = vld [vmem:[%s369 + $0x30] sm:$0xff]
        %v618 = vld [vmem:[%s369 + $0x38] sm:$0xff]
        %v619 = vld [vmem:[%s369 + $0x40] sm:$0xff]
        %v620 = vld [vmem:[%s369 + $0x48] sm:$0xff]
        %v621 = vld [vmem:[%s369 + $0x50] sm:$0xff]
        %v622 = vld [vmem:[%s369 + $0x58] sm:$0xff]
        %v623 = vld [vmem:[%s369 + $0x60] sm:$0xff]
        %v624 = vld [vmem:[%s369 + $0x68] sm:$0xff]
        %v625 = vld [vmem:[%s369 + $0x70] sm:$0xff]
        %v626 = vld [vmem:[%s369 + $0x78] sm:$0xff]
        %v627 = vld [vmem:[%s369 + $0x80] sm:$0xff]
        %v628 = vld [vmem:[%s369 + $0x88] sm:$0xff]
        %v629 = vld [vmem:[%s369 + $0x90] sm:$0xff]
        %v630 = vld [vmem:[%s369 + $0x98] sm:$0xff]
        %v631 = vld [vmem:[%s369 + $0xa0] sm:$0xff]
        %v632 = vld [vmem:[%s369 + $0xa8] sm:$0xff]
        %v633 = vld [vmem:[%s369 + $0xb0] sm:$0xff]
        %v634 = vld [vmem:[%s369 + $0xb8] sm:$0xff]
        %v635 = vld [vmem:[%s369 + $0xc0] sm:$0xff]
        %v636 = vld [vmem:[%s369 + $0xc8] sm:$0xff]
        %v637 = vld [vmem:[%s369 + $0xd0] sm:$0xff]
        %v638 = vld [vmem:[%s369 + $0xd8] sm:$0xff]
        %v639 = vld [vmem:[%s369 + $0xe0] sm:$0xff]
        %v640 = vld [vmem:[%s369 + $0xe8] sm:$0xff]
        %v641 = vld [vmem:[%s369 + $0xf0] sm:$0xff]
        %v642 = vld [vmem:[%s369 + $0xf8] sm:$0xff]
        %v643 = vld [vmem:[%s369 + $0x100] sm:$0xff]
        %v644 = vld [vmem:[%s369 + $0x108] sm:$0xff]
        %v645 = vld [vmem:[%s369 + $0x110] sm:$0xff]
        %v646 = vld [vmem:[%s369 + $0x118] sm:$0xff]
        %v647 = vld [vmem:[%s369 + $0x120] sm:$0xff]
        %v648 = vld [vmem:[%s369 + $0x128] sm:$0xff]
        %v649 = vld [vmem:[%s369 + $0x130] sm:$0xff]
        %v650 = vld [vmem:[%s369 + $0x138] sm:$0xff]
        %v651 = vld [vmem:[%s369 + $0x140] sm:$0xff]
        %v652 = vld [vmem:[%s369 + $0x148] sm:$0xff]
        %v653 = vld [vmem:[%s369 + $0x150] sm:$0xff]
        %v654 = vld [vmem:[%s369 + $0x158] sm:$0xff]
        %v655 = vld [vmem:[%s369 + $0x160] sm:$0xff]
        %v656 = vld [vmem:[%s369 + $0x168] sm:$0xff]
        %v657 = vld [vmem:[%s369 + $0x170] sm:$0xff]
        %v658 = vld [vmem:[%s369 + $0x178] sm:$0xff]
        %v659 = vld [vmem:[%s369 + $0x180] sm:$0xff]
        %v660 = vld [vmem:[%s369 + $0x188] sm:$0xff]
        %v661 = vld [vmem:[%s369 + $0x190] sm:$0xff]
        %v662 = vld [vmem:[%s369 + $0x198] sm:$0xff]
        %v663 = vld [vmem:[%s369 + $0x1a0] sm:$0xff]
        %v664 = vld [vmem:[%s369 + $0x1a8] sm:$0xff]
        %v665 = vld [vmem:[%s369 + $0x1b0] sm:$0xff]
        %v666 = vld [vmem:[%s369 + $0x1b8] sm:$0xff]
        %v667 = vld [vmem:[%s369 + $0x1c0] sm:$0xff]
        %v668 = vld [vmem:[%s369 + $0x1c8] sm:$0xff]
        %v669 = vld [vmem:[%s369 + $0x1d0] sm:$0xff]
        %v670 = vld [vmem:[%s369 + $0x1d8] sm:$0xff]
        %v671 = vld [vmem:[%s369 + $0x1e0] sm:$0xff]
        %v672 = vld [vmem:[%s369 + $0x1e8] sm:$0xff]
        %v673 = vld [vmem:[%s369 + $0x1f0] sm:$0xff]
        %v674 = vld [vmem:[%s369 + $0x1f8] sm:$0xff]
        %v675 = vld [vmem:[%s369 + $0x200] sm:$0xff]
        %v676 = vld [vmem:[%s369 + $0x208] sm:$0xff]
        %v677 = vld [vmem:[%s369 + $0x210] sm:$0xff]
        %v678 = vld [vmem:[%s369 + $0x218] sm:$0xff]
        %v679 = vld [vmem:[%s369 + $0x220] sm:$0xff]
        %v680 = vld [vmem:[%s369 + $0x228] sm:$0xff]
        %v681 = vld [vmem:[%s369 + $0x230] sm:$0xff]
        %v682 = vld [vmem:[%s369 + $0x238] sm:$0xff]
        %v683 = vld [vmem:[%s369 + $0x240] sm:$0xff]
        %v684 = vld [vmem:[%s369 + $0x248] sm:$0xff]
        %v685 = vld [vmem:[%s369 + $0x250] sm:$0xff]
        %v686 = vld [vmem:[%s369 + $0x258] sm:$0xff]
        %v687 = vld [vmem:[%s369 + $0x260] sm:$0xff]
        %v688 = vld [vmem:[%s369 + $0x268] sm:$0xff]
        %v689 = vld [vmem:[%s369 + $0x270] sm:$0xff]
        %v690 = vld [vmem:[%s369 + $0x278] sm:$0xff]
        %v691 = vld [vmem:[%s369 + $0x280] sm:$0xff]
        %v692 = vld [vmem:[%s369 + $0x288] sm:$0xff]
        %v693 = vld [vmem:[%s369 + $0x290] sm:$0xff]
        %v694 = vld [vmem:[%s369 + $0x298] sm:$0xff]
        %v695 = vld [vmem:[%s369 + $0x2a0] sm:$0xff]
        %v696 = vld [vmem:[%s369 + $0x2a8] sm:$0xff]
        %v697 = vld [vmem:[%s369 + $0x2b0] sm:$0xff]
        %v698 = vld [vmem:[%s369 + $0x2b8] sm:$0xff]
        %v699 = vld [vmem:[%s369 + $0x2c0] sm:$0xff]
        %v700 = vld [vmem:[%s369 + $0x2c8] sm:$0xff]
        %v701 = vld [vmem:[%s369 + $0x2d0] sm:$0xff]
        %v702 = vld [vmem:[%s369 + $0x2d8] sm:$0xff]
        %v703 = vld [vmem:[%s369 + $0x2e0] sm:$0xff]
        %v704 = vld [vmem:[%s369 + $0x2e8] sm:$0xff]
        %v705 = vld [vmem:[%s369 + $0x2f0] sm:$0xff]
        %v706 = vld [vmem:[%s369 + $0x2f8] sm:$0xff]
        %v707 = vld [vmem:[%s369 + $0x300] sm:$0xff]
        %v708 = vld [vmem:[%s369 + $0x308] sm:$0xff]
        %v709 = vld [vmem:[%s369 + $0x310] sm:$0xff]
        %v710 = vld [vmem:[%s369 + $0x318] sm:$0xff]
        %v711 = vld [vmem:[%s369 + $0x320] sm:$0xff]
        %v712 = vld [vmem:[%s369 + $0x328] sm:$0xff]
        %v713 = vld [vmem:[%s369 + $0x330] sm:$0xff]
        %v714 = vld [vmem:[%s369 + $0x338] sm:$0xff]
        %v715 = vld [vmem:[%s369 + $0x340] sm:$0xff]
        %v716 = vld [vmem:[%s369 + $0x348] sm:$0xff]
        %v717 = vld [vmem:[%s369 + $0x350] sm:$0xff]
        %v718 = vld [vmem:[%s369 + $0x358] sm:$0xff]
        %v719 = vld [vmem:[%s369 + $0x360] sm:$0xff]
        %v720 = vld [vmem:[%s369 + $0x368] sm:$0xff]
        %v721 = vld [vmem:[%s369 + $0x370] sm:$0xff]
        %v722 = vld [vmem:[%s369 + $0x378] sm:$0xff]
        %v723 = vld [vmem:[%s369 + $0x380] sm:$0xff]
        %v724 = vld [vmem:[%s369 + $0x388] sm:$0xff]
        %v725 = vld [vmem:[%s369 + $0x390] sm:$0xff]
        %v726 = vld [vmem:[%s369 + $0x398] sm:$0xff]
        %v727 = vld [vmem:[%s369 + $0x3a0] sm:$0xff]
        %v728 = vld [vmem:[%s369 + $0x3a8] sm:$0xff]
        %v729 = vld [vmem:[%s369 + $0x3b0] sm:$0xff]
        %v730 = vld [vmem:[%s369 + $0x3b8] sm:$0xff]
        %v731 = vld [vmem:[%s369 + $0x3c0] sm:$0xff]
        %v732 = vld [vmem:[%s369 + $0x3c8] sm:$0xff]
        %v733 = vld [vmem:[%s369 + $0x3d0] sm:$0xff]
        %v734 = vld [vmem:[%s369 + $0x3d8] sm:$0xff]
        %v735 = vld [vmem:[%s369 + $0x3e0] sm:$0xff]
        %v736 = vld [vmem:[%s369 + $0x3e8] sm:$0xff]
        %v737 = vld [vmem:[%s369 + $0x3f0] sm:$0xff]
        %v738 = vld [vmem:[%s369 + $0x3f8] sm:$0xff]
        %v739 = vld [vmem:[%s369 + $0x400] sm:$0xff]
        %v740 = vld [vmem:[%s369 + $0x408] sm:$0xff]
        %v741 = vld [vmem:[%s369 + $0x410] sm:$0xff]
        %v742 = vld [vmem:[%s369 + $0x418] sm:$0xff]
        %v743 = vld [vmem:[%s369 + $0x420] sm:$0xff]
        %v744 = vld [vmem:[%s369 + $0x428] sm:$0xff]
        %v745 = vld [vmem:[%s369 + $0x430] sm:$0xff]
        %v746 = vld [vmem:[%s369 + $0x438] sm:$0xff]
        %v747 = vld [vmem:[%s369 + $0x440] sm:$0xff]
        %v748 = vld [vmem:[%s369 + $0x448] sm:$0xff]
        %v749 = vld [vmem:[%s369 + $0x450] sm:$0xff]
        %v750 = vld [vmem:[%s369 + $0x458] sm:$0xff]
        %v751 = vld [vmem:[%s369 + $0x460] sm:$0xff]
        %v752 = vld [vmem:[%s369 + $0x468] sm:$0xff]
        %v753 = vld [vmem:[%s369 + $0x470] sm:$0xff]
        %v754 = vld [vmem:[%s369 + $0x478] sm:$0xff]
        %v755 = vld [vmem:[%s369 + $0x480] sm:$0xff]
        %v756 = vld [vmem:[%s369 + $0x488] sm:$0xff]
        %v757 = vld [vmem:[%s369 + $0x490] sm:$0xff]
        %v758 = vld [vmem:[%s369 + $0x498] sm:$0xff]
        %v759 = vld [vmem:[%s369 + $0x4a0] sm:$0xff]
        %v760 = vld [vmem:[%s369 + $0x4a8] sm:$0xff]
        %v761 = vld [vmem:[%s369 + $0x4b0] sm:$0xff]
        %v762 = vld [vmem:[%s369 + $0x4b8] sm:$0xff]
        %v763 = vld [vmem:[%s369 + $0x4c0] sm:$0xff]
        %v764 = vld [vmem:[%s369 + $0x4c8] sm:$0xff]
        %v765 = vld [vmem:[%s369 + $0x4d0] sm:$0xff]
        %v766 = vld [vmem:[%s369 + $0x4d8] sm:$0xff]
        %v767 = vld [vmem:[%s369 + $0x4e0] sm:$0xff]
        %v768 = vld [vmem:[%s369 + $0x4e8] sm:$0xff]
        %v769 = vld [vmem:[%s369 + $0x4f0] sm:$0xff]
        %v770 = vld [vmem:[%s369 + $0x4f8] sm:$0xff]
        %v771 = vld [vmem:[%s369 + $0x500] sm:$0xff]
        %v772 = vld [vmem:[%s369 + $0x508] sm:$0xff]
        %v773 = vld [vmem:[%s369 + $0x510] sm:$0xff]
        %v774 = vld [vmem:[%s369 + $0x518] sm:$0xff]
        %v775 = vld [vmem:[%s369 + $0x520] sm:$0xff]
        %v776 = vld [vmem:[%s369 + $0x528] sm:$0xff]
        %v777 = vld [vmem:[%s369 + $0x530] sm:$0xff]
        %v778 = vld [vmem:[%s369 + $0x538] sm:$0xff]
        %v779 = vld [vmem:[%s369 + $0x540] sm:$0xff]
        %v780 = vld [vmem:[%s369 + $0x548] sm:$0xff]
        %v781 = vld [vmem:[%s369 + $0x550] sm:$0xff]
        %v782 = vld [vmem:[%s369 + $0x558] sm:$0xff]
        %v783 = vld [vmem:[%s369 + $0x560] sm:$0xff]
        %v784 = vld [vmem:[%s369 + $0x568] sm:$0xff]
        %v785 = vld [vmem:[%s369 + $0x570] sm:$0xff]
        %v786 = vld [vmem:[%s369 + $0x578] sm:$0xff]
        %v787 = vld [vmem:[%s369 + $0x580] sm:$0xff]
        %v788 = vld [vmem:[%s369 + $0x588] sm:$0xff]
        %v789 = vld [vmem:[%s369 + $0x590] sm:$0xff]
        %v790 = vld [vmem:[%s369 + $0x598] sm:$0xff]
        %v791 = vld [vmem:[%s369 + $0x5a0] sm:$0xff]
        %v792 = vld [vmem:[%s369 + $0x5a8] sm:$0xff]
        %v793 = vld [vmem:[%s369 + $0x5b0] sm:$0xff]
        %v794 = vld [vmem:[%s369 + $0x5b8] sm:$0xff]
        %v795 = vld [vmem:[%s369 + $0x5c0] sm:$0xff]
        %v796 = vld [vmem:[%s369 + $0x5c8] sm:$0xff]
        %v797 = vld [vmem:[%s369 + $0x5d0] sm:$0xff]
        %v798 = vld [vmem:[%s369 + $0x5d8] sm:$0xff]
        %v799 = vld [vmem:[%s369 + $0x5e0] sm:$0xff]
        %v800 = vld [vmem:[%s369 + $0x5e8] sm:$0xff]
        %v801 = vld [vmem:[%s369 + $0x5f0] sm:$0xff]
        %v802 = vld [vmem:[%s369 + $0x5f8] sm:$0xff]
        %v803 = vld [vmem:[%s369 + $0x600] sm:$0xff]
        %v804 = vld [vmem:[%s369 + $0x608] sm:$0xff]
        %v805 = vld [vmem:[%s369 + $0x610] sm:$0xff]
        %v806 = vld [vmem:[%s369 + $0x618] sm:$0xff]
        %v807 = vld [vmem:[%s369 + $0x620] sm:$0xff]
        %v808 = vld [vmem:[%s369 + $0x628] sm:$0xff]
        %v809 = vld [vmem:[%s369 + $0x630] sm:$0xff]
        %v810 = vld [vmem:[%s369 + $0x638] sm:$0xff]
        %v811 = vld [vmem:[%s369 + $0x640] sm:$0xff]
        %v812 = vld [vmem:[%s369 + $0x648] sm:$0xff]
        %v813 = vld [vmem:[%s369 + $0x650] sm:$0xff]
        %v814 = vld [vmem:[%s369 + $0x658] sm:$0xff]
        %v815 = vld [vmem:[%s369 + $0x660] sm:$0xff]
        %v816 = vld [vmem:[%s369 + $0x668] sm:$0xff]
        %v817 = vld [vmem:[%s369 + $0x670] sm:$0xff]
        %v818 = vld [vmem:[%s369 + $0x678] sm:$0xff]
        %v819 = vld [vmem:[%s369 + $0x680] sm:$0xff]
        %v820 = vld [vmem:[%s369 + $0x688] sm:$0xff]
        %v821 = vld [vmem:[%s369 + $0x690] sm:$0xff]
        %v822 = vld [vmem:[%s369 + $0x698] sm:$0xff]
        %v823 = vld [vmem:[%s369 + $0x6a0] sm:$0xff]
        %v824 = vld [vmem:[%s369 + $0x6a8] sm:$0xff]
        %v825 = vld [vmem:[%s369 + $0x6b0] sm:$0xff]
        %v826 = vld [vmem:[%s369 + $0x6b8] sm:$0xff]
        %v827 = vld [vmem:[%s369 + $0x6c0] sm:$0xff]
        %v828 = vld [vmem:[%s369 + $0x6c8] sm:$0xff]
        %v829 = vld [vmem:[%s369 + $0x6d0] sm:$0xff]
        %v830 = vld [vmem:[%s369 + $0x6d8] sm:$0xff]
        %v831 = vld [vmem:[%s369 + $0x6e0] sm:$0xff]
        %v832 = vld [vmem:[%s369 + $0x6e8] sm:$0xff]
        %v833 = vld [vmem:[%s369 + $0x6f0] sm:$0xff]
        %v834 = vld [vmem:[%s369 + $0x6f8] sm:$0xff]
        %v835 = vld [vmem:[%s369 + $0x700] sm:$0xff]
        %v836 = vld [vmem:[%s369 + $0x708] sm:$0xff]
        %v837 = vld [vmem:[%s369 + $0x710] sm:$0xff]
        %v838 = vld [vmem:[%s369 + $0x718] sm:$0xff]
        %v839 = vld [vmem:[%s369 + $0x720] sm:$0xff]
        %v840 = vld [vmem:[%s369 + $0x728] sm:$0xff]
        %v841 = vld [vmem:[%s369 + $0x730] sm:$0xff]
        %v842 = vld [vmem:[%s369 + $0x738] sm:$0xff]
        %v843 = vld [vmem:[%s369 + $0x740] sm:$0xff]
        %v844 = vld [vmem:[%s369 + $0x748] sm:$0xff]
        %v845 = vld [vmem:[%s369 + $0x750] sm:$0xff]
        %v846 = vld [vmem:[%s369 + $0x758] sm:$0xff]
        %v847 = vld [vmem:[%s369 + $0x760] sm:$0xff]
        %v848 = vld [vmem:[%s369 + $0x768] sm:$0xff]
        %v849 = vld [vmem:[%s369 + $0x770] sm:$0xff]
        %v850 = vld [vmem:[%s369 + $0x778] sm:$0xff]
        %v851 = vld [vmem:[%s369 + $0x780] sm:$0xff]
        %v852 = vld [vmem:[%s369 + $0x788] sm:$0xff]
        %v853 = vld [vmem:[%s369 + $0x790] sm:$0xff]
        %v854 = vld [vmem:[%s369 + $0x798] sm:$0xff]
        %v855 = vld [vmem:[%s369 + $0x7a0] sm:$0xff]
        %v856 = vld [vmem:[%s369 + $0x7a8] sm:$0xff]
        %v857 = vld [vmem:[%s369 + $0x7b0] sm:$0xff]
        %v858 = vld [vmem:[%s369 + $0x7b8] sm:$0xff]
        %v859 = vld [vmem:[%s369 + $0x7c0] sm:$0xff]
        %v860 = vld [vmem:[%s369 + $0x7c8] sm:$0xff]
        %v861 = vld [vmem:[%s369 + $0x7d0] sm:$0xff]
        %v862 = vld [vmem:[%s369 + $0x7d8] sm:$0xff]
        %v863 = vld [vmem:[%s369 + $0x7e0] sm:$0xff]
        %v864 = vld [vmem:[%s369 + $0x7e8] sm:$0xff]
        %v865 = vld [vmem:[%s369 + $0x7f0] sm:$0xff]
        %v866 = vld [vmem:[%s369 + $0x7f8] sm:$0xff]
        %v867 = vld [vmem:[%s369 + $0x800] sm:$0xff]
        %v868 = vld [vmem:[%s369 + $0x808] sm:$0xff]
        %v869 = vld [vmem:[%s369 + $0x810] sm:$0xff]
        %v870 = vld [vmem:[%s369 + $0x818] sm:$0xff]
        %v871 = vld [vmem:[%s369 + $0x820] sm:$0xff]
        %v872 = vld [vmem:[%s369 + $0x828] sm:$0xff]
        %v873 = vld [vmem:[%s369 + $0x830] sm:$0xff]
        %v874 = vld [vmem:[%s369 + $0x838] sm:$0xff]
        %v875 = vld [vmem:[%s369 + $0x840] sm:$0xff]
        %v876 = vld [vmem:[%s369 + $0x848] sm:$0xff]
        %v877 = vld [vmem:[%s369 + $0x850] sm:$0xff]
        %v878 = vld [vmem:[%s369 + $0x858] sm:$0xff]
        %v879 = vld [vmem:[%s369 + $0x860] sm:$0xff]
        %v880 = vld [vmem:[%s369 + $0x868] sm:$0xff]
        %v881 = vld [vmem:[%s369 + $0x870] sm:$0xff]
        %v882 = vld [vmem:[%s369 + $0x878] sm:$0xff]
        %v883 = vld [vmem:[%s369 + $0x880] sm:$0xff]
        %v884 = vld [vmem:[%s369 + $0x888] sm:$0xff]
        %v885 = vld [vmem:[%s369 + $0x890] sm:$0xff]
        %v886 = vld [vmem:[%s369 + $0x898] sm:$0xff]
        %v887 = vld [vmem:[%s369 + $0x8a0] sm:$0xff]
        %v888 = vld [vmem:[%s369 + $0x8a8] sm:$0xff]
        %v889 = vld [vmem:[%s369 + $0x8b0] sm:$0xff]
        %v890 = vld [vmem:[%s369 + $0x8b8] sm:$0xff]
        %v891 = vld [vmem:[%s369 + $0x8c0] sm:$0xff]
        %v892 = vld [vmem:[%s369 + $0x8c8] sm:$0xff]
        %v893 = vld [vmem:[%s369 + $0x8d0] sm:$0xff]
        %v894 = vld [vmem:[%s369 + $0x8d8] sm:$0xff]
        %v895 = vld [vmem:[%s369 + $0x8e0] sm:$0xff]
        %v896 = vld [vmem:[%s369 + $0x8e8] sm:$0xff]
        %v897 = vld [vmem:[%s369 + $0x8f0] sm:$0xff]
        %v898 = vld [vmem:[%s369 + $0x8f8] sm:$0xff]
        %v899 = vld [vmem:[%s369 + $0x900] sm:$0xff]
        %v900 = vld [vmem:[%s369 + $0x908] sm:$0xff]
        %v901 = vld [vmem:[%s369 + $0x910] sm:$0xff]
        %v902 = vld [vmem:[%s369 + $0x918] sm:$0xff]
        %v903 = vld [vmem:[%s369 + $0x920] sm:$0xff]
        %v904 = vld [vmem:[%s369 + $0x928] sm:$0xff]
        %v905 = vld [vmem:[%s369 + $0x930] sm:$0xff]
        %v906 = vld [vmem:[%s369 + $0x938] sm:$0xff]
        %v907 = vld [vmem:[%s369 + $0x940] sm:$0xff]
        %v908 = vld [vmem:[%s369 + $0x948] sm:$0xff]
        %v909 = vld [vmem:[%s369 + $0x950] sm:$0xff]
        %v910 = vld [vmem:[%s369 + $0x958] sm:$0xff]
        %v911 = vld [vmem:[%s369 + $0x960] sm:$0xff]
        %v912 = vld [vmem:[%s369 + $0x968] sm:$0xff]
        %v913 = vld [vmem:[%s369 + $0x970] sm:$0xff]
        %v914 = vld [vmem:[%s369 + $0x978] sm:$0xff]
        %v915 = vld [vmem:[%s369 + $0x980] sm:$0xff]
        %v916 = vld [vmem:[%s369 + $0x988] sm:$0xff]
        %v917 = vld [vmem:[%s369 + $0x990] sm:$0xff]
        %v918 = vld [vmem:[%s369 + $0x998] sm:$0xff]
        %v919 = vld [vmem:[%s369 + $0x9a0] sm:$0xff]
        %v920 = vld [vmem:[%s369 + $0x9a8] sm:$0xff]
        %v921 = vld [vmem:[%s369 + $0x9b0] sm:$0xff]
        %v922 = vld [vmem:[%s369 + $0x9b8] sm:$0xff]
        %v923 = vld [vmem:[%s369 + $0x9c0] sm:$0xff]
        %v924 = vld [vmem:[%s369 + $0x9c8] sm:$0xff]
        %v925 = vld [vmem:[%s369 + $0x9d0] sm:$0xff]
        %v926 = vld [vmem:[%s369 + $0x9d8] sm:$0xff]
        %v927 = vld [vmem:[%s369 + $0x9e0] sm:$0xff]
        %v928 = vld [vmem:[%s369 + $0x9e8] sm:$0xff]
        %v929 = vld [vmem:[%s369 + $0x9f0] sm:$0xff]
        %v930 = vld [vmem:[%s369 + $0x9f8] sm:$0xff]
        %v931 = vld [vmem:[%s369 + $0xa00] sm:$0xff]
        %v932 = vld [vmem:[%s369 + $0xa08] sm:$0xff]
        %v933 = vld [vmem:[%s369 + $0xa10] sm:$0xff]
        %v934 = vld [vmem:[%s369 + $0xa18] sm:$0xff]
        %v935 = vld [vmem:[%s369 + $0xa20] sm:$0xff]
        %v936 = vld [vmem:[%s369 + $0xa28] sm:$0xff]
        %v937 = vld [vmem:[%s369 + $0xa30] sm:$0xff]
        %v938 = vld [vmem:[%s369 + $0xa38] sm:$0xff]
        %v939 = vld [vmem:[%s369 + $0xa40] sm:$0xff]
        %v940 = vld [vmem:[%s369 + $0xa48] sm:$0xff]
        %v941 = vld [vmem:[%s369 + $0xa50] sm:$0xff]
        %v942 = vld [vmem:[%s369 + $0xa58] sm:$0xff]
        %v943 = vld [vmem:[%s369 + $0xa60] sm:$0xff]
        %v944 = vld [vmem:[%s369 + $0xa68] sm:$0xff]
        %v945 = vld [vmem:[%s369 + $0xa70] sm:$0xff]
        %v946 = vld [vmem:[%s369 + $0xa78] sm:$0xff]
        %v947 = vld [vmem:[%s369 + $0xa80] sm:$0xff]
        %v948 = vld [vmem:[%s369 + $0xa88] sm:$0xff]
        %v949 = vld [vmem:[%s369 + $0xa90] sm:$0xff]
        %v950 = vld [vmem:[%s369 + $0xa98] sm:$0xff]
        %v951 = vld [vmem:[%s369 + $0xaa0] sm:$0xff]
        %v952 = vld [vmem:[%s369 + $0xaa8] sm:$0xff]
        %v953 = vld [vmem:[%s369 + $0xab0] sm:$0xff]
        %v954 = vld [vmem:[%s369 + $0xab8] sm:$0xff]
        %v955 = vld [vmem:[%s369 + $0xac0] sm:$0xff]
        %v956 = vld [vmem:[%s369 + $0xac8] sm:$0xff]
        %v957 = vld [vmem:[%s369 + $0xad0] sm:$0xff]
        %v958 = vld [vmem:[%s369 + $0xad8] sm:$0xff]
        %v959 = vld [vmem:[%s369 + $0xae0] sm:$0xff]
        %v960 = vld [vmem:[%s369 + $0xae8] sm:$0xff]
        %v961 = vld [vmem:[%s369 + $0xaf0] sm:$0xff]
        %v962 = vld [vmem:[%s369 + $0xaf8] sm:$0xff]
        %v963 = vld [vmem:[%s369 + $0xb00] sm:$0xff]
        %v964 = vld [vmem:[%s369 + $0xb08] sm:$0xff]
        %v965 = vld [vmem:[%s369 + $0xb10] sm:$0xff]
        %v966 = vld [vmem:[%s369 + $0xb18] sm:$0xff]
        %v967 = vld [vmem:[%s369 + $0xb20] sm:$0xff]
        %v968 = vld [vmem:[%s369 + $0xb28] sm:$0xff]
        %v969 = vld [vmem:[%s369 + $0xb30] sm:$0xff]
        %v970 = vld [vmem:[%s369 + $0xb38] sm:$0xff]
        %v971 = vld [vmem:[%s369 + $0xb40] sm:$0xff]
        %v972 = vld [vmem:[%s369 + $0xb48] sm:$0xff]
        %v973 = vld [vmem:[%s369 + $0xb50] sm:$0xff]
        %v974 = vld [vmem:[%s369 + $0xb58] sm:$0xff]
        %v975 = vld [vmem:[%s369 + $0xb60] sm:$0xff]
        %v976 = vld [vmem:[%s369 + $0xb68] sm:$0xff]
        %v977 = vld [vmem:[%s369 + $0xb70] sm:$0xff]
        %v978 = vld [vmem:[%s369 + $0xb78] sm:$0xff]
        %v979 = vld [vmem:[%s369 + $0xb80] sm:$0xff]
        %v980 = vld [vmem:[%s369 + $0xb88] sm:$0xff]
        %v981 = vld [vmem:[%s369 + $0xb90] sm:$0xff]
        %v982 = vld [vmem:[%s369 + $0xb98] sm:$0xff]
        %v983 = vld [vmem:[%s369 + $0xba0] sm:$0xff]
        %v984 = vld [vmem:[%s369 + $0xba8] sm:$0xff]
        %v985 = vld [vmem:[%s369 + $0xbb0] sm:$0xff]
        %v986 = vld [vmem:[%s369 + $0xbb8] sm:$0xff]
        %v987 = vld [vmem:[%s369 + $0xbc0] sm:$0xff]
        %v988 = vld [vmem:[%s369 + $0xbc8] sm:$0xff]
        %v989 = vld [vmem:[%s369 + $0xbd0] sm:$0xff]
        %v990 = vld [vmem:[%s369 + $0xbd8] sm:$0xff]
        %v991 = vld [vmem:[%s369 + $0xbe0] sm:$0xff]
        %v992 = vld [vmem:[%s369 + $0xbe8] sm:$0xff]
        %v993 = vld [vmem:[%s369 + $0xbf0] sm:$0xff]
        %v994 = vld [vmem:[%s369 + $0xbf8] sm:$0xff]
        %v995 = vld [vmem:[%s369 + $0xc00] sm:$0xff]
        %v996 = vld [vmem:[%s369 + $0xc08] sm:$0xff]
        %v997 = vld [vmem:[%s369 + $0xc10] sm:$0xff]
        %v998 = vld [vmem:[%s369 + $0xc18] sm:$0xff]
        %v999 = vld [vmem:[%s369 + $0xc20] sm:$0xff]
        %v1000 = vld [vmem:[%s369 + $0xc28] sm:$0xff]
        %v1001 = vld [vmem:[%s369 + $0xc30] sm:$0xff]
        %v1002 = vld [vmem:[%s369 + $0xc38] sm:$0xff]
        %v1003 = vld [vmem:[%s369 + $0xc40] sm:$0xff]
        %v1004 = vld [vmem:[%s369 + $0xc48] sm:$0xff]
        %v1005 = vld [vmem:[%s369 + $0xc50] sm:$0xff]
        %v1006 = vld [vmem:[%s369 + $0xc58] sm:$0xff]
        %v1007 = vld [vmem:[%s369 + $0xc60] sm:$0xff]
        %v1008 = vld [vmem:[%s369 + $0xc68] sm:$0xff]
        %v1009 = vld [vmem:[%s369 + $0xc70] sm:$0xff]
        %v1010 = vld [vmem:[%s369 + $0xc78] sm:$0xff]
        %v1011 = vld [vmem:[%s369 + $0xc80] sm:$0xff]
        %v1012 = vld [vmem:[%s369 + $0xc88] sm:$0xff]
        %v1013 = vld [vmem:[%s369 + $0xc90] sm:$0xff]
        %v1014 = vld [vmem:[%s369 + $0xc98] sm:$0xff]
        %v1015 = vld [vmem:[%s369 + $0xca0] sm:$0xff]
        %v1016 = vld [vmem:[%s369 + $0xca8] sm:$0xff]
        %v1017 = vld [vmem:[%s369 + $0xcb0] sm:$0xff]
        %v1018 = vld [vmem:[%s369 + $0xcb8] sm:$0xff]
        %v1019 = vld [vmem:[%s369 + $0xcc0] sm:$0xff]
        %v1020 = vld [vmem:[%s369 + $0xcc8] sm:$0xff]
        %v1021 = vld [vmem:[%s369 + $0xcd0] sm:$0xff]
        %v1022 = vld [vmem:[%s369 + $0xcd8] sm:$0xff]
        %v1023 = vld [vmem:[%s369 + $0xce0] sm:$0xff]
        %v1024 = vld [vmem:[%s369 + $0xce8] sm:$0xff]
        %v1025 = vld [vmem:[%s369 + $0xcf0] sm:$0xff]
        %v1026 = vld [vmem:[%s369 + $0xcf8] sm:$0xff]
        %v1027 = vld [vmem:[%s369 + $0xd00] sm:$0xff]
        %v1028 = vld [vmem:[%s369 + $0xd08] sm:$0xff]
        %v1029 = vld [vmem:[%s369 + $0xd10] sm:$0xff]
        %v1030 = vld [vmem:[%s369 + $0xd18] sm:$0xff]
        %v1031 = vld [vmem:[%s369 + $0xd20] sm:$0xff]
        %v1032 = vld [vmem:[%s369 + $0xd28] sm:$0xff]
        %v1033 = vld [vmem:[%s369 + $0xd30] sm:$0xff]
        %v1034 = vld [vmem:[%s369 + $0xd38] sm:$0xff]
        %v1035 = vld [vmem:[%s369 + $0xd40] sm:$0xff]
        %v1036 = vld [vmem:[%s369 + $0xd48] sm:$0xff]
        %v1037 = vld [vmem:[%s369 + $0xd50] sm:$0xff]
        %v1038 = vld [vmem:[%s369 + $0xd58] sm:$0xff]
        %v1039 = vld [vmem:[%s369 + $0xd60] sm:$0xff]
        %v1040 = vld [vmem:[%s369 + $0xd68] sm:$0xff]
        %v1041 = vld [vmem:[%s369 + $0xd70] sm:$0xff]
        %v1042 = vld [vmem:[%s369 + $0xd78] sm:$0xff]
        %v1043 = vld [vmem:[%s369 + $0xd80] sm:$0xff]
        %v1044 = vld [vmem:[%s369 + $0xd88] sm:$0xff]
        %v1045 = vld [vmem:[%s369 + $0xd90] sm:$0xff]
        %v1046 = vld [vmem:[%s369 + $0xd98] sm:$0xff]
        %v1047 = vld [vmem:[%s369 + $0xda0] sm:$0xff]
        %v1048 = vld [vmem:[%s369 + $0xda8] sm:$0xff]
        %v1049 = vld [vmem:[%s369 + $0xdb0] sm:$0xff]
        %v1050 = vld [vmem:[%s369 + $0xdb8] sm:$0xff]
        %v1051 = vld [vmem:[%s369 + $0xdc0] sm:$0xff]
        %v1052 = vld [vmem:[%s369 + $0xdc8] sm:$0xff]
        %v1053 = vld [vmem:[%s369 + $0xdd0] sm:$0xff]
        %v1054 = vld [vmem:[%s369 + $0xdd8] sm:$0xff]
        %v1055 = vld [vmem:[%s369 + $0xde0] sm:$0xff]
        %v1056 = vld [vmem:[%s369 + $0xde8] sm:$0xff]
        %v1057 = vld [vmem:[%s369 + $0xdf0] sm:$0xff]
        %v1058 = vld [vmem:[%s369 + $0xdf8] sm:$0xff]
        %v1059 = vld [vmem:[%s369 + $0xe00] sm:$0xff]
        %v1060 = vld [vmem:[%s369 + $0xe08] sm:$0xff]
        %v1061 = vld [vmem:[%s369 + $0xe10] sm:$0xff]
        %v1062 = vld [vmem:[%s369 + $0xe18] sm:$0xff]
        %v1063 = vld [vmem:[%s369 + $0xe20] sm:$0xff]
        %v1064 = vld [vmem:[%s369 + $0xe28] sm:$0xff]
        %v1065 = vld [vmem:[%s369 + $0xe30] sm:$0xff]
        %v1066 = vld [vmem:[%s369 + $0xe38] sm:$0xff]
        %v1067 = vld [vmem:[%s369 + $0xe40] sm:$0xff]
        %v1068 = vld [vmem:[%s369 + $0xe48] sm:$0xff]
        %v1069 = vld [vmem:[%s369 + $0xe50] sm:$0xff]
        %v1070 = vld [vmem:[%s369 + $0xe58] sm:$0xff]
        %v1071 = vld [vmem:[%s369 + $0xe60] sm:$0xff]
        %v1072 = vld [vmem:[%s369 + $0xe68] sm:$0xff]
        %v1073 = vld [vmem:[%s369 + $0xe70] sm:$0xff]
        %v1074 = vld [vmem:[%s369 + $0xe78] sm:$0xff]
        %v1075 = vld [vmem:[%s369 + $0xe80] sm:$0xff]
        %v1076 = vld [vmem:[%s369 + $0xe88] sm:$0xff]
        %v1077 = vld [vmem:[%s369 + $0xe90] sm:$0xff]
        %v1078 = vld [vmem:[%s369 + $0xe98] sm:$0xff]
        %v1079 = vld [vmem:[%s369 + $0xea0] sm:$0xff]
        %v1080 = vld [vmem:[%s369 + $0xea8] sm:$0xff]
        %v1081 = vld [vmem:[%s369 + $0xeb0] sm:$0xff]
        %v1082 = vld [vmem:[%s369 + $0xeb8] sm:$0xff]
        %v1083 = vld [vmem:[%s369 + $0xec0] sm:$0xff]
        %v1084 = vld [vmem:[%s369 + $0xec8] sm:$0xff]
        %v1085 = vld [vmem:[%s369 + $0xed0] sm:$0xff]
        %v1086 = vld [vmem:[%s369 + $0xed8] sm:$0xff]
        %v1087 = vld [vmem:[%s369 + $0xee0] sm:$0xff]
        %v1088 = vld [vmem:[%s369 + $0xee8] sm:$0xff]
        %v1089 = vld [vmem:[%s369 + $0xef0] sm:$0xff]
        %v1090 = vld [vmem:[%s369 + $0xef8] sm:$0xff]
        %v1091 = vld [vmem:[%s369 + $0xf00] sm:$0xff]
        %v1092 = vld [vmem:[%s369 + $0xf08] sm:$0xff]
        %v1093 = vld [vmem:[%s369 + $0xf10] sm:$0xff]
        %v1094 = vld [vmem:[%s369 + $0xf18] sm:$0xff]
        %v1095 = vld [vmem:[%s369 + $0xf20] sm:$0xff]
        %v1096 = vld [vmem:[%s369 + $0xf28] sm:$0xff]
        %v1097 = vld [vmem:[%s369 + $0xf30] sm:$0xff]
        %v1098 = vld [vmem:[%s369 + $0xf38] sm:$0xff]
        %v1099 = vld [vmem:[%s369 + $0xf40] sm:$0xff]
        %v1100 = vld [vmem:[%s369 + $0xf48] sm:$0xff]
        %v1101 = vld [vmem:[%s369 + $0xf50] sm:$0xff]
        %v1102 = vld [vmem:[%s369 + $0xf58] sm:$0xff]
        %v1103 = vld [vmem:[%s369 + $0xf60] sm:$0xff]
        %v1104 = vld [vmem:[%s369 + $0xf68] sm:$0xff]
        %v1105 = vld [vmem:[%s369 + $0xf70] sm:$0xff]
        %v1106 = vld [vmem:[%s369 + $0xf78] sm:$0xff]
        %v1107 = vld [vmem:[%s369 + $0xf80] sm:$0xff]
        %v1108 = vld [vmem:[%s369 + $0xf88] sm:$0xff]
        %v1109 = vld [vmem:[%s369 + $0xf90] sm:$0xff]
        %v1110 = vld [vmem:[%s369 + $0xf98] sm:$0xff]
        %v1111 = vld [vmem:[%s369 + $0xfa0] sm:$0xff]
        %v1112 = vld [vmem:[%s369 + $0xfa8] sm:$0xff]
        %v1113 = vld [vmem:[%s369 + $0xfb0] sm:$0xff]
        %v1114 = vld [vmem:[%s369 + $0xfb8] sm:$0xff]
        %v1115 = vld [vmem:[%s369 + $0xfc0] sm:$0xff]
        %v1116 = vld [vmem:[%s369 + $0xfc8] sm:$0xff]
        %v1117 = vld [vmem:[%s369 + $0xfd0] sm:$0xff]
        %v1118 = vld [vmem:[%s369 + $0xfd8] sm:$0xff]
        %v1119 = vld [vmem:[%s369 + $0xfe0] sm:$0xff]
        %v1120 = vld [vmem:[%s369 + $0xfe8] sm:$0xff]
        %v1121 = vld [vmem:[%s369 + $0xff0] sm:$0xff]
        %v1122 = vld [vmem:[%s369 + $0xff8] sm:$0xff]
        %v1123 = vld [vmem:[%s369 + $0x1000] sm:$0xff]
        %v1124 = vld [vmem:[%s369 + $0x1008] sm:$0xff]
        %v1125 = vld [vmem:[%s369 + $0x1010] sm:$0xff]
        %v1126 = vld [vmem:[%s369 + $0x1018] sm:$0xff]
        %v1127 = vld [vmem:[%s369 + $0x1020] sm:$0xff]
        %v1128 = vld [vmem:[%s369 + $0x1028] sm:$0xff]
        %v1129 = vld [vmem:[%s369 + $0x1030] sm:$0xff]
        %v1130 = vld [vmem:[%s369 + $0x1038] sm:$0xff]
        %v1131 = vld [vmem:[%s369 + $0x1040] sm:$0xff]
        %v1132 = vld [vmem:[%s369 + $0x1048] sm:$0xff]
        %v1133 = vld [vmem:[%s369 + $0x1050] sm:$0xff]
        %v1134 = vld [vmem:[%s369 + $0x1058] sm:$0xff]
        %v1135 = vld [vmem:[%s369 + $0x1060] sm:$0xff]
        %v1136 = vld [vmem:[%s369 + $0x1068] sm:$0xff]
        %v1137 = vld [vmem:[%s369 + $0x1070] sm:$0xff]
        %v1138 = vld [vmem:[%s369 + $0x1078] sm:$0xff]
        %v1139 = vld [vmem:[%s369 + $0x1080] sm:$0xff]
        %v1140 = vld [vmem:[%s369 + $0x1088] sm:$0xff]
        %v1141 = vld [vmem:[%s369 + $0x1090] sm:$0xff]
        %v1142 = vld [vmem:[%s369 + $0x1098] sm:$0xff]
        %v1143 = vld [vmem:[%s369 + $0x10a0] sm:$0xff]
        %v1144 = vld [vmem:[%s369 + $0x10a8] sm:$0xff]
        %v1145 = vld [vmem:[%s369 + $0x10b0] sm:$0xff]
        %v1146 = vld [vmem:[%s369 + $0x10b8] sm:$0xff]
        %v1147 = vld [vmem:[%s369 + $0x10c0] sm:$0xff]
        %v1148 = vld [vmem:[%s369 + $0x10c8] sm:$0xff]
        %v1149 = vld [vmem:[%s369 + $0x10d0] sm:$0xff]
        %v1150 = vld [vmem:[%s369 + $0x10d8] sm:$0xff]
        %v1151 = vld [vmem:[%s369 + $0x10e0] sm:$0xff]
        %v1152 = vld [vmem:[%s369 + $0x10e8] sm:$0xff]
        %v1153 = vld [vmem:[%s369 + $0x10f0] sm:$0xff]
        %v1154 = vld [vmem:[%s369 + $0x10f8] sm:$0xff]
        %v1155 = vld [vmem:[%s369 + $0x1100] sm:$0xff]
        %v1156 = vld [vmem:[%s369 + $0x1108] sm:$0xff]
        %v1157 = vld [vmem:[%s369 + $0x1110] sm:$0xff]
        %v1158 = vld [vmem:[%s369 + $0x1118] sm:$0xff]
        %v1159 = vld [vmem:[%s369 + $0x1120] sm:$0xff]
        %v1160 = vld [vmem:[%s369 + $0x1128] sm:$0xff]
        %v1161 = vld [vmem:[%s369 + $0x1130] sm:$0xff]
        %v1162 = vld [vmem:[%s369 + $0x1138] sm:$0xff]
        %v1163 = vld [vmem:[%s369 + $0x1140] sm:$0xff]
        %v1164 = vld [vmem:[%s369 + $0x1148] sm:$0xff]
        %v1165 = vld [vmem:[%s369 + $0x1150] sm:$0xff]
        %v1166 = vld [vmem:[%s369 + $0x1158] sm:$0xff]
        %v1167 = vld [vmem:[%s369 + $0x1160] sm:$0xff]
        %v1168 = vld [vmem:[%s369 + $0x1168] sm:$0xff]
        %v1169 = vld [vmem:[%s369 + $0x1170] sm:$0xff]
        %v1170 = vld [vmem:[%s369 + $0x1178] sm:$0xff]
        %v1171 = vld [vmem:[%s369 + $0x1180] sm:$0xff]
        %v1172 = vld [vmem:[%s369 + $0x1188] sm:$0xff]
        %v1173 = vld [vmem:[%s369 + $0x1190] sm:$0xff]
        %v1174 = vld [vmem:[%s369 + $0x1198] sm:$0xff]
        %v1175 = vld [vmem:[%s369 + $0x11a0] sm:$0xff]
        %v1176 = vld [vmem:[%s369 + $0x11a8] sm:$0xff]
        %v1177 = vld [vmem:[%s369 + $0x11b0] sm:$0xff]
        %v1178 = vld [vmem:[%s369 + $0x11b8] sm:$0xff]
        %v1179 = vld [vmem:[%s369 + $0x11c0] sm:$0xff]
        %v1180 = vld [vmem:[%s369 + $0x11c8] sm:$0xff]
        %v1181 = vld [vmem:[%s369 + $0x11d0] sm:$0xff]
        %v1182 = vld [vmem:[%s369 + $0x11d8] sm:$0xff]
        %v1183 = vld [vmem:[%s369 + $0x11e0] sm:$0xff]
        %v1184 = vld [vmem:[%s369 + $0x11e8] sm:$0xff]
        %v1185 = vld [vmem:[%s369 + $0x11f0] sm:$0xff]
        %v1186 = vld [vmem:[%s369 + $0x11f8] sm:$0xff]
        %v1187 = vld [vmem:[%s369 + $0x1200] sm:$0xff]
        %v1188 = vld [vmem:[%s369 + $0x1208] sm:$0xff]
        %v1189 = vld [vmem:[%s369 + $0x1210] sm:$0xff]
        %v1190 = vld [vmem:[%s369 + $0x1218] sm:$0xff]
        %v1191 = vld [vmem:[%s369 + $0x1220] sm:$0xff]
        %v1192 = vld [vmem:[%s369 + $0x1228] sm:$0xff]
        %v1193 = vld [vmem:[%s369 + $0x1230] sm:$0xff]
        %v1194 = vld [vmem:[%s369 + $0x1238] sm:$0xff]
        %v1195 = vld [vmem:[%s369 + $0x1240] sm:$0xff]
        %v1196 = vld [vmem:[%s369 + $0x1248] sm:$0xff]
        %v1197 = vld [vmem:[%s369 + $0x1250] sm:$0xff]
        %v1198 = vld [vmem:[%s369 + $0x1258] sm:$0xff]
        %v1199 = vld [vmem:[%s369 + $0x1260] sm:$0xff]
        %v1200 = vld [vmem:[%s369 + $0x1268] sm:$0xff]
        %v1201 = vld [vmem:[%s369 + $0x1270] sm:$0xff]
        %v1202 = vld [vmem:[%s369 + $0x1278] sm:$0xff]
        %v1203 = vld [vmem:[%s369 + $0x1280] sm:$0xff]
        %v1204 = vld [vmem:[%s369 + $0x1288] sm:$0xff]
        %v1205 = vld [vmem:[%s369 + $0x1290] sm:$0xff]
        %v1206 = vld [vmem:[%s369 + $0x1298] sm:$0xff]
        %v1207 = vld [vmem:[%s369 + $0x12a0] sm:$0xff]
        %v1208 = vld [vmem:[%s369 + $0x12a8] sm:$0xff]
        %v1209 = vld [vmem:[%s369 + $0x12b0] sm:$0xff]
        %v1210 = vld [vmem:[%s369 + $0x12b8] sm:$0xff]
        %v1211 = vld [vmem:[%s369 + $0x12c0] sm:$0xff]
        %v1212 = vld [vmem:[%s369 + $0x12c8] sm:$0xff]
        %v1213 = vld [vmem:[%s369 + $0x12d0] sm:$0xff]
        %v1214 = vld [vmem:[%s369 + $0x12d8] sm:$0xff]
        %v1215 = vld [vmem:[%s369 + $0x12e0] sm:$0xff]
        %v1216 = vld [vmem:[%s369 + $0x12e8] sm:$0xff]
        %v1217 = vld [vmem:[%s369 + $0x12f0] sm:$0xff]
        %v1218 = vld [vmem:[%s369 + $0x12f8] sm:$0xff]
        %v1219 = vld [vmem:[%s369 + $0x1300] sm:$0xff]
        %v1220 = vld [vmem:[%s369 + $0x1308] sm:$0xff]
        %v1221 = vld [vmem:[%s369 + $0x1310] sm:$0xff]
        %v1222 = vld [vmem:[%s369 + $0x1318] sm:$0xff]
        %v1223 = vld [vmem:[%s369 + $0x1320] sm:$0xff]
        %v1224 = vld [vmem:[%s369 + $0x1328] sm:$0xff]
        %v1225 = vld [vmem:[%s369 + $0x1330] sm:$0xff]
        %v1226 = vld [vmem:[%s369 + $0x1338] sm:$0xff]
        %v1227 = vld [vmem:[%s369 + $0x1340] sm:$0xff]
        %v1228 = vld [vmem:[%s369 + $0x1348] sm:$0xff]
        %v1229 = vld [vmem:[%s369 + $0x1350] sm:$0xff]
        %v1230 = vld [vmem:[%s369 + $0x1358] sm:$0xff]
        %v1231 = vld [vmem:[%s369 + $0x1360] sm:$0xff]
        %v1232 = vld [vmem:[%s369 + $0x1368] sm:$0xff]
        %v1233 = vld [vmem:[%s369 + $0x1370] sm:$0xff]
        %v1234 = vld [vmem:[%s369 + $0x1378] sm:$0xff]
        %v1235 = vld [vmem:[%s369 + $0x1380] sm:$0xff]
        %v1236 = vld [vmem:[%s369 + $0x1388] sm:$0xff]
        %v1237 = vld [vmem:[%s369 + $0x1390] sm:$0xff]
        %v1238 = vld [vmem:[%s369 + $0x1398] sm:$0xff]
        %v1239 = vld [vmem:[%s369 + $0x13a0] sm:$0xff]
        %v1240 = vld [vmem:[%s369 + $0x13a8] sm:$0xff]
        %v1241 = vld [vmem:[%s369 + $0x13b0] sm:$0xff]
        %v1242 = vld [vmem:[%s369 + $0x13b8] sm:$0xff]
        %v1243 = vld [vmem:[%s369 + $0x13c0] sm:$0xff]
        %v1244 = vld [vmem:[%s369 + $0x13c8] sm:$0xff]
        %v1245 = vld [vmem:[%s369 + $0x13d0] sm:$0xff]
        %v1246 = vld [vmem:[%s369 + $0x13d8] sm:$0xff]
        %v1247 = vld [vmem:[%s369 + $0x13e0] sm:$0xff]
        %v1248 = vld [vmem:[%s369 + $0x13e8] sm:$0xff]
        %v1249 = vld [vmem:[%s369 + $0x13f0] sm:$0xff]
        %v1250 = vld [vmem:[%s369 + $0x13f8] sm:$0xff]
        %v1251 = vld [vmem:[%s369 + $0x1400] sm:$0xff]
        %v1252 = vld [vmem:[%s369 + $0x1408] sm:$0xff]
        %v1253 = vld [vmem:[%s369 + $0x1410] sm:$0xff]
        %v1254 = vld [vmem:[%s369 + $0x1418] sm:$0xff]
        %v1255 = vld [vmem:[%s369 + $0x1420] sm:$0xff]
        %v1256 = vld [vmem:[%s369 + $0x1428] sm:$0xff]
        %v1257 = vld [vmem:[%s369 + $0x1430] sm:$0xff]
        %v1258 = vld [vmem:[%s369 + $0x1438] sm:$0xff]
        %v1259 = vld [vmem:[%s369 + $0x1440] sm:$0xff]
        %v1260 = vld [vmem:[%s369 + $0x1448] sm:$0xff]
        %v1261 = vld [vmem:[%s369 + $0x1450] sm:$0xff]
        %v1262 = vld [vmem:[%s369 + $0x1458] sm:$0xff]
        %v1263 = vld [vmem:[%s369 + $0x1460] sm:$0xff]
        %v1264 = vld [vmem:[%s369 + $0x1468] sm:$0xff]
        %v1265 = vld [vmem:[%s369 + $0x1470] sm:$0xff]
        %v1266 = vld [vmem:[%s369 + $0x1478] sm:$0xff]
        %v1267 = vld [vmem:[%s369 + $0x1480] sm:$0xff]
        %v1268 = vld [vmem:[%s369 + $0x1488] sm:$0xff]
        %v1269 = vld [vmem:[%s369 + $0x1490] sm:$0xff]
        %v1270 = vld [vmem:[%s369 + $0x1498] sm:$0xff]
        %v1271 = vld [vmem:[%s369 + $0x14a0] sm:$0xff]
        %v1272 = vld [vmem:[%s369 + $0x14a8] sm:$0xff]
        %v1273 = vld [vmem:[%s369 + $0x14b0] sm:$0xff]
        %v1274 = vld [vmem:[%s369 + $0x14b8] sm:$0xff]
        %v1275 = vld [vmem:[%s369 + $0x14c0] sm:$0xff]
        %v1276 = vld [vmem:[%s369 + $0x14c8] sm:$0xff]
        %v1277 = vld [vmem:[%s369 + $0x14d0] sm:$0xff]
        %v1278 = vld [vmem:[%s369 + $0x14d8] sm:$0xff]
        %v1279 = vld [vmem:[%s369 + $0x14e0] sm:$0xff]
        %v1280 = vld [vmem:[%s369 + $0x14e8] sm:$0xff]
        %v1281 = vld [vmem:[%s369 + $0x14f0] sm:$0xff]
        %v1282 = vld [vmem:[%s369 + $0x14f8] sm:$0xff]
        %v1283 = vld [vmem:[%s369 + $0x1500] sm:$0xff]
        %v1284 = vld [vmem:[%s369 + $0x1508] sm:$0xff]
        %v1285 = vld [vmem:[%s369 + $0x1510] sm:$0xff]
        %v1286 = vld [vmem:[%s369 + $0x1518] sm:$0xff]
        %v1287 = vld [vmem:[%s369 + $0x1520] sm:$0xff]
        %v1288 = vld [vmem:[%s369 + $0x1528] sm:$0xff]
        %v1289 = vld [vmem:[%s369 + $0x1530] sm:$0xff]
        %v1290 = vld [vmem:[%s369 + $0x1538] sm:$0xff]
        %v1291 = vld [vmem:[%s369 + $0x1540] sm:$0xff]
        %v1292 = vld [vmem:[%s369 + $0x1548] sm:$0xff]
        %v1293 = vld [vmem:[%s369 + $0x1550] sm:$0xff]
        %v1294 = vld [vmem:[%s369 + $0x1558] sm:$0xff]
        %v1295 = vld [vmem:[%s369 + $0x1560] sm:$0xff]
        %v1296 = vld [vmem:[%s369 + $0x1568] sm:$0xff]
        %v1297 = vld [vmem:[%s369 + $0x1570] sm:$0xff]
        %v1298 = vld [vmem:[%s369 + $0x1578] sm:$0xff]
        %v1299 = vld [vmem:[%s369 + $0x1580] sm:$0xff]
        %v1300 = vld [vmem:[%s369 + $0x1588] sm:$0xff]
        %v1301 = vld [vmem:[%s369 + $0x1590] sm:$0xff]
        %v1302 = vld [vmem:[%s369 + $0x1598] sm:$0xff]
        %v1303 = vld [vmem:[%s369 + $0x15a0] sm:$0xff]
        %v1304 = vld [vmem:[%s369 + $0x15a8] sm:$0xff]
        %v1305 = vld [vmem:[%s369 + $0x15b0] sm:$0xff]
        %v1306 = vld [vmem:[%s369 + $0x15b8] sm:$0xff]
        %v1307 = vld [vmem:[%s369 + $0x15c0] sm:$0xff]
        %v1308 = vld [vmem:[%s369 + $0x15c8] sm:$0xff]
        %v1309 = vld [vmem:[%s369 + $0x15d0] sm:$0xff]
        %v1310 = vld [vmem:[%s369 + $0x15d8] sm:$0xff]
        %v1311 = vld [vmem:[%s369 + $0x15e0] sm:$0xff]
        %v1312 = vld [vmem:[%s369 + $0x15e8] sm:$0xff]
        %v1313 = vld [vmem:[%s369 + $0x15f0] sm:$0xff]
        %v1314 = vld [vmem:[%s369 + $0x15f8] sm:$0xff]
        %v1315 = vld [vmem:[%s369 + $0x1600] sm:$0xff]
        %v1316 = vld [vmem:[%s369 + $0x1608] sm:$0xff]
        %v1317 = vld [vmem:[%s369 + $0x1610] sm:$0xff]
        %v1318 = vld [vmem:[%s369 + $0x1618] sm:$0xff]
        %v1319 = vld [vmem:[%s369 + $0x1620] sm:$0xff]
        %v1320 = vld [vmem:[%s369 + $0x1628] sm:$0xff]
        %v1321 = vld [vmem:[%s369 + $0x1630] sm:$0xff]
        %v1322 = vld [vmem:[%s369 + $0x1638] sm:$0xff]
        %v1323 = vld [vmem:[%s369 + $0x1640] sm:$0xff]
        %v1324 = vld [vmem:[%s369 + $0x1648] sm:$0xff]
        %v1325 = vld [vmem:[%s369 + $0x1650] sm:$0xff]
        %v1326 = vld [vmem:[%s369 + $0x1658] sm:$0xff]
        %v1327 = vld [vmem:[%s369 + $0x1660] sm:$0xff]
        %v1328 = vld [vmem:[%s369 + $0x1668] sm:$0xff]
        %v1329 = vld [vmem:[%s369 + $0x1670] sm:$0xff]
        %v1330 = vld [vmem:[%s369 + $0x1678] sm:$0xff]
        %v1331 = vld [vmem:[%s369 + $0x1680] sm:$0xff]
        %v1332 = vld [vmem:[%s369 + $0x1688] sm:$0xff]
        %v1333 = vld [vmem:[%s369 + $0x1690] sm:$0xff]
        %v1334 = vld [vmem:[%s369 + $0x1698] sm:$0xff]
        %v1335 = vld [vmem:[%s369 + $0x16a0] sm:$0xff]
        %v1336 = vld [vmem:[%s369 + $0x16a8] sm:$0xff]
        %v1337 = vld [vmem:[%s369 + $0x16b0] sm:$0xff]
        %v1338 = vld [vmem:[%s369 + $0x16b8] sm:$0xff]
        %v1339 = vld [vmem:[%s369 + $0x16c0] sm:$0xff]
        %v1340 = vld [vmem:[%s369 + $0x16c8] sm:$0xff]
        %v1341 = vld [vmem:[%s369 + $0x16d0] sm:$0xff]
        %v1342 = vld [vmem:[%s369 + $0x16d8] sm:$0xff]
        %v1343 = vld [vmem:[%s369 + $0x16e0] sm:$0xff]
        %v1344 = vld [vmem:[%s369 + $0x16e8] sm:$0xff]
        %v1345 = vld [vmem:[%s369 + $0x16f0] sm:$0xff]
        %v1346 = vld [vmem:[%s369 + $0x16f8] sm:$0xff]
        %v1347 = vld [vmem:[%s369 + $0x1700] sm:$0xff]
        %v1348 = vld [vmem:[%s369 + $0x1708] sm:$0xff]
        %v1349 = vld [vmem:[%s369 + $0x1710] sm:$0xff]
        %v1350 = vld [vmem:[%s369 + $0x1718] sm:$0xff]
        %v1351 = vld [vmem:[%s369 + $0x1720] sm:$0xff]
        %v1352 = vld [vmem:[%s369 + $0x1728] sm:$0xff]
        %v1353 = vld [vmem:[%s369 + $0x1730] sm:$0xff]
        %v1354 = vld [vmem:[%s369 + $0x1738] sm:$0xff]
        %v1355 = vld [vmem:[%s369 + $0x1740] sm:$0xff]
        %v1356 = vld [vmem:[%s369 + $0x1748] sm:$0xff]
        %v1357 = vld [vmem:[%s369 + $0x1750] sm:$0xff]
        %v1358 = vld [vmem:[%s369 + $0x1758] sm:$0xff]
        %v1359 = vld [vmem:[%s369 + $0x1760] sm:$0xff]
        %v1360 = vld [vmem:[%s369 + $0x1768] sm:$0xff]
        %v1361 = vld [vmem:[%s369 + $0x1770] sm:$0xff]
        %v1362 = vld [vmem:[%s369 + $0x1778] sm:$0xff]
        %v1363 = vld [vmem:[%s369 + $0x1780] sm:$0xff]
        %v1364 = vld [vmem:[%s369 + $0x1788] sm:$0xff]
        %v1365 = vld [vmem:[%s369 + $0x1790] sm:$0xff]
        %v1366 = vld [vmem:[%s369 + $0x1798] sm:$0xff]
        %v1367 = vld [vmem:[%s369 + $0x17a0] sm:$0xff]
        %v1368 = vld [vmem:[%s369 + $0x17a8] sm:$0xff]
        %v1369 = vld [vmem:[%s369 + $0x17b0] sm:$0xff]
        %v1370 = vld [vmem:[%s369 + $0x17b8] sm:$0xff]
        %v1371 = vld [vmem:[%s369 + $0x17c0] sm:$0xff]
        %v1372 = vld [vmem:[%s369 + $0x17c8] sm:$0xff]
        %v1373 = vld [vmem:[%s369 + $0x17d0] sm:$0xff]
        %v1374 = vld [vmem:[%s369 + $0x17d8] sm:$0xff]
        %v1375 = vld [vmem:[%s369 + $0x17e0] sm:$0xff]
        %v1376 = vld [vmem:[%s369 + $0x17e8] sm:$0xff]
        %v1377 = vld [vmem:[%s369 + $0x17f0] sm:$0xff]
        %v1378 = vld [vmem:[%s369 + $0x17f8] sm:$0xff]
        %v1379 = vld [vmem:[%s369 + $0x1800] sm:$0xff]
        %v1380 = vld [vmem:[%s369 + $0x1808] sm:$0xff]
        %v1381 = vld [vmem:[%s369 + $0x1810] sm:$0xff]
        %v1382 = vld [vmem:[%s369 + $0x1818] sm:$0xff]
        %v1383 = vld [vmem:[%s369 + $0x1820] sm:$0xff]
        %v1384 = vld [vmem:[%s369 + $0x1828] sm:$0xff]
        %v1385 = vld [vmem:[%s369 + $0x1830] sm:$0xff]
        %v1386 = vld [vmem:[%s369 + $0x1838] sm:$0xff]
        %v1387 = vld [vmem:[%s369 + $0x1840] sm:$0xff]
        %v1388 = vld [vmem:[%s369 + $0x1848] sm:$0xff]
        %v1389 = vld [vmem:[%s369 + $0x1850] sm:$0xff]
        %v1390 = vld [vmem:[%s369 + $0x1858] sm:$0xff]
        %v1391 = vld [vmem:[%s369 + $0x1860] sm:$0xff]
        %v1392 = vld [vmem:[%s369 + $0x1868] sm:$0xff]
        %v1393 = vld [vmem:[%s369 + $0x1870] sm:$0xff]
        %v1394 = vld [vmem:[%s369 + $0x1878] sm:$0xff]
        %v1395 = vld [vmem:[%s369 + $0x1880] sm:$0xff]
        %v1396 = vld [vmem:[%s369 + $0x1888] sm:$0xff]
        %v1397 = vld [vmem:[%s369 + $0x1890] sm:$0xff]
        %v1398 = vld [vmem:[%s369 + $0x1898] sm:$0xff]
        %v1399 = vld [vmem:[%s369 + $0x18a0] sm:$0xff]
        %v1400 = vld [vmem:[%s369 + $0x18a8] sm:$0xff]
        %v1401 = vld [vmem:[%s369 + $0x18b0] sm:$0xff]
        %v1402 = vld [vmem:[%s369 + $0x18b8] sm:$0xff]
        %v1403 = vld [vmem:[%s369 + $0x18c0] sm:$0xff]
        %v1404 = vld [vmem:[%s369 + $0x18c8] sm:$0xff]
        %v1405 = vld [vmem:[%s369 + $0x18d0] sm:$0xff]
        %v1406 = vld [vmem:[%s369 + $0x18d8] sm:$0xff]
        %v1407 = vld [vmem:[%s369 + $0x18e0] sm:$0xff]
        %v1408 = vld [vmem:[%s369 + $0x18e8] sm:$0xff]
        %v1409 = vld [vmem:[%s369 + $0x18f0] sm:$0xff]
        %v1410 = vld [vmem:[%s369 + $0x18f8] sm:$0xff]
        %v2211 = vunpack.c.l.b16 %v611
        %v2212 = vunpack.c.h.b16 %v611
        %v2213 = vunpack.c.l.b16 %v612
        %v2214 = vunpack.c.h.b16 %v612
        %v2215 = vunpack.c.l.b16 %v613
        %v2216 = vunpack.c.h.b16 %v613
        %v2217 = vunpack.c.l.b16 %v614
        %v2218 = vunpack.c.h.b16 %v614
        %v2219 = vunpack.c.l.b16 %v615
        %v2220 = vunpack.c.h.b16 %v615
        %v2221 = vunpack.c.l.b16 %v616
        %v2222 = vunpack.c.h.b16 %v616
        %v2223 = vunpack.c.l.b16 %v617
        %v2224 = vunpack.c.h.b16 %v617
        %v2225 = vunpack.c.l.b16 %v618
        %v2226 = vunpack.c.h.b16 %v618
        %v2227 = vunpack.c.l.b16 %v619
        %v2228 = vunpack.c.h.b16 %v619
        %v2229 = vunpack.c.l.b16 %v620
        %v2230 = vunpack.c.h.b16 %v620
        %v2231 = vunpack.c.l.b16 %v621
        %v2232 = vunpack.c.h.b16 %v621
        %v2233 = vunpack.c.l.b16 %v622
        %v2234 = vunpack.c.h.b16 %v622
        %v2235 = vunpack.c.l.b16 %v623
        %v2236 = vunpack.c.h.b16 %v623
        %v2237 = vunpack.c.l.b16 %v624
        %v2238 = vunpack.c.h.b16 %v624
        %v2239 = vunpack.c.l.b16 %v625
        %v2240 = vunpack.c.h.b16 %v625
        %v2241 = vunpack.c.l.b16 %v626
        %v2242 = vunpack.c.h.b16 %v626
        %v2243 = vunpack.c.l.b16 %v627
        %v2244 = vunpack.c.h.b16 %v627
        %v2245 = vunpack.c.l.b16 %v628
        %v2246 = vunpack.c.h.b16 %v628
        %v2247 = vunpack.c.l.b16 %v629
        %v2248 = vunpack.c.h.b16 %v629
        %v2249 = vunpack.c.l.b16 %v630
        %v2250 = vunpack.c.h.b16 %v630
        %v2251 = vunpack.c.l.b16 %v631
        %v2252 = vunpack.c.h.b16 %v631
        %v2253 = vunpack.c.l.b16 %v632
        %v2254 = vunpack.c.h.b16 %v632
        %v2255 = vunpack.c.l.b16 %v633
        %v2256 = vunpack.c.h.b16 %v633
        %v2257 = vunpack.c.l.b16 %v634
        %v2258 = vunpack.c.h.b16 %v634
        %v2259 = vunpack.c.l.b16 %v635
        %v2260 = vunpack.c.h.b16 %v635
        %v2261 = vunpack.c.l.b16 %v636
        %v2262 = vunpack.c.h.b16 %v636
        %v2263 = vunpack.c.l.b16 %v637
        %v2264 = vunpack.c.h.b16 %v637
        %v2265 = vunpack.c.l.b16 %v638
        %v2266 = vunpack.c.h.b16 %v638
        %v2267 = vunpack.c.l.b16 %v639
        %v2268 = vunpack.c.h.b16 %v639
        %v2269 = vunpack.c.l.b16 %v640
        %v2270 = vunpack.c.h.b16 %v640
        %v2271 = vunpack.c.l.b16 %v641
        %v2272 = vunpack.c.h.b16 %v641
        %v2273 = vunpack.c.l.b16 %v642
        %v2274 = vunpack.c.h.b16 %v642
        %v2275 = vunpack.c.l.b16 %v643
        %v2276 = vunpack.c.h.b16 %v643
        %v2277 = vunpack.c.l.b16 %v644
        %v2278 = vunpack.c.h.b16 %v644
        %v2279 = vunpack.c.l.b16 %v645
        %v2280 = vunpack.c.h.b16 %v645
        %v2281 = vunpack.c.l.b16 %v646
        %v2282 = vunpack.c.h.b16 %v646
        %v2283 = vunpack.c.l.b16 %v647
        %v2284 = vunpack.c.h.b16 %v647
        %v2285 = vunpack.c.l.b16 %v648
        %v2286 = vunpack.c.h.b16 %v648
        %v2287 = vunpack.c.l.b16 %v649
        %v2288 = vunpack.c.h.b16 %v649
        %v2289 = vunpack.c.l.b16 %v650
        %v2290 = vunpack.c.h.b16 %v650
        %v2291 = vunpack.c.l.b16 %v651
        %v2292 = vunpack.c.h.b16 %v651
        %v2293 = vunpack.c.l.b16 %v652
        %v2294 = vunpack.c.h.b16 %v652
        %v2295 = vunpack.c.l.b16 %v653
        %v2296 = vunpack.c.h.b16 %v653
        %v2297 = vunpack.c.l.b16 %v654
        %v2298 = vunpack.c.h.b16 %v654
        %v2299 = vunpack.c.l.b16 %v655
        %v2300 = vunpack.c.h.b16 %v655
        %v2301 = vunpack.c.l.b16 %v656
        %v2302 = vunpack.c.h.b16 %v656
        %v2303 = vunpack.c.l.b16 %v657
        %v2304 = vunpack.c.h.b16 %v657
        %v2305 = vunpack.c.l.b16 %v658
        %v2306 = vunpack.c.h.b16 %v658
        %v2307 = vunpack.c.l.b16 %v659
        %v2308 = vunpack.c.h.b16 %v659
        %v2309 = vunpack.c.l.b16 %v660
        %v2310 = vunpack.c.h.b16 %v660
        %v2311 = vunpack.c.l.b16 %v661
        %v2312 = vunpack.c.h.b16 %v661
        %v2313 = vunpack.c.l.b16 %v662
        %v2314 = vunpack.c.h.b16 %v662
        %v2315 = vunpack.c.l.b16 %v663
        %v2316 = vunpack.c.h.b16 %v663
        %v2317 = vunpack.c.l.b16 %v664
        %v2318 = vunpack.c.h.b16 %v664
        %v2319 = vunpack.c.l.b16 %v665
        %v2320 = vunpack.c.h.b16 %v665
        %v2321 = vunpack.c.l.b16 %v666
        %v2322 = vunpack.c.h.b16 %v666
        %v2323 = vunpack.c.l.b16 %v667
        %v2324 = vunpack.c.h.b16 %v667
        %v2325 = vunpack.c.l.b16 %v668
        %v2326 = vunpack.c.h.b16 %v668
        %v2327 = vunpack.c.l.b16 %v669
        %v2328 = vunpack.c.h.b16 %v669
        %v2329 = vunpack.c.l.b16 %v670
        %v2330 = vunpack.c.h.b16 %v670
        %v2331 = vunpack.c.l.b16 %v671
        %v2332 = vunpack.c.h.b16 %v671
        %v2333 = vunpack.c.l.b16 %v672
        %v2334 = vunpack.c.h.b16 %v672
        %v2335 = vunpack.c.l.b16 %v673
        %v2336 = vunpack.c.h.b16 %v673
        %v2337 = vunpack.c.l.b16 %v674
        %v2338 = vunpack.c.h.b16 %v674
        %v2339 = vunpack.c.l.b16 %v675
        %v2340 = vunpack.c.h.b16 %v675
        %v2341 = vunpack.c.l.b16 %v676
        %v2342 = vunpack.c.h.b16 %v676
        %v2343 = vunpack.c.l.b16 %v677
        %v2344 = vunpack.c.h.b16 %v677
        %v2345 = vunpack.c.l.b16 %v678
        %v2346 = vunpack.c.h.b16 %v678
        %v2347 = vunpack.c.l.b16 %v679
        %v2348 = vunpack.c.h.b16 %v679
        %v2349 = vunpack.c.l.b16 %v680
        %v2350 = vunpack.c.h.b16 %v680
        %v2351 = vunpack.c.l.b16 %v681
        %v2352 = vunpack.c.h.b16 %v681
        %v2353 = vunpack.c.l.b16 %v682
        %v2354 = vunpack.c.h.b16 %v682
        %v2355 = vunpack.c.l.b16 %v683
        %v2356 = vunpack.c.h.b16 %v683
        %v2357 = vunpack.c.l.b16 %v684
        %v2358 = vunpack.c.h.b16 %v684
        %v2359 = vunpack.c.l.b16 %v685
        %v2360 = vunpack.c.h.b16 %v685
        %v2361 = vunpack.c.l.b16 %v686
        %v2362 = vunpack.c.h.b16 %v686
        %v2363 = vunpack.c.l.b16 %v687
        %v2364 = vunpack.c.h.b16 %v687
        %v2365 = vunpack.c.l.b16 %v688
        %v2366 = vunpack.c.h.b16 %v688
        %v2367 = vunpack.c.l.b16 %v689
        %v2368 = vunpack.c.h.b16 %v689
        %v2369 = vunpack.c.l.b16 %v690
        %v2370 = vunpack.c.h.b16 %v690
        %v2371 = vunpack.c.l.b16 %v691
        %v2372 = vunpack.c.h.b16 %v691
        %v2373 = vunpack.c.l.b16 %v692
        %v2374 = vunpack.c.h.b16 %v692
        %v2375 = vunpack.c.l.b16 %v693
        %v2376 = vunpack.c.h.b16 %v693
        %v2377 = vunpack.c.l.b16 %v694
        %v2378 = vunpack.c.h.b16 %v694
        %v2379 = vunpack.c.l.b16 %v695
        %v2380 = vunpack.c.h.b16 %v695
        %v2381 = vunpack.c.l.b16 %v696
        %v2382 = vunpack.c.h.b16 %v696
        %v2383 = vunpack.c.l.b16 %v697
        %v2384 = vunpack.c.h.b16 %v697
        %v2385 = vunpack.c.l.b16 %v698
        %v2386 = vunpack.c.h.b16 %v698
        %v2387 = vunpack.c.l.b16 %v699
        %v2388 = vunpack.c.h.b16 %v699
        %v2389 = vunpack.c.l.b16 %v700
        %v2390 = vunpack.c.h.b16 %v700
        %v2391 = vunpack.c.l.b16 %v701
        %v2392 = vunpack.c.h.b16 %v701
        %v2393 = vunpack.c.l.b16 %v702
        %v2394 = vunpack.c.h.b16 %v702
        %v2395 = vunpack.c.l.b16 %v703
        %v2396 = vunpack.c.h.b16 %v703
        %v2397 = vunpack.c.l.b16 %v704
        %v2398 = vunpack.c.h.b16 %v704
        %v2399 = vunpack.c.l.b16 %v705
        %v2400 = vunpack.c.h.b16 %v705
        %v2401 = vunpack.c.l.b16 %v706
        %v2402 = vunpack.c.h.b16 %v706
        %v2403 = vunpack.c.l.b16 %v707
        %v2404 = vunpack.c.h.b16 %v707
        %v2405 = vunpack.c.l.b16 %v708
        %v2406 = vunpack.c.h.b16 %v708
        %v2407 = vunpack.c.l.b16 %v709
        %v2408 = vunpack.c.h.b16 %v709
        %v2409 = vunpack.c.l.b16 %v710
        %v2410 = vunpack.c.h.b16 %v710
        %v2411 = vunpack.c.l.b16 %v711
        %v2412 = vunpack.c.h.b16 %v711
        %v2413 = vunpack.c.l.b16 %v712
        %v2414 = vunpack.c.h.b16 %v712
        %v2415 = vunpack.c.l.b16 %v713
        %v2416 = vunpack.c.h.b16 %v713
        %v2417 = vunpack.c.l.b16 %v714
        %v2418 = vunpack.c.h.b16 %v714
        %v2419 = vunpack.c.l.b16 %v715
        %v2420 = vunpack.c.h.b16 %v715
        %v2421 = vunpack.c.l.b16 %v716
        %v2422 = vunpack.c.h.b16 %v716
        %v2423 = vunpack.c.l.b16 %v717
        %v2424 = vunpack.c.h.b16 %v717
        %v2425 = vunpack.c.l.b16 %v718
        %v2426 = vunpack.c.h.b16 %v718
        %v2427 = vunpack.c.l.b16 %v719
        %v2428 = vunpack.c.h.b16 %v719
        %v2429 = vunpack.c.l.b16 %v720
        %v2430 = vunpack.c.h.b16 %v720
        %v2431 = vunpack.c.l.b16 %v721
        %v2432 = vunpack.c.h.b16 %v721
        %v2433 = vunpack.c.l.b16 %v722
        %v2434 = vunpack.c.h.b16 %v722
        %v2435 = vunpack.c.l.b16 %v723
        %v2436 = vunpack.c.h.b16 %v723
        %v2437 = vunpack.c.l.b16 %v724
        %v2438 = vunpack.c.h.b16 %v724
        %v2439 = vunpack.c.l.b16 %v725
        %v2440 = vunpack.c.h.b16 %v725
        %v2441 = vunpack.c.l.b16 %v726
        %v2442 = vunpack.c.h.b16 %v726
        %v2443 = vunpack.c.l.b16 %v727
        %v2444 = vunpack.c.h.b16 %v727
        %v2445 = vunpack.c.l.b16 %v728
        %v2446 = vunpack.c.h.b16 %v728
        %v2447 = vunpack.c.l.b16 %v729
        %v2448 = vunpack.c.h.b16 %v729
        %v2449 = vunpack.c.l.b16 %v730
        %v2450 = vunpack.c.h.b16 %v730
        %v2451 = vunpack.c.l.b16 %v731
        %v2452 = vunpack.c.h.b16 %v731
        %v2453 = vunpack.c.l.b16 %v732
        %v2454 = vunpack.c.h.b16 %v732
        %v2455 = vunpack.c.l.b16 %v733
        %v2456 = vunpack.c.h.b16 %v733
        %v2457 = vunpack.c.l.b16 %v734
        %v2458 = vunpack.c.h.b16 %v734
        %v2459 = vunpack.c.l.b16 %v735
        %v2460 = vunpack.c.h.b16 %v735
        %v2461 = vunpack.c.l.b16 %v736
        %v2462 = vunpack.c.h.b16 %v736
        %v2463 = vunpack.c.l.b16 %v737
        %v2464 = vunpack.c.h.b16 %v737
        %v2465 = vunpack.c.l.b16 %v738
        %v2466 = vunpack.c.h.b16 %v738
        %v2467 = vunpack.c.l.b16 %v739
        %v2468 = vunpack.c.h.b16 %v739
        %v2469 = vunpack.c.l.b16 %v740
        %v2470 = vunpack.c.h.b16 %v740
        %v2471 = vunpack.c.l.b16 %v741
        %v2472 = vunpack.c.h.b16 %v741
        %v2473 = vunpack.c.l.b16 %v742
        %v2474 = vunpack.c.h.b16 %v742
        %v2475 = vunpack.c.l.b16 %v743
        %v2476 = vunpack.c.h.b16 %v743
        %v2477 = vunpack.c.l.b16 %v744
        %v2478 = vunpack.c.h.b16 %v744
        %v2479 = vunpack.c.l.b16 %v745
        %v2480 = vunpack.c.h.b16 %v745
        %v2481 = vunpack.c.l.b16 %v746
        %v2482 = vunpack.c.h.b16 %v746
        %v2483 = vunpack.c.l.b16 %v747
        %v2484 = vunpack.c.h.b16 %v747
        %v2485 = vunpack.c.l.b16 %v748
        %v2486 = vunpack.c.h.b16 %v748
        %v2487 = vunpack.c.l.b16 %v749
        %v2488 = vunpack.c.h.b16 %v749
        %v2489 = vunpack.c.l.b16 %v750
        %v2490 = vunpack.c.h.b16 %v750
        %v2491 = vunpack.c.l.b16 %v751
        %v2492 = vunpack.c.h.b16 %v751
        %v2493 = vunpack.c.l.b16 %v752
        %v2494 = vunpack.c.h.b16 %v752
        %v2495 = vunpack.c.l.b16 %v753
        %v2496 = vunpack.c.h.b16 %v753
        %v2497 = vunpack.c.l.b16 %v754
        %v2498 = vunpack.c.h.b16 %v754
        %v2499 = vunpack.c.l.b16 %v755
        %v2500 = vunpack.c.h.b16 %v755
        %v2501 = vunpack.c.l.b16 %v756
        %v2502 = vunpack.c.h.b16 %v756
        %v2503 = vunpack.c.l.b16 %v757
        %v2504 = vunpack.c.h.b16 %v757
        %v2505 = vunpack.c.l.b16 %v758
        %v2506 = vunpack.c.h.b16 %v758
        %v2507 = vunpack.c.l.b16 %v759
        %v2508 = vunpack.c.h.b16 %v759
        %v2509 = vunpack.c.l.b16 %v760
        %v2510 = vunpack.c.h.b16 %v760
        %v2511 = vunpack.c.l.b16 %v761
        %v2512 = vunpack.c.h.b16 %v761
        %v2513 = vunpack.c.l.b16 %v762
        %v2514 = vunpack.c.h.b16 %v762
        %v2515 = vunpack.c.l.b16 %v763
        %v2516 = vunpack.c.h.b16 %v763
        %v2517 = vunpack.c.l.b16 %v764
        %v2518 = vunpack.c.h.b16 %v764
        %v2519 = vunpack.c.l.b16 %v765
        %v2520 = vunpack.c.h.b16 %v765
        %v2521 = vunpack.c.l.b16 %v766
        %v2522 = vunpack.c.h.b16 %v766
        %v2523 = vunpack.c.l.b16 %v767
        %v2524 = vunpack.c.h.b16 %v767
        %v2525 = vunpack.c.l.b16 %v768
        %v2526 = vunpack.c.h.b16 %v768
        %v2527 = vunpack.c.l.b16 %v769
        %v2528 = vunpack.c.h.b16 %v769
        %v2529 = vunpack.c.l.b16 %v770
        %v2530 = vunpack.c.h.b16 %v770
        %v2531 = vunpack.c.l.b16 %v771
        %v2532 = vunpack.c.h.b16 %v771
        %v2533 = vunpack.c.l.b16 %v772
        %v2534 = vunpack.c.h.b16 %v772
        %v2535 = vunpack.c.l.b16 %v773
        %v2536 = vunpack.c.h.b16 %v773
        %v2537 = vunpack.c.l.b16 %v774
        %v2538 = vunpack.c.h.b16 %v774
        %v2539 = vunpack.c.l.b16 %v775
        %v2540 = vunpack.c.h.b16 %v775
        %v2541 = vunpack.c.l.b16 %v776
        %v2542 = vunpack.c.h.b16 %v776
        %v2543 = vunpack.c.l.b16 %v777
        %v2544 = vunpack.c.h.b16 %v777
        %v2545 = vunpack.c.l.b16 %v778
        %v2546 = vunpack.c.h.b16 %v778
        %v2547 = vunpack.c.l.b16 %v779
        %v2548 = vunpack.c.h.b16 %v779
        %v2549 = vunpack.c.l.b16 %v780
        %v2550 = vunpack.c.h.b16 %v780
        %v2551 = vunpack.c.l.b16 %v781
        %v2552 = vunpack.c.h.b16 %v781
        %v2553 = vunpack.c.l.b16 %v782
        %v2554 = vunpack.c.h.b16 %v782
        %v2555 = vunpack.c.l.b16 %v783
        %v2556 = vunpack.c.h.b16 %v783
        %v2557 = vunpack.c.l.b16 %v784
        %v2558 = vunpack.c.h.b16 %v784
        %v2559 = vunpack.c.l.b16 %v785
        %v2560 = vunpack.c.h.b16 %v785
        %v2561 = vunpack.c.l.b16 %v786
        %v2562 = vunpack.c.h.b16 %v786
        %v2563 = vunpack.c.l.b16 %v787
        %v2564 = vunpack.c.h.b16 %v787
        %v2565 = vunpack.c.l.b16 %v788
        %v2566 = vunpack.c.h.b16 %v788
        %v2567 = vunpack.c.l.b16 %v789
        %v2568 = vunpack.c.h.b16 %v789
        %v2569 = vunpack.c.l.b16 %v790
        %v2570 = vunpack.c.h.b16 %v790
        %v2571 = vunpack.c.l.b16 %v791
        %v2572 = vunpack.c.h.b16 %v791
        %v2573 = vunpack.c.l.b16 %v792
        %v2574 = vunpack.c.h.b16 %v792
        %v2575 = vunpack.c.l.b16 %v793
        %v2576 = vunpack.c.h.b16 %v793
        %v2577 = vunpack.c.l.b16 %v794
        %v2578 = vunpack.c.h.b16 %v794
        %v2579 = vunpack.c.l.b16 %v795
        %v2580 = vunpack.c.h.b16 %v795
        %v2581 = vunpack.c.l.b16 %v796
        %v2582 = vunpack.c.h.b16 %v796
        %v2583 = vunpack.c.l.b16 %v797
        %v2584 = vunpack.c.h.b16 %v797
        %v2585 = vunpack.c.l.b16 %v798
        %v2586 = vunpack.c.h.b16 %v798
        %v2587 = vunpack.c.l.b16 %v799
        %v2588 = vunpack.c.h.b16 %v799
        %v2589 = vunpack.c.l.b16 %v800
        %v2590 = vunpack.c.h.b16 %v800
        %v2591 = vunpack.c.l.b16 %v801
        %v2592 = vunpack.c.h.b16 %v801
        %v2593 = vunpack.c.l.b16 %v802
        %v2594 = vunpack.c.h.b16 %v802
        %v2595 = vunpack.c.l.b16 %v803
        %v2596 = vunpack.c.h.b16 %v803
        %v2597 = vunpack.c.l.b16 %v804
        %v2598 = vunpack.c.h.b16 %v804
        %v2599 = vunpack.c.l.b16 %v805
        %v2600 = vunpack.c.h.b16 %v805
        %v2601 = vunpack.c.l.b16 %v806
        %v2602 = vunpack.c.h.b16 %v806
        %v2603 = vunpack.c.l.b16 %v807
        %v2604 = vunpack.c.h.b16 %v807
        %v2605 = vunpack.c.l.b16 %v808
        %v2606 = vunpack.c.h.b16 %v808
        %v2607 = vunpack.c.l.b16 %v809
        %v2608 = vunpack.c.h.b16 %v809
        %v2609 = vunpack.c.l.b16 %v810
        %v2610 = vunpack.c.h.b16 %v810
        %v2611 = vunpack.c.l.b16 %v811
        %v2612 = vunpack.c.h.b16 %v811
        %v2613 = vunpack.c.l.b16 %v812
        %v2614 = vunpack.c.h.b16 %v812
        %v2615 = vunpack.c.l.b16 %v813
        %v2616 = vunpack.c.h.b16 %v813
        %v2617 = vunpack.c.l.b16 %v814
        %v2618 = vunpack.c.h.b16 %v814
        %v2619 = vunpack.c.l.b16 %v815
        %v2620 = vunpack.c.h.b16 %v815
        %v2621 = vunpack.c.l.b16 %v816
        %v2622 = vunpack.c.h.b16 %v816
        %v2623 = vunpack.c.l.b16 %v817
        %v2624 = vunpack.c.h.b16 %v817
        %v2625 = vunpack.c.l.b16 %v818
        %v2626 = vunpack.c.h.b16 %v818
        %v2627 = vunpack.c.l.b16 %v819
        %v2628 = vunpack.c.h.b16 %v819
        %v2629 = vunpack.c.l.b16 %v820
        %v2630 = vunpack.c.h.b16 %v820
        %v2631 = vunpack.c.l.b16 %v821
        %v2632 = vunpack.c.h.b16 %v821
        %v2633 = vunpack.c.l.b16 %v822
        %v2634 = vunpack.c.h.b16 %v822
        %v2635 = vunpack.c.l.b16 %v823
        %v2636 = vunpack.c.h.b16 %v823
        %v2637 = vunpack.c.l.b16 %v824
        %v2638 = vunpack.c.h.b16 %v824
        %v2639 = vunpack.c.l.b16 %v825
        %v2640 = vunpack.c.h.b16 %v825
        %v2641 = vunpack.c.l.b16 %v826
        %v2642 = vunpack.c.h.b16 %v826
        %v2643 = vunpack.c.l.b16 %v827
        %v2644 = vunpack.c.h.b16 %v827
        %v2645 = vunpack.c.l.b16 %v828
        %v2646 = vunpack.c.h.b16 %v828
        %v2647 = vunpack.c.l.b16 %v829
        %v2648 = vunpack.c.h.b16 %v829
        %v2649 = vunpack.c.l.b16 %v830
        %v2650 = vunpack.c.h.b16 %v830
        %v2651 = vunpack.c.l.b16 %v831
        %v2652 = vunpack.c.h.b16 %v831
        %v2653 = vunpack.c.l.b16 %v832
        %v2654 = vunpack.c.h.b16 %v832
        %v2655 = vunpack.c.l.b16 %v833
        %v2656 = vunpack.c.h.b16 %v833
        %v2657 = vunpack.c.l.b16 %v834
        %v2658 = vunpack.c.h.b16 %v834
        %v2659 = vunpack.c.l.b16 %v835
        %v2660 = vunpack.c.h.b16 %v835
        %v2661 = vunpack.c.l.b16 %v836
        %v2662 = vunpack.c.h.b16 %v836
        %v2663 = vunpack.c.l.b16 %v837
        %v2664 = vunpack.c.h.b16 %v837
        %v2665 = vunpack.c.l.b16 %v838
        %v2666 = vunpack.c.h.b16 %v838
        %v2667 = vunpack.c.l.b16 %v839
        %v2668 = vunpack.c.h.b16 %v839
        %v2669 = vunpack.c.l.b16 %v840
        %v2670 = vunpack.c.h.b16 %v840
        %v2671 = vunpack.c.l.b16 %v841
        %v2672 = vunpack.c.h.b16 %v841
        %v2673 = vunpack.c.l.b16 %v842
        %v2674 = vunpack.c.h.b16 %v842
        %v2675 = vunpack.c.l.b16 %v843
        %v2676 = vunpack.c.h.b16 %v843
        %v2677 = vunpack.c.l.b16 %v844
        %v2678 = vunpack.c.h.b16 %v844
        %v2679 = vunpack.c.l.b16 %v845
        %v2680 = vunpack.c.h.b16 %v845
        %v2681 = vunpack.c.l.b16 %v846
        %v2682 = vunpack.c.h.b16 %v846
        %v2683 = vunpack.c.l.b16 %v847
        %v2684 = vunpack.c.h.b16 %v847
        %v2685 = vunpack.c.l.b16 %v848
        %v2686 = vunpack.c.h.b16 %v848
        %v2687 = vunpack.c.l.b16 %v849
        %v2688 = vunpack.c.h.b16 %v849
        %v2689 = vunpack.c.l.b16 %v850
        %v2690 = vunpack.c.h.b16 %v850
        %v2691 = vunpack.c.l.b16 %v851
        %v2692 = vunpack.c.h.b16 %v851
        %v2693 = vunpack.c.l.b16 %v852
        %v2694 = vunpack.c.h.b16 %v852
        %v2695 = vunpack.c.l.b16 %v853
        %v2696 = vunpack.c.h.b16 %v853
        %v2697 = vunpack.c.l.b16 %v854
        %v2698 = vunpack.c.h.b16 %v854
        %v2699 = vunpack.c.l.b16 %v855
        %v2700 = vunpack.c.h.b16 %v855
        %v2701 = vunpack.c.l.b16 %v856
        %v2702 = vunpack.c.h.b16 %v856
        %v2703 = vunpack.c.l.b16 %v857
        %v2704 = vunpack.c.h.b16 %v857
        %v2705 = vunpack.c.l.b16 %v858
        %v2706 = vunpack.c.h.b16 %v858
        %v2707 = vunpack.c.l.b16 %v859
        %v2708 = vunpack.c.h.b16 %v859
        %v2709 = vunpack.c.l.b16 %v860
        %v2710 = vunpack.c.h.b16 %v860
        %v2711 = vunpack.c.l.b16 %v861
        %v2712 = vunpack.c.h.b16 %v861
        %v2713 = vunpack.c.l.b16 %v862
        %v2714 = vunpack.c.h.b16 %v862
        %v2715 = vunpack.c.l.b16 %v863
        %v2716 = vunpack.c.h.b16 %v863
        %v2717 = vunpack.c.l.b16 %v864
        %v2718 = vunpack.c.h.b16 %v864
        %v2719 = vunpack.c.l.b16 %v865
        %v2720 = vunpack.c.h.b16 %v865
        %v2721 = vunpack.c.l.b16 %v866
        %v2722 = vunpack.c.h.b16 %v866
        %v2723 = vunpack.c.l.b16 %v867
        %v2724 = vunpack.c.h.b16 %v867
        %v2725 = vunpack.c.l.b16 %v868
        %v2726 = vunpack.c.h.b16 %v868
        %v2727 = vunpack.c.l.b16 %v869
        %v2728 = vunpack.c.h.b16 %v869
        %v2729 = vunpack.c.l.b16 %v870
        %v2730 = vunpack.c.h.b16 %v870
        %v2731 = vunpack.c.l.b16 %v871
        %v2732 = vunpack.c.h.b16 %v871
        %v2733 = vunpack.c.l.b16 %v872
        %v2734 = vunpack.c.h.b16 %v872
        %v2735 = vunpack.c.l.b16 %v873
        %v2736 = vunpack.c.h.b16 %v873
        %v2737 = vunpack.c.l.b16 %v874
        %v2738 = vunpack.c.h.b16 %v874
        %v2739 = vunpack.c.l.b16 %v875
        %v2740 = vunpack.c.h.b16 %v875
        %v2741 = vunpack.c.l.b16 %v876
        %v2742 = vunpack.c.h.b16 %v876
        %v2743 = vunpack.c.l.b16 %v877
        %v2744 = vunpack.c.h.b16 %v877
        %v2745 = vunpack.c.l.b16 %v878
        %v2746 = vunpack.c.h.b16 %v878
        %v2747 = vunpack.c.l.b16 %v879
        %v2748 = vunpack.c.h.b16 %v879
        %v2749 = vunpack.c.l.b16 %v880
        %v2750 = vunpack.c.h.b16 %v880
        %v2751 = vunpack.c.l.b16 %v881
        %v2752 = vunpack.c.h.b16 %v881
        %v2753 = vunpack.c.l.b16 %v882
        %v2754 = vunpack.c.h.b16 %v882
        %v2755 = vunpack.c.l.b16 %v883
        %v2756 = vunpack.c.h.b16 %v883
        %v2757 = vunpack.c.l.b16 %v884
        %v2758 = vunpack.c.h.b16 %v884
        %v2759 = vunpack.c.l.b16 %v885
        %v2760 = vunpack.c.h.b16 %v885
        %v2761 = vunpack.c.l.b16 %v886
        %v2762 = vunpack.c.h.b16 %v886
        %v2763 = vunpack.c.l.b16 %v887
        %v2764 = vunpack.c.h.b16 %v887
        %v2765 = vunpack.c.l.b16 %v888
        %v2766 = vunpack.c.h.b16 %v888
        %v2767 = vunpack.c.l.b16 %v889
        %v2768 = vunpack.c.h.b16 %v889
        %v2769 = vunpack.c.l.b16 %v890
        %v2770 = vunpack.c.h.b16 %v890
        %v2771 = vunpack.c.l.b16 %v891
        %v2772 = vunpack.c.h.b16 %v891
        %v2773 = vunpack.c.l.b16 %v892
        %v2774 = vunpack.c.h.b16 %v892
        %v2775 = vunpack.c.l.b16 %v893
        %v2776 = vunpack.c.h.b16 %v893
        %v2777 = vunpack.c.l.b16 %v894
        %v2778 = vunpack.c.h.b16 %v894
        %v2779 = vunpack.c.l.b16 %v895
        %v2780 = vunpack.c.h.b16 %v895
        %v2781 = vunpack.c.l.b16 %v896
        %v2782 = vunpack.c.h.b16 %v896
        %v2783 = vunpack.c.l.b16 %v897
        %v2784 = vunpack.c.h.b16 %v897
        %v2785 = vunpack.c.l.b16 %v898
        %v2786 = vunpack.c.h.b16 %v898
        %v2787 = vunpack.c.l.b16 %v899
        %v2788 = vunpack.c.h.b16 %v899
        %v2789 = vunpack.c.l.b16 %v900
        %v2790 = vunpack.c.h.b16 %v900
        %v2791 = vunpack.c.l.b16 %v901
        %v2792 = vunpack.c.h.b16 %v901
        %v2793 = vunpack.c.l.b16 %v902
        %v2794 = vunpack.c.h.b16 %v902
        %v2795 = vunpack.c.l.b16 %v903
        %v2796 = vunpack.c.h.b16 %v903
        %v2797 = vunpack.c.l.b16 %v904
        %v2798 = vunpack.c.h.b16 %v904
        %v2799 = vunpack.c.l.b16 %v905
        %v2800 = vunpack.c.h.b16 %v905
        %v2801 = vunpack.c.l.b16 %v906
        %v2802 = vunpack.c.h.b16 %v906
        %v2803 = vunpack.c.l.b16 %v907
        %v2804 = vunpack.c.h.b16 %v907
        %v2805 = vunpack.c.l.b16 %v908
        %v2806 = vunpack.c.h.b16 %v908
        %v2807 = vunpack.c.l.b16 %v909
        %v2808 = vunpack.c.h.b16 %v909
        %v2809 = vunpack.c.l.b16 %v910
        %v2810 = vunpack.c.h.b16 %v910
        %v2811 = vunpack.c.l.b16 %v911
        %v2812 = vunpack.c.h.b16 %v911
        %v2813 = vunpack.c.l.b16 %v912
        %v2814 = vunpack.c.h.b16 %v912
        %v2815 = vunpack.c.l.b16 %v913
        %v2816 = vunpack.c.h.b16 %v913
        %v2817 = vunpack.c.l.b16 %v914
        %v2818 = vunpack.c.h.b16 %v914
        %v2819 = vunpack.c.l.b16 %v915
        %v2820 = vunpack.c.h.b16 %v915
        %v2821 = vunpack.c.l.b16 %v916
        %v2822 = vunpack.c.h.b16 %v916
        %v2823 = vunpack.c.l.b16 %v917
        %v2824 = vunpack.c.h.b16 %v917
        %v2825 = vunpack.c.l.b16 %v918
        %v2826 = vunpack.c.h.b16 %v918
        %v2827 = vunpack.c.l.b16 %v919
        %v2828 = vunpack.c.h.b16 %v919
        %v2829 = vunpack.c.l.b16 %v920
        %v2830 = vunpack.c.h.b16 %v920
        %v2831 = vunpack.c.l.b16 %v921
        %v2832 = vunpack.c.h.b16 %v921
        %v2833 = vunpack.c.l.b16 %v922
        %v2834 = vunpack.c.h.b16 %v922
        %v2835 = vunpack.c.l.b16 %v923
        %v2836 = vunpack.c.h.b16 %v923
        %v2837 = vunpack.c.l.b16 %v924
        %v2838 = vunpack.c.h.b16 %v924
        %v2839 = vunpack.c.l.b16 %v925
        %v2840 = vunpack.c.h.b16 %v925
        %v2841 = vunpack.c.l.b16 %v926
        %v2842 = vunpack.c.h.b16 %v926
        %v2843 = vunpack.c.l.b16 %v927
        %v2844 = vunpack.c.h.b16 %v927
        %v2845 = vunpack.c.l.b16 %v928
        %v2846 = vunpack.c.h.b16 %v928
        %v2847 = vunpack.c.l.b16 %v929
        %v2848 = vunpack.c.h.b16 %v929
        %v2849 = vunpack.c.l.b16 %v930
        %v2850 = vunpack.c.h.b16 %v930
        %v2851 = vunpack.c.l.b16 %v931
        %v2852 = vunpack.c.h.b16 %v931
        %v2853 = vunpack.c.l.b16 %v932
        %v2854 = vunpack.c.h.b16 %v932
        %v2855 = vunpack.c.l.b16 %v933
        %v2856 = vunpack.c.h.b16 %v933
        %v2857 = vunpack.c.l.b16 %v934
        %v2858 = vunpack.c.h.b16 %v934
        %v2859 = vunpack.c.l.b16 %v935
        %v2860 = vunpack.c.h.b16 %v935
        %v2861 = vunpack.c.l.b16 %v936
        %v2862 = vunpack.c.h.b16 %v936
        %v2863 = vunpack.c.l.b16 %v937
        %v2864 = vunpack.c.h.b16 %v937
        %v2865 = vunpack.c.l.b16 %v938
        %v2866 = vunpack.c.h.b16 %v938
        %v2867 = vunpack.c.l.b16 %v939
        %v2868 = vunpack.c.h.b16 %v939
        %v2869 = vunpack.c.l.b16 %v940
        %v2870 = vunpack.c.h.b16 %v940
        %v2871 = vunpack.c.l.b16 %v941
        %v2872 = vunpack.c.h.b16 %v941
        %v2873 = vunpack.c.l.b16 %v942
        %v2874 = vunpack.c.h.b16 %v942
        %v2875 = vunpack.c.l.b16 %v943
        %v2876 = vunpack.c.h.b16 %v943
        %v2877 = vunpack.c.l.b16 %v944
        %v2878 = vunpack.c.h.b16 %v944
        %v2879 = vunpack.c.l.b16 %v945
        %v2880 = vunpack.c.h.b16 %v945
        %v2881 = vunpack.c.l.b16 %v946
        %v2882 = vunpack.c.h.b16 %v946
        %v2883 = vunpack.c.l.b16 %v947
        %v2884 = vunpack.c.h.b16 %v947
        %v2885 = vunpack.c.l.b16 %v948
        %v2886 = vunpack.c.h.b16 %v948
        %v2887 = vunpack.c.l.b16 %v949
        %v2888 = vunpack.c.h.b16 %v949
        %v2889 = vunpack.c.l.b16 %v950
        %v2890 = vunpack.c.h.b16 %v950
        %v2891 = vunpack.c.l.b16 %v951
        %v2892 = vunpack.c.h.b16 %v951
        %v2893 = vunpack.c.l.b16 %v952
        %v2894 = vunpack.c.h.b16 %v952
        %v2895 = vunpack.c.l.b16 %v953
        %v2896 = vunpack.c.h.b16 %v953
        %v2897 = vunpack.c.l.b16 %v954
        %v2898 = vunpack.c.h.b16 %v954
        %v2899 = vunpack.c.l.b16 %v955
        %v2900 = vunpack.c.h.b16 %v955
        %v2901 = vunpack.c.l.b16 %v956
        %v2902 = vunpack.c.h.b16 %v956
        %v2903 = vunpack.c.l.b16 %v957
        %v2904 = vunpack.c.h.b16 %v957
        %v2905 = vunpack.c.l.b16 %v958
        %v2906 = vunpack.c.h.b16 %v958
        %v2907 = vunpack.c.l.b16 %v959
        %v2908 = vunpack.c.h.b16 %v959
        %v2909 = vunpack.c.l.b16 %v960
        %v2910 = vunpack.c.h.b16 %v960
        %v2911 = vunpack.c.l.b16 %v961
        %v2912 = vunpack.c.h.b16 %v961
        %v2913 = vunpack.c.l.b16 %v962
        %v2914 = vunpack.c.h.b16 %v962
        %v2915 = vunpack.c.l.b16 %v963
        %v2916 = vunpack.c.h.b16 %v963
        %v2917 = vunpack.c.l.b16 %v964
        %v2918 = vunpack.c.h.b16 %v964
        %v2919 = vunpack.c.l.b16 %v965
        %v2920 = vunpack.c.h.b16 %v965
        %v2921 = vunpack.c.l.b16 %v966
        %v2922 = vunpack.c.h.b16 %v966
        %v2923 = vunpack.c.l.b16 %v967
        %v2924 = vunpack.c.h.b16 %v967
        %v2925 = vunpack.c.l.b16 %v968
        %v2926 = vunpack.c.h.b16 %v968
        %v2927 = vunpack.c.l.b16 %v969
        %v2928 = vunpack.c.h.b16 %v969
        %v2929 = vunpack.c.l.b16 %v970
        %v2930 = vunpack.c.h.b16 %v970
        %v2931 = vunpack.c.l.b16 %v971
        %v2932 = vunpack.c.h.b16 %v971
        %v2933 = vunpack.c.l.b16 %v972
        %v2934 = vunpack.c.h.b16 %v972
        %v2935 = vunpack.c.l.b16 %v973
        %v2936 = vunpack.c.h.b16 %v973
        %v2937 = vunpack.c.l.b16 %v974
        %v2938 = vunpack.c.h.b16 %v974
        %v2939 = vunpack.c.l.b16 %v975
        %v2940 = vunpack.c.h.b16 %v975
        %v2941 = vunpack.c.l.b16 %v976
        %v2942 = vunpack.c.h.b16 %v976
        %v2943 = vunpack.c.l.b16 %v977
        %v2944 = vunpack.c.h.b16 %v977
        %v2945 = vunpack.c.l.b16 %v978
        %v2946 = vunpack.c.h.b16 %v978
        %v2947 = vunpack.c.l.b16 %v979
        %v2948 = vunpack.c.h.b16 %v979
        %v2949 = vunpack.c.l.b16 %v980
        %v2950 = vunpack.c.h.b16 %v980
        %v2951 = vunpack.c.l.b16 %v981
        %v2952 = vunpack.c.h.b16 %v981
        %v2953 = vunpack.c.l.b16 %v982
        %v2954 = vunpack.c.h.b16 %v982
        %v2955 = vunpack.c.l.b16 %v983
        %v2956 = vunpack.c.h.b16 %v983
        %v2957 = vunpack.c.l.b16 %v984
        %v2958 = vunpack.c.h.b16 %v984
        %v2959 = vunpack.c.l.b16 %v985
        %v2960 = vunpack.c.h.b16 %v985
        %v2961 = vunpack.c.l.b16 %v986
        %v2962 = vunpack.c.h.b16 %v986
        %v2963 = vunpack.c.l.b16 %v987
        %v2964 = vunpack.c.h.b16 %v987
        %v2965 = vunpack.c.l.b16 %v988
        %v2966 = vunpack.c.h.b16 %v988
        %v2967 = vunpack.c.l.b16 %v989
        %v2968 = vunpack.c.h.b16 %v989
        %v2969 = vunpack.c.l.b16 %v990
        %v2970 = vunpack.c.h.b16 %v990
        %v2971 = vunpack.c.l.b16 %v991
        %v2972 = vunpack.c.h.b16 %v991
        %v2973 = vunpack.c.l.b16 %v992
        %v2974 = vunpack.c.h.b16 %v992
        %v2975 = vunpack.c.l.b16 %v993
        %v2976 = vunpack.c.h.b16 %v993
        %v2977 = vunpack.c.l.b16 %v994
        %v2978 = vunpack.c.h.b16 %v994
        %v2979 = vunpack.c.l.b16 %v995
        %v2980 = vunpack.c.h.b16 %v995
        %v2981 = vunpack.c.l.b16 %v996
        %v2982 = vunpack.c.h.b16 %v996
        %v2983 = vunpack.c.l.b16 %v997
        %v2984 = vunpack.c.h.b16 %v997
        %v2985 = vunpack.c.l.b16 %v998
        %v2986 = vunpack.c.h.b16 %v998
        %v2987 = vunpack.c.l.b16 %v999
        %v2988 = vunpack.c.h.b16 %v999
        %v2989 = vunpack.c.l.b16 %v1000
        %v2990 = vunpack.c.h.b16 %v1000
        %v2991 = vunpack.c.l.b16 %v1001
        %v2992 = vunpack.c.h.b16 %v1001
        %v2993 = vunpack.c.l.b16 %v1002
        %v2994 = vunpack.c.h.b16 %v1002
        %v2995 = vunpack.c.l.b16 %v1003
        %v2996 = vunpack.c.h.b16 %v1003
        %v2997 = vunpack.c.l.b16 %v1004
        %v2998 = vunpack.c.h.b16 %v1004
        %v2999 = vunpack.c.l.b16 %v1005
        %v3000 = vunpack.c.h.b16 %v1005
        %v3001 = vunpack.c.l.b16 %v1006
        %v3002 = vunpack.c.h.b16 %v1006
        %v3003 = vunpack.c.l.b16 %v1007
        %v3004 = vunpack.c.h.b16 %v1007
        %v3005 = vunpack.c.l.b16 %v1008
        %v3006 = vunpack.c.h.b16 %v1008
        %v3007 = vunpack.c.l.b16 %v1009
        %v3008 = vunpack.c.h.b16 %v1009
        %v3009 = vunpack.c.l.b16 %v1010
        %v3010 = vunpack.c.h.b16 %v1010
        %v3011 = vunpack.c.l.b16 %v1011
        %v3012 = vunpack.c.h.b16 %v1011
        %v3013 = vunpack.c.l.b16 %v1012
        %v3014 = vunpack.c.h.b16 %v1012
        %v3015 = vunpack.c.l.b16 %v1013
        %v3016 = vunpack.c.h.b16 %v1013
        %v3017 = vunpack.c.l.b16 %v1014
        %v3018 = vunpack.c.h.b16 %v1014
        %v3019 = vunpack.c.l.b16 %v1015
        %v3020 = vunpack.c.h.b16 %v1015
        %v3021 = vunpack.c.l.b16 %v1016
        %v3022 = vunpack.c.h.b16 %v1016
        %v3023 = vunpack.c.l.b16 %v1017
        %v3024 = vunpack.c.h.b16 %v1017
        %v3025 = vunpack.c.l.b16 %v1018
        %v3026 = vunpack.c.h.b16 %v1018
        %v3027 = vunpack.c.l.b16 %v1019
        %v3028 = vunpack.c.h.b16 %v1019
        %v3029 = vunpack.c.l.b16 %v1020
        %v3030 = vunpack.c.h.b16 %v1020
        %v3031 = vunpack.c.l.b16 %v1021
        %v3032 = vunpack.c.h.b16 %v1021
        %v3033 = vunpack.c.l.b16 %v1022
        %v3034 = vunpack.c.h.b16 %v1022
        %v3035 = vunpack.c.l.b16 %v1023
        %v3036 = vunpack.c.h.b16 %v1023
        %v3037 = vunpack.c.l.b16 %v1024
        %v3038 = vunpack.c.h.b16 %v1024
        %v3039 = vunpack.c.l.b16 %v1025
        %v3040 = vunpack.c.h.b16 %v1025
        %v3041 = vunpack.c.l.b16 %v1026
        %v3042 = vunpack.c.h.b16 %v1026
        %v3043 = vunpack.c.l.b16 %v1027
        %v3044 = vunpack.c.h.b16 %v1027
        %v3045 = vunpack.c.l.b16 %v1028
        %v3046 = vunpack.c.h.b16 %v1028
        %v3047 = vunpack.c.l.b16 %v1029
        %v3048 = vunpack.c.h.b16 %v1029
        %v3049 = vunpack.c.l.b16 %v1030
        %v3050 = vunpack.c.h.b16 %v1030
        %v3051 = vunpack.c.l.b16 %v1031
        %v3052 = vunpack.c.h.b16 %v1031
        %v3053 = vunpack.c.l.b16 %v1032
        %v3054 = vunpack.c.h.b16 %v1032
        %v3055 = vunpack.c.l.b16 %v1033
        %v3056 = vunpack.c.h.b16 %v1033
        %v3057 = vunpack.c.l.b16 %v1034
        %v3058 = vunpack.c.h.b16 %v1034
        %v3059 = vunpack.c.l.b16 %v1035
        %v3060 = vunpack.c.h.b16 %v1035
        %v3061 = vunpack.c.l.b16 %v1036
        %v3062 = vunpack.c.h.b16 %v1036
        %v3063 = vunpack.c.l.b16 %v1037
        %v3064 = vunpack.c.h.b16 %v1037
        %v3065 = vunpack.c.l.b16 %v1038
        %v3066 = vunpack.c.h.b16 %v1038
        %v3067 = vunpack.c.l.b16 %v1039
        %v3068 = vunpack.c.h.b16 %v1039
        %v3069 = vunpack.c.l.b16 %v1040
        %v3070 = vunpack.c.h.b16 %v1040
        %v3071 = vunpack.c.l.b16 %v1041
        %v3072 = vunpack.c.h.b16 %v1041
        %v3073 = vunpack.c.l.b16 %v1042
        %v3074 = vunpack.c.h.b16 %v1042
        %v3075 = vunpack.c.l.b16 %v1043
        %v3076 = vunpack.c.h.b16 %v1043
        %v3077 = vunpack.c.l.b16 %v1044
        %v3078 = vunpack.c.h.b16 %v1044
        %v3079 = vunpack.c.l.b16 %v1045
        %v3080 = vunpack.c.h.b16 %v1045
        %v3081 = vunpack.c.l.b16 %v1046
        %v3082 = vunpack.c.h.b16 %v1046
        %v3083 = vunpack.c.l.b16 %v1047
        %v3084 = vunpack.c.h.b16 %v1047
        %v3085 = vunpack.c.l.b16 %v1048
        %v3086 = vunpack.c.h.b16 %v1048
        %v3087 = vunpack.c.l.b16 %v1049
        %v3088 = vunpack.c.h.b16 %v1049
        %v3089 = vunpack.c.l.b16 %v1050
        %v3090 = vunpack.c.h.b16 %v1050
        %v3091 = vunpack.c.l.b16 %v1051
        %v3092 = vunpack.c.h.b16 %v1051
        %v3093 = vunpack.c.l.b16 %v1052
        %v3094 = vunpack.c.h.b16 %v1052
        %v3095 = vunpack.c.l.b16 %v1053
        %v3096 = vunpack.c.h.b16 %v1053
        %v3097 = vunpack.c.l.b16 %v1054
        %v3098 = vunpack.c.h.b16 %v1054
        %v3099 = vunpack.c.l.b16 %v1055
        %v3100 = vunpack.c.h.b16 %v1055
        %v3101 = vunpack.c.l.b16 %v1056
        %v3102 = vunpack.c.h.b16 %v1056
        %v3103 = vunpack.c.l.b16 %v1057
        %v3104 = vunpack.c.h.b16 %v1057
        %v3105 = vunpack.c.l.b16 %v1058
        %v3106 = vunpack.c.h.b16 %v1058
        %v3107 = vunpack.c.l.b16 %v1059
        %v3108 = vunpack.c.h.b16 %v1059
        %v3109 = vunpack.c.l.b16 %v1060
        %v3110 = vunpack.c.h.b16 %v1060
        %v3111 = vunpack.c.l.b16 %v1061
        %v3112 = vunpack.c.h.b16 %v1061
        %v3113 = vunpack.c.l.b16 %v1062
        %v3114 = vunpack.c.h.b16 %v1062
        %v3115 = vunpack.c.l.b16 %v1063
        %v3116 = vunpack.c.h.b16 %v1063
        %v3117 = vunpack.c.l.b16 %v1064
        %v3118 = vunpack.c.h.b16 %v1064
        %v3119 = vunpack.c.l.b16 %v1065
        %v3120 = vunpack.c.h.b16 %v1065
        %v3121 = vunpack.c.l.b16 %v1066
        %v3122 = vunpack.c.h.b16 %v1066
        %v3123 = vunpack.c.l.b16 %v1067
        %v3124 = vunpack.c.h.b16 %v1067
        %v3125 = vunpack.c.l.b16 %v1068
        %v3126 = vunpack.c.h.b16 %v1068
        %v3127 = vunpack.c.l.b16 %v1069
        %v3128 = vunpack.c.h.b16 %v1069
        %v3129 = vunpack.c.l.b16 %v1070
        %v3130 = vunpack.c.h.b16 %v1070
        %v3131 = vunpack.c.l.b16 %v1071
        %v3132 = vunpack.c.h.b16 %v1071
        %v3133 = vunpack.c.l.b16 %v1072
        %v3134 = vunpack.c.h.b16 %v1072
        %v3135 = vunpack.c.l.b16 %v1073
        %v3136 = vunpack.c.h.b16 %v1073
        %v3137 = vunpack.c.l.b16 %v1074
        %v3138 = vunpack.c.h.b16 %v1074
        %v3139 = vunpack.c.l.b16 %v1075
        %v3140 = vunpack.c.h.b16 %v1075
        %v3141 = vunpack.c.l.b16 %v1076
        %v3142 = vunpack.c.h.b16 %v1076
        %v3143 = vunpack.c.l.b16 %v1077
        %v3144 = vunpack.c.h.b16 %v1077
        %v3145 = vunpack.c.l.b16 %v1078
        %v3146 = vunpack.c.h.b16 %v1078
        %v3147 = vunpack.c.l.b16 %v1079
        %v3148 = vunpack.c.h.b16 %v1079
        %v3149 = vunpack.c.l.b16 %v1080
        %v3150 = vunpack.c.h.b16 %v1080
        %v3151 = vunpack.c.l.b16 %v1081
        %v3152 = vunpack.c.h.b16 %v1081
        %v3153 = vunpack.c.l.b16 %v1082
        %v3154 = vunpack.c.h.b16 %v1082
        %v3155 = vunpack.c.l.b16 %v1083
        %v3156 = vunpack.c.h.b16 %v1083
        %v3157 = vunpack.c.l.b16 %v1084
        %v3158 = vunpack.c.h.b16 %v1084
        %v3159 = vunpack.c.l.b16 %v1085
        %v3160 = vunpack.c.h.b16 %v1085
        %v3161 = vunpack.c.l.b16 %v1086
        %v3162 = vunpack.c.h.b16 %v1086
        %v3163 = vunpack.c.l.b16 %v1087
        %v3164 = vunpack.c.h.b16 %v1087
        %v3165 = vunpack.c.l.b16 %v1088
        %v3166 = vunpack.c.h.b16 %v1088
        %v3167 = vunpack.c.l.b16 %v1089
        %v3168 = vunpack.c.h.b16 %v1089
        %v3169 = vunpack.c.l.b16 %v1090
        %v3170 = vunpack.c.h.b16 %v1090
        %v3171 = vunpack.c.l.b16 %v1091
        %v3172 = vunpack.c.h.b16 %v1091
        %v3173 = vunpack.c.l.b16 %v1092
        %v3174 = vunpack.c.h.b16 %v1092
        %v3175 = vunpack.c.l.b16 %v1093
        %v3176 = vunpack.c.h.b16 %v1093
        %v3177 = vunpack.c.l.b16 %v1094
        %v3178 = vunpack.c.h.b16 %v1094
        %v3179 = vunpack.c.l.b16 %v1095
        %v3180 = vunpack.c.h.b16 %v1095
        %v3181 = vunpack.c.l.b16 %v1096
        %v3182 = vunpack.c.h.b16 %v1096
        %v3183 = vunpack.c.l.b16 %v1097
        %v3184 = vunpack.c.h.b16 %v1097
        %v3185 = vunpack.c.l.b16 %v1098
        %v3186 = vunpack.c.h.b16 %v1098
        %v3187 = vunpack.c.l.b16 %v1099
        %v3188 = vunpack.c.h.b16 %v1099
        %v3189 = vunpack.c.l.b16 %v1100
        %v3190 = vunpack.c.h.b16 %v1100
        %v3191 = vunpack.c.l.b16 %v1101
        %v3192 = vunpack.c.h.b16 %v1101
        %v3193 = vunpack.c.l.b16 %v1102
        %v3194 = vunpack.c.h.b16 %v1102
        %v3195 = vunpack.c.l.b16 %v1103
        %v3196 = vunpack.c.h.b16 %v1103
        %v3197 = vunpack.c.l.b16 %v1104
        %v3198 = vunpack.c.h.b16 %v1104
        %v3199 = vunpack.c.l.b16 %v1105
        %v3200 = vunpack.c.h.b16 %v1105
        %v3201 = vunpack.c.l.b16 %v1106
        %v3202 = vunpack.c.h.b16 %v1106
        %v3203 = vunpack.c.l.b16 %v1107
        %v3204 = vunpack.c.h.b16 %v1107
        %v3205 = vunpack.c.l.b16 %v1108
        %v3206 = vunpack.c.h.b16 %v1108
        %v3207 = vunpack.c.l.b16 %v1109
        %v3208 = vunpack.c.h.b16 %v1109
        %v3209 = vunpack.c.l.b16 %v1110
        %v3210 = vunpack.c.h.b16 %v1110
        %v3211 = vunpack.c.l.b16 %v1111
        %v3212 = vunpack.c.h.b16 %v1111
        %v3213 = vunpack.c.l.b16 %v1112
        %v3214 = vunpack.c.h.b16 %v1112
        %v3215 = vunpack.c.l.b16 %v1113
        %v3216 = vunpack.c.h.b16 %v1113
        %v3217 = vunpack.c.l.b16 %v1114
        %v3218 = vunpack.c.h.b16 %v1114
        %v3219 = vunpack.c.l.b16 %v1115
        %v3220 = vunpack.c.h.b16 %v1115
        %v3221 = vunpack.c.l.b16 %v1116
        %v3222 = vunpack.c.h.b16 %v1116
        %v3223 = vunpack.c.l.b16 %v1117
        %v3224 = vunpack.c.h.b16 %v1117
        %v3225 = vunpack.c.l.b16 %v1118
        %v3226 = vunpack.c.h.b16 %v1118
        %v3227 = vunpack.c.l.b16 %v1119
        %v3228 = vunpack.c.h.b16 %v1119
        %v3229 = vunpack.c.l.b16 %v1120
        %v3230 = vunpack.c.h.b16 %v1120
        %v3231 = vunpack.c.l.b16 %v1121
        %v3232 = vunpack.c.h.b16 %v1121
        %v3233 = vunpack.c.l.b16 %v1122
        %v3234 = vunpack.c.h.b16 %v1122
        %v3235 = vunpack.c.l.b16 %v1123
        %v3236 = vunpack.c.h.b16 %v1123
        %v3237 = vunpack.c.l.b16 %v1124
        %v3238 = vunpack.c.h.b16 %v1124
        %v3239 = vunpack.c.l.b16 %v1125
        %v3240 = vunpack.c.h.b16 %v1125
        %v3241 = vunpack.c.l.b16 %v1126
        %v3242 = vunpack.c.h.b16 %v1126
        %v3243 = vunpack.c.l.b16 %v1127
        %v3244 = vunpack.c.h.b16 %v1127
        %v3245 = vunpack.c.l.b16 %v1128
        %v3246 = vunpack.c.h.b16 %v1128
        %v3247 = vunpack.c.l.b16 %v1129
        %v3248 = vunpack.c.h.b16 %v1129
        %v3249 = vunpack.c.l.b16 %v1130
        %v3250 = vunpack.c.h.b16 %v1130
        %v3251 = vunpack.c.l.b16 %v1131
        %v3252 = vunpack.c.h.b16 %v1131
        %v3253 = vunpack.c.l.b16 %v1132
        %v3254 = vunpack.c.h.b16 %v1132
        %v3255 = vunpack.c.l.b16 %v1133
        %v3256 = vunpack.c.h.b16 %v1133
        %v3257 = vunpack.c.l.b16 %v1134
        %v3258 = vunpack.c.h.b16 %v1134
        %v3259 = vunpack.c.l.b16 %v1135
        %v3260 = vunpack.c.h.b16 %v1135
        %v3261 = vunpack.c.l.b16 %v1136
        %v3262 = vunpack.c.h.b16 %v1136
        %v3263 = vunpack.c.l.b16 %v1137
        %v3264 = vunpack.c.h.b16 %v1137
        %v3265 = vunpack.c.l.b16 %v1138
        %v3266 = vunpack.c.h.b16 %v1138
        %v3267 = vunpack.c.l.b16 %v1139
        %v3268 = vunpack.c.h.b16 %v1139
        %v3269 = vunpack.c.l.b16 %v1140
        %v3270 = vunpack.c.h.b16 %v1140
        %v3271 = vunpack.c.l.b16 %v1141
        %v3272 = vunpack.c.h.b16 %v1141
        %v3273 = vunpack.c.l.b16 %v1142
        %v3274 = vunpack.c.h.b16 %v1142
        %v3275 = vunpack.c.l.b16 %v1143
        %v3276 = vunpack.c.h.b16 %v1143
        %v3277 = vunpack.c.l.b16 %v1144
        %v3278 = vunpack.c.h.b16 %v1144
        %v3279 = vunpack.c.l.b16 %v1145
        %v3280 = vunpack.c.h.b16 %v1145
        %v3281 = vunpack.c.l.b16 %v1146
        %v3282 = vunpack.c.h.b16 %v1146
        %v3283 = vunpack.c.l.b16 %v1147
        %v3284 = vunpack.c.h.b16 %v1147
        %v3285 = vunpack.c.l.b16 %v1148
        %v3286 = vunpack.c.h.b16 %v1148
        %v3287 = vunpack.c.l.b16 %v1149
        %v3288 = vunpack.c.h.b16 %v1149
        %v3289 = vunpack.c.l.b16 %v1150
        %v3290 = vunpack.c.h.b16 %v1150
        %v3291 = vunpack.c.l.b16 %v1151
        %v3292 = vunpack.c.h.b16 %v1151
        %v3293 = vunpack.c.l.b16 %v1152
        %v3294 = vunpack.c.h.b16 %v1152
        %v3295 = vunpack.c.l.b16 %v1153
        %v3296 = vunpack.c.h.b16 %v1153
        %v3297 = vunpack.c.l.b16 %v1154
        %v3298 = vunpack.c.h.b16 %v1154
        %v3299 = vunpack.c.l.b16 %v1155
        %v3300 = vunpack.c.h.b16 %v1155
        %v3301 = vunpack.c.l.b16 %v1156
        %v3302 = vunpack.c.h.b16 %v1156
        %v3303 = vunpack.c.l.b16 %v1157
        %v3304 = vunpack.c.h.b16 %v1157
        %v3305 = vunpack.c.l.b16 %v1158
        %v3306 = vunpack.c.h.b16 %v1158
        %v3307 = vunpack.c.l.b16 %v1159
        %v3308 = vunpack.c.h.b16 %v1159
        %v3309 = vunpack.c.l.b16 %v1160
        %v3310 = vunpack.c.h.b16 %v1160
        %v3311 = vunpack.c.l.b16 %v1161
        %v3312 = vunpack.c.h.b16 %v1161
        %v3313 = vunpack.c.l.b16 %v1162
        %v3314 = vunpack.c.h.b16 %v1162
        %v3315 = vunpack.c.l.b16 %v1163
        %v3316 = vunpack.c.h.b16 %v1163
        %v3317 = vunpack.c.l.b16 %v1164
        %v3318 = vunpack.c.h.b16 %v1164
        %v3319 = vunpack.c.l.b16 %v1165
        %v3320 = vunpack.c.h.b16 %v1165
        %v3321 = vunpack.c.l.b16 %v1166
        %v3322 = vunpack.c.h.b16 %v1166
        %v3323 = vunpack.c.l.b16 %v1167
        %v3324 = vunpack.c.h.b16 %v1167
        %v3325 = vunpack.c.l.b16 %v1168
        %v3326 = vunpack.c.h.b16 %v1168
        %v3327 = vunpack.c.l.b16 %v1169
        %v3328 = vunpack.c.h.b16 %v1169
        %v3329 = vunpack.c.l.b16 %v1170
        %v3330 = vunpack.c.h.b16 %v1170
        %v3331 = vunpack.c.l.b16 %v1171
        %v3332 = vunpack.c.h.b16 %v1171
        %v3333 = vunpack.c.l.b16 %v1172
        %v3334 = vunpack.c.h.b16 %v1172
        %v3335 = vunpack.c.l.b16 %v1173
        %v3336 = vunpack.c.h.b16 %v1173
        %v3337 = vunpack.c.l.b16 %v1174
        %v3338 = vunpack.c.h.b16 %v1174
        %v3339 = vunpack.c.l.b16 %v1175
        %v3340 = vunpack.c.h.b16 %v1175
        %v3341 = vunpack.c.l.b16 %v1176
        %v3342 = vunpack.c.h.b16 %v1176
        %v3343 = vunpack.c.l.b16 %v1177
        %v3344 = vunpack.c.h.b16 %v1177
        %v3345 = vunpack.c.l.b16 %v1178
        %v3346 = vunpack.c.h.b16 %v1178
        %v3347 = vunpack.c.l.b16 %v1179
        %v3348 = vunpack.c.h.b16 %v1179
        %v3349 = vunpack.c.l.b16 %v1180
        %v3350 = vunpack.c.h.b16 %v1180
        %v3351 = vunpack.c.l.b16 %v1181
        %v3352 = vunpack.c.h.b16 %v1181
        %v3353 = vunpack.c.l.b16 %v1182
        %v3354 = vunpack.c.h.b16 %v1182
        %v3355 = vunpack.c.l.b16 %v1183
        %v3356 = vunpack.c.h.b16 %v1183
        %v3357 = vunpack.c.l.b16 %v1184
        %v3358 = vunpack.c.h.b16 %v1184
        %v3359 = vunpack.c.l.b16 %v1185
        %v3360 = vunpack.c.h.b16 %v1185
        %v3361 = vunpack.c.l.b16 %v1186
        %v3362 = vunpack.c.h.b16 %v1186
        %v3363 = vunpack.c.l.b16 %v1187
        %v3364 = vunpack.c.h.b16 %v1187
        %v3365 = vunpack.c.l.b16 %v1188
        %v3366 = vunpack.c.h.b16 %v1188
        %v3367 = vunpack.c.l.b16 %v1189
        %v3368 = vunpack.c.h.b16 %v1189
        %v3369 = vunpack.c.l.b16 %v1190
        %v3370 = vunpack.c.h.b16 %v1190
        %v3371 = vunpack.c.l.b16 %v1191
        %v3372 = vunpack.c.h.b16 %v1191
        %v3373 = vunpack.c.l.b16 %v1192
        %v3374 = vunpack.c.h.b16 %v1192
        %v3375 = vunpack.c.l.b16 %v1193
        %v3376 = vunpack.c.h.b16 %v1193
        %v3377 = vunpack.c.l.b16 %v1194
        %v3378 = vunpack.c.h.b16 %v1194
        %v3379 = vunpack.c.l.b16 %v1195
        %v3380 = vunpack.c.h.b16 %v1195
        %v3381 = vunpack.c.l.b16 %v1196
        %v3382 = vunpack.c.h.b16 %v1196
        %v3383 = vunpack.c.l.b16 %v1197
        %v3384 = vunpack.c.h.b16 %v1197
        %v3385 = vunpack.c.l.b16 %v1198
        %v3386 = vunpack.c.h.b16 %v1198
        %v3387 = vunpack.c.l.b16 %v1199
        %v3388 = vunpack.c.h.b16 %v1199
        %v3389 = vunpack.c.l.b16 %v1200
        %v3390 = vunpack.c.h.b16 %v1200
        %v3391 = vunpack.c.l.b16 %v1201
        %v3392 = vunpack.c.h.b16 %v1201
        %v3393 = vunpack.c.l.b16 %v1202
        %v3394 = vunpack.c.h.b16 %v1202
        %v3395 = vunpack.c.l.b16 %v1203
        %v3396 = vunpack.c.h.b16 %v1203
        %v3397 = vunpack.c.l.b16 %v1204
        %v3398 = vunpack.c.h.b16 %v1204
        %v3399 = vunpack.c.l.b16 %v1205
        %v3400 = vunpack.c.h.b16 %v1205
        %v3401 = vunpack.c.l.b16 %v1206
        %v3402 = vunpack.c.h.b16 %v1206
        %v3403 = vunpack.c.l.b16 %v1207
        %v3404 = vunpack.c.h.b16 %v1207
        %v3405 = vunpack.c.l.b16 %v1208
        %v3406 = vunpack.c.h.b16 %v1208
        %v3407 = vunpack.c.l.b16 %v1209
        %v3408 = vunpack.c.h.b16 %v1209
        %v3409 = vunpack.c.l.b16 %v1210
        %v3410 = vunpack.c.h.b16 %v1210
        %v3411 = vunpack.c.l.b16 %v1211
        %v3412 = vunpack.c.h.b16 %v1211
        %v3413 = vunpack.c.l.b16 %v1212
        %v3414 = vunpack.c.h.b16 %v1212
        %v3415 = vunpack.c.l.b16 %v1213
        %v3416 = vunpack.c.h.b16 %v1213
        %v3417 = vunpack.c.l.b16 %v1214
        %v3418 = vunpack.c.h.b16 %v1214
        %v3419 = vunpack.c.l.b16 %v1215
        %v3420 = vunpack.c.h.b16 %v1215
        %v3421 = vunpack.c.l.b16 %v1216
        %v3422 = vunpack.c.h.b16 %v1216
        %v3423 = vunpack.c.l.b16 %v1217
        %v3424 = vunpack.c.h.b16 %v1217
        %v3425 = vunpack.c.l.b16 %v1218
        %v3426 = vunpack.c.h.b16 %v1218
        %v3427 = vunpack.c.l.b16 %v1219
        %v3428 = vunpack.c.h.b16 %v1219
        %v3429 = vunpack.c.l.b16 %v1220
        %v3430 = vunpack.c.h.b16 %v1220
        %v3431 = vunpack.c.l.b16 %v1221
        %v3432 = vunpack.c.h.b16 %v1221
        %v3433 = vunpack.c.l.b16 %v1222
        %v3434 = vunpack.c.h.b16 %v1222
        %v3435 = vunpack.c.l.b16 %v1223
        %v3436 = vunpack.c.h.b16 %v1223
        %v3437 = vunpack.c.l.b16 %v1224
        %v3438 = vunpack.c.h.b16 %v1224
        %v3439 = vunpack.c.l.b16 %v1225
        %v3440 = vunpack.c.h.b16 %v1225
        %v3441 = vunpack.c.l.b16 %v1226
        %v3442 = vunpack.c.h.b16 %v1226
        %v3443 = vunpack.c.l.b16 %v1227
        %v3444 = vunpack.c.h.b16 %v1227
        %v3445 = vunpack.c.l.b16 %v1228
        %v3446 = vunpack.c.h.b16 %v1228
        %v3447 = vunpack.c.l.b16 %v1229
        %v3448 = vunpack.c.h.b16 %v1229
        %v3449 = vunpack.c.l.b16 %v1230
        %v3450 = vunpack.c.h.b16 %v1230
        %v3451 = vunpack.c.l.b16 %v1231
        %v3452 = vunpack.c.h.b16 %v1231
        %v3453 = vunpack.c.l.b16 %v1232
        %v3454 = vunpack.c.h.b16 %v1232
        %v3455 = vunpack.c.l.b16 %v1233
        %v3456 = vunpack.c.h.b16 %v1233
        %v3457 = vunpack.c.l.b16 %v1234
        %v3458 = vunpack.c.h.b16 %v1234
        %v3459 = vunpack.c.l.b16 %v1235
        %v3460 = vunpack.c.h.b16 %v1235
        %v3461 = vunpack.c.l.b16 %v1236
        %v3462 = vunpack.c.h.b16 %v1236
        %v3463 = vunpack.c.l.b16 %v1237
        %v3464 = vunpack.c.h.b16 %v1237
        %v3465 = vunpack.c.l.b16 %v1238
        %v3466 = vunpack.c.h.b16 %v1238
        %v3467 = vunpack.c.l.b16 %v1239
        %v3468 = vunpack.c.h.b16 %v1239
        %v3469 = vunpack.c.l.b16 %v1240
        %v3470 = vunpack.c.h.b16 %v1240
        %v3471 = vunpack.c.l.b16 %v1241
        %v3472 = vunpack.c.h.b16 %v1241
        %v3473 = vunpack.c.l.b16 %v1242
        %v3474 = vunpack.c.h.b16 %v1242
        %v3475 = vunpack.c.l.b16 %v1243
        %v3476 = vunpack.c.h.b16 %v1243
        %v3477 = vunpack.c.l.b16 %v1244
        %v3478 = vunpack.c.h.b16 %v1244
        %v3479 = vunpack.c.l.b16 %v1245
        %v3480 = vunpack.c.h.b16 %v1245
        %v3481 = vunpack.c.l.b16 %v1246
        %v3482 = vunpack.c.h.b16 %v1246
        %v3483 = vunpack.c.l.b16 %v1247
        %v3484 = vunpack.c.h.b16 %v1247
        %v3485 = vunpack.c.l.b16 %v1248
        %v3486 = vunpack.c.h.b16 %v1248
        %v3487 = vunpack.c.l.b16 %v1249
        %v3488 = vunpack.c.h.b16 %v1249
        %v3489 = vunpack.c.l.b16 %v1250
        %v3490 = vunpack.c.h.b16 %v1250
        %v3491 = vunpack.c.l.b16 %v1251
        %v3492 = vunpack.c.h.b16 %v1251
        %v3493 = vunpack.c.l.b16 %v1252
        %v3494 = vunpack.c.h.b16 %v1252
        %v3495 = vunpack.c.l.b16 %v1253
        %v3496 = vunpack.c.h.b16 %v1253
        %v3497 = vunpack.c.l.b16 %v1254
        %v3498 = vunpack.c.h.b16 %v1254
        %v3499 = vunpack.c.l.b16 %v1255
        %v3500 = vunpack.c.h.b16 %v1255
        %v3501 = vunpack.c.l.b16 %v1256
        %v3502 = vunpack.c.h.b16 %v1256
        %v3503 = vunpack.c.l.b16 %v1257
        %v3504 = vunpack.c.h.b16 %v1257
        %v3505 = vunpack.c.l.b16 %v1258
        %v3506 = vunpack.c.h.b16 %v1258
        %v3507 = vunpack.c.l.b16 %v1259
        %v3508 = vunpack.c.h.b16 %v1259
        %v3509 = vunpack.c.l.b16 %v1260
        %v3510 = vunpack.c.h.b16 %v1260
        %v3511 = vunpack.c.l.b16 %v1261
        %v3512 = vunpack.c.h.b16 %v1261
        %v3513 = vunpack.c.l.b16 %v1262
        %v3514 = vunpack.c.h.b16 %v1262
        %v3515 = vunpack.c.l.b16 %v1263
        %v3516 = vunpack.c.h.b16 %v1263
        %v3517 = vunpack.c.l.b16 %v1264
        %v3518 = vunpack.c.h.b16 %v1264
        %v3519 = vunpack.c.l.b16 %v1265
        %v3520 = vunpack.c.h.b16 %v1265
        %v3521 = vunpack.c.l.b16 %v1266
        %v3522 = vunpack.c.h.b16 %v1266
        %v3523 = vunpack.c.l.b16 %v1267
        %v3524 = vunpack.c.h.b16 %v1267
        %v3525 = vunpack.c.l.b16 %v1268
        %v3526 = vunpack.c.h.b16 %v1268
        %v3527 = vunpack.c.l.b16 %v1269
        %v3528 = vunpack.c.h.b16 %v1269
        %v3529 = vunpack.c.l.b16 %v1270
        %v3530 = vunpack.c.h.b16 %v1270
        %v3531 = vunpack.c.l.b16 %v1271
        %v3532 = vunpack.c.h.b16 %v1271
        %v3533 = vunpack.c.l.b16 %v1272
        %v3534 = vunpack.c.h.b16 %v1272
        %v3535 = vunpack.c.l.b16 %v1273
        %v3536 = vunpack.c.h.b16 %v1273
        %v3537 = vunpack.c.l.b16 %v1274
        %v3538 = vunpack.c.h.b16 %v1274
        %v3539 = vunpack.c.l.b16 %v1275
        %v3540 = vunpack.c.h.b16 %v1275
        %v3541 = vunpack.c.l.b16 %v1276
        %v3542 = vunpack.c.h.b16 %v1276
        %v3543 = vunpack.c.l.b16 %v1277
        %v3544 = vunpack.c.h.b16 %v1277
        %v3545 = vunpack.c.l.b16 %v1278
        %v3546 = vunpack.c.h.b16 %v1278
        %v3547 = vunpack.c.l.b16 %v1279
        %v3548 = vunpack.c.h.b16 %v1279
        %v3549 = vunpack.c.l.b16 %v1280
        %v3550 = vunpack.c.h.b16 %v1280
        %v3551 = vunpack.c.l.b16 %v1281
        %v3552 = vunpack.c.h.b16 %v1281
        %v3553 = vunpack.c.l.b16 %v1282
        %v3554 = vunpack.c.h.b16 %v1282
        %v3555 = vunpack.c.l.b16 %v1283
        %v3556 = vunpack.c.h.b16 %v1283
        %v3557 = vunpack.c.l.b16 %v1284
        %v3558 = vunpack.c.h.b16 %v1284
        %v3559 = vunpack.c.l.b16 %v1285
        %v3560 = vunpack.c.h.b16 %v1285
        %v3561 = vunpack.c.l.b16 %v1286
        %v3562 = vunpack.c.h.b16 %v1286
        %v3563 = vunpack.c.l.b16 %v1287
        %v3564 = vunpack.c.h.b16 %v1287
        %v3565 = vunpack.c.l.b16 %v1288
        %v3566 = vunpack.c.h.b16 %v1288
        %v3567 = vunpack.c.l.b16 %v1289
        %v3568 = vunpack.c.h.b16 %v1289
        %v3569 = vunpack.c.l.b16 %v1290
        %v3570 = vunpack.c.h.b16 %v1290
        %v3571 = vunpack.c.l.b16 %v1291
        %v3572 = vunpack.c.h.b16 %v1291
        %v3573 = vunpack.c.l.b16 %v1292
        %v3574 = vunpack.c.h.b16 %v1292
        %v3575 = vunpack.c.l.b16 %v1293
        %v3576 = vunpack.c.h.b16 %v1293
        %v3577 = vunpack.c.l.b16 %v1294
        %v3578 = vunpack.c.h.b16 %v1294
        %v3579 = vunpack.c.l.b16 %v1295
        %v3580 = vunpack.c.h.b16 %v1295
        %v3581 = vunpack.c.l.b16 %v1296
        %v3582 = vunpack.c.h.b16 %v1296
        %v3583 = vunpack.c.l.b16 %v1297
        %v3584 = vunpack.c.h.b16 %v1297
        %v3585 = vunpack.c.l.b16 %v1298
        %v3586 = vunpack.c.h.b16 %v1298
        %v3587 = vunpack.c.l.b16 %v1299
        %v3588 = vunpack.c.h.b16 %v1299
        %v3589 = vunpack.c.l.b16 %v1300
        %v3590 = vunpack.c.h.b16 %v1300
        %v3591 = vunpack.c.l.b16 %v1301
        %v3592 = vunpack.c.h.b16 %v1301
        %v3593 = vunpack.c.l.b16 %v1302
        %v3594 = vunpack.c.h.b16 %v1302
        %v3595 = vunpack.c.l.b16 %v1303
        %v3596 = vunpack.c.h.b16 %v1303
        %v3597 = vunpack.c.l.b16 %v1304
        %v3598 = vunpack.c.h.b16 %v1304
        %v3599 = vunpack.c.l.b16 %v1305
        %v3600 = vunpack.c.h.b16 %v1305
        %v3601 = vunpack.c.l.b16 %v1306
        %v3602 = vunpack.c.h.b16 %v1306
        %v3603 = vunpack.c.l.b16 %v1307
        %v3604 = vunpack.c.h.b16 %v1307
        %v3605 = vunpack.c.l.b16 %v1308
        %v3606 = vunpack.c.h.b16 %v1308
        %v3607 = vunpack.c.l.b16 %v1309
        %v3608 = vunpack.c.h.b16 %v1309
        %v3609 = vunpack.c.l.b16 %v1310
        %v3610 = vunpack.c.h.b16 %v1310
        %v3611 = vunpack.c.l.b16 %v1311
        %v3612 = vunpack.c.h.b16 %v1311
        %v3613 = vunpack.c.l.b16 %v1312
        %v3614 = vunpack.c.h.b16 %v1312
        %v3615 = vunpack.c.l.b16 %v1313
        %v3616 = vunpack.c.h.b16 %v1313
        %v3617 = vunpack.c.l.b16 %v1314
        %v3618 = vunpack.c.h.b16 %v1314
        %v3619 = vunpack.c.l.b16 %v1315
        %v3620 = vunpack.c.h.b16 %v1315
        %v3621 = vunpack.c.l.b16 %v1316
        %v3622 = vunpack.c.h.b16 %v1316
        %v3623 = vunpack.c.l.b16 %v1317
        %v3624 = vunpack.c.h.b16 %v1317
        %v3625 = vunpack.c.l.b16 %v1318
        %v3626 = vunpack.c.h.b16 %v1318
        %v3627 = vunpack.c.l.b16 %v1319
        %v3628 = vunpack.c.h.b16 %v1319
        %v3629 = vunpack.c.l.b16 %v1320
        %v3630 = vunpack.c.h.b16 %v1320
        %v3631 = vunpack.c.l.b16 %v1321
        %v3632 = vunpack.c.h.b16 %v1321
        %v3633 = vunpack.c.l.b16 %v1322
        %v3634 = vunpack.c.h.b16 %v1322
        %v3635 = vunpack.c.l.b16 %v1323
        %v3636 = vunpack.c.h.b16 %v1323
        %v3637 = vunpack.c.l.b16 %v1324
        %v3638 = vunpack.c.h.b16 %v1324
        %v3639 = vunpack.c.l.b16 %v1325
        %v3640 = vunpack.c.h.b16 %v1325
        %v3641 = vunpack.c.l.b16 %v1326
        %v3642 = vunpack.c.h.b16 %v1326
        %v3643 = vunpack.c.l.b16 %v1327
        %v3644 = vunpack.c.h.b16 %v1327
        %v3645 = vunpack.c.l.b16 %v1328
        %v3646 = vunpack.c.h.b16 %v1328
        %v3647 = vunpack.c.l.b16 %v1329
        %v3648 = vunpack.c.h.b16 %v1329
        %v3649 = vunpack.c.l.b16 %v1330
        %v3650 = vunpack.c.h.b16 %v1330
        %v3651 = vunpack.c.l.b16 %v1331
        %v3652 = vunpack.c.h.b16 %v1331
        %v3653 = vunpack.c.l.b16 %v1332
        %v3654 = vunpack.c.h.b16 %v1332
        %v3655 = vunpack.c.l.b16 %v1333
        %v3656 = vunpack.c.h.b16 %v1333
        %v3657 = vunpack.c.l.b16 %v1334
        %v3658 = vunpack.c.h.b16 %v1334
        %v3659 = vunpack.c.l.b16 %v1335
        %v3660 = vunpack.c.h.b16 %v1335
        %v3661 = vunpack.c.l.b16 %v1336
        %v3662 = vunpack.c.h.b16 %v1336
        %v3663 = vunpack.c.l.b16 %v1337
        %v3664 = vunpack.c.h.b16 %v1337
        %v3665 = vunpack.c.l.b16 %v1338
        %v3666 = vunpack.c.h.b16 %v1338
        %v3667 = vunpack.c.l.b16 %v1339
        %v3668 = vunpack.c.h.b16 %v1339
        %v3669 = vunpack.c.l.b16 %v1340
        %v3670 = vunpack.c.h.b16 %v1340
        %v3671 = vunpack.c.l.b16 %v1341
        %v3672 = vunpack.c.h.b16 %v1341
        %v3673 = vunpack.c.l.b16 %v1342
        %v3674 = vunpack.c.h.b16 %v1342
        %v3675 = vunpack.c.l.b16 %v1343
        %v3676 = vunpack.c.h.b16 %v1343
        %v3677 = vunpack.c.l.b16 %v1344
        %v3678 = vunpack.c.h.b16 %v1344
        %v3679 = vunpack.c.l.b16 %v1345
        %v3680 = vunpack.c.h.b16 %v1345
        %v3681 = vunpack.c.l.b16 %v1346
        %v3682 = vunpack.c.h.b16 %v1346
        %v3683 = vunpack.c.l.b16 %v1347
        %v3684 = vunpack.c.h.b16 %v1347
        %v3685 = vunpack.c.l.b16 %v1348
        %v3686 = vunpack.c.h.b16 %v1348
        %v3687 = vunpack.c.l.b16 %v1349
        %v3688 = vunpack.c.h.b16 %v1349
        %v3689 = vunpack.c.l.b16 %v1350
        %v3690 = vunpack.c.h.b16 %v1350
        %v3691 = vunpack.c.l.b16 %v1351
        %v3692 = vunpack.c.h.b16 %v1351
        %v3693 = vunpack.c.l.b16 %v1352
        %v3694 = vunpack.c.h.b16 %v1352
        %v3695 = vunpack.c.l.b16 %v1353
        %v3696 = vunpack.c.h.b16 %v1353
        %v3697 = vunpack.c.l.b16 %v1354
        %v3698 = vunpack.c.h.b16 %v1354
        %v3699 = vunpack.c.l.b16 %v1355
        %v3700 = vunpack.c.h.b16 %v1355
        %v3701 = vunpack.c.l.b16 %v1356
        %v3702 = vunpack.c.h.b16 %v1356
        %v3703 = vunpack.c.l.b16 %v1357
        %v3704 = vunpack.c.h.b16 %v1357
        %v3705 = vunpack.c.l.b16 %v1358
        %v3706 = vunpack.c.h.b16 %v1358
        %v3707 = vunpack.c.l.b16 %v1359
        %v3708 = vunpack.c.h.b16 %v1359
        %v3709 = vunpack.c.l.b16 %v1360
        %v3710 = vunpack.c.h.b16 %v1360
        %v3711 = vunpack.c.l.b16 %v1361
        %v3712 = vunpack.c.h.b16 %v1361
        %v3713 = vunpack.c.l.b16 %v1362
        %v3714 = vunpack.c.h.b16 %v1362
        %v3715 = vunpack.c.l.b16 %v1363
        %v3716 = vunpack.c.h.b16 %v1363
        %v3717 = vunpack.c.l.b16 %v1364
        %v3718 = vunpack.c.h.b16 %v1364
        %v3719 = vunpack.c.l.b16 %v1365
        %v3720 = vunpack.c.h.b16 %v1365
        %v3721 = vunpack.c.l.b16 %v1366
        %v3722 = vunpack.c.h.b16 %v1366
        %v3723 = vunpack.c.l.b16 %v1367
        %v3724 = vunpack.c.h.b16 %v1367
        %v3725 = vunpack.c.l.b16 %v1368
        %v3726 = vunpack.c.h.b16 %v1368
        %v3727 = vunpack.c.l.b16 %v1369
        %v3728 = vunpack.c.h.b16 %v1369
        %v3729 = vunpack.c.l.b16 %v1370
        %v3730 = vunpack.c.h.b16 %v1370
        %v3731 = vunpack.c.l.b16 %v1371
        %v3732 = vunpack.c.h.b16 %v1371
        %v3733 = vunpack.c.l.b16 %v1372
        %v3734 = vunpack.c.h.b16 %v1372
        %v3735 = vunpack.c.l.b16 %v1373
        %v3736 = vunpack.c.h.b16 %v1373
        %v3737 = vunpack.c.l.b16 %v1374
        %v3738 = vunpack.c.h.b16 %v1374
        %v3739 = vunpack.c.l.b16 %v1375
        %v3740 = vunpack.c.h.b16 %v1375
        %v3741 = vunpack.c.l.b16 %v1376
        %v3742 = vunpack.c.h.b16 %v1376
        %v3743 = vunpack.c.l.b16 %v1377
        %v3744 = vunpack.c.h.b16 %v1377
        %v3745 = vunpack.c.l.b16 %v1378
        %v3746 = vunpack.c.h.b16 %v1378
        %v3747 = vunpack.c.l.b16 %v1379
        %v3748 = vunpack.c.h.b16 %v1379
        %v3749 = vunpack.c.l.b16 %v1380
        %v3750 = vunpack.c.h.b16 %v1380
        %v3751 = vunpack.c.l.b16 %v1381
        %v3752 = vunpack.c.h.b16 %v1381
        %v3753 = vunpack.c.l.b16 %v1382
        %v3754 = vunpack.c.h.b16 %v1382
        %v3755 = vunpack.c.l.b16 %v1383
        %v3756 = vunpack.c.h.b16 %v1383
        %v3757 = vunpack.c.l.b16 %v1384
        %v3758 = vunpack.c.h.b16 %v1384
        %v3759 = vunpack.c.l.b16 %v1385
        %v3760 = vunpack.c.h.b16 %v1385
        %v3761 = vunpack.c.l.b16 %v1386
        %v3762 = vunpack.c.h.b16 %v1386
        %v3763 = vunpack.c.l.b16 %v1387
        %v3764 = vunpack.c.h.b16 %v1387
        %v3765 = vunpack.c.l.b16 %v1388
        %v3766 = vunpack.c.h.b16 %v1388
        %v3767 = vunpack.c.l.b16 %v1389
        %v3768 = vunpack.c.h.b16 %v1389
        %v3769 = vunpack.c.l.b16 %v1390
        %v3770 = vunpack.c.h.b16 %v1390
        %v3771 = vunpack.c.l.b16 %v1391
        %v3772 = vunpack.c.h.b16 %v1391
        %v3773 = vunpack.c.l.b16 %v1392
        %v3774 = vunpack.c.h.b16 %v1392
        %v3775 = vunpack.c.l.b16 %v1393
        %v3776 = vunpack.c.h.b16 %v1393
        %v3777 = vunpack.c.l.b16 %v1394
        %v3778 = vunpack.c.h.b16 %v1394
        %v3779 = vunpack.c.l.b16 %v1395
        %v3780 = vunpack.c.h.b16 %v1395
        %v3781 = vunpack.c.l.b16 %v1396
        %v3782 = vunpack.c.h.b16 %v1396
        %v3783 = vunpack.c.l.b16 %v1397
        %v3784 = vunpack.c.h.b16 %v1397
        %v3785 = vunpack.c.l.b16 %v1398
        %v3786 = vunpack.c.h.b16 %v1398
        %v3787 = vunpack.c.l.b16 %v1399
        %v3788 = vunpack.c.h.b16 %v1399
        %v3789 = vunpack.c.l.b16 %v1400
        %v3790 = vunpack.c.h.b16 %v1400
        %v3791 = vunpack.c.l.b16 %v1401
        %v3792 = vunpack.c.h.b16 %v1401
        %v3793 = vunpack.c.l.b16 %v1402
        %v3794 = vunpack.c.h.b16 %v1402
        %v3795 = vunpack.c.l.b16 %v1403
        %v3796 = vunpack.c.h.b16 %v1403
        %v3797 = vunpack.c.l.b16 %v1404
        %v3798 = vunpack.c.h.b16 %v1404
        %v3799 = vunpack.c.l.b16 %v1405
        %v3800 = vunpack.c.h.b16 %v1405
        %v3801 = vunpack.c.l.b16 %v1406
        %v3802 = vunpack.c.h.b16 %v1406
        %v3803 = vunpack.c.l.b16 %v1407
        %v3804 = vunpack.c.h.b16 %v1407
        %v3805 = vunpack.c.l.b16 %v1408
        %v3806 = vunpack.c.h.b16 %v1408
        %v3807 = vunpack.c.l.b16 %v1409
        %v3808 = vunpack.c.h.b16 %v1409
        %v3809 = vunpack.c.l.b16 %v1410
        %v3810 = vunpack.c.h.b16 %v1410
        %v3811 = vpack.c.b16 %v2215, %v2211
        %v3812 = vpack.c.b16 %v2216, %v2212
        %v3813 = vpack.c.b16 %v2217, %v2213
        %v3814 = vpack.c.b16 %v2218, %v2214
        %v3815 = vpack.c.b16 %v2223, %v2219
        %v3816 = vpack.c.b16 %v2224, %v2220
        %v3817 = vpack.c.b16 %v2225, %v2221
        %v3818 = vpack.c.b16 %v2226, %v2222
        %v3819 = vpack.c.b16 %v2231, %v2227
        %v3820 = vpack.c.b16 %v2232, %v2228
        %v3821 = vpack.c.b16 %v2233, %v2229
        %v3822 = vpack.c.b16 %v2234, %v2230
        %v3823 = vpack.c.b16 %v2239, %v2235
        %v3824 = vpack.c.b16 %v2240, %v2236
        %v3825 = vpack.c.b16 %v2241, %v2237
        %v3826 = vpack.c.b16 %v2242, %v2238
        %v3827 = vpack.c.b16 %v2247, %v2243
        %v3828 = vpack.c.b16 %v2248, %v2244
        %v3829 = vpack.c.b16 %v2249, %v2245
        %v3830 = vpack.c.b16 %v2250, %v2246
        %v3831 = vpack.c.b16 %v2255, %v2251
        %v3832 = vpack.c.b16 %v2256, %v2252
        %v3833 = vpack.c.b16 %v2257, %v2253
        %v3834 = vpack.c.b16 %v2258, %v2254
        %v3835 = vpack.c.b16 %v2263, %v2259
        %v3836 = vpack.c.b16 %v2264, %v2260
        %v3837 = vpack.c.b16 %v2265, %v2261
        %v3838 = vpack.c.b16 %v2266, %v2262
        %v3839 = vpack.c.b16 %v2271, %v2267
        %v3840 = vpack.c.b16 %v2272, %v2268
        %v3841 = vpack.c.b16 %v2273, %v2269
        %v3842 = vpack.c.b16 %v2274, %v2270
        %v3843 = vpack.c.b16 %v2279, %v2275
        %v3844 = vpack.c.b16 %v2280, %v2276
        %v3845 = vpack.c.b16 %v2281, %v2277
        %v3846 = vpack.c.b16 %v2282, %v2278
        %v3847 = vpack.c.b16 %v2287, %v2283
        %v3848 = vpack.c.b16 %v2288, %v2284
        %v3849 = vpack.c.b16 %v2289, %v2285
        %v3850 = vpack.c.b16 %v2290, %v2286
        %v3851 = vpack.c.b16 %v2295, %v2291
        %v3852 = vpack.c.b16 %v2296, %v2292
        %v3853 = vpack.c.b16 %v2297, %v2293
        %v3854 = vpack.c.b16 %v2298, %v2294
        %v3855 = vpack.c.b16 %v2303, %v2299
        %v3856 = vpack.c.b16 %v2304, %v2300
        %v3857 = vpack.c.b16 %v2305, %v2301
        %v3858 = vpack.c.b16 %v2306, %v2302
        %v3859 = vpack.c.b16 %v2311, %v2307
        %v3860 = vpack.c.b16 %v2312, %v2308
        %v3861 = vpack.c.b16 %v2313, %v2309
        %v3862 = vpack.c.b16 %v2314, %v2310
        %v3863 = vpack.c.b16 %v2319, %v2315
        %v3864 = vpack.c.b16 %v2320, %v2316
        %v3865 = vpack.c.b16 %v2321, %v2317
        %v3866 = vpack.c.b16 %v2322, %v2318
        %v3867 = vpack.c.b16 %v2327, %v2323
        %v3868 = vpack.c.b16 %v2328, %v2324
        %v3869 = vpack.c.b16 %v2329, %v2325
        %v3870 = vpack.c.b16 %v2330, %v2326
        %v3871 = vpack.c.b16 %v2335, %v2331
        %v3872 = vpack.c.b16 %v2336, %v2332
        %v3873 = vpack.c.b16 %v2337, %v2333
        %v3874 = vpack.c.b16 %v2338, %v2334
        %v3875 = vpack.c.b16 %v2343, %v2339
        %v3876 = vpack.c.b16 %v2344, %v2340
        %v3877 = vpack.c.b16 %v2345, %v2341
        %v3878 = vpack.c.b16 %v2346, %v2342
        %v3879 = vpack.c.b16 %v2351, %v2347
        %v3880 = vpack.c.b16 %v2352, %v2348
        %v3881 = vpack.c.b16 %v2353, %v2349
        %v3882 = vpack.c.b16 %v2354, %v2350
        %v3883 = vpack.c.b16 %v2359, %v2355
        %v3884 = vpack.c.b16 %v2360, %v2356
        %v3885 = vpack.c.b16 %v2361, %v2357
        %v3886 = vpack.c.b16 %v2362, %v2358
        %v3887 = vpack.c.b16 %v2367, %v2363
        %v3888 = vpack.c.b16 %v2368, %v2364
        %v3889 = vpack.c.b16 %v2369, %v2365
        %v3890 = vpack.c.b16 %v2370, %v2366
        %v3891 = vpack.c.b16 %v2375, %v2371
        %v3892 = vpack.c.b16 %v2376, %v2372
        %v3893 = vpack.c.b16 %v2377, %v2373
        %v3894 = vpack.c.b16 %v2378, %v2374
        %v3895 = vpack.c.b16 %v2383, %v2379
        %v3896 = vpack.c.b16 %v2384, %v2380
        %v3897 = vpack.c.b16 %v2385, %v2381
        %v3898 = vpack.c.b16 %v2386, %v2382
        %v3899 = vpack.c.b16 %v2391, %v2387
        %v3900 = vpack.c.b16 %v2392, %v2388
        %v3901 = vpack.c.b16 %v2393, %v2389
        %v3902 = vpack.c.b16 %v2394, %v2390
        %v3903 = vpack.c.b16 %v2399, %v2395
        %v3904 = vpack.c.b16 %v2400, %v2396
        %v3905 = vpack.c.b16 %v2401, %v2397
        %v3906 = vpack.c.b16 %v2402, %v2398
        %v3907 = vpack.c.b16 %v2407, %v2403
        %v3908 = vpack.c.b16 %v2408, %v2404
        %v3909 = vpack.c.b16 %v2409, %v2405
        %v3910 = vpack.c.b16 %v2410, %v2406
        %v3911 = vpack.c.b16 %v2415, %v2411
        %v3912 = vpack.c.b16 %v2416, %v2412
        %v3913 = vpack.c.b16 %v2417, %v2413
        %v3914 = vpack.c.b16 %v2418, %v2414
        %v3915 = vpack.c.b16 %v2423, %v2419
        %v3916 = vpack.c.b16 %v2424, %v2420
        %v3917 = vpack.c.b16 %v2425, %v2421
        %v3918 = vpack.c.b16 %v2426, %v2422
        %v3919 = vpack.c.b16 %v2431, %v2427
        %v3920 = vpack.c.b16 %v2432, %v2428
        %v3921 = vpack.c.b16 %v2433, %v2429
        %v3922 = vpack.c.b16 %v2434, %v2430
        %v3923 = vpack.c.b16 %v2439, %v2435
        %v3924 = vpack.c.b16 %v2440, %v2436
        %v3925 = vpack.c.b16 %v2441, %v2437
        %v3926 = vpack.c.b16 %v2442, %v2438
        %v3927 = vpack.c.b16 %v2447, %v2443
        %v3928 = vpack.c.b16 %v2448, %v2444
        %v3929 = vpack.c.b16 %v2449, %v2445
        %v3930 = vpack.c.b16 %v2450, %v2446
        %v3931 = vpack.c.b16 %v2455, %v2451
        %v3932 = vpack.c.b16 %v2456, %v2452
        %v3933 = vpack.c.b16 %v2457, %v2453
        %v3934 = vpack.c.b16 %v2458, %v2454
        %v3935 = vpack.c.b16 %v2463, %v2459
        %v3936 = vpack.c.b16 %v2464, %v2460
        %v3937 = vpack.c.b16 %v2465, %v2461
        %v3938 = vpack.c.b16 %v2466, %v2462
        %v3939 = vpack.c.b16 %v2471, %v2467
        %v3940 = vpack.c.b16 %v2472, %v2468
        %v3941 = vpack.c.b16 %v2473, %v2469
        %v3942 = vpack.c.b16 %v2474, %v2470
        %v3943 = vpack.c.b16 %v2479, %v2475
        %v3944 = vpack.c.b16 %v2480, %v2476
        %v3945 = vpack.c.b16 %v2481, %v2477
        %v3946 = vpack.c.b16 %v2482, %v2478
        %v3947 = vpack.c.b16 %v2487, %v2483
        %v3948 = vpack.c.b16 %v2488, %v2484
        %v3949 = vpack.c.b16 %v2489, %v2485
        %v3950 = vpack.c.b16 %v2490, %v2486
        %v3951 = vpack.c.b16 %v2495, %v2491
        %v3952 = vpack.c.b16 %v2496, %v2492
        %v3953 = vpack.c.b16 %v2497, %v2493
        %v3954 = vpack.c.b16 %v2498, %v2494
        %v3955 = vpack.c.b16 %v2503, %v2499
        %v3956 = vpack.c.b16 %v2504, %v2500
        %v3957 = vpack.c.b16 %v2505, %v2501
        %v3958 = vpack.c.b16 %v2506, %v2502
        %v3959 = vpack.c.b16 %v2511, %v2507
        %v3960 = vpack.c.b16 %v2512, %v2508
        %v3961 = vpack.c.b16 %v2513, %v2509
        %v3962 = vpack.c.b16 %v2514, %v2510
        %v3963 = vpack.c.b16 %v2519, %v2515
        %v3964 = vpack.c.b16 %v2520, %v2516
        %v3965 = vpack.c.b16 %v2521, %v2517
        %v3966 = vpack.c.b16 %v2522, %v2518
        %v3967 = vpack.c.b16 %v2527, %v2523
        %v3968 = vpack.c.b16 %v2528, %v2524
        %v3969 = vpack.c.b16 %v2529, %v2525
        %v3970 = vpack.c.b16 %v2530, %v2526
        %v3971 = vpack.c.b16 %v2535, %v2531
        %v3972 = vpack.c.b16 %v2536, %v2532
        %v3973 = vpack.c.b16 %v2537, %v2533
        %v3974 = vpack.c.b16 %v2538, %v2534
        %v3975 = vpack.c.b16 %v2543, %v2539
        %v3976 = vpack.c.b16 %v2544, %v2540
        %v3977 = vpack.c.b16 %v2545, %v2541
        %v3978 = vpack.c.b16 %v2546, %v2542
        %v3979 = vpack.c.b16 %v2551, %v2547
        %v3980 = vpack.c.b16 %v2552, %v2548
        %v3981 = vpack.c.b16 %v2553, %v2549
        %v3982 = vpack.c.b16 %v2554, %v2550
        %v3983 = vpack.c.b16 %v2559, %v2555
        %v3984 = vpack.c.b16 %v2560, %v2556
        %v3985 = vpack.c.b16 %v2561, %v2557
        %v3986 = vpack.c.b16 %v2562, %v2558
        %v3987 = vpack.c.b16 %v2567, %v2563
        %v3988 = vpack.c.b16 %v2568, %v2564
        %v3989 = vpack.c.b16 %v2569, %v2565
        %v3990 = vpack.c.b16 %v2570, %v2566
        %v3991 = vpack.c.b16 %v2575, %v2571
        %v3992 = vpack.c.b16 %v2576, %v2572
        %v3993 = vpack.c.b16 %v2577, %v2573
        %v3994 = vpack.c.b16 %v2578, %v2574
        %v3995 = vpack.c.b16 %v2583, %v2579
        %v3996 = vpack.c.b16 %v2584, %v2580
        %v3997 = vpack.c.b16 %v2585, %v2581
        %v3998 = vpack.c.b16 %v2586, %v2582
        %v3999 = vpack.c.b16 %v2591, %v2587
        %v4000 = vpack.c.b16 %v2592, %v2588
        %v4001 = vpack.c.b16 %v2593, %v2589
        %v4002 = vpack.c.b16 %v2594, %v2590
        %v4003 = vpack.c.b16 %v2599, %v2595
        %v4004 = vpack.c.b16 %v2600, %v2596
        %v4005 = vpack.c.b16 %v2601, %v2597
        %v4006 = vpack.c.b16 %v2602, %v2598
        %v4007 = vpack.c.b16 %v2607, %v2603
        %v4008 = vpack.c.b16 %v2608, %v2604
        %v4009 = vpack.c.b16 %v2609, %v2605
        %v4010 = vpack.c.b16 %v2610, %v2606
        %v4011 = vpack.c.b16 %v2615, %v2611
        %v4012 = vpack.c.b16 %v2616, %v2612
        %v4013 = vpack.c.b16 %v2617, %v2613
        %v4014 = vpack.c.b16 %v2618, %v2614
        %v4015 = vpack.c.b16 %v2623, %v2619
        %v4016 = vpack.c.b16 %v2624, %v2620
        %v4017 = vpack.c.b16 %v2625, %v2621
        %v4018 = vpack.c.b16 %v2626, %v2622
        %v4019 = vpack.c.b16 %v2631, %v2627
        %v4020 = vpack.c.b16 %v2632, %v2628
        %v4021 = vpack.c.b16 %v2633, %v2629
        %v4022 = vpack.c.b16 %v2634, %v2630
        %v4023 = vpack.c.b16 %v2639, %v2635
        %v4024 = vpack.c.b16 %v2640, %v2636
        %v4025 = vpack.c.b16 %v2641, %v2637
        %v4026 = vpack.c.b16 %v2642, %v2638
        %v4027 = vpack.c.b16 %v2647, %v2643
        %v4028 = vpack.c.b16 %v2648, %v2644
        %v4029 = vpack.c.b16 %v2649, %v2645
        %v4030 = vpack.c.b16 %v2650, %v2646
        %v4031 = vpack.c.b16 %v2655, %v2651
        %v4032 = vpack.c.b16 %v2656, %v2652
        %v4033 = vpack.c.b16 %v2657, %v2653
        %v4034 = vpack.c.b16 %v2658, %v2654
        %v4035 = vpack.c.b16 %v2663, %v2659
        %v4036 = vpack.c.b16 %v2664, %v2660
        %v4037 = vpack.c.b16 %v2665, %v2661
        %v4038 = vpack.c.b16 %v2666, %v2662
        %v4039 = vpack.c.b16 %v2671, %v2667
        %v4040 = vpack.c.b16 %v2672, %v2668
        %v4041 = vpack.c.b16 %v2673, %v2669
        %v4042 = vpack.c.b16 %v2674, %v2670
        %v4043 = vpack.c.b16 %v2679, %v2675
        %v4044 = vpack.c.b16 %v2680, %v2676
        %v4045 = vpack.c.b16 %v2681, %v2677
        %v4046 = vpack.c.b16 %v2682, %v2678
        %v4047 = vpack.c.b16 %v2687, %v2683
        %v4048 = vpack.c.b16 %v2688, %v2684
        %v4049 = vpack.c.b16 %v2689, %v2685
        %v4050 = vpack.c.b16 %v2690, %v2686
        %v4051 = vpack.c.b16 %v2695, %v2691
        %v4052 = vpack.c.b16 %v2696, %v2692
        %v4053 = vpack.c.b16 %v2697, %v2693
        %v4054 = vpack.c.b16 %v2698, %v2694
        %v4055 = vpack.c.b16 %v2703, %v2699
        %v4056 = vpack.c.b16 %v2704, %v2700
        %v4057 = vpack.c.b16 %v2705, %v2701
        %v4058 = vpack.c.b16 %v2706, %v2702
        %v4059 = vpack.c.b16 %v2711, %v2707
        %v4060 = vpack.c.b16 %v2712, %v2708
        %v4061 = vpack.c.b16 %v2713, %v2709
        %v4062 = vpack.c.b16 %v2714, %v2710
        %v4063 = vpack.c.b16 %v2719, %v2715
        %v4064 = vpack.c.b16 %v2720, %v2716
        %v4065 = vpack.c.b16 %v2721, %v2717
        %v4066 = vpack.c.b16 %v2722, %v2718
        %v4067 = vpack.c.b16 %v2727, %v2723
        %v4068 = vpack.c.b16 %v2728, %v2724
        %v4069 = vpack.c.b16 %v2729, %v2725
        %v4070 = vpack.c.b16 %v2730, %v2726
        %v4071 = vpack.c.b16 %v2735, %v2731
        %v4072 = vpack.c.b16 %v2736, %v2732
        %v4073 = vpack.c.b16 %v2737, %v2733
        %v4074 = vpack.c.b16 %v2738, %v2734
        %v4075 = vpack.c.b16 %v2743, %v2739
        %v4076 = vpack.c.b16 %v2744, %v2740
        %v4077 = vpack.c.b16 %v2745, %v2741
        %v4078 = vpack.c.b16 %v2746, %v2742
        %v4079 = vpack.c.b16 %v2751, %v2747
        %v4080 = vpack.c.b16 %v2752, %v2748
        %v4081 = vpack.c.b16 %v2753, %v2749
        %v4082 = vpack.c.b16 %v2754, %v2750
        %v4083 = vpack.c.b16 %v2759, %v2755
        %v4084 = vpack.c.b16 %v2760, %v2756
        %v4085 = vpack.c.b16 %v2761, %v2757
        %v4086 = vpack.c.b16 %v2762, %v2758
        %v4087 = vpack.c.b16 %v2767, %v2763
        %v4088 = vpack.c.b16 %v2768, %v2764
        %v4089 = vpack.c.b16 %v2769, %v2765
        %v4090 = vpack.c.b16 %v2770, %v2766
        %v4091 = vpack.c.b16 %v2775, %v2771
        %v4092 = vpack.c.b16 %v2776, %v2772
        %v4093 = vpack.c.b16 %v2777, %v2773
        %v4094 = vpack.c.b16 %v2778, %v2774
        %v4095 = vpack.c.b16 %v2783, %v2779
        %v4096 = vpack.c.b16 %v2784, %v2780
        %v4097 = vpack.c.b16 %v2785, %v2781
        %v4098 = vpack.c.b16 %v2786, %v2782
        %v4099 = vpack.c.b16 %v2791, %v2787
        %v4100 = vpack.c.b16 %v2792, %v2788
        %v4101 = vpack.c.b16 %v2793, %v2789
        %v4102 = vpack.c.b16 %v2794, %v2790
        %v4103 = vpack.c.b16 %v2799, %v2795
        %v4104 = vpack.c.b16 %v2800, %v2796
        %v4105 = vpack.c.b16 %v2801, %v2797
        %v4106 = vpack.c.b16 %v2802, %v2798
        %v4107 = vpack.c.b16 %v2807, %v2803
        %v4108 = vpack.c.b16 %v2808, %v2804
        %v4109 = vpack.c.b16 %v2809, %v2805
        %v4110 = vpack.c.b16 %v2810, %v2806
        %v4111 = vpack.c.b16 %v2815, %v2811
        %v4112 = vpack.c.b16 %v2816, %v2812
        %v4113 = vpack.c.b16 %v2817, %v2813
        %v4114 = vpack.c.b16 %v2818, %v2814
        %v4115 = vpack.c.b16 %v2823, %v2819
        %v4116 = vpack.c.b16 %v2824, %v2820
        %v4117 = vpack.c.b16 %v2825, %v2821
        %v4118 = vpack.c.b16 %v2826, %v2822
        %v4119 = vpack.c.b16 %v2831, %v2827
        %v4120 = vpack.c.b16 %v2832, %v2828
        %v4121 = vpack.c.b16 %v2833, %v2829
        %v4122 = vpack.c.b16 %v2834, %v2830
        %v4123 = vpack.c.b16 %v2839, %v2835
        %v4124 = vpack.c.b16 %v2840, %v2836
        %v4125 = vpack.c.b16 %v2841, %v2837
        %v4126 = vpack.c.b16 %v2842, %v2838
        %v4127 = vpack.c.b16 %v2847, %v2843
        %v4128 = vpack.c.b16 %v2848, %v2844
        %v4129 = vpack.c.b16 %v2849, %v2845
        %v4130 = vpack.c.b16 %v2850, %v2846
        %v4131 = vpack.c.b16 %v2855, %v2851
        %v4132 = vpack.c.b16 %v2856, %v2852
        %v4133 = vpack.c.b16 %v2857, %v2853
        %v4134 = vpack.c.b16 %v2858, %v2854
        %v4135 = vpack.c.b16 %v2863, %v2859
        %v4136 = vpack.c.b16 %v2864, %v2860
        %v4137 = vpack.c.b16 %v2865, %v2861
        %v4138 = vpack.c.b16 %v2866, %v2862
        %v4139 = vpack.c.b16 %v2871, %v2867
        %v4140 = vpack.c.b16 %v2872, %v2868
        %v4141 = vpack.c.b16 %v2873, %v2869
        %v4142 = vpack.c.b16 %v2874, %v2870
        %v4143 = vpack.c.b16 %v2879, %v2875
        %v4144 = vpack.c.b16 %v2880, %v2876
        %v4145 = vpack.c.b16 %v2881, %v2877
        %v4146 = vpack.c.b16 %v2882, %v2878
        %v4147 = vpack.c.b16 %v2887, %v2883
        %v4148 = vpack.c.b16 %v2888, %v2884
        %v4149 = vpack.c.b16 %v2889, %v2885
        %v4150 = vpack.c.b16 %v2890, %v2886
        %v4151 = vpack.c.b16 %v2895, %v2891
        %v4152 = vpack.c.b16 %v2896, %v2892
        %v4153 = vpack.c.b16 %v2897, %v2893
        %v4154 = vpack.c.b16 %v2898, %v2894
        %v4155 = vpack.c.b16 %v2903, %v2899
        %v4156 = vpack.c.b16 %v2904, %v2900
        %v4157 = vpack.c.b16 %v2905, %v2901
        %v4158 = vpack.c.b16 %v2906, %v2902
        %v4159 = vpack.c.b16 %v2911, %v2907
        %v4160 = vpack.c.b16 %v2912, %v2908
        %v4161 = vpack.c.b16 %v2913, %v2909
        %v4162 = vpack.c.b16 %v2914, %v2910
        %v4163 = vpack.c.b16 %v2919, %v2915
        %v4164 = vpack.c.b16 %v2920, %v2916
        %v4165 = vpack.c.b16 %v2921, %v2917
        %v4166 = vpack.c.b16 %v2922, %v2918
        %v4167 = vpack.c.b16 %v2927, %v2923
        %v4168 = vpack.c.b16 %v2928, %v2924
        %v4169 = vpack.c.b16 %v2929, %v2925
        %v4170 = vpack.c.b16 %v2930, %v2926
        %v4171 = vpack.c.b16 %v2935, %v2931
        %v4172 = vpack.c.b16 %v2936, %v2932
        %v4173 = vpack.c.b16 %v2937, %v2933
        %v4174 = vpack.c.b16 %v2938, %v2934
        %v4175 = vpack.c.b16 %v2943, %v2939
        %v4176 = vpack.c.b16 %v2944, %v2940
        %v4177 = vpack.c.b16 %v2945, %v2941
        %v4178 = vpack.c.b16 %v2946, %v2942
        %v4179 = vpack.c.b16 %v2951, %v2947
        %v4180 = vpack.c.b16 %v2952, %v2948
        %v4181 = vpack.c.b16 %v2953, %v2949
        %v4182 = vpack.c.b16 %v2954, %v2950
        %v4183 = vpack.c.b16 %v2959, %v2955
        %v4184 = vpack.c.b16 %v2960, %v2956
        %v4185 = vpack.c.b16 %v2961, %v2957
        %v4186 = vpack.c.b16 %v2962, %v2958
        %v4187 = vpack.c.b16 %v2967, %v2963
        %v4188 = vpack.c.b16 %v2968, %v2964
        %v4189 = vpack.c.b16 %v2969, %v2965
        %v4190 = vpack.c.b16 %v2970, %v2966
        %v4191 = vpack.c.b16 %v2975, %v2971
        %v4192 = vpack.c.b16 %v2976, %v2972
        %v4193 = vpack.c.b16 %v2977, %v2973
        %v4194 = vpack.c.b16 %v2978, %v2974
        %v4195 = vpack.c.b16 %v2983, %v2979
        %v4196 = vpack.c.b16 %v2984, %v2980
        %v4197 = vpack.c.b16 %v2985, %v2981
        %v4198 = vpack.c.b16 %v2986, %v2982
        %v4199 = vpack.c.b16 %v2991, %v2987
        %v4200 = vpack.c.b16 %v2992, %v2988
        %v4201 = vpack.c.b16 %v2993, %v2989
        %v4202 = vpack.c.b16 %v2994, %v2990
        %v4203 = vpack.c.b16 %v2999, %v2995
        %v4204 = vpack.c.b16 %v3000, %v2996
        %v4205 = vpack.c.b16 %v3001, %v2997
        %v4206 = vpack.c.b16 %v3002, %v2998
        %v4207 = vpack.c.b16 %v3007, %v3003
        %v4208 = vpack.c.b16 %v3008, %v3004
        %v4209 = vpack.c.b16 %v3009, %v3005
        %v4210 = vpack.c.b16 %v3010, %v3006
        %v4211 = vpack.c.b16 %v3015, %v3011
        %v4212 = vpack.c.b16 %v3016, %v3012
        %v4213 = vpack.c.b16 %v3017, %v3013
        %v4214 = vpack.c.b16 %v3018, %v3014
        %v4215 = vpack.c.b16 %v3023, %v3019
        %v4216 = vpack.c.b16 %v3024, %v3020
        %v4217 = vpack.c.b16 %v3025, %v3021
        %v4218 = vpack.c.b16 %v3026, %v3022
        %v4219 = vpack.c.b16 %v3031, %v3027
        %v4220 = vpack.c.b16 %v3032, %v3028
        %v4221 = vpack.c.b16 %v3033, %v3029
        %v4222 = vpack.c.b16 %v3034, %v3030
        %v4223 = vpack.c.b16 %v3039, %v3035
        %v4224 = vpack.c.b16 %v3040, %v3036
        %v4225 = vpack.c.b16 %v3041, %v3037
        %v4226 = vpack.c.b16 %v3042, %v3038
        %v4227 = vpack.c.b16 %v3047, %v3043
        %v4228 = vpack.c.b16 %v3048, %v3044
        %v4229 = vpack.c.b16 %v3049, %v3045
        %v4230 = vpack.c.b16 %v3050, %v3046
        %v4231 = vpack.c.b16 %v3055, %v3051
        %v4232 = vpack.c.b16 %v3056, %v3052
        %v4233 = vpack.c.b16 %v3057, %v3053
        %v4234 = vpack.c.b16 %v3058, %v3054
        %v4235 = vpack.c.b16 %v3063, %v3059
        %v4236 = vpack.c.b16 %v3064, %v3060
        %v4237 = vpack.c.b16 %v3065, %v3061
        %v4238 = vpack.c.b16 %v3066, %v3062
        %v4239 = vpack.c.b16 %v3071, %v3067
        %v4240 = vpack.c.b16 %v3072, %v3068
        %v4241 = vpack.c.b16 %v3073, %v3069
        %v4242 = vpack.c.b16 %v3074, %v3070
        %v4243 = vpack.c.b16 %v3079, %v3075
        %v4244 = vpack.c.b16 %v3080, %v3076
        %v4245 = vpack.c.b16 %v3081, %v3077
        %v4246 = vpack.c.b16 %v3082, %v3078
        %v4247 = vpack.c.b16 %v3087, %v3083
        %v4248 = vpack.c.b16 %v3088, %v3084
        %v4249 = vpack.c.b16 %v3089, %v3085
        %v4250 = vpack.c.b16 %v3090, %v3086
        %v4251 = vpack.c.b16 %v3095, %v3091
        %v4252 = vpack.c.b16 %v3096, %v3092
        %v4253 = vpack.c.b16 %v3097, %v3093
        %v4254 = vpack.c.b16 %v3098, %v3094
        %v4255 = vpack.c.b16 %v3103, %v3099
        %v4256 = vpack.c.b16 %v3104, %v3100
        %v4257 = vpack.c.b16 %v3105, %v3101
        %v4258 = vpack.c.b16 %v3106, %v3102
        %v4259 = vpack.c.b16 %v3111, %v3107
        %v4260 = vpack.c.b16 %v3112, %v3108
        %v4261 = vpack.c.b16 %v3113, %v3109
        %v4262 = vpack.c.b16 %v3114, %v3110
        %v4263 = vpack.c.b16 %v3119, %v3115
        %v4264 = vpack.c.b16 %v3120, %v3116
        %v4265 = vpack.c.b16 %v3121, %v3117
        %v4266 = vpack.c.b16 %v3122, %v3118
        %v4267 = vpack.c.b16 %v3127, %v3123
        %v4268 = vpack.c.b16 %v3128, %v3124
        %v4269 = vpack.c.b16 %v3129, %v3125
        %v4270 = vpack.c.b16 %v3130, %v3126
        %v4271 = vpack.c.b16 %v3135, %v3131
        %v4272 = vpack.c.b16 %v3136, %v3132
        %v4273 = vpack.c.b16 %v3137, %v3133
        %v4274 = vpack.c.b16 %v3138, %v3134
        %v4275 = vpack.c.b16 %v3143, %v3139
        %v4276 = vpack.c.b16 %v3144, %v3140
        %v4277 = vpack.c.b16 %v3145, %v3141
        %v4278 = vpack.c.b16 %v3146, %v3142
        %v4279 = vpack.c.b16 %v3151, %v3147
        %v4280 = vpack.c.b16 %v3152, %v3148
        %v4281 = vpack.c.b16 %v3153, %v3149
        %v4282 = vpack.c.b16 %v3154, %v3150
        %v4283 = vpack.c.b16 %v3159, %v3155
        %v4284 = vpack.c.b16 %v3160, %v3156
        %v4285 = vpack.c.b16 %v3161, %v3157
        %v4286 = vpack.c.b16 %v3162, %v3158
        %v4287 = vpack.c.b16 %v3167, %v3163
        %v4288 = vpack.c.b16 %v3168, %v3164
        %v4289 = vpack.c.b16 %v3169, %v3165
        %v4290 = vpack.c.b16 %v3170, %v3166
        %v4291 = vpack.c.b16 %v3175, %v3171
        %v4292 = vpack.c.b16 %v3176, %v3172
        %v4293 = vpack.c.b16 %v3177, %v3173
        %v4294 = vpack.c.b16 %v3178, %v3174
        %v4295 = vpack.c.b16 %v3183, %v3179
        %v4296 = vpack.c.b16 %v3184, %v3180
        %v4297 = vpack.c.b16 %v3185, %v3181
        %v4298 = vpack.c.b16 %v3186, %v3182
        %v4299 = vpack.c.b16 %v3191, %v3187
        %v4300 = vpack.c.b16 %v3192, %v3188
        %v4301 = vpack.c.b16 %v3193, %v3189
        %v4302 = vpack.c.b16 %v3194, %v3190
        %v4303 = vpack.c.b16 %v3199, %v3195
        %v4304 = vpack.c.b16 %v3200, %v3196
        %v4305 = vpack.c.b16 %v3201, %v3197
        %v4306 = vpack.c.b16 %v3202, %v3198
        %v4307 = vpack.c.b16 %v3207, %v3203
        %v4308 = vpack.c.b16 %v3208, %v3204
        %v4309 = vpack.c.b16 %v3209, %v3205
        %v4310 = vpack.c.b16 %v3210, %v3206
        %v4311 = vpack.c.b16 %v3215, %v3211
        %v4312 = vpack.c.b16 %v3216, %v3212
        %v4313 = vpack.c.b16 %v3217, %v3213
        %v4314 = vpack.c.b16 %v3218, %v3214
        %v4315 = vpack.c.b16 %v3223, %v3219
        %v4316 = vpack.c.b16 %v3224, %v3220
        %v4317 = vpack.c.b16 %v3225, %v3221
        %v4318 = vpack.c.b16 %v3226, %v3222
        %v4319 = vpack.c.b16 %v3231, %v3227
        %v4320 = vpack.c.b16 %v3232, %v3228
        %v4321 = vpack.c.b16 %v3233, %v3229
        %v4322 = vpack.c.b16 %v3234, %v3230
        %v4323 = vpack.c.b16 %v3239, %v3235
        %v4324 = vpack.c.b16 %v3240, %v3236
        %v4325 = vpack.c.b16 %v3241, %v3237
        %v4326 = vpack.c.b16 %v3242, %v3238
        %v4327 = vpack.c.b16 %v3247, %v3243
        %v4328 = vpack.c.b16 %v3248, %v3244
        %v4329 = vpack.c.b16 %v3249, %v3245
        %v4330 = vpack.c.b16 %v3250, %v3246
        %v4331 = vpack.c.b16 %v3255, %v3251
        %v4332 = vpack.c.b16 %v3256, %v3252
        %v4333 = vpack.c.b16 %v3257, %v3253
        %v4334 = vpack.c.b16 %v3258, %v3254
        %v4335 = vpack.c.b16 %v3263, %v3259
        %v4336 = vpack.c.b16 %v3264, %v3260
        %v4337 = vpack.c.b16 %v3265, %v3261
        %v4338 = vpack.c.b16 %v3266, %v3262
        %v4339 = vpack.c.b16 %v3271, %v3267
        %v4340 = vpack.c.b16 %v3272, %v3268
        %v4341 = vpack.c.b16 %v3273, %v3269
        %v4342 = vpack.c.b16 %v3274, %v3270
        %v4343 = vpack.c.b16 %v3279, %v3275
        %v4344 = vpack.c.b16 %v3280, %v3276
        %v4345 = vpack.c.b16 %v3281, %v3277
        %v4346 = vpack.c.b16 %v3282, %v3278
        %v4347 = vpack.c.b16 %v3287, %v3283
        %v4348 = vpack.c.b16 %v3288, %v3284
        %v4349 = vpack.c.b16 %v3289, %v3285
        %v4350 = vpack.c.b16 %v3290, %v3286
        %v4351 = vpack.c.b16 %v3295, %v3291
        %v4352 = vpack.c.b16 %v3296, %v3292
        %v4353 = vpack.c.b16 %v3297, %v3293
        %v4354 = vpack.c.b16 %v3298, %v3294
        %v4355 = vpack.c.b16 %v3303, %v3299
        %v4356 = vpack.c.b16 %v3304, %v3300
        %v4357 = vpack.c.b16 %v3305, %v3301
        %v4358 = vpack.c.b16 %v3306, %v3302
        %v4359 = vpack.c.b16 %v3311, %v3307
        %v4360 = vpack.c.b16 %v3312, %v3308
        %v4361 = vpack.c.b16 %v3313, %v3309
        %v4362 = vpack.c.b16 %v3314, %v3310
        %v4363 = vpack.c.b16 %v3319, %v3315
        %v4364 = vpack.c.b16 %v3320, %v3316
        %v4365 = vpack.c.b16 %v3321, %v3317
        %v4366 = vpack.c.b16 %v3322, %v3318
        %v4367 = vpack.c.b16 %v3327, %v3323
        %v4368 = vpack.c.b16 %v3328, %v3324
        %v4369 = vpack.c.b16 %v3329, %v3325
        %v4370 = vpack.c.b16 %v3330, %v3326
        %v4371 = vpack.c.b16 %v3335, %v3331
        %v4372 = vpack.c.b16 %v3336, %v3332
        %v4373 = vpack.c.b16 %v3337, %v3333
        %v4374 = vpack.c.b16 %v3338, %v3334
        %v4375 = vpack.c.b16 %v3343, %v3339
        %v4376 = vpack.c.b16 %v3344, %v3340
        %v4377 = vpack.c.b16 %v3345, %v3341
        %v4378 = vpack.c.b16 %v3346, %v3342
        %v4379 = vpack.c.b16 %v3351, %v3347
        %v4380 = vpack.c.b16 %v3352, %v3348
        %v4381 = vpack.c.b16 %v3353, %v3349
        %v4382 = vpack.c.b16 %v3354, %v3350
        %v4383 = vpack.c.b16 %v3359, %v3355
        %v4384 = vpack.c.b16 %v3360, %v3356
        %v4385 = vpack.c.b16 %v3361, %v3357
        %v4386 = vpack.c.b16 %v3362, %v3358
        %v4387 = vpack.c.b16 %v3367, %v3363
        %v4388 = vpack.c.b16 %v3368, %v3364
        %v4389 = vpack.c.b16 %v3369, %v3365
        %v4390 = vpack.c.b16 %v3370, %v3366
        %v4391 = vpack.c.b16 %v3375, %v3371
        %v4392 = vpack.c.b16 %v3376, %v3372
        %v4393 = vpack.c.b16 %v3377, %v3373
        %v4394 = vpack.c.b16 %v3378, %v3374
        %v4395 = vpack.c.b16 %v3383, %v3379
        %v4396 = vpack.c.b16 %v3384, %v3380
        %v4397 = vpack.c.b16 %v3385, %v3381
        %v4398 = vpack.c.b16 %v3386, %v3382
        %v4399 = vpack.c.b16 %v3391, %v3387
        %v4400 = vpack.c.b16 %v3392, %v3388
        %v4401 = vpack.c.b16 %v3393, %v3389
        %v4402 = vpack.c.b16 %v3394, %v3390
        %v4403 = vpack.c.b16 %v3399, %v3395
        %v4404 = vpack.c.b16 %v3400, %v3396
        %v4405 = vpack.c.b16 %v3401, %v3397
        %v4406 = vpack.c.b16 %v3402, %v3398
        %v4407 = vpack.c.b16 %v3407, %v3403
        %v4408 = vpack.c.b16 %v3408, %v3404
        %v4409 = vpack.c.b16 %v3409, %v3405
        %v4410 = vpack.c.b16 %v3410, %v3406
        %v4411 = vpack.c.b16 %v3415, %v3411
        %v4412 = vpack.c.b16 %v3416, %v3412
        %v4413 = vpack.c.b16 %v3417, %v3413
        %v4414 = vpack.c.b16 %v3418, %v3414
        %v4415 = vpack.c.b16 %v3423, %v3419
        %v4416 = vpack.c.b16 %v3424, %v3420
        %v4417 = vpack.c.b16 %v3425, %v3421
        %v4418 = vpack.c.b16 %v3426, %v3422
        %v4419 = vpack.c.b16 %v3431, %v3427
        %v4420 = vpack.c.b16 %v3432, %v3428
        %v4421 = vpack.c.b16 %v3433, %v3429
        %v4422 = vpack.c.b16 %v3434, %v3430
        %v4423 = vpack.c.b16 %v3439, %v3435
        %v4424 = vpack.c.b16 %v3440, %v3436
        %v4425 = vpack.c.b16 %v3441, %v3437
        %v4426 = vpack.c.b16 %v3442, %v3438
        %v4427 = vpack.c.b16 %v3447, %v3443
        %v4428 = vpack.c.b16 %v3448, %v3444
        %v4429 = vpack.c.b16 %v3449, %v3445
        %v4430 = vpack.c.b16 %v3450, %v3446
        %v4431 = vpack.c.b16 %v3455, %v3451
        %v4432 = vpack.c.b16 %v3456, %v3452
        %v4433 = vpack.c.b16 %v3457, %v3453
        %v4434 = vpack.c.b16 %v3458, %v3454
        %v4435 = vpack.c.b16 %v3463, %v3459
        %v4436 = vpack.c.b16 %v3464, %v3460
        %v4437 = vpack.c.b16 %v3465, %v3461
        %v4438 = vpack.c.b16 %v3466, %v3462
        %v4439 = vpack.c.b16 %v3471, %v3467
        %v4440 = vpack.c.b16 %v3472, %v3468
        %v4441 = vpack.c.b16 %v3473, %v3469
        %v4442 = vpack.c.b16 %v3474, %v3470
        %v4443 = vpack.c.b16 %v3479, %v3475
        %v4444 = vpack.c.b16 %v3480, %v3476
        %v4445 = vpack.c.b16 %v3481, %v3477
        %v4446 = vpack.c.b16 %v3482, %v3478
        %v4447 = vpack.c.b16 %v3487, %v3483
        %v4448 = vpack.c.b16 %v3488, %v3484
        %v4449 = vpack.c.b16 %v3489, %v3485
        %v4450 = vpack.c.b16 %v3490, %v3486
        %v4451 = vpack.c.b16 %v3495, %v3491
        %v4452 = vpack.c.b16 %v3496, %v3492
        %v4453 = vpack.c.b16 %v3497, %v3493
        %v4454 = vpack.c.b16 %v3498, %v3494
        %v4455 = vpack.c.b16 %v3503, %v3499
        %v4456 = vpack.c.b16 %v3504, %v3500
        %v4457 = vpack.c.b16 %v3505, %v3501
        %v4458 = vpack.c.b16 %v3506, %v3502
        %v4459 = vpack.c.b16 %v3511, %v3507
        %v4460 = vpack.c.b16 %v3512, %v3508
        %v4461 = vpack.c.b16 %v3513, %v3509
        %v4462 = vpack.c.b16 %v3514, %v3510
        %v4463 = vpack.c.b16 %v3519, %v3515
        %v4464 = vpack.c.b16 %v3520, %v3516
        %v4465 = vpack.c.b16 %v3521, %v3517
        %v4466 = vpack.c.b16 %v3522, %v3518
        %v4467 = vpack.c.b16 %v3527, %v3523
        %v4468 = vpack.c.b16 %v3528, %v3524
        %v4469 = vpack.c.b16 %v3529, %v3525
        %v4470 = vpack.c.b16 %v3530, %v3526
        %v4471 = vpack.c.b16 %v3535, %v3531
        %v4472 = vpack.c.b16 %v3536, %v3532
        %v4473 = vpack.c.b16 %v3537, %v3533
        %v4474 = vpack.c.b16 %v3538, %v3534
        %v4475 = vpack.c.b16 %v3543, %v3539
        %v4476 = vpack.c.b16 %v3544, %v3540
        %v4477 = vpack.c.b16 %v3545, %v3541
        %v4478 = vpack.c.b16 %v3546, %v3542
        %v4479 = vpack.c.b16 %v3551, %v3547
        %v4480 = vpack.c.b16 %v3552, %v3548
        %v4481 = vpack.c.b16 %v3553, %v3549
        %v4482 = vpack.c.b16 %v3554, %v3550
        %v4483 = vpack.c.b16 %v3559, %v3555
        %v4484 = vpack.c.b16 %v3560, %v3556
        %v4485 = vpack.c.b16 %v3561, %v3557
        %v4486 = vpack.c.b16 %v3562, %v3558
        %v4487 = vpack.c.b16 %v3567, %v3563
        %v4488 = vpack.c.b16 %v3568, %v3564
        %v4489 = vpack.c.b16 %v3569, %v3565
        %v4490 = vpack.c.b16 %v3570, %v3566
        %v4491 = vpack.c.b16 %v3575, %v3571
        %v4492 = vpack.c.b16 %v3576, %v3572
        %v4493 = vpack.c.b16 %v3577, %v3573
        %v4494 = vpack.c.b16 %v3578, %v3574
        %v4495 = vpack.c.b16 %v3583, %v3579
        %v4496 = vpack.c.b16 %v3584, %v3580
        %v4497 = vpack.c.b16 %v3585, %v3581
        %v4498 = vpack.c.b16 %v3586, %v3582
        %v4499 = vpack.c.b16 %v3591, %v3587
        %v4500 = vpack.c.b16 %v3592, %v3588
        %v4501 = vpack.c.b16 %v3593, %v3589
        %v4502 = vpack.c.b16 %v3594, %v3590
        %v4503 = vpack.c.b16 %v3599, %v3595
        %v4504 = vpack.c.b16 %v3600, %v3596
        %v4505 = vpack.c.b16 %v3601, %v3597
        %v4506 = vpack.c.b16 %v3602, %v3598
        %v4507 = vpack.c.b16 %v3607, %v3603
        %v4508 = vpack.c.b16 %v3608, %v3604
        %v4509 = vpack.c.b16 %v3609, %v3605
        %v4510 = vpack.c.b16 %v3610, %v3606
        %v4511 = vpack.c.b16 %v3615, %v3611
        %v4512 = vpack.c.b16 %v3616, %v3612
        %v4513 = vpack.c.b16 %v3617, %v3613
        %v4514 = vpack.c.b16 %v3618, %v3614
        %v4515 = vpack.c.b16 %v3623, %v3619
        %v4516 = vpack.c.b16 %v3624, %v3620
        %v4517 = vpack.c.b16 %v3625, %v3621
        %v4518 = vpack.c.b16 %v3626, %v3622
        %v4519 = vpack.c.b16 %v3631, %v3627
        %v4520 = vpack.c.b16 %v3632, %v3628
        %v4521 = vpack.c.b16 %v3633, %v3629
        %v4522 = vpack.c.b16 %v3634, %v3630
        %v4523 = vpack.c.b16 %v3639, %v3635
        %v4524 = vpack.c.b16 %v3640, %v3636
        %v4525 = vpack.c.b16 %v3641, %v3637
        %v4526 = vpack.c.b16 %v3642, %v3638
        %v4527 = vpack.c.b16 %v3647, %v3643
        %v4528 = vpack.c.b16 %v3648, %v3644
        %v4529 = vpack.c.b16 %v3649, %v3645
        %v4530 = vpack.c.b16 %v3650, %v3646
        %v4531 = vpack.c.b16 %v3655, %v3651
        %v4532 = vpack.c.b16 %v3656, %v3652
        %v4533 = vpack.c.b16 %v3657, %v3653
        %v4534 = vpack.c.b16 %v3658, %v3654
        %v4535 = vpack.c.b16 %v3663, %v3659
        %v4536 = vpack.c.b16 %v3664, %v3660
        %v4537 = vpack.c.b16 %v3665, %v3661
        %v4538 = vpack.c.b16 %v3666, %v3662
        %v4539 = vpack.c.b16 %v3671, %v3667
        %v4540 = vpack.c.b16 %v3672, %v3668
        %v4541 = vpack.c.b16 %v3673, %v3669
        %v4542 = vpack.c.b16 %v3674, %v3670
        %v4543 = vpack.c.b16 %v3679, %v3675
        %v4544 = vpack.c.b16 %v3680, %v3676
        %v4545 = vpack.c.b16 %v3681, %v3677
        %v4546 = vpack.c.b16 %v3682, %v3678
        %v4547 = vpack.c.b16 %v3687, %v3683
        %v4548 = vpack.c.b16 %v3688, %v3684
        %v4549 = vpack.c.b16 %v3689, %v3685
        %v4550 = vpack.c.b16 %v3690, %v3686
        %v4551 = vpack.c.b16 %v3695, %v3691
        %v4552 = vpack.c.b16 %v3696, %v3692
        %v4553 = vpack.c.b16 %v3697, %v3693
        %v4554 = vpack.c.b16 %v3698, %v3694
        %v4555 = vpack.c.b16 %v3703, %v3699
        %v4556 = vpack.c.b16 %v3704, %v3700
        %v4557 = vpack.c.b16 %v3705, %v3701
        %v4558 = vpack.c.b16 %v3706, %v3702
        %v4559 = vpack.c.b16 %v3711, %v3707
        %v4560 = vpack.c.b16 %v3712, %v3708
        %v4561 = vpack.c.b16 %v3713, %v3709
        %v4562 = vpack.c.b16 %v3714, %v3710
        %v4563 = vpack.c.b16 %v3719, %v3715
        %v4564 = vpack.c.b16 %v3720, %v3716
        %v4565 = vpack.c.b16 %v3721, %v3717
        %v4566 = vpack.c.b16 %v3722, %v3718
        %v4567 = vpack.c.b16 %v3727, %v3723
        %v4568 = vpack.c.b16 %v3728, %v3724
        %v4569 = vpack.c.b16 %v3729, %v3725
        %v4570 = vpack.c.b16 %v3730, %v3726
        %v4571 = vpack.c.b16 %v3735, %v3731
        %v4572 = vpack.c.b16 %v3736, %v3732
        %v4573 = vpack.c.b16 %v3737, %v3733
        %v4574 = vpack.c.b16 %v3738, %v3734
        %v4575 = vpack.c.b16 %v3743, %v3739
        %v4576 = vpack.c.b16 %v3744, %v3740
        %v4577 = vpack.c.b16 %v3745, %v3741
        %v4578 = vpack.c.b16 %v3746, %v3742
        %v4579 = vpack.c.b16 %v3751, %v3747
        %v4580 = vpack.c.b16 %v3752, %v3748
        %v4581 = vpack.c.b16 %v3753, %v3749
        %v4582 = vpack.c.b16 %v3754, %v3750
        %v4583 = vpack.c.b16 %v3759, %v3755
        %v4584 = vpack.c.b16 %v3760, %v3756
        %v4585 = vpack.c.b16 %v3761, %v3757
        %v4586 = vpack.c.b16 %v3762, %v3758
        %v4587 = vpack.c.b16 %v3767, %v3763
        %v4588 = vpack.c.b16 %v3768, %v3764
        %v4589 = vpack.c.b16 %v3769, %v3765
        %v4590 = vpack.c.b16 %v3770, %v3766
        %v4591 = vpack.c.b16 %v3775, %v3771
        %v4592 = vpack.c.b16 %v3776, %v3772
        %v4593 = vpack.c.b16 %v3777, %v3773
        %v4594 = vpack.c.b16 %v3778, %v3774
        %v4595 = vpack.c.b16 %v3783, %v3779
        %v4596 = vpack.c.b16 %v3784, %v3780
        %v4597 = vpack.c.b16 %v3785, %v3781
        %v4598 = vpack.c.b16 %v3786, %v3782
        %v4599 = vpack.c.b16 %v3791, %v3787
        %v4600 = vpack.c.b16 %v3792, %v3788
        %v4601 = vpack.c.b16 %v3793, %v3789
        %v4602 = vpack.c.b16 %v3794, %v3790
        %v4603 = vpack.c.b16 %v3799, %v3795
        %v4604 = vpack.c.b16 %v3800, %v3796
        %v4605 = vpack.c.b16 %v3801, %v3797
        %v4606 = vpack.c.b16 %v3802, %v3798
        %v4607 = vpack.c.b16 %v3807, %v3803
        %v4608 = vpack.c.b16 %v3808, %v3804
        %v4609 = vpack.c.b16 %v3809, %v3805
        %v4610 = vpack.c.b16 %v3810, %v3806
        %5411 = vmatprep.subr.bf16.mxu0 %v3812
        %5412 = vmatpush1.bf16.msra.mxu0 %v3811
        %5413 = vmatprep.subr.bf16.mxu0 %v3816
        %5414 = vmatpush1.bf16.msra.mxu0 %v3815
        %5415 = vmatprep.subr.bf16.mxu0 %v3820
        %5416 = vmatpush1.bf16.msra.mxu0 %v3819
        %5417 = vmatprep.subr.bf16.mxu0 %v3824
        %5418 = vmatpush1.bf16.msra.mxu0 %v3823
        %5419 = vmatprep.subr.bf16.mxu0 %v3828
        %5420 = vmatpush1.bf16.msra.mxu0 %v3827
        %5421 = vmatprep.subr.bf16.mxu0 %v3832
        %5422 = vmatpush1.bf16.msra.mxu0 %v3831
        %5423 = vmatprep.subr.bf16.mxu0 %v3836
        %5424 = vmatpush1.bf16.msra.mxu0 %v3835
        %5425 = vmatprep.subr.bf16.mxu0 %v3840
        %5426 = vmatpush1.bf16.msra.mxu0 %v3839
        %5427 = vmatprep.subr.bf16.mxu0 %v3844
        %5428 = vmatpush1.bf16.msra.mxu0 %v3843
        %5429 = vmatprep.subr.bf16.mxu0 %v3848
        %5430 = vmatpush1.bf16.msra.mxu0 %v3847
        %5431 = vmatprep.subr.bf16.mxu0 %v3852
        %5432 = vmatpush1.bf16.msra.mxu0 %v3851
        %5433 = vmatprep.subr.bf16.mxu0 %v3856
        %5434 = vmatpush1.bf16.msra.mxu0 %v3855
        %5435 = vmatprep.subr.bf16.mxu0 %v3860
        %5436 = vmatpush1.bf16.msra.mxu0 %v3859
        %5437 = vmatprep.subr.bf16.mxu0 %v3864
        %5438 = vmatpush1.bf16.msra.mxu0 %v3863
        %5439 = vmatprep.subr.bf16.mxu0 %v3868
        %5440 = vmatpush1.bf16.msra.mxu0 %v3867
        %5441 = vmatprep.subr.bf16.mxu0 %v3872
        %5442 = vmatpush1.bf16.msra.mxu0 %v3871
        %5443 = vmatprep.mubr.bf16.mxu0 %v587
        %5444 = vmatmul.mubr.bf16.gmra.mrb[0].mxu0 %v586
        %v5445 = vpop.f32.mrb[0].mxu0
        %v5446 = vadd.f32 0.0, %v5445
        %v5447 = vpop.f32.mrb[0].mxu0
        %v5448 = vadd.f32 0.0, %v5447
        %v5449 = vpop.f32.mrb[0].mxu0
        %v5450 = vpop.f32.mrb[0].mxu0
        %5451 = vdwg.mxu0
        %5452 = vmatprep.subr.bf16.mxu0 %v3876
        %5453 = vmatpush1.bf16.msra.mxu0 %v3875
        %5454 = vmatprep.subr.bf16.mxu0 %v3880
        %5455 = vmatpush1.bf16.msra.mxu0 %v3879
        %5456 = vmatprep.subr.bf16.mxu0 %v3884
        %5457 = vmatpush1.bf16.msra.mxu0 %v3883
        %5458 = vmatprep.subr.bf16.mxu0 %v3888
        %5459 = vmatpush1.bf16.msra.mxu0 %v3887
        %5460 = vmatprep.subr.bf16.mxu0 %v3892
        %5461 = vmatpush1.bf16.msra.mxu0 %v3891
        %5462 = vmatprep.subr.bf16.mxu0 %v3896
        %5463 = vmatpush1.bf16.msra.mxu0 %v3895
        %5464 = vmatprep.subr.bf16.mxu0 %v3900
        %5465 = vmatpush1.bf16.msra.mxu0 %v3899
        %5466 = vmatprep.subr.bf16.mxu0 %v3904
        %5467 = vmatpush1.bf16.msra.mxu0 %v3903
        %5468 = vmatprep.subr.bf16.mxu0 %v3908
        %5469 = vmatpush1.bf16.msra.mxu0 %v3907
        %5470 = vmatprep.subr.bf16.mxu0 %v3912
        %5471 = vmatpush1.bf16.msra.mxu0 %v3911
        %5472 = vmatprep.subr.bf16.mxu0 %v3916
        %5473 = vmatpush1.bf16.msra.mxu0 %v3915
        %5474 = vmatprep.subr.bf16.mxu0 %v3920
        %5475 = vmatpush1.bf16.msra.mxu0 %v3919
        %5476 = vmatprep.subr.bf16.mxu0 %v3924
        %5477 = vmatpush1.bf16.msra.mxu0 %v3923
        %5478 = vmatprep.subr.bf16.mxu0 %v3928
        %5479 = vmatpush1.bf16.msra.mxu0 %v3927
        %5480 = vmatprep.subr.bf16.mxu0 %v3932
        %5481 = vmatpush1.bf16.msra.mxu0 %v3931
        %5482 = vmatprep.subr.bf16.mxu0 %v3936
        %5483 = vmatpush1.bf16.msra.mxu0 %v3935
        %5484 = vmatprep.mubr.bf16.mxu0 %v589
        %5485 = vmatmul.mubr.bf16.gmra.mrb[0].mxu0 %v588
        %v5486 = vpop.f32.mrb[0].mxu0
        %v5487 = vadd.f32 %v5446, %v5486
        %v5488 = vpop.f32.mrb[0].mxu0
        %v5489 = vadd.f32 %v5448, %v5488
        %v5490 = vpop.f32.mrb[0].mxu0
        %v5491 = vpop.f32.mrb[0].mxu0
        %5492 = vdwg.mxu0
        %5493 = vmatprep.subr.bf16.mxu0 %v3940
        %5494 = vmatpush1.bf16.msra.mxu0 %v3939
        %5495 = vmatprep.subr.bf16.mxu0 %v3944
        %5496 = vmatpush1.bf16.msra.mxu0 %v3943
        %5497 = vmatprep.subr.bf16.mxu0 %v3948
        %5498 = vmatpush1.bf16.msra.mxu0 %v3947
        %5499 = vmatprep.subr.bf16.mxu0 %v3952
        %5500 = vmatpush1.bf16.msra.mxu0 %v3951
        %5501 = vmatprep.subr.bf16.mxu0 %v3956
        %5502 = vmatpush1.bf16.msra.mxu0 %v3955
        %5503 = vmatprep.subr.bf16.mxu0 %v3960
        %5504 = vmatpush1.bf16.msra.mxu0 %v3959
        %5505 = vmatprep.subr.bf16.mxu0 %v3964
        %5506 = vmatpush1.bf16.msra.mxu0 %v3963
        %5507 = vmatprep.subr.bf16.mxu0 %v3968
        %5508 = vmatpush1.bf16.msra.mxu0 %v3967
        %5509 = vmatprep.subr.bf16.mxu0 %v3972
        %5510 = vmatpush1.bf16.msra.mxu0 %v3971
        %5511 = vmatprep.subr.bf16.mxu0 %v3976
        %5512 = vmatpush1.bf16.msra.mxu0 %v3975
        %5513 = vmatprep.subr.bf16.mxu0 %v3980
        %5514 = vmatpush1.bf16.msra.mxu0 %v3979
        %5515 = vmatprep.subr.bf16.mxu0 %v3984
        %5516 = vmatpush1.bf16.msra.mxu0 %v3983
        %5517 = vmatprep.subr.bf16.mxu0 %v3988
        %5518 = vmatpush1.bf16.msra.mxu0 %v3987
        %5519 = vmatprep.subr.bf16.mxu0 %v3992
        %5520 = vmatpush1.bf16.msra.mxu0 %v3991
        %5521 = vmatprep.subr.bf16.mxu0 %v3996
        %5522 = vmatpush1.bf16.msra.mxu0 %v3995
        %5523 = vmatprep.subr.bf16.mxu0 %v4000
        %5524 = vmatpush1.bf16.msra.mxu0 %v3999
        %5525 = vmatprep.mubr.bf16.mxu0 %v591
        %5526 = vmatmul.mubr.bf16.gmra.mrb[0].mxu0 %v590
        %v5527 = vpop.f32.mrb[0].mxu0
        %v5528 = vadd.f32 %v5487, %v5527
        %v5529 = vpop.f32.mrb[0].mxu0
        %v5530 = vadd.f32 %v5489, %v5529
        %v5531 = vpop.f32.mrb[0].mxu0
        %v5532 = vpop.f32.mrb[0].mxu0
        %5533 = vdwg.mxu0
        %5534 = vmatprep.subr.bf16.mxu0 %v4004
        %5535 = vmatpush1.bf16.msra.mxu0 %v4003
        %5536 = vmatprep.subr.bf16.mxu0 %v4008
        %5537 = vmatpush1.bf16.msra.mxu0 %v4007
        %5538 = vmatprep.subr.bf16.mxu0 %v4012
        %5539 = vmatpush1.bf16.msra.mxu0 %v4011
        %5540 = vmatprep.subr.bf16.mxu0 %v4016
        %5541 = vmatpush1.bf16.msra.mxu0 %v4015
        %5542 = vmatprep.subr.bf16.mxu0 %v4020
        %5543 = vmatpush1.bf16.msra.mxu0 %v4019
        %5544 = vmatprep.subr.bf16.mxu0 %v4024
        %5545 = vmatpush1.bf16.msra.mxu0 %v4023
        %5546 = vmatprep.subr.bf16.mxu0 %v4028
        %5547 = vmatpush1.bf16.msra.mxu0 %v4027
        %5548 = vmatprep.subr.bf16.mxu0 %v4032
        %5549 = vmatpush1.bf16.msra.mxu0 %v4031
        %5550 = vmatprep.subr.bf16.mxu0 %v4036
        %5551 = vmatpush1.bf16.msra.mxu0 %v4035
        %5552 = vmatprep.subr.bf16.mxu0 %v4040
        %5553 = vmatpush1.bf16.msra.mxu0 %v4039
        %5554 = vmatprep.subr.bf16.mxu0 %v4044
        %5555 = vmatpush1.bf16.msra.mxu0 %v4043
        %5556 = vmatprep.subr.bf16.mxu0 %v4048
        %5557 = vmatpush1.bf16.msra.mxu0 %v4047
        %5558 = vmatprep.subr.bf16.mxu0 %v4052
        %5559 = vmatpush1.bf16.msra.mxu0 %v4051
        %5560 = vmatprep.subr.bf16.mxu0 %v4056
        %5561 = vmatpush1.bf16.msra.mxu0 %v4055
        %5562 = vmatprep.subr.bf16.mxu0 %v4060
        %5563 = vmatpush1.bf16.msra.mxu0 %v4059
        %5564 = vmatprep.subr.bf16.mxu0 %v4064
        %5565 = vmatpush1.bf16.msra.mxu0 %v4063
        %5566 = vmatprep.mubr.bf16.mxu0 %v593
        %5567 = vmatmul.mubr.bf16.gmra.mrb[0].mxu0 %v592
        %v5568 = vpop.f32.mrb[0].mxu0
        %v5569 = vadd.f32 %v5528, %v5568
        %v5570 = vpop.f32.mrb[0].mxu0
        %v5571 = vadd.f32 %v5530, %v5570
        %v5572 = vpop.f32.mrb[0].mxu0
        %v5573 = vpop.f32.mrb[0].mxu0
        %5574 = vdwg.mxu0
        %5575 = vmatprep.subr.bf16.mxu0 %v4068
        %5576 = vmatpush1.bf16.msra.mxu0 %v4067
        %5577 = vmatprep.subr.bf16.mxu0 %v4072
        %5578 = vmatpush1.bf16.msra.mxu0 %v4071
        %5579 = vmatprep.subr.bf16.mxu0 %v4076
        %5580 = vmatpush1.bf16.msra.mxu0 %v4075
        %5581 = vmatprep.subr.bf16.mxu0 %v4080
        %5582 = vmatpush1.bf16.msra.mxu0 %v4079
        %5583 = vmatprep.subr.bf16.mxu0 %v4084
        %5584 = vmatpush1.bf16.msra.mxu0 %v4083
        %5585 = vmatprep.subr.bf16.mxu0 %v4088
        %5586 = vmatpush1.bf16.msra.mxu0 %v4087
        %5587 = vmatprep.subr.bf16.mxu0 %v4092
        %5588 = vmatpush1.bf16.msra.mxu0 %v4091
        %5589 = vmatprep.subr.bf16.mxu0 %v4096
        %5590 = vmatpush1.bf16.msra.mxu0 %v4095
        %5591 = vmatprep.subr.bf16.mxu0 %v4100
        %5592 = vmatpush1.bf16.msra.mxu0 %v4099
        %5593 = vmatprep.subr.bf16.mxu0 %v4104
        %5594 = vmatpush1.bf16.msra.mxu0 %v4103
        %5595 = vmatprep.subr.bf16.mxu0 %v4108
        %5596 = vmatpush1.bf16.msra.mxu0 %v4107
        %5597 = vmatprep.subr.bf16.mxu0 %v4112
        %5598 = vmatpush1.bf16.msra.mxu0 %v4111
        %5599 = vmatprep.subr.bf16.mxu0 %v4116
        %5600 = vmatpush1.bf16.msra.mxu0 %v4115
        %5601 = vmatprep.subr.bf16.mxu0 %v4120
        %5602 = vmatpush1.bf16.msra.mxu0 %v4119
        %5603 = vmatprep.subr.bf16.mxu0 %v4124
        %5604 = vmatpush1.bf16.msra.mxu0 %v4123
        %5605 = vmatprep.subr.bf16.mxu0 %v4128
        %5606 = vmatpush1.bf16.msra.mxu0 %v4127
        %5607 = vmatprep.mubr.bf16.mxu0 %v595
        %5608 = vmatmul.mubr.bf16.gmra.mrb[0].mxu0 %v594
        %v5609 = vpop.f32.mrb[0].mxu0
        %v5610 = vadd.f32 %v5569, %v5609
        %v5611 = vpop.f32.mrb[0].mxu0
        %v5612 = vadd.f32 %v5571, %v5611
        %v5613 = vpop.f32.mrb[0].mxu0
        %v5614 = vpop.f32.mrb[0].mxu0
        %5615 = vdwg.mxu0
        %5616 = vmatprep.subr.bf16.mxu0 %v4132
        %5617 = vmatpush1.bf16.msra.mxu0 %v4131
        %5618 = vmatprep.subr.bf16.mxu0 %v4136
        %5619 = vmatpush1.bf16.msra.mxu0 %v4135
        %5620 = vmatprep.subr.bf16.mxu0 %v4140
        %5621 = vmatpush1.bf16.msra.mxu0 %v4139
        %5622 = vmatprep.subr.bf16.mxu0 %v4144
        %5623 = vmatpush1.bf16.msra.mxu0 %v4143
        %5624 = vmatprep.subr.bf16.mxu0 %v4148
        %5625 = vmatpush1.bf16.msra.mxu0 %v4147
        %5626 = vmatprep.subr.bf16.mxu0 %v4152
        %5627 = vmatpush1.bf16.msra.mxu0 %v4151
        %5628 = vmatprep.subr.bf16.mxu0 %v4156
        %5629 = vmatpush1.bf16.msra.mxu0 %v4155
        %5630 = vmatprep.subr.bf16.mxu0 %v4160
        %5631 = vmatpush1.bf16.msra.mxu0 %v4159
        %5632 = vmatprep.subr.bf16.mxu0 %v4164
        %5633 = vmatpush1.bf16.msra.mxu0 %v4163
        %5634 = vmatprep.subr.bf16.mxu0 %v4168
        %5635 = vmatpush1.bf16.msra.mxu0 %v4167
        %5636 = vmatprep.subr.bf16.mxu0 %v4172
        %5637 = vmatpush1.bf16.msra.mxu0 %v4171
        %5638 = vmatprep.subr.bf16.mxu0 %v4176
        %5639 = vmatpush1.bf16.msra.mxu0 %v4175
        %5640 = vmatprep.subr.bf16.mxu0 %v4180
        %5641 = vmatpush1.bf16.msra.mxu0 %v4179
        %5642 = vmatprep.subr.bf16.mxu0 %v4184
        %5643 = vmatpush1.bf16.msra.mxu0 %v4183
        %5644 = vmatprep.subr.bf16.mxu0 %v4188
        %5645 = vmatpush1.bf16.msra.mxu0 %v4187
        %5646 = vmatprep.subr.bf16.mxu0 %v4192
        %5647 = vmatpush1.bf16.msra.mxu0 %v4191
        %5648 = vmatprep.mubr.bf16.mxu0 %v597
        %5649 = vmatmul.mubr.bf16.gmra.mrb[0].mxu0 %v596
        %v5650 = vpop.f32.mrb[0].mxu0
        %v5651 = vadd.f32 %v5610, %v5650
        %v5652 = vpop.f32.mrb[0].mxu0
        %v5653 = vadd.f32 %v5612, %v5652
        %v5654 = vpop.f32.mrb[0].mxu0
        %v5655 = vpop.f32.mrb[0].mxu0
        %5656 = vdwg.mxu0
        %5657 = vmatprep.subr.bf16.mxu0 %v4196
        %5658 = vmatpush1.bf16.msra.mxu0 %v4195
        %5659 = vmatprep.subr.bf16.mxu0 %v4200
        %5660 = vmatpush1.bf16.msra.mxu0 %v4199
        %5661 = vmatprep.subr.bf16.mxu0 %v4204
        %5662 = vmatpush1.bf16.msra.mxu0 %v4203
        %5663 = vmatprep.subr.bf16.mxu0 %v4208
        %5664 = vmatpush1.bf16.msra.mxu0 %v4207
        %5665 = vmatprep.subr.bf16.mxu0 %v4212
        %5666 = vmatpush1.bf16.msra.mxu0 %v4211
        %5667 = vmatprep.subr.bf16.mxu0 %v4216
        %5668 = vmatpush1.bf16.msra.mxu0 %v4215
        %5669 = vmatprep.subr.bf16.mxu0 %v4220
        %5670 = vmatpush1.bf16.msra.mxu0 %v4219
        %5671 = vmatprep.subr.bf16.mxu0 %v4224
        %5672 = vmatpush1.bf16.msra.mxu0 %v4223
        %5673 = vmatprep.subr.bf16.mxu0 %v4228
        %5674 = vmatpush1.bf16.msra.mxu0 %v4227
        %5675 = vmatprep.subr.bf16.mxu0 %v4232
        %5676 = vmatpush1.bf16.msra.mxu0 %v4231
        %5677 = vmatprep.subr.bf16.mxu0 %v4236
        %5678 = vmatpush1.bf16.msra.mxu0 %v4235
        %5679 = vmatprep.subr.bf16.mxu0 %v4240
        %5680 = vmatpush1.bf16.msra.mxu0 %v4239
        %5681 = vmatprep.subr.bf16.mxu0 %v4244
        %5682 = vmatpush1.bf16.msra.mxu0 %v4243
        %5683 = vmatprep.subr.bf16.mxu0 %v4248
        %5684 = vmatpush1.bf16.msra.mxu0 %v4247
        %5685 = vmatprep.subr.bf16.mxu0 %v4252
        %5686 = vmatpush1.bf16.msra.mxu0 %v4251
        %5687 = vmatprep.subr.bf16.mxu0 %v4256
        %5688 = vmatpush1.bf16.msra.mxu0 %v4255
        %5689 = vmatprep.mubr.bf16.mxu0 %v599
        %5690 = vmatmul.mubr.bf16.gmra.mrb[0].mxu0 %v598
        %v5691 = vpop.f32.mrb[0].mxu0
        %v5692 = vadd.f32 %v5651, %v5691
        %v5693 = vpop.f32.mrb[0].mxu0
        %v5694 = vadd.f32 %v5653, %v5693
        %v5695 = vpop.f32.mrb[0].mxu0
        %v5696 = vpop.f32.mrb[0].mxu0
        %5697 = vdwg.mxu0
        %5698 = vmatprep.subr.bf16.mxu0 %v4260
        %5699 = vmatpush1.bf16.msra.mxu0 %v4259
        %5700 = vmatprep.subr.bf16.mxu0 %v4264
        %5701 = vmatpush1.bf16.msra.mxu0 %v4263
        %5702 = vmatprep.subr.bf16.mxu0 %v4268
        %5703 = vmatpush1.bf16.msra.mxu0 %v4267
        %5704 = vmatprep.subr.bf16.mxu0 %v4272
        %5705 = vmatpush1.bf16.msra.mxu0 %v4271
        %5706 = vmatprep.subr.bf16.mxu0 %v4276
        %5707 = vmatpush1.bf16.msra.mxu0 %v4275
        %5708 = vmatprep.subr.bf16.mxu0 %v4280
        %5709 = vmatpush1.bf16.msra.mxu0 %v4279
        %5710 = vmatprep.subr.bf16.mxu0 %v4284
        %5711 = vmatpush1.bf16.msra.mxu0 %v4283
        %5712 = vmatprep.subr.bf16.mxu0 %v4288
        %5713 = vmatpush1.bf16.msra.mxu0 %v4287
        %5714 = vmatprep.subr.bf16.mxu0 %v4292
        %5715 = vmatpush1.bf16.msra.mxu0 %v4291
        %5716 = vmatprep.subr.bf16.mxu0 %v4296
        %5717 = vmatpush1.bf16.msra.mxu0 %v4295
        %5718 = vmatprep.subr.bf16.mxu0 %v4300
        %5719 = vmatpush1.bf16.msra.mxu0 %v4299
        %5720 = vmatprep.subr.bf16.mxu0 %v4304
        %5721 = vmatpush1.bf16.msra.mxu0 %v4303
        %5722 = vmatprep.subr.bf16.mxu0 %v4308
        %5723 = vmatpush1.bf16.msra.mxu0 %v4307
        %5724 = vmatprep.subr.bf16.mxu0 %v4312
        %5725 = vmatpush1.bf16.msra.mxu0 %v4311
        %5726 = vmatprep.subr.bf16.mxu0 %v4316
        %5727 = vmatpush1.bf16.msra.mxu0 %v4315
        %5728 = vmatprep.subr.bf16.mxu0 %v4320
        %5729 = vmatpush1.bf16.msra.mxu0 %v4319
        %5730 = vmatprep.mubr.bf16.mxu0 %v601
        %5731 = vmatmul.mubr.bf16.gmra.mrb[0].mxu0 %v600
        %v5732 = vpop.f32.mrb[0].mxu0
        %v5733 = vadd.f32 %v5692, %v5732
        %v5734 = vpop.f32.mrb[0].mxu0
        %v5735 = vadd.f32 %v5694, %v5734
        %v5736 = vpop.f32.mrb[0].mxu0
        %v5737 = vpop.f32.mrb[0].mxu0
        %5738 = vdwg.mxu0
        %5739 = vmatprep.subr.bf16.mxu0 %v4324
        %5740 = vmatpush1.bf16.msra.mxu0 %v4323
        %5741 = vmatprep.subr.bf16.mxu0 %v4328
        %5742 = vmatpush1.bf16.msra.mxu0 %v4327
        %5743 = vmatprep.subr.bf16.mxu0 %v4332
        %5744 = vmatpush1.bf16.msra.mxu0 %v4331
        %5745 = vmatprep.subr.bf16.mxu0 %v4336
        %5746 = vmatpush1.bf16.msra.mxu0 %v4335
        %5747 = vmatprep.subr.bf16.mxu0 %v4340
        %5748 = vmatpush1.bf16.msra.mxu0 %v4339
        %5749 = vmatprep.subr.bf16.mxu0 %v4344
        %5750 = vmatpush1.bf16.msra.mxu0 %v4343
        %5751 = vmatprep.subr.bf16.mxu0 %v4348
        %5752 = vmatpush1.bf16.msra.mxu0 %v4347
        %5753 = vmatprep.subr.bf16.mxu0 %v4352
        %5754 = vmatpush1.bf16.msra.mxu0 %v4351
        %5755 = vmatprep.subr.bf16.mxu0 %v4356
        %5756 = vmatpush1.bf16.msra.mxu0 %v4355
        %5757 = vmatprep.subr.bf16.mxu0 %v4360
        %5758 = vmatpush1.bf16.msra.mxu0 %v4359
        %5759 = vmatprep.subr.bf16.mxu0 %v4364
        %5760 = vmatpush1.bf16.msra.mxu0 %v4363
        %5761 = vmatprep.subr.bf16.mxu0 %v4368
        %5762 = vmatpush1.bf16.msra.mxu0 %v4367
        %5763 = vmatprep.subr.bf16.mxu0 %v4372
        %5764 = vmatpush1.bf16.msra.mxu0 %v4371
        %5765 = vmatprep.subr.bf16.mxu0 %v4376
        %5766 = vmatpush1.bf16.msra.mxu0 %v4375
        %5767 = vmatprep.subr.bf16.mxu0 %v4380
        %5768 = vmatpush1.bf16.msra.mxu0 %v4379
        %5769 = vmatprep.subr.bf16.mxu0 %v4384
        %5770 = vmatpush1.bf16.msra.mxu0 %v4383
        %5771 = vmatprep.mubr.bf16.mxu0 %v603
        %5772 = vmatmul.mubr.bf16.gmra.mrb[0].mxu0 %v602
        %v5773 = vpop.f32.mrb[0].mxu0
        %v5774 = vadd.f32 %v5733, %v5773
        %v5775 = vpop.f32.mrb[0].mxu0
        %v5776 = vadd.f32 %v5735, %v5775
        %v5777 = vpop.f32.mrb[0].mxu0
        %v5778 = vpop.f32.mrb[0].mxu0
        %5779 = vdwg.mxu0
        %5780 = vmatprep.subr.bf16.mxu0 %v4388
        %5781 = vmatpush1.bf16.msra.mxu0 %v4387
        %5782 = vmatprep.subr.bf16.mxu0 %v4392
        %5783 = vmatpush1.bf16.msra.mxu0 %v4391
        %5784 = vmatprep.subr.bf16.mxu0 %v4396
        %5785 = vmatpush1.bf16.msra.mxu0 %v4395
        %5786 = vmatprep.subr.bf16.mxu0 %v4400
        %5787 = vmatpush1.bf16.msra.mxu0 %v4399
        %5788 = vmatprep.subr.bf16.mxu0 %v4404
        %5789 = vmatpush1.bf16.msra.mxu0 %v4403
        %5790 = vmatprep.subr.bf16.mxu0 %v4408
        %5791 = vmatpush1.bf16.msra.mxu0 %v4407
        %5792 = vmatprep.subr.bf16.mxu0 %v4412
        %5793 = vmatpush1.bf16.msra.mxu0 %v4411
        %5794 = vmatprep.subr.bf16.mxu0 %v4416
        %5795 = vmatpush1.bf16.msra.mxu0 %v4415
        %5796 = vmatprep.subr.bf16.mxu0 %v4420
        %5797 = vmatpush1.bf16.msra.mxu0 %v4419
        %5798 = vmatprep.subr.bf16.mxu0 %v4424
        %5799 = vmatpush1.bf16.msra.mxu0 %v4423
        %5800 = vmatprep.subr.bf16.mxu0 %v4428
        %5801 = vmatpush1.bf16.msra.mxu0 %v4427
        %5802 = vmatprep.subr.bf16.mxu0 %v4432
        %5803 = vmatpush1.bf16.msra.mxu0 %v4431
        %5804 = vmatprep.subr.bf16.mxu0 %v4436
        %5805 = vmatpush1.bf16.msra.mxu0 %v4435
        %5806 = vmatprep.subr.bf16.mxu0 %v4440
        %5807 = vmatpush1.bf16.msra.mxu0 %v4439
        %5808 = vmatprep.subr.bf16.mxu0 %v4444
        %5809 = vmatpush1.bf16.msra.mxu0 %v4443
        %5810 = vmatprep.subr.bf16.mxu0 %v4448
        %5811 = vmatpush1.bf16.msra.mxu0 %v4447
        %5812 = vmatprep.mubr.bf16.mxu0 %v605
        %5813 = vmatmul.mubr.bf16.gmra.mrb[0].mxu0 %v604
        %v5814 = vpop.f32.mrb[0].mxu0
        %v5815 = vadd.f32 %v5774, %v5814
        %v5816 = vpop.f32.mrb[0].mxu0
        %v5817 = vadd.f32 %v5776, %v5816
        %v5818 = vpop.f32.mrb[0].mxu0
        %v5819 = vpop.f32.mrb[0].mxu0
        %5820 = vdwg.mxu0
        %5821 = vmatprep.subr.bf16.mxu0 %v4452
        %5822 = vmatpush1.bf16.msra.mxu0 %v4451
        %5823 = vmatprep.subr.bf16.mxu0 %v4456
        %5824 = vmatpush1.bf16.msra.mxu0 %v4455
        %5825 = vmatprep.subr.bf16.mxu0 %v4460
        %5826 = vmatpush1.bf16.msra.mxu0 %v4459
        %5827 = vmatprep.subr.bf16.mxu0 %v4464
        %5828 = vmatpush1.bf16.msra.mxu0 %v4463
        %5829 = vmatprep.subr.bf16.mxu0 %v4468
        %5830 = vmatpush1.bf16.msra.mxu0 %v4467
        %5831 = vmatprep.subr.bf16.mxu0 %v4472
        %5832 = vmatpush1.bf16.msra.mxu0 %v4471
        %5833 = vmatprep.subr.bf16.mxu0 %v4476
        %5834 = vmatpush1.bf16.msra.mxu0 %v4475
        %5835 = vmatprep.subr.bf16.mxu0 %v4480
        %5836 = vmatpush1.bf16.msra.mxu0 %v4479
        %5837 = vmatprep.subr.bf16.mxu0 %v4484
        %5838 = vmatpush1.bf16.msra.mxu0 %v4483
        %5839 = vmatprep.subr.bf16.mxu0 %v4488
        %5840 = vmatpush1.bf16.msra.mxu0 %v4487
        %5841 = vmatprep.subr.bf16.mxu0 %v4492
        %5842 = vmatpush1.bf16.msra.mxu0 %v4491
        %5843 = vmatprep.subr.bf16.mxu0 %v4496
        %5844 = vmatpush1.bf16.msra.mxu0 %v4495
        %5845 = vmatprep.subr.bf16.mxu0 %v4500
        %5846 = vmatpush1.bf16.msra.mxu0 %v4499
        %5847 = vmatprep.subr.bf16.mxu0 %v4504
        %5848 = vmatpush1.bf16.msra.mxu0 %v4503
        %5849 = vmatprep.subr.bf16.mxu0 %v4508
        %5850 = vmatpush1.bf16.msra.mxu0 %v4507
        %5851 = vmatprep.subr.bf16.mxu0 %v4512
        %5852 = vmatpush1.bf16.msra.mxu0 %v4511
        %5853 = vmatprep.mubr.bf16.mxu0 %v607
        %5854 = vmatmul.mubr.bf16.gmra.mrb[0].mxu0 %v606
        %v5855 = vpop.f32.mrb[0].mxu0
        %v5856 = vadd.f32 %v5815, %v5855
        %v5857 = vpop.f32.mrb[0].mxu0
        %v5858 = vadd.f32 %v5817, %v5857
        %v5859 = vpop.f32.mrb[0].mxu0
        %v5860 = vpop.f32.mrb[0].mxu0
        %5861 = vdwg.mxu0
        %5862 = vmatprep.subr.bf16.mxu0 %v4516
        %5863 = vmatpush1.bf16.msra.mxu0 %v4515
        %5864 = vmatprep.subr.bf16.mxu0 %v4520
        %5865 = vmatpush1.bf16.msra.mxu0 %v4519
        %5866 = vmatprep.subr.bf16.mxu0 %v4524
        %5867 = vmatpush1.bf16.msra.mxu0 %v4523
        %5868 = vmatprep.subr.bf16.mxu0 %v4528
        %5869 = vmatpush1.bf16.msra.mxu0 %v4527
        %5870 = vmatprep.subr.bf16.mxu0 %v4532
        %5871 = vmatpush1.bf16.msra.mxu0 %v4531
        %5872 = vmatprep.subr.bf16.mxu0 %v4536
        %5873 = vmatpush1.bf16.msra.mxu0 %v4535
        %5874 = vmatprep.subr.bf16.mxu0 %v4540
        %5875 = vmatpush1.bf16.msra.mxu0 %v4539
        %5876 = vmatprep.subr.bf16.mxu0 %v4544
        %5877 = vmatpush1.bf16.msra.mxu0 %v4543
        %5878 = vmatprep.subr.bf16.mxu0 %v4548
        %5879 = vmatpush1.bf16.msra.mxu0 %v4547
        %5880 = vmatprep.subr.bf16.mxu0 %v4552
        %5881 = vmatpush1.bf16.msra.mxu0 %v4551
        %5882 = vmatprep.subr.bf16.mxu0 %v4556
        %5883 = vmatpush1.bf16.msra.mxu0 %v4555
        %5884 = vmatprep.subr.bf16.mxu0 %v4560
        %5885 = vmatpush1.bf16.msra.mxu0 %v4559
        %5886 = vmatprep.subr.bf16.mxu0 %v4564
        %5887 = vmatpush1.bf16.msra.mxu0 %v4563
        %5888 = vmatprep.subr.bf16.mxu0 %v4568
        %5889 = vmatpush1.bf16.msra.mxu0 %v4567
        %5890 = vmatprep.subr.bf16.mxu0 %v4572
        %5891 = vmatpush1.bf16.msra.mxu0 %v4571
        %5892 = vmatprep.subr.bf16.mxu0 %v4576
        %5893 = vmatpush1.bf16.msra.mxu0 %v4575
        %5894 = vmatprep.mubr.bf16.mxu0 %v609
        %5895 = vmatmul.mubr.bf16.gmra.mrb[0].mxu0 %v608
        %v5896 = vpop.f32.mrb[0].mxu0
        %v5897 = vadd.f32 %v5856, %v5896
        %v5898 = vpop.f32.mrb[0].mxu0
        %v5899 = vadd.f32 %v5858, %v5898
        %v5900 = vpop.f32.mrb[0].mxu0
        %v5901 = vpop.f32.mrb[0].mxu0
        %5902 = vdwg.mxu0
        %5903 = vmatprep.subr.bf16.mxu0 %v4580
        %5904 = vmatpush1.bf16.msra.mxu0 %v4579
        %5905 = vmatprep.subr.bf16.mxu0 %v4584
        %5906 = vmatpush1.bf16.msra.mxu0 %v4583
        %5907 = vmatprep.subr.bf16.mxu0 %v4588
        %5908 = vmatpush1.bf16.msra.mxu0 %v4587
        %5909 = vmatprep.subr.bf16.mxu0 %v4592
        %5910 = vmatpush1.bf16.msra.mxu0 %v4591
        %5911 = vmatprep.subr.bf16.mxu0 %v4596
        %5912 = vmatpush1.bf16.msra.mxu0 %v4595
        %5913 = vmatprep.subr.bf16.mxu0 %v4600
        %5914 = vmatpush1.bf16.msra.mxu0 %v4599
        %5915 = vmatprep.subr.bf16.mxu0 %v4604
        %5916 = vmatpush1.bf16.msra.mxu0 %v4603
        %5917 = vmatprep.subr.bf16.mxu0 %v4608
        %5918 = vmatpush1.bf16.msra.mxu0 %v4607
        %5919 = vmatprep.subr.bf16.mxu0 0
        %5920 = vmatpush1.bf16.msra.mxu0 0
        %5921 = vmatprep.subr.bf16.mxu0 0
        %5922 = vmatpush1.bf16.msra.mxu0 0
        %5923 = vmatprep.subr.bf16.mxu0 0
        %5924 = vmatpush1.bf16.msra.mxu0 0
        %5925 = vmatprep.subr.bf16.mxu0 0
        %5926 = vmatpush1.bf16.msra.mxu0 0
        %5927 = vmatprep.subr.bf16.mxu0 0
        %5928 = vmatpush1.bf16.msra.mxu0 0
        %5929 = vmatprep.subr.bf16.mxu0 0
        %5930 = vmatpush1.bf16.msra.mxu0 0
        %5931 = vmatprep.subr.bf16.mxu0 0
        %5932 = vmatpush1.bf16.msra.mxu0 0
        %5933 = vmatprep.subr.bf16.mxu0 0
        %5934 = vmatpush1.bf16.msra.mxu0 0
        %5935 = vmatprep.mubr.bf16.mxu0 0
        %5936 = vmatmul.mubr.bf16.gmra.mrb[0].mxu0 %v610
        %v5937 = vpop.f32.mrb[0].mxu0
        %v5938 = vadd.f32 %v5897, %v5937
        %v5939 = vpop.f32.mrb[0].mxu0
        %v5940 = vadd.f32 %v5899, %v5939
        %v5941 = vpop.f32.mrb[0].mxu0
        %v5942 = vpop.f32.mrb[0].mxu0
        %5943 = vdwg.mxu0
        %5944 = vmatprep.subr.bf16.mxu0 %v3814
        %5945 = vmatpush1.bf16.msra.mxu0 %v3813
        %5946 = vmatprep.subr.bf16.mxu0 %v3818
        %5947 = vmatpush1.bf16.msra.mxu0 %v3817
        %5948 = vmatprep.subr.bf16.mxu0 %v3822
        %5949 = vmatpush1.bf16.msra.mxu0 %v3821
        %5950 = vmatprep.subr.bf16.mxu0 %v3826
        %5951 = vmatpush1.bf16.msra.mxu0 %v3825
        %5952 = vmatprep.subr.bf16.mxu0 %v3830
        %5953 = vmatpush1.bf16.msra.mxu0 %v3829
        %5954 = vmatprep.subr.bf16.mxu0 %v3834
        %5955 = vmatpush1.bf16.msra.mxu0 %v3833
        %5956 = vmatprep.subr.bf16.mxu0 %v3838
        %5957 = vmatpush1.bf16.msra.mxu0 %v3837
        %5958 = vmatprep.subr.bf16.mxu0 %v3842
        %5959 = vmatpush1.bf16.msra.mxu0 %v3841
        %5960 = vmatprep.subr.bf16.mxu0 %v3846
        %5961 = vmatpush1.bf16.msra.mxu0 %v3845
        %5962 = vmatprep.subr.bf16.mxu0 %v3850
        %5963 = vmatpush1.bf16.msra.mxu0 %v3849
        %5964 = vmatprep.subr.bf16.mxu0 %v3854
        %5965 = vmatpush1.bf16.msra.mxu0 %v3853
        %5966 = vmatprep.subr.bf16.mxu0 %v3858
        %5967 = vmatpush1.bf16.msra.mxu0 %v3857
        %5968 = vmatprep.subr.bf16.mxu0 %v3862
        %5969 = vmatpush1.bf16.msra.mxu0 %v3861
        %5970 = vmatprep.subr.bf16.mxu0 %v3866
        %5971 = vmatpush1.bf16.msra.mxu0 %v3865
        %5972 = vmatprep.subr.bf16.mxu0 %v3870
        %5973 = vmatpush1.bf16.msra.mxu0 %v3869
        %5974 = vmatprep.subr.bf16.mxu0 %v3874
        %5975 = vmatpush1.bf16.msra.mxu0 %v3873
        %5976 = vmatprep.mubr.bf16.mxu0 %v587
        %5977 = vmatmul.mubr.bf16.gmra.mrb[0].mxu0 %v586
        %v5978 = vpop.f32.mrb[0].mxu0
        %v5979 = vadd.f32 0.0, %v5978
        %v5980 = vpop.f32.mrb[0].mxu0
        %v5981 = vadd.f32 0.0, %v5980
        %v5982 = vpop.f32.mrb[0].mxu0
        %v5983 = vpop.f32.mrb[0].mxu0
        %5984 = vdwg.mxu0
        %5985 = vmatprep.subr.bf16.mxu0 %v3878
        %5986 = vmatpush1.bf16.msra.mxu0 %v3877
        %5987 = vmatprep.subr.bf16.mxu0 %v3882
        %5988 = vmatpush1.bf16.msra.mxu0 %v3881
        %5989 = vmatprep.subr.bf16.mxu0 %v3886
        %5990 = vmatpush1.bf16.msra.mxu0 %v3885
        %5991 = vmatprep.subr.bf16.mxu0 %v3890
        %5992 = vmatpush1.bf16.msra.mxu0 %v3889
        %5993 = vmatprep.subr.bf16.mxu0 %v3894
        %5994 = vmatpush1.bf16.msra.mxu0 %v3893
        %5995 = vmatprep.subr.bf16.mxu0 %v3898
        %5996 = vmatpush1.bf16.msra.mxu0 %v3897
        %5997 = vmatprep.subr.bf16.mxu0 %v3902
        %5998 = vmatpush1.bf16.msra.mxu0 %v3901
        %5999 = vmatprep.subr.bf16.mxu0 %v3906
        %6000 = vmatpush1.bf16.msra.mxu0 %v3905
        %6001 = vmatprep.subr.bf16.mxu0 %v3910
        %6002 = vmatpush1.bf16.msra.mxu0 %v3909
        %6003 = vmatprep.subr.bf16.mxu0 %v3914
        %6004 = vmatpush1.bf16.msra.mxu0 %v3913
        %6005 = vmatprep.subr.bf16.mxu0 %v3918
        %6006 = vmatpush1.bf16.msra.mxu0 %v3917
        %6007 = vmatprep.subr.bf16.mxu0 %v3922
        %6008 = vmatpush1.bf16.msra.mxu0 %v3921
        %6009 = vmatprep.subr.bf16.mxu0 %v3926
        %6010 = vmatpush1.bf16.msra.mxu0 %v3925
        %6011 = vmatprep.subr.bf16.mxu0 %v3930
        %6012 = vmatpush1.bf16.msra.mxu0 %v3929
        %6013 = vmatprep.subr.bf16.mxu0 %v3934
        %6014 = vmatpush1.bf16.msra.mxu0 %v3933
        %6015 = vmatprep.subr.bf16.mxu0 %v3938
        %6016 = vmatpush1.bf16.msra.mxu0 %v3937
        %6017 = vmatprep.mubr.bf16.mxu0 %v589
        %6018 = vmatmul.mubr.bf16.gmra.mrb[0].mxu0 %v588
        %v6019 = vpop.f32.mrb[0].mxu0
        %v6020 = vadd.f32 %v5979, %v6019
        %v6021 = vpop.f32.mrb[0].mxu0
        %v6022 = vadd.f32 %v5981, %v6021
        %v6023 = vpop.f32.mrb[0].mxu0
        %v6024 = vpop.f32.mrb[0].mxu0
        %6025 = vdwg.mxu0
        %6026 = vmatprep.subr.bf16.mxu0 %v3942
        %6027 = vmatpush1.bf16.msra.mxu0 %v3941
        %6028 = vmatprep.subr.bf16.mxu0 %v3946
        %6029 = vmatpush1.bf16.msra.mxu0 %v3945
        %6030 = vmatprep.subr.bf16.mxu0 %v3950
        %6031 = vmatpush1.bf16.msra.mxu0 %v3949
        %6032 = vmatprep.subr.bf16.mxu0 %v3954
        %6033 = vmatpush1.bf16.msra.mxu0 %v3953
        %6034 = vmatprep.subr.bf16.mxu0 %v3958
        %6035 = vmatpush1.bf16.msra.mxu0 %v3957
        %6036 = vmatprep.subr.bf16.mxu0 %v3962
        %6037 = vmatpush1.bf16.msra.mxu0 %v3961
        %6038 = vmatprep.subr.bf16.mxu0 %v3966
        %6039 = vmatpush1.bf16.msra.mxu0 %v3965
        %6040 = vmatprep.subr.bf16.mxu0 %v3970
        %6041 = vmatpush1.bf16.msra.mxu0 %v3969
        %6042 = vmatprep.subr.bf16.mxu0 %v3974
        %6043 = vmatpush1.bf16.msra.mxu0 %v3973
        %6044 = vmatprep.subr.bf16.mxu0 %v3978
        %6045 = vmatpush1.bf16.msra.mxu0 %v3977
        %6046 = vmatprep.subr.bf16.mxu0 %v3982
        %6047 = vmatpush1.bf16.msra.mxu0 %v3981
        %6048 = vmatprep.subr.bf16.mxu0 %v3986
        %6049 = vmatpush1.bf16.msra.mxu0 %v3985
        %6050 = vmatprep.subr.bf16.mxu0 %v3990
        %6051 = vmatpush1.bf16.msra.mxu0 %v3989
        %6052 = vmatprep.subr.bf16.mxu0 %v3994
        %6053 = vmatpush1.bf16.msra.mxu0 %v3993
        %6054 = vmatprep.subr.bf16.mxu0 %v3998
        %6055 = vmatpush1.bf16.msra.mxu0 %v3997
        %6056 = vmatprep.subr.bf16.mxu0 %v4002
        %6057 = vmatpush1.bf16.msra.mxu0 %v4001
        %6058 = vmatprep.mubr.bf16.mxu0 %v591
        %6059 = vmatmul.mubr.bf16.gmra.mrb[0].mxu0 %v590
        %v6060 = vpop.f32.mrb[0].mxu0
        %v6061 = vadd.f32 %v6020, %v6060
        %v6062 = vpop.f32.mrb[0].mxu0
        %v6063 = vadd.f32 %v6022, %v6062
        %v6064 = vpop.f32.mrb[0].mxu0
        %v6065 = vpop.f32.mrb[0].mxu0
        %6066 = vdwg.mxu0
        %6067 = vmatprep.subr.bf16.mxu0 %v4006
        %6068 = vmatpush1.bf16.msra.mxu0 %v4005
        %6069 = vmatprep.subr.bf16.mxu0 %v4010
        %6070 = vmatpush1.bf16.msra.mxu0 %v4009
        %6071 = vmatprep.subr.bf16.mxu0 %v4014
        %6072 = vmatpush1.bf16.msra.mxu0 %v4013
        %6073 = vmatprep.subr.bf16.mxu0 %v4018
        %6074 = vmatpush1.bf16.msra.mxu0 %v4017
        %6075 = vmatprep.subr.bf16.mxu0 %v4022
        %6076 = vmatpush1.bf16.msra.mxu0 %v4021
        %6077 = vmatprep.subr.bf16.mxu0 %v4026
        %6078 = vmatpush1.bf16.msra.mxu0 %v4025
        %6079 = vmatprep.subr.bf16.mxu0 %v4030
        %6080 = vmatpush1.bf16.msra.mxu0 %v4029
        %6081 = vmatprep.subr.bf16.mxu0 %v4034
        %6082 = vmatpush1.bf16.msra.mxu0 %v4033
        %6083 = vmatprep.subr.bf16.mxu0 %v4038
        %6084 = vmatpush1.bf16.msra.mxu0 %v4037
        %6085 = vmatprep.subr.bf16.mxu0 %v4042
        %6086 = vmatpush1.bf16.msra.mxu0 %v4041
        %6087 = vmatprep.subr.bf16.mxu0 %v4046
        %6088 = vmatpush1.bf16.msra.mxu0 %v4045
        %6089 = vmatprep.subr.bf16.mxu0 %v4050
        %6090 = vmatpush1.bf16.msra.mxu0 %v4049
        %6091 = vmatprep.subr.bf16.mxu0 %v4054
        %6092 = vmatpush1.bf16.msra.mxu0 %v4053
        %6093 = vmatprep.subr.bf16.mxu0 %v4058
        %6094 = vmatpush1.bf16.msra.mxu0 %v4057
        %6095 = vmatprep.subr.bf16.mxu0 %v4062
        %6096 = vmatpush1.bf16.msra.mxu0 %v4061
        %6097 = vmatprep.subr.bf16.mxu0 %v4066
        %6098 = vmatpush1.bf16.msra.mxu0 %v4065
        %6099 = vmatprep.mubr.bf16.mxu0 %v593
        %6100 = vmatmul.mubr.bf16.gmra.mrb[0].mxu0 %v592
        %v6101 = vpop.f32.mrb[0].mxu0
        %v6102 = vadd.f32 %v6061, %v6101
        %v6103 = vpop.f32.mrb[0].mxu0
        %v6104 = vadd.f32 %v6063, %v6103
        %v6105 = vpop.f32.mrb[0].mxu0
        %v6106 = vpop.f32.mrb[0].mxu0
        %6107 = vdwg.mxu0
        %6108 = vmatprep.subr.bf16.mxu0 %v4070
        %6109 = vmatpush1.bf16.msra.mxu0 %v4069
        %6110 = vmatprep.subr.bf16.mxu0 %v4074
        %6111 = vmatpush1.bf16.msra.mxu0 %v4073
        %6112 = vmatprep.subr.bf16.mxu0 %v4078
        %6113 = vmatpush1.bf16.msra.mxu0 %v4077
        %6114 = vmatprep.subr.bf16.mxu0 %v4082
        %6115 = vmatpush1.bf16.msra.mxu0 %v4081
        %6116 = vmatprep.subr.bf16.mxu0 %v4086
        %6117 = vmatpush1.bf16.msra.mxu0 %v4085
        %6118 = vmatprep.subr.bf16.mxu0 %v4090
        %6119 = vmatpush1.bf16.msra.mxu0 %v4089
        %6120 = vmatprep.subr.bf16.mxu0 %v4094
        %6121 = vmatpush1.bf16.msra.mxu0 %v4093
        %6122 = vmatprep.subr.bf16.mxu0 %v4098
        %6123 = vmatpush1.bf16.msra.mxu0 %v4097
        %6124 = vmatprep.subr.bf16.mxu0 %v4102
        %6125 = vmatpush1.bf16.msra.mxu0 %v4101
        %6126 = vmatprep.subr.bf16.mxu0 %v4106
        %6127 = vmatpush1.bf16.msra.mxu0 %v4105
        %6128 = vmatprep.subr.bf16.mxu0 %v4110
        %6129 = vmatpush1.bf16.msra.mxu0 %v4109
        %6130 = vmatprep.subr.bf16.mxu0 %v4114
        %6131 = vmatpush1.bf16.msra.mxu0 %v4113
        %6132 = vmatprep.subr.bf16.mxu0 %v4118
        %6133 = vmatpush1.bf16.msra.mxu0 %v4117
        %6134 = vmatprep.subr.bf16.mxu0 %v4122
        %6135 = vmatpush1.bf16.msra.mxu0 %v4121
        %6136 = vmatprep.subr.bf16.mxu0 %v4126
        %6137 = vmatpush1.bf16.msra.mxu0 %v4125
        %6138 = vmatprep.subr.bf16.mxu0 %v4130
        %6139 = vmatpush1.bf16.msra.mxu0 %v4129
        %6140 = vmatprep.mubr.bf16.mxu0 %v595
        %6141 = vmatmul.mubr.bf16.gmra.mrb[0].mxu0 %v594
        %v6142 = vpop.f32.mrb[0].mxu0
        %v6143 = vadd.f32 %v6102, %v6142
        %v6144 = vpop.f32.mrb[0].mxu0
        %v6145 = vadd.f32 %v6104, %v6144
        %v6146 = vpop.f32.mrb[0].mxu0
        %v6147 = vpop.f32.mrb[0].mxu0
        %6148 = vdwg.mxu0
        %6149 = vmatprep.subr.bf16.mxu0 %v4134
        %6150 = vmatpush1.bf16.msra.mxu0 %v4133
        %6151 = vmatprep.subr.bf16.mxu0 %v4138
        %6152 = vmatpush1.bf16.msra.mxu0 %v4137
        %6153 = vmatprep.subr.bf16.mxu0 %v4142
        %6154 = vmatpush1.bf16.msra.mxu0 %v4141
        %6155 = vmatprep.subr.bf16.mxu0 %v4146
        %6156 = vmatpush1.bf16.msra.mxu0 %v4145
        %6157 = vmatprep.subr.bf16.mxu0 %v4150
        %6158 = vmatpush1.bf16.msra.mxu0 %v4149
        %6159 = vmatprep.subr.bf16.mxu0 %v4154
        %6160 = vmatpush1.bf16.msra.mxu0 %v4153
        %6161 = vmatprep.subr.bf16.mxu0 %v4158
        %6162 = vmatpush1.bf16.msra.mxu0 %v4157
        %6163 = vmatprep.subr.bf16.mxu0 %v4162
        %6164 = vmatpush1.bf16.msra.mxu0 %v4161
        %6165 = vmatprep.subr.bf16.mxu0 %v4166
        %6166 = vmatpush1.bf16.msra.mxu0 %v4165
        %6167 = vmatprep.subr.bf16.mxu0 %v4170
        %6168 = vmatpush1.bf16.msra.mxu0 %v4169
        %6169 = vmatprep.subr.bf16.mxu0 %v4174
        %6170 = vmatpush1.bf16.msra.mxu0 %v4173
        %6171 = vmatprep.subr.bf16.mxu0 %v4178
        %6172 = vmatpush1.bf16.msra.mxu0 %v4177
        %6173 = vmatprep.subr.bf16.mxu0 %v4182
        %6174 = vmatpush1.bf16.msra.mxu0 %v4181
        %6175 = vmatprep.subr.bf16.mxu0 %v4186
        %6176 = vmatpush1.bf16.msra.mxu0 %v4185
        %6177 = vmatprep.subr.bf16.mxu0 %v4190
        %6178 = vmatpush1.bf16.msra.mxu0 %v4189
        %6179 = vmatprep.subr.bf16.mxu0 %v4194
        %6180 = vmatpush1.bf16.msra.mxu0 %v4193
        %6181 = vmatprep.mubr.bf16.mxu0 %v597
        %6182 = vmatmul.mubr.bf16.gmra.mrb[0].mxu0 %v596
        %v6183 = vpop.f32.mrb[0].mxu0
        %v6184 = vadd.f32 %v6143, %v6183
        %v6185 = vpop.f32.mrb[0].mxu0
        %v6186 = vadd.f32 %v6145, %v6185
        %v6187 = vpop.f32.mrb[0].mxu0
        %v6188 = vpop.f32.mrb[0].mxu0
        %6189 = vdwg.mxu0
        %6190 = vmatprep.subr.bf16.mxu0 %v4198
        %6191 = vmatpush1.bf16.msra.mxu0 %v4197
        %6192 = vmatprep.subr.bf16.mxu0 %v4202
        %6193 = vmatpush1.bf16.msra.mxu0 %v4201
        %6194 = vmatprep.subr.bf16.mxu0 %v4206
        %6195 = vmatpush1.bf16.msra.mxu0 %v4205
        %6196 = vmatprep.subr.bf16.mxu0 %v4210
        %6197 = vmatpush1.bf16.msra.mxu0 %v4209
        %6198 = vmatprep.subr.bf16.mxu0 %v4214
        %6199 = vmatpush1.bf16.msra.mxu0 %v4213
        %6200 = vmatprep.subr.bf16.mxu0 %v4218
        %6201 = vmatpush1.bf16.msra.mxu0 %v4217
        %6202 = vmatprep.subr.bf16.mxu0 %v4222
        %6203 = vmatpush1.bf16.msra.mxu0 %v4221
        %6204 = vmatprep.subr.bf16.mxu0 %v4226
        %6205 = vmatpush1.bf16.msra.mxu0 %v4225
        %6206 = vmatprep.subr.bf16.mxu0 %v4230
        %6207 = vmatpush1.bf16.msra.mxu0 %v4229
        %6208 = vmatprep.subr.bf16.mxu0 %v4234
        %6209 = vmatpush1.bf16.msra.mxu0 %v4233
        %6210 = vmatprep.subr.bf16.mxu0 %v4238
        %6211 = vmatpush1.bf16.msra.mxu0 %v4237
        %6212 = vmatprep.subr.bf16.mxu0 %v4242
        %6213 = vmatpush1.bf16.msra.mxu0 %v4241
        %6214 = vmatprep.subr.bf16.mxu0 %v4246
        %6215 = vmatpush1.bf16.msra.mxu0 %v4245
        %6216 = vmatprep.subr.bf16.mxu0 %v4250
        %6217 = vmatpush1.bf16.msra.mxu0 %v4249
        %6218 = vmatprep.subr.bf16.mxu0 %v4254
        %6219 = vmatpush1.bf16.msra.mxu0 %v4253
        %6220 = vmatprep.subr.bf16.mxu0 %v4258
        %6221 = vmatpush1.bf16.msra.mxu0 %v4257
        %6222 = vmatprep.mubr.bf16.mxu0 %v599
        %6223 = vmatmul.mubr.bf16.gmra.mrb[0].mxu0 %v598
        %v6224 = vpop.f32.mrb[0].mxu0
        %v6225 = vadd.f32 %v6184, %v6224
        %v6226 = vpop.f32.mrb[0].mxu0
        %v6227 = vadd.f32 %v6186, %v6226
        %v6228 = vpop.f32.mrb[0].mxu0
        %v6229 = vpop.f32.mrb[0].mxu0
        %6230 = vdwg.mxu0
        %6231 = vmatprep.subr.bf16.mxu0 %v4262
        %6232 = vmatpush1.bf16.msra.mxu0 %v4261
        %6233 = vmatprep.subr.bf16.mxu0 %v4266
        %6234 = vmatpush1.bf16.msra.mxu0 %v4265
        %6235 = vmatprep.subr.bf16.mxu0 %v4270
        %6236 = vmatpush1.bf16.msra.mxu0 %v4269
        %6237 = vmatprep.subr.bf16.mxu0 %v4274
        %6238 = vmatpush1.bf16.msra.mxu0 %v4273
        %6239 = vmatprep.subr.bf16.mxu0 %v4278
        %6240 = vmatpush1.bf16.msra.mxu0 %v4277
        %6241 = vmatprep.subr.bf16.mxu0 %v4282
        %6242 = vmatpush1.bf16.msra.mxu0 %v4281
        %6243 = vmatprep.subr.bf16.mxu0 %v4286
        %6244 = vmatpush1.bf16.msra.mxu0 %v4285
        %6245 = vmatprep.subr.bf16.mxu0 %v4290
        %6246 = vmatpush1.bf16.msra.mxu0 %v4289
        %6247 = vmatprep.subr.bf16.mxu0 %v4294
        %6248 = vmatpush1.bf16.msra.mxu0 %v4293
        %6249 = vmatprep.subr.bf16.mxu0 %v4298
        %6250 = vmatpush1.bf16.msra.mxu0 %v4297
        %6251 = vmatprep.subr.bf16.mxu0 %v4302
        %6252 = vmatpush1.bf16.msra.mxu0 %v4301
        %6253 = vmatprep.subr.bf16.mxu0 %v4306
        %6254 = vmatpush1.bf16.msra.mxu0 %v4305
        %6255 = vmatprep.subr.bf16.mxu0 %v4310
        %6256 = vmatpush1.bf16.msra.mxu0 %v4309
        %6257 = vmatprep.subr.bf16.mxu0 %v4314
        %6258 = vmatpush1.bf16.msra.mxu0 %v4313
        %6259 = vmatprep.subr.bf16.mxu0 %v4318
        %6260 = vmatpush1.bf16.msra.mxu0 %v4317
        %6261 = vmatprep.subr.bf16.mxu0 %v4322
        %6262 = vmatpush1.bf16.msra.mxu0 %v4321
        %6263 = vmatprep.mubr.bf16.mxu0 %v601
        %6264 = vmatmul.mubr.bf16.gmra.mrb[0].mxu0 %v600
        %v6265 = vpop.f32.mrb[0].mxu0
        %v6266 = vadd.f32 %v6225, %v6265
        %v6267 = vpop.f32.mrb[0].mxu0
        %v6268 = vadd.f32 %v6227, %v6267
        %v6269 = vpop.f32.mrb[0].mxu0
        %v6270 = vpop.f32.mrb[0].mxu0
        %6271 = vdwg.mxu0
        %6272 = vmatprep.subr.bf16.mxu0 %v4326
        %6273 = vmatpush1.bf16.msra.mxu0 %v4325
        %6274 = vmatprep.subr.bf16.mxu0 %v4330
        %6275 = vmatpush1.bf16.msra.mxu0 %v4329
        %6276 = vmatprep.subr.bf16.mxu0 %v4334
        %6277 = vmatpush1.bf16.msra.mxu0 %v4333
        %6278 = vmatprep.subr.bf16.mxu0 %v4338
        %6279 = vmatpush1.bf16.msra.mxu0 %v4337
        %6280 = vmatprep.subr.bf16.mxu0 %v4342
        %6281 = vmatpush1.bf16.msra.mxu0 %v4341
        %6282 = vmatprep.subr.bf16.mxu0 %v4346
        %6283 = vmatpush1.bf16.msra.mxu0 %v4345
        %6284 = vmatprep.subr.bf16.mxu0 %v4350
        %6285 = vmatpush1.bf16.msra.mxu0 %v4349
        %6286 = vmatprep.subr.bf16.mxu0 %v4354
        %6287 = vmatpush1.bf16.msra.mxu0 %v4353
        %6288 = vmatprep.subr.bf16.mxu0 %v4358
        %6289 = vmatpush1.bf16.msra.mxu0 %v4357
        %6290 = vmatprep.subr.bf16.mxu0 %v4362
        %6291 = vmatpush1.bf16.msra.mxu0 %v4361
        %6292 = vmatprep.subr.bf16.mxu0 %v4366
        %6293 = vmatpush1.bf16.msra.mxu0 %v4365
        %6294 = vmatprep.subr.bf16.mxu0 %v4370
        %6295 = vmatpush1.bf16.msra.mxu0 %v4369
        %6296 = vmatprep.subr.bf16.mxu0 %v4374
        %6297 = vmatpush1.bf16.msra.mxu0 %v4373
        %6298 = vmatprep.subr.bf16.mxu0 %v4378
        %6299 = vmatpush1.bf16.msra.mxu0 %v4377
        %6300 = vmatprep.subr.bf16.mxu0 %v4382
        %6301 = vmatpush1.bf16.msra.mxu0 %v4381
        %6302 = vmatprep.subr.bf16.mxu0 %v4386
        %6303 = vmatpush1.bf16.msra.mxu0 %v4385
        %6304 = vmatprep.mubr.bf16.mxu0 %v603
        %6305 = vmatmul.mubr.bf16.gmra.mrb[0].mxu0 %v602
        %v6306 = vpop.f32.mrb[0].mxu0
        %v6307 = vadd.f32 %v6266, %v6306
        %v6308 = vpop.f32.mrb[0].mxu0
        %v6309 = vadd.f32 %v6268, %v6308
        %v6310 = vpop.f32.mrb[0].mxu0
        %v6311 = vpop.f32.mrb[0].mxu0
        %6312 = vdwg.mxu0
        %6313 = vmatprep.subr.bf16.mxu0 %v4390
        %6314 = vmatpush1.bf16.msra.mxu0 %v4389
        %6315 = vmatprep.subr.bf16.mxu0 %v4394
        %6316 = vmatpush1.bf16.msra.mxu0 %v4393
        %6317 = vmatprep.subr.bf16.mxu0 %v4398
        %6318 = vmatpush1.bf16.msra.mxu0 %v4397
        %6319 = vmatprep.subr.bf16.mxu0 %v4402
        %6320 = vmatpush1.bf16.msra.mxu0 %v4401
        %6321 = vmatprep.subr.bf16.mxu0 %v4406
        %6322 = vmatpush1.bf16.msra.mxu0 %v4405
        %6323 = vmatprep.subr.bf16.mxu0 %v4410
        %6324 = vmatpush1.bf16.msra.mxu0 %v4409
        %6325 = vmatprep.subr.bf16.mxu0 %v4414
        %6326 = vmatpush1.bf16.msra.mxu0 %v4413
        %6327 = vmatprep.subr.bf16.mxu0 %v4418
        %6328 = vmatpush1.bf16.msra.mxu0 %v4417
        %6329 = vmatprep.subr.bf16.mxu0 %v4422
        %6330 = vmatpush1.bf16.msra.mxu0 %v4421
        %6331 = vmatprep.subr.bf16.mxu0 %v4426
        %6332 = vmatpush1.bf16.msra.mxu0 %v4425
        %6333 = vmatprep.subr.bf16.mxu0 %v4430
        %6334 = vmatpush1.bf16.msra.mxu0 %v4429
        %6335 = vmatprep.subr.bf16.mxu0 %v4434
        %6336 = vmatpush1.bf16.msra.mxu0 %v4433
        %6337 = vmatprep.subr.bf16.mxu0 %v4438
        %6338 = vmatpush1.bf16.msra.mxu0 %v4437
        %6339 = vmatprep.subr.bf16.mxu0 %v4442
        %6340 = vmatpush1.bf16.msra.mxu0 %v4441
        %6341 = vmatprep.subr.bf16.mxu0 %v4446
        %6342 = vmatpush1.bf16.msra.mxu0 %v4445
        %6343 = vmatprep.subr.bf16.mxu0 %v4450
        %6344 = vmatpush1.bf16.msra.mxu0 %v4449
        %6345 = vmatprep.mubr.bf16.mxu0 %v605
        %6346 = vmatmul.mubr.bf16.gmra.mrb[0].mxu0 %v604
        %v6347 = vpop.f32.mrb[0].mxu0
        %v6348 = vadd.f32 %v6307, %v6347
        %v6349 = vpop.f32.mrb[0].mxu0
        %v6350 = vadd.f32 %v6309, %v6349
        %v6351 = vpop.f32.mrb[0].mxu0
        %v6352 = vpop.f32.mrb[0].mxu0
        %6353 = vdwg.mxu0
        %6354 = vmatprep.subr.bf16.mxu0 %v4454
        %6355 = vmatpush1.bf16.msra.mxu0 %v4453
        %6356 = vmatprep.subr.bf16.mxu0 %v4458
        %6357 = vmatpush1.bf16.msra.mxu0 %v4457
        %6358 = vmatprep.subr.bf16.mxu0 %v4462
        %6359 = vmatpush1.bf16.msra.mxu0 %v4461
        %6360 = vmatprep.subr.bf16.mxu0 %v4466
        %6361 = vmatpush1.bf16.msra.mxu0 %v4465
        %6362 = vmatprep.subr.bf16.mxu0 %v4470
        %6363 = vmatpush1.bf16.msra.mxu0 %v4469
        %6364 = vmatprep.subr.bf16.mxu0 %v4474
        %6365 = vmatpush1.bf16.msra.mxu0 %v4473
        %6366 = vmatprep.subr.bf16.mxu0 %v4478
        %6367 = vmatpush1.bf16.msra.mxu0 %v4477
        %6368 = vmatprep.subr.bf16.mxu0 %v4482
        %6369 = vmatpush1.bf16.msra.mxu0 %v4481
        %6370 = vmatprep.subr.bf16.mxu0 %v4486
        %6371 = vmatpush1.bf16.msra.mxu0 %v4485
        %6372 = vmatprep.subr.bf16.mxu0 %v4490
        %6373 = vmatpush1.bf16.msra.mxu0 %v4489
        %6374 = vmatprep.subr.bf16.mxu0 %v4494
        %6375 = vmatpush1.bf16.msra.mxu0 %v4493
        %6376 = vmatprep.subr.bf16.mxu0 %v4498
        %6377 = vmatpush1.bf16.msra.mxu0 %v4497
        %6378 = vmatprep.subr.bf16.mxu0 %v4502
        %6379 = vmatpush1.bf16.msra.mxu0 %v4501
        %6380 = vmatprep.subr.bf16.mxu0 %v4506
        %6381 = vmatpush1.bf16.msra.mxu0 %v4505
        %6382 = vmatprep.subr.bf16.mxu0 %v4510
        %6383 = vmatpush1.bf16.msra.mxu0 %v4509
        %6384 = vmatprep.subr.bf16.mxu0 %v4514
        %6385 = vmatpush1.bf16.msra.mxu0 %v4513
        %6386 = vmatprep.mubr.bf16.mxu0 %v607
        %6387 = vmatmul.mubr.bf16.gmra.mrb[0].mxu0 %v606
        %v6388 = vpop.f32.mrb[0].mxu0
        %v6389 = vadd.f32 %v6348, %v6388
        %v6390 = vpop.f32.mrb[0].mxu0
        %v6391 = vadd.f32 %v6350, %v6390
        %v6392 = vpop.f32.mrb[0].mxu0
        %v6393 = vpop.f32.mrb[0].mxu0
        %6394 = vdwg.mxu0
        %6395 = vmatprep.subr.bf16.mxu0 %v4518
        %6396 = vmatpush1.bf16.msra.mxu0 %v4517
        %6397 = vmatprep.subr.bf16.mxu0 %v4522
        %6398 = vmatpush1.bf16.msra.mxu0 %v4521
        %6399 = vmatprep.subr.bf16.mxu0 %v4526
        %6400 = vmatpush1.bf16.msra.mxu0 %v4525
        %6401 = vmatprep.subr.bf16.mxu0 %v4530
        %6402 = vmatpush1.bf16.msra.mxu0 %v4529
        %6403 = vmatprep.subr.bf16.mxu0 %v4534
        %6404 = vmatpush1.bf16.msra.mxu0 %v4533
        %6405 = vmatprep.subr.bf16.mxu0 %v4538
        %6406 = vmatpush1.bf16.msra.mxu0 %v4537
        %6407 = vmatprep.subr.bf16.mxu0 %v4542
        %6408 = vmatpush1.bf16.msra.mxu0 %v4541
        %6409 = vmatprep.subr.bf16.mxu0 %v4546
        %6410 = vmatpush1.bf16.msra.mxu0 %v4545
        %6411 = vmatprep.subr.bf16.mxu0 %v4550
        %6412 = vmatpush1.bf16.msra.mxu0 %v4549
        %6413 = vmatprep.subr.bf16.mxu0 %v4554
        %6414 = vmatpush1.bf16.msra.mxu0 %v4553
        %6415 = vmatprep.subr.bf16.mxu0 %v4558
        %6416 = vmatpush1.bf16.msra.mxu0 %v4557
        %6417 = vmatprep.subr.bf16.mxu0 %v4562
        %6418 = vmatpush1.bf16.msra.mxu0 %v4561
        %6419 = vmatprep.subr.bf16.mxu0 %v4566
        %6420 = vmatpush1.bf16.msra.mxu0 %v4565
        %6421 = vmatprep.subr.bf16.mxu0 %v4570
        %6422 = vmatpush1.bf16.msra.mxu0 %v4569
        %6423 = vmatprep.subr.bf16.mxu0 %v4574
        %6424 = vmatpush1.bf16.msra.mxu0 %v4573
        %6425 = vmatprep.subr.bf16.mxu0 %v4578
        %6426 = vmatpush1.bf16.msra.mxu0 %v4577
        %6427 = vmatprep.mubr.bf16.mxu0 %v609
        %6428 = vmatmul.mubr.bf16.gmra.mrb[0].mxu0 %v608
        %v6429 = vpop.f32.mrb[0].mxu0
        %v6430 = vadd.f32 %v6389, %v6429
        %v6431 = vpop.f32.mrb[0].mxu0
        %v6432 = vadd.f32 %v6391, %v6431
        %v6433 = vpop.f32.mrb[0].mxu0
        %v6434 = vpop.f32.mrb[0].mxu0
        %6435 = vdwg.mxu0
        %6436 = vmatprep.subr.bf16.mxu0 %v4582
        %6437 = vmatpush1.bf16.msra.mxu0 %v4581
        %6438 = vmatprep.subr.bf16.mxu0 %v4586
        %6439 = vmatpush1.bf16.msra.mxu0 %v4585
        %6440 = vmatprep.subr.bf16.mxu0 %v4590
        %6441 = vmatpush1.bf16.msra.mxu0 %v4589
        %6442 = vmatprep.subr.bf16.mxu0 %v4594
        %6443 = vmatpush1.bf16.msra.mxu0 %v4593
        %6444 = vmatprep.subr.bf16.mxu0 %v4598
        %6445 = vmatpush1.bf16.msra.mxu0 %v4597
        %6446 = vmatprep.subr.bf16.mxu0 %v4602
        %6447 = vmatpush1.bf16.msra.mxu0 %v4601
        %6448 = vmatprep.subr.bf16.mxu0 %v4606
        %6449 = vmatpush1.bf16.msra.mxu0 %v4605
        %6450 = vmatprep.subr.bf16.mxu0 %v4610
        %6451 = vmatpush1.bf16.msra.mxu0 %v4609
        %6452 = vmatprep.subr.bf16.mxu0 0
        %6453 = vmatpush1.bf16.msra.mxu0 0
        %6454 = vmatprep.subr.bf16.mxu0 0
        %6455 = vmatpush1.bf16.msra.mxu0 0
        %6456 = vmatprep.subr.bf16.mxu0 0
        %6457 = vmatpush1.bf16.msra.mxu0 0
        %6458 = vmatprep.subr.bf16.mxu0 0
        %6459 = vmatpush1.bf16.msra.mxu0 0
        %6460 = vmatprep.subr.bf16.mxu0 0
        %6461 = vmatpush1.bf16.msra.mxu0 0
        %6462 = vmatprep.subr.bf16.mxu0 0
        %6463 = vmatpush1.bf16.msra.mxu0 0
        %6464 = vmatprep.subr.bf16.mxu0 0
        %6465 = vmatpush1.bf16.msra.mxu0 0
        %6466 = vmatprep.subr.bf16.mxu0 0
        %6467 = vmatpush1.bf16.msra.mxu0 0
        %6468 = vmatprep.mubr.bf16.mxu0 0
        %6469 = vmatmul.mubr.bf16.gmra.mrb[0].mxu0 %v610
        %v6470 = vpop.f32.mrb[0].mxu0
        %v6471 = vadd.f32 %v6430, %v6470
        %v6472 = vpop.f32.mrb[0].mxu0
        %v6473 = vadd.f32 %v6432, %v6472
        %v6474 = vpop.f32.mrb[0].mxu0
        %v6475 = vpop.f32.mrb[0].mxu0
        %6476 = vdwg.mxu0
        %v6481 = vcombine.low %v5938, %v5940
        %v6482 = vcombine.low %v6471, %v6473
        %v6484 = vunpack.c.l.s4 1983009808
        %v6485 = vunpack.c.0.s8 %v6484
        %v6486 = vlaneseq
        %v6487 = vshrl.u32 %v6486, 7
        %v6488 = vsub.s32 %v6485, %v6487
        %v6489 = vrot.slane %v6481, %v6488
        %v6491 = vunpack.c.l.s4 1983009808
        %v6492 = vunpack.c.0.s8 %v6491
        %v6493 = vlaneseq
        %v6494 = vshrl.u32 %v6493, 7
        %v6495 = vsub.s32 %v6492, %v6494
        %v6496 = vrot.slane %v6482, %v6495
        %v6497 = vcombine.low %v6489, %v6496
        %v6499 = vadd.f32 %v437, %v6497
        %6500 = vst [vmem:[#allocation2] sm:$0xff] %v6499
        %p6501 = scmp.eq.s32.totalorder %s28, 4
        // Predicated region
        $region85: #{net_forward.3} parent=55 // pred_check
          %p6502 = pneg %p6501
        $region86: #{net_forward.3} parent=55 // pred_check_branch
          %6504 = sbr.rel (%p6502) target = $region88
        $region87: #{net_forward.3} parent=55 // pred_region
          %v6505 = vld [vmem:[#allocation2] sm:$0xff]
          %v6506 = vld [vmem:[#allocation6] sm:$0xf]
          %v6508 = vlaneseq
          %v6509 = vshrl.u32 %v6508, 7
          %v6510 = vsub.s32 0, %v6509
          %v6511 = vrot.slane %v6506, %v6510
          %v6512 = vlaneseq
          %v6513 = vshrl.u32 %v6512, 7
          %v6514 = vsub.s32 1, %v6513
          %v6515 = vrot.slane %v6506, %v6514
          %v6516 = vlaneseq
          %v6517 = vshrl.u32 %v6516, 7
          %v6518 = vsub.s32 2, %v6517
          %v6519 = vrot.slane %v6506, %v6518
          %v6520 = vlaneseq
          %v6521 = vshrl.u32 %v6520, 7
          %v6522 = vsub.s32 3, %v6521
          %v6523 = vrot.slane %v6506, %v6522
          %v6524 = vcombine.low %v6511, %v6515
          %v6525 = vcombine.low %v6519, %v6523
          %v6527 = vunpack.c.l.s4 1983009808
          %v6528 = vunpack.c.0.s8 %v6527
          %v6529 = vlaneseq
          %v6530 = vshrl.u32 %v6529, 7
          %v6531 = vsub.s32 %v6528, %v6530
          %v6532 = vrot.slane %v6524, %v6531
          %v6534 = vunpack.c.l.s4 1983009808
          %v6535 = vunpack.c.0.s8 %v6534
          %v6536 = vlaneseq
          %v6537 = vshrl.u32 %v6536, 7
          %v6538 = vsub.s32 %v6535, %v6537
          %v6539 = vrot.slane %v6525, %v6538
          %v6540 = vcombine.low %v6532, %v6539
          %v6542 = vadd.f32 %v6505, %v6540
          %v6543 = vmax.f32 %v6542, 0.0
          %v6545 = vcombine.high %v6543, %v6543
          %v6547 = vunpack.c.l.s4 1983009808
          %v6548 = vunpack.c.0.s8 %v6547
          %v6549 = vlaneseq
          %v6550 = vshrl.u32 %v6549, 7
          %v6551 = vsub.s32 %v6548, %v6550
          %v6552 = vrot.slane %v6543, %v6551
          %v6554 = vunpack.c.l.s4 1983009808
          %v6555 = vunpack.c.0.s8 %v6554
          %v6556 = vlaneseq
          %v6557 = vshrl.u32 %v6556, 7
          %v6558 = vsub.s32 %v6555, %v6557
          %v6559 = vrot.slane %v6545, %v6558
          %v6560 = vcombine.high %v6552, %v6552
          %v6561 = vcombine.high %v6559, %v6559
          %v6566 = vpack.c.bf16 %v6552, %v6552
          %v6567 = vpack.c.bf16 %v6560, %v6560
          %v6568 = vpack.c.bf16 %v6559, %v6559
          %v6569 = vpack.c.bf16 %v6561, %v6561
          %v6570 = vld [vmem:[#allocation8] sm:$0xff]
          %v6571 = vld [vmem:[#allocation8 + $0x8] sm:$0xff]
          %v6572 = vld [vmem:[#allocation8 + $0x10] sm:$0xff]
          %v6573 = vld [vmem:[#allocation8 + $0x18] sm:$0xff]
          %v6574 = vld [vmem:[#allocation8 + $0x20] sm:$0xff]
          %v6575 = vld [vmem:[#allocation8 + $0x28] sm:$0xff]
          %v6576 = vld [vmem:[#allocation8 + $0x30] sm:$0xff]
          %v6577 = vld [vmem:[#allocation8 + $0x38] sm:$0xff]
          %v6578 = vld [vmem:[#allocation8 + $0x40] sm:$0xff]
          %v6579 = vld [vmem:[#allocation8 + $0x48] sm:$0xff]
          %v6580 = vld [vmem:[#allocation8 + $0x50] sm:$0xff]
          %v6581 = vld [vmem:[#allocation8 + $0x58] sm:$0xff]
          %v6582 = vld [vmem:[#allocation8 + $0x60] sm:$0xff]
          %v6583 = vld [vmem:[#allocation8 + $0x68] sm:$0xff]
          %v6584 = vld [vmem:[#allocation8 + $0x70] sm:$0xff]
          %v6585 = vld [vmem:[#allocation8 + $0x78] sm:$0xff]
          %v6586 = vld [vmem:[#allocation8 + $0x80] sm:$0xff]
          %v6587 = vld [vmem:[#allocation8 + $0x88] sm:$0xff]
          %v6588 = vld [vmem:[#allocation8 + $0x90] sm:$0xff]
          %v6589 = vld [vmem:[#allocation8 + $0x98] sm:$0xff]
          %v6590 = vld [vmem:[#allocation8 + $0xa0] sm:$0xff]
          %v6591 = vld [vmem:[#allocation8 + $0xa8] sm:$0xff]
          %v6592 = vld [vmem:[#allocation8 + $0xb0] sm:$0xff]
          %v6593 = vld [vmem:[#allocation8 + $0xb8] sm:$0xff]
          %v6594 = vld [vmem:[#allocation8 + $0xc0] sm:$0xff]
          %v6595 = vld [vmem:[#allocation8 + $0xc8] sm:$0xff]
          %v6596 = vld [vmem:[#allocation8 + $0xd0] sm:$0xff]
          %v6597 = vld [vmem:[#allocation8 + $0xd8] sm:$0xff]
          %v6598 = vld [vmem:[#allocation8 + $0xe0] sm:$0xff]
          %v6599 = vld [vmem:[#allocation8 + $0xe8] sm:$0xff]
          %v6600 = vld [vmem:[#allocation8 + $0xf0] sm:$0xff]
          %v6601 = vld [vmem:[#allocation8 + $0xf8] sm:$0xff]
          %v6602 = vld [vmem:[#allocation8 + $0x100] sm:$0xff]
          %v6603 = vld [vmem:[#allocation8 + $0x108] sm:$0xff]
          %v6604 = vld [vmem:[#allocation8 + $0x110] sm:$0xff]
          %v6605 = vld [vmem:[#allocation8 + $0x118] sm:$0xff]
          %v6606 = vld [vmem:[#allocation8 + $0x120] sm:$0xff]
          %v6607 = vld [vmem:[#allocation8 + $0x128] sm:$0xff]
          %v6608 = vld [vmem:[#allocation8 + $0x130] sm:$0xff]
          %v6609 = vld [vmem:[#allocation8 + $0x138] sm:$0xff]
          %v6610 = vld [vmem:[#allocation8 + $0x140] sm:$0xff]
          %v6611 = vld [vmem:[#allocation8 + $0x148] sm:$0xff]
          %v6612 = vld [vmem:[#allocation8 + $0x150] sm:$0xff]
          %v6613 = vld [vmem:[#allocation8 + $0x158] sm:$0xff]
          %v6614 = vld [vmem:[#allocation8 + $0x160] sm:$0xff]
          %v6615 = vld [vmem:[#allocation8 + $0x168] sm:$0xff]
          %v6616 = vld [vmem:[#allocation8 + $0x170] sm:$0xff]
          %v6617 = vld [vmem:[#allocation8 + $0x178] sm:$0xff]
          %v6618 = vld [vmem:[#allocation8 + $0x180] sm:$0xff]
          %v6619 = vld [vmem:[#allocation8 + $0x188] sm:$0xff]
          %v6620 = vld [vmem:[#allocation8 + $0x190] sm:$0xff]
          %v6621 = vld [vmem:[#allocation8 + $0x198] sm:$0xff]
          %v6622 = vld [vmem:[#allocation8 + $0x1a0] sm:$0xff]
          %v6623 = vld [vmem:[#allocation8 + $0x1a8] sm:$0xff]
          %v6624 = vld [vmem:[#allocation8 + $0x1b0] sm:$0xff]
          %v6625 = vld [vmem:[#allocation8 + $0x1b8] sm:$0xff]
          %v6626 = vld [vmem:[#allocation8 + $0x1c0] sm:$0xff]
          %v6627 = vld [vmem:[#allocation8 + $0x1c8] sm:$0xff]
          %v6628 = vld [vmem:[#allocation8 + $0x1d0] sm:$0xff]
          %v6629 = vld [vmem:[#allocation8 + $0x1d8] sm:$0xff]
          %v6630 = vld [vmem:[#allocation8 + $0x1e0] sm:$0xff]
          %v6631 = vld [vmem:[#allocation8 + $0x1e8] sm:$0xff]
          %v6632 = vld [vmem:[#allocation8 + $0x1f0] sm:$0xff]
          %v6633 = vld [vmem:[#allocation8 + $0x1f8] sm:$0xff]
          %v6634 = vld [vmem:[#allocation9] sm:$0x3]
          %v6636 = vlaneseq
          %v6637 = vshrl.u32 %v6636, 7
          %v6638 = vsub.s32 0, %v6637
          %v6639 = vrot.slane %v6634, %v6638
          %v6640 = vlaneseq
          %v6641 = vshrl.u32 %v6640, 7
          %v6642 = vsub.s32 1, %v6641
          %v6643 = vrot.slane %v6634, %v6642
          %v6710 = vunpack.c.l.b16 %v6570
          %v6711 = vunpack.c.h.b16 %v6570
          %v6712 = vunpack.c.l.b16 %v6571
          %v6713 = vunpack.c.h.b16 %v6571
          %v6714 = vunpack.c.l.b16 %v6572
          %v6715 = vunpack.c.h.b16 %v6572
          %v6716 = vunpack.c.l.b16 %v6573
          %v6717 = vunpack.c.h.b16 %v6573
          %v6718 = vunpack.c.l.b16 %v6574
          %v6719 = vunpack.c.h.b16 %v6574
          %v6720 = vunpack.c.l.b16 %v6575
          %v6721 = vunpack.c.h.b16 %v6575
          %v6722 = vunpack.c.l.b16 %v6576
          %v6723 = vunpack.c.h.b16 %v6576
          %v6724 = vunpack.c.l.b16 %v6577
          %v6725 = vunpack.c.h.b16 %v6577
          %v6726 = vunpack.c.l.b16 %v6578
          %v6727 = vunpack.c.h.b16 %v6578
          %v6728 = vunpack.c.l.b16 %v6579
          %v6729 = vunpack.c.h.b16 %v6579
          %v6730 = vunpack.c.l.b16 %v6580
          %v6731 = vunpack.c.h.b16 %v6580
          %v6732 = vunpack.c.l.b16 %v6581
          %v6733 = vunpack.c.h.b16 %v6581
          %v6734 = vunpack.c.l.b16 %v6582
          %v6735 = vunpack.c.h.b16 %v6582
          %v6736 = vunpack.c.l.b16 %v6583
          %v6737 = vunpack.c.h.b16 %v6583
          %v6738 = vunpack.c.l.b16 %v6584
          %v6739 = vunpack.c.h.b16 %v6584
          %v6740 = vunpack.c.l.b16 %v6585
          %v6741 = vunpack.c.h.b16 %v6585
          %v6742 = vunpack.c.l.b16 %v6586
          %v6743 = vunpack.c.h.b16 %v6586
          %v6744 = vunpack.c.l.b16 %v6587
          %v6745 = vunpack.c.h.b16 %v6587
          %v6746 = vunpack.c.l.b16 %v6588
          %v6747 = vunpack.c.h.b16 %v6588
          %v6748 = vunpack.c.l.b16 %v6589
          %v6749 = vunpack.c.h.b16 %v6589
          %v6750 = vunpack.c.l.b16 %v6590
          %v6751 = vunpack.c.h.b16 %v6590
          %v6752 = vunpack.c.l.b16 %v6591
          %v6753 = vunpack.c.h.b16 %v6591
          %v6754 = vunpack.c.l.b16 %v6592
          %v6755 = vunpack.c.h.b16 %v6592
          %v6756 = vunpack.c.l.b16 %v6593
          %v6757 = vunpack.c.h.b16 %v6593
          %v6758 = vunpack.c.l.b16 %v6594
          %v6759 = vunpack.c.h.b16 %v6594
          %v6760 = vunpack.c.l.b16 %v6595
          %v6761 = vunpack.c.h.b16 %v6595
          %v6762 = vunpack.c.l.b16 %v6596
          %v6763 = vunpack.c.h.b16 %v6596
          %v6764 = vunpack.c.l.b16 %v6597
          %v6765 = vunpack.c.h.b16 %v6597
          %v6766 = vunpack.c.l.b16 %v6598
          %v6767 = vunpack.c.h.b16 %v6598
          %v6768 = vunpack.c.l.b16 %v6599
          %v6769 = vunpack.c.h.b16 %v6599
          %v6770 = vunpack.c.l.b16 %v6600
          %v6771 = vunpack.c.h.b16 %v6600
          %v6772 = vunpack.c.l.b16 %v6601
          %v6773 = vunpack.c.h.b16 %v6601
          %v6774 = vunpack.c.l.b16 %v6602
          %v6775 = vunpack.c.h.b16 %v6602
          %v6776 = vunpack.c.l.b16 %v6603
          %v6777 = vunpack.c.h.b16 %v6603
          %v6778 = vunpack.c.l.b16 %v6604
          %v6779 = vunpack.c.h.b16 %v6604
          %v6780 = vunpack.c.l.b16 %v6605
          %v6781 = vunpack.c.h.b16 %v6605
          %v6782 = vunpack.c.l.b16 %v6606
          %v6783 = vunpack.c.h.b16 %v6606
          %v6784 = vunpack.c.l.b16 %v6607
          %v6785 = vunpack.c.h.b16 %v6607
          %v6786 = vunpack.c.l.b16 %v6608
          %v6787 = vunpack.c.h.b16 %v6608
          %v6788 = vunpack.c.l.b16 %v6609
          %v6789 = vunpack.c.h.b16 %v6609
          %v6790 = vunpack.c.l.b16 %v6610
          %v6791 = vunpack.c.h.b16 %v6610
          %v6792 = vunpack.c.l.b16 %v6611
          %v6793 = vunpack.c.h.b16 %v6611
          %v6794 = vunpack.c.l.b16 %v6612
          %v6795 = vunpack.c.h.b16 %v6612
          %v6796 = vunpack.c.l.b16 %v6613
          %v6797 = vunpack.c.h.b16 %v6613
          %v6798 = vunpack.c.l.b16 %v6614
          %v6799 = vunpack.c.h.b16 %v6614
          %v6800 = vunpack.c.l.b16 %v6615
          %v6801 = vunpack.c.h.b16 %v6615
          %v6802 = vunpack.c.l.b16 %v6616
          %v6803 = vunpack.c.h.b16 %v6616
          %v6804 = vunpack.c.l.b16 %v6617
          %v6805 = vunpack.c.h.b16 %v6617
          %v6806 = vunpack.c.l.b16 %v6618
          %v6807 = vunpack.c.h.b16 %v6618
          %v6808 = vunpack.c.l.b16 %v6619
          %v6809 = vunpack.c.h.b16 %v6619
          %v6810 = vunpack.c.l.b16 %v6620
          %v6811 = vunpack.c.h.b16 %v6620
          %v6812 = vunpack.c.l.b16 %v6621
          %v6813 = vunpack.c.h.b16 %v6621
          %v6814 = vunpack.c.l.b16 %v6622
          %v6815 = vunpack.c.h.b16 %v6622
          %v6816 = vunpack.c.l.b16 %v6623
          %v6817 = vunpack.c.h.b16 %v6623
          %v6818 = vunpack.c.l.b16 %v6624
          %v6819 = vunpack.c.h.b16 %v6624
          %v6820 = vunpack.c.l.b16 %v6625
          %v6821 = vunpack.c.h.b16 %v6625
          %v6822 = vunpack.c.l.b16 %v6626
          %v6823 = vunpack.c.h.b16 %v6626
          %v6824 = vunpack.c.l.b16 %v6627
          %v6825 = vunpack.c.h.b16 %v6627
          %v6826 = vunpack.c.l.b16 %v6628
          %v6827 = vunpack.c.h.b16 %v6628
          %v6828 = vunpack.c.l.b16 %v6629
          %v6829 = vunpack.c.h.b16 %v6629
          %v6830 = vunpack.c.l.b16 %v6630
          %v6831 = vunpack.c.h.b16 %v6630
          %v6832 = vunpack.c.l.b16 %v6631
          %v6833 = vunpack.c.h.b16 %v6631
          %v6834 = vunpack.c.l.b16 %v6632
          %v6835 = vunpack.c.h.b16 %v6632
          %v6836 = vunpack.c.l.b16 %v6633
          %v6837 = vunpack.c.h.b16 %v6633
          %v6838 = vpack.c.b16 %v6712, %v6710
          %v6839 = vpack.c.b16 %v6713, %v6711
          %v6840 = vpack.c.b16 %v6716, %v6714
          %v6841 = vpack.c.b16 %v6717, %v6715
          %v6842 = vpack.c.b16 %v6720, %v6718
          %v6843 = vpack.c.b16 %v6721, %v6719
          %v6844 = vpack.c.b16 %v6724, %v6722
          %v6845 = vpack.c.b16 %v6725, %v6723
          %v6846 = vpack.c.b16 %v6728, %v6726
          %v6847 = vpack.c.b16 %v6729, %v6727
          %v6848 = vpack.c.b16 %v6732, %v6730
          %v6849 = vpack.c.b16 %v6733, %v6731
          %v6850 = vpack.c.b16 %v6736, %v6734
          %v6851 = vpack.c.b16 %v6737, %v6735
          %v6852 = vpack.c.b16 %v6740, %v6738
          %v6853 = vpack.c.b16 %v6741, %v6739
          %v6854 = vpack.c.b16 %v6744, %v6742
          %v6855 = vpack.c.b16 %v6745, %v6743
          %v6856 = vpack.c.b16 %v6748, %v6746
          %v6857 = vpack.c.b16 %v6749, %v6747
          %v6858 = vpack.c.b16 %v6752, %v6750
          %v6859 = vpack.c.b16 %v6753, %v6751
          %v6860 = vpack.c.b16 %v6756, %v6754
          %v6861 = vpack.c.b16 %v6757, %v6755
          %v6862 = vpack.c.b16 %v6760, %v6758
          %v6863 = vpack.c.b16 %v6761, %v6759
          %v6864 = vpack.c.b16 %v6764, %v6762
          %v6865 = vpack.c.b16 %v6765, %v6763
          %v6866 = vpack.c.b16 %v6768, %v6766
          %v6867 = vpack.c.b16 %v6769, %v6767
          %v6868 = vpack.c.b16 %v6772, %v6770
          %v6869 = vpack.c.b16 %v6773, %v6771
          %v6870 = vpack.c.b16 %v6776, %v6774
          %v6871 = vpack.c.b16 %v6777, %v6775
          %v6872 = vpack.c.b16 %v6780, %v6778
          %v6873 = vpack.c.b16 %v6781, %v6779
          %v6874 = vpack.c.b16 %v6784, %v6782
          %v6875 = vpack.c.b16 %v6785, %v6783
          %v6876 = vpack.c.b16 %v6788, %v6786
          %v6877 = vpack.c.b16 %v6789, %v6787
          %v6878 = vpack.c.b16 %v6792, %v6790
          %v6879 = vpack.c.b16 %v6793, %v6791
          %v6880 = vpack.c.b16 %v6796, %v6794
          %v6881 = vpack.c.b16 %v6797, %v6795
          %v6882 = vpack.c.b16 %v6800, %v6798
          %v6883 = vpack.c.b16 %v6801, %v6799
          %v6884 = vpack.c.b16 %v6804, %v6802
          %v6885 = vpack.c.b16 %v6805, %v6803
          %v6886 = vpack.c.b16 %v6808, %v6806
          %v6887 = vpack.c.b16 %v6809, %v6807
          %v6888 = vpack.c.b16 %v6812, %v6810
          %v6889 = vpack.c.b16 %v6813, %v6811
          %v6890 = vpack.c.b16 %v6816, %v6814
          %v6891 = vpack.c.b16 %v6817, %v6815
          %v6892 = vpack.c.b16 %v6820, %v6818
          %v6893 = vpack.c.b16 %v6821, %v6819
          %v6894 = vpack.c.b16 %v6824, %v6822
          %v6895 = vpack.c.b16 %v6825, %v6823
          %v6896 = vpack.c.b16 %v6828, %v6826
          %v6897 = vpack.c.b16 %v6829, %v6827
          %v6898 = vpack.c.b16 %v6832, %v6830
          %v6899 = vpack.c.b16 %v6833, %v6831
          %v6900 = vpack.c.b16 %v6836, %v6834
          %v6901 = vpack.c.b16 %v6837, %v6835
          %6966 = vmatprep.subr.bf16.mxu0 %v6839
          %6967 = vmatpush1.bf16.msra.mxu0 %v6838
          %6968 = vmatprep.subr.bf16.mxu0 %v6841
          %6969 = vmatpush1.bf16.msra.mxu0 %v6840
          %6970 = vmatprep.subr.bf16.mxu0 %v6843
          %6971 = vmatpush1.bf16.msra.mxu0 %v6842
          %6972 = vmatprep.subr.bf16.mxu0 %v6845
          %6973 = vmatpush1.bf16.msra.mxu0 %v6844
          %6974 = vmatprep.subr.bf16.mxu0 %v6847
          %6975 = vmatpush1.bf16.msra.mxu0 %v6846
          %6976 = vmatprep.subr.bf16.mxu0 %v6849
          %6977 = vmatpush1.bf16.msra.mxu0 %v6848
          %6978 = vmatprep.subr.bf16.mxu0 %v6851
          %6979 = vmatpush1.bf16.msra.mxu0 %v6850
          %6980 = vmatprep.subr.bf16.mxu0 %v6853
          %6981 = vmatpush1.bf16.msra.mxu0 %v6852
          %6982 = vmatprep.subr.bf16.mxu0 %v6855
          %6983 = vmatpush1.bf16.msra.mxu0 %v6854
          %6984 = vmatprep.subr.bf16.mxu0 %v6857
          %6985 = vmatpush1.bf16.msra.mxu0 %v6856
          %6986 = vmatprep.subr.bf16.mxu0 %v6859
          %6987 = vmatpush1.bf16.msra.mxu0 %v6858
          %6988 = vmatprep.subr.bf16.mxu0 %v6861
          %6989 = vmatpush1.bf16.msra.mxu0 %v6860
          %6990 = vmatprep.subr.bf16.mxu0 %v6863
          %6991 = vmatpush1.bf16.msra.mxu0 %v6862
          %6992 = vmatprep.subr.bf16.mxu0 %v6865
          %6993 = vmatpush1.bf16.msra.mxu0 %v6864
          %6994 = vmatprep.subr.bf16.mxu0 %v6867
          %6995 = vmatpush1.bf16.msra.mxu0 %v6866
          %6996 = vmatprep.subr.bf16.mxu0 %v6869
          %6997 = vmatpush1.bf16.msra.mxu0 %v6868
          %6998 = vmatprep.mubr.bf16.mxu0 %v6567
          %6999 = vmatmul.mubr.bf16.gmra.mrb[0].mxu0 %v6566
          %v7000 = vpop.f32.mrb[0].mxu0
          %v7001 = vadd.f32 %v6639, %v7000
          %v7002 = vpop.f32.mrb[0].mxu0
          %v7003 = vadd.f32 %v6643, %v7002
          %v7004 = vpop.f32.mrb[0].mxu0
          %v7005 = vpop.f32.mrb[0].mxu0
          %7006 = vdwg.mxu0
          %7007 = vmatprep.subr.bf16.mxu0 %v6871
          %7008 = vmatpush1.bf16.msra.mxu0 %v6870
          %7009 = vmatprep.subr.bf16.mxu0 %v6873
          %7010 = vmatpush1.bf16.msra.mxu0 %v6872
          %7011 = vmatprep.subr.bf16.mxu0 %v6875
          %7012 = vmatpush1.bf16.msra.mxu0 %v6874
          %7013 = vmatprep.subr.bf16.mxu0 %v6877
          %7014 = vmatpush1.bf16.msra.mxu0 %v6876
          %7015 = vmatprep.subr.bf16.mxu0 %v6879
          %7016 = vmatpush1.bf16.msra.mxu0 %v6878
          %7017 = vmatprep.subr.bf16.mxu0 %v6881
          %7018 = vmatpush1.bf16.msra.mxu0 %v6880
          %7019 = vmatprep.subr.bf16.mxu0 %v6883
          %7020 = vmatpush1.bf16.msra.mxu0 %v6882
          %7021 = vmatprep.subr.bf16.mxu0 %v6885
          %7022 = vmatpush1.bf16.msra.mxu0 %v6884
          %7023 = vmatprep.subr.bf16.mxu0 %v6887
          %7024 = vmatpush1.bf16.msra.mxu0 %v6886
          %7025 = vmatprep.subr.bf16.mxu0 %v6889
          %7026 = vmatpush1.bf16.msra.mxu0 %v6888
          %7027 = vmatprep.subr.bf16.mxu0 %v6891
          %7028 = vmatpush1.bf16.msra.mxu0 %v6890
          %7029 = vmatprep.subr.bf16.mxu0 %v6893
          %7030 = vmatpush1.bf16.msra.mxu0 %v6892
          %7031 = vmatprep.subr.bf16.mxu0 %v6895
          %7032 = vmatpush1.bf16.msra.mxu0 %v6894
          %7033 = vmatprep.subr.bf16.mxu0 %v6897
          %7034 = vmatpush1.bf16.msra.mxu0 %v6896
          %7035 = vmatprep.subr.bf16.mxu0 %v6899
          %7036 = vmatpush1.bf16.msra.mxu0 %v6898
          %7037 = vmatprep.subr.bf16.mxu0 %v6901
          %7038 = vmatpush1.bf16.msra.mxu0 %v6900
          %7039 = vmatprep.mubr.bf16.mxu0 %v6569
          %7040 = vmatmul.mubr.bf16.gmra.mrb[0].mxu0 %v6568
          %v7041 = vpop.f32.mrb[0].mxu0
          %v7042 = vadd.f32 %v7001, %v7041
          %v7043 = vpop.f32.mrb[0].mxu0
          %v7044 = vadd.f32 %v7003, %v7043
          %v7045 = vpop.f32.mrb[0].mxu0
          %v7046 = vpop.f32.mrb[0].mxu0
          %7047 = vdwg.mxu0
          %v7048 = vmax.f32 %v7042, 0.0
          %v7049 = vmax.f32 %v7044, 0.0
          %v7050 = vpack.c.bf16 %v7048, %v7048
          %v7051 = vpack.c.bf16 %v7049, %v7049
          %v7052 = vld [vmem:[#allocation11] sm:$0xf]
          %v7053 = vld [vmem:[#allocation11 + $0x4] sm:$0xf]
          %v7054 = vld [vmem:[#allocation11 + $0x8] sm:$0xf]
          %v7055 = vld [vmem:[#allocation11 + $0xc] sm:$0xf]
          %v7056 = vld [vmem:[#allocation11 + $0x10] sm:$0xf]
          %v7057 = vld [vmem:[#allocation11 + $0x14] sm:$0xf]
          %v7058 = vld [vmem:[#allocation11 + $0x18] sm:$0xf]
          %v7059 = vld [vmem:[#allocation11 + $0x1c] sm:$0xf]
          %v7060 = vld [vmem:[#allocation11 + $0x20] sm:$0xf]
          %v7061 = vld [vmem:[#allocation11 + $0x24] sm:$0xf]
          %v7062 = vld [vmem:[#allocation11 + $0x28] sm:$0xf]
          %v7063 = vld [vmem:[#allocation11 + $0x2c] sm:$0xf]
          %v7064 = vld [vmem:[#allocation11 + $0x30] sm:$0xf]
          %v7065 = vld [vmem:[#allocation11 + $0x34] sm:$0xf]
          %v7066 = vld [vmem:[#allocation11 + $0x38] sm:$0xf]
          %v7067 = vld [vmem:[#allocation11 + $0x3c] sm:$0xf]
          %v7068 = vld [vmem:[#allocation11 + $0x40] sm:$0xf]
          %v7069 = vld [vmem:[#allocation11 + $0x44] sm:$0xf]
          %v7070 = vld [vmem:[#allocation11 + $0x48] sm:$0xf]
          %v7071 = vld [vmem:[#allocation11 + $0x4c] sm:$0xf]
          %v7072 = vld [vmem:[#allocation11 + $0x50] sm:$0xf]
          %v7073 = vld [vmem:[#allocation11 + $0x54] sm:$0xf]
          %v7074 = vld [vmem:[#allocation11 + $0x58] sm:$0xf]
          %v7075 = vld [vmem:[#allocation11 + $0x5c] sm:$0xf]
          %v7076 = vld [vmem:[#allocation11 + $0x60] sm:$0xf]
          %v7077 = vld [vmem:[#allocation11 + $0x64] sm:$0xf]
          %v7078 = vld [vmem:[#allocation11 + $0x68] sm:$0xf]
          %v7079 = vld [vmem:[#allocation11 + $0x6c] sm:$0xf]
          %v7080 = vld [vmem:[#allocation11 + $0x70] sm:$0xf]
          %v7081 = vld [vmem:[#allocation11 + $0x74] sm:$0xf]
          %v7082 = vld [vmem:[#allocation11 + $0x78] sm:$0xf]
          %v7083 = vld [vmem:[#allocation11 + $0x7c] sm:$0xf]
          %v7084 = vld [vmem:[#allocation12] sm:$0x1]
          %v7086 = vlaneseq
          %v7087 = vshrl.u32 %v7086, 7
          %v7088 = vsub.s32 0, %v7087
          %v7089 = vrot.slane %v7084, %v7088
          %v7123 = vunpack.c.l.b16 %v7052
          %v7124 = vunpack.c.l.b16 %v7053
          %v7125 = vunpack.c.l.b16 %v7054
          %v7126 = vunpack.c.l.b16 %v7055
          %v7127 = vunpack.c.l.b16 %v7056
          %v7128 = vunpack.c.l.b16 %v7057
          %v7129 = vunpack.c.l.b16 %v7058
          %v7130 = vunpack.c.l.b16 %v7059
          %v7131 = vunpack.c.l.b16 %v7060
          %v7132 = vunpack.c.l.b16 %v7061
          %v7133 = vunpack.c.l.b16 %v7062
          %v7134 = vunpack.c.l.b16 %v7063
          %v7135 = vunpack.c.l.b16 %v7064
          %v7136 = vunpack.c.l.b16 %v7065
          %v7137 = vunpack.c.l.b16 %v7066
          %v7138 = vunpack.c.l.b16 %v7067
          %v7139 = vunpack.c.l.b16 %v7068
          %v7140 = vunpack.c.l.b16 %v7069
          %v7141 = vunpack.c.l.b16 %v7070
          %v7142 = vunpack.c.l.b16 %v7071
          %v7143 = vunpack.c.l.b16 %v7072
          %v7144 = vunpack.c.l.b16 %v7073
          %v7145 = vunpack.c.l.b16 %v7074
          %v7146 = vunpack.c.l.b16 %v7075
          %v7147 = vunpack.c.l.b16 %v7076
          %v7148 = vunpack.c.l.b16 %v7077
          %v7149 = vunpack.c.l.b16 %v7078
          %v7150 = vunpack.c.l.b16 %v7079
          %v7151 = vunpack.c.l.b16 %v7080
          %v7152 = vunpack.c.l.b16 %v7081
          %v7153 = vunpack.c.l.b16 %v7082
          %v7154 = vunpack.c.l.b16 %v7083
          %v7155 = vpack.c.b16 %v7124, %v7123
          %v7156 = vpack.c.b16 %v7126, %v7125
          %v7157 = vpack.c.b16 %v7128, %v7127
          %v7158 = vpack.c.b16 %v7130, %v7129
          %v7159 = vpack.c.b16 %v7132, %v7131
          %v7160 = vpack.c.b16 %v7134, %v7133
          %v7161 = vpack.c.b16 %v7136, %v7135
          %v7162 = vpack.c.b16 %v7138, %v7137
          %v7163 = vpack.c.b16 %v7140, %v7139
          %v7164 = vpack.c.b16 %v7142, %v7141
          %v7165 = vpack.c.b16 %v7144, %v7143
          %v7166 = vpack.c.b16 %v7146, %v7145
          %v7167 = vpack.c.b16 %v7148, %v7147
          %v7168 = vpack.c.b16 %v7150, %v7149
          %v7169 = vpack.c.b16 %v7152, %v7151
          %v7170 = vpack.c.b16 %v7154, %v7153
          %7187 = vmatprep.subr.bf16.mxu0 0
          %7188 = vmatpush1.bf16.msra.mxu0 %v7155
          %7189 = vmatprep.subr.bf16.mxu0 0
          %7190 = vmatpush1.bf16.msra.mxu0 %v7156
          %7191 = vmatprep.subr.bf16.mxu0 0
          %7192 = vmatpush1.bf16.msra.mxu0 %v7157
          %7193 = vmatprep.subr.bf16.mxu0 0
          %7194 = vmatpush1.bf16.msra.mxu0 %v7158
          %7195 = vmatprep.subr.bf16.mxu0 0
          %7196 = vmatpush1.bf16.msra.mxu0 %v7159
          %7197 = vmatprep.subr.bf16.mxu0 0
          %7198 = vmatpush1.bf16.msra.mxu0 %v7160
          %7199 = vmatprep.subr.bf16.mxu0 0
          %7200 = vmatpush1.bf16.msra.mxu0 %v7161
          %7201 = vmatprep.subr.bf16.mxu0 0
          %7202 = vmatpush1.bf16.msra.mxu0 %v7162
          %7203 = vmatprep.subr.bf16.mxu0 0
          %7204 = vmatpush1.bf16.msra.mxu0 %v7163
          %7205 = vmatprep.subr.bf16.mxu0 0
          %7206 = vmatpush1.bf16.msra.mxu0 %v7164
          %7207 = vmatprep.subr.bf16.mxu0 0
          %7208 = vmatpush1.bf16.msra.mxu0 %v7165
          %7209 = vmatprep.subr.bf16.mxu0 0
          %7210 = vmatpush1.bf16.msra.mxu0 %v7166
          %7211 = vmatprep.subr.bf16.mxu0 0
          %7212 = vmatpush1.bf16.msra.mxu0 %v7167
          %7213 = vmatprep.subr.bf16.mxu0 0
          %7214 = vmatpush1.bf16.msra.mxu0 %v7168
          %7215 = vmatprep.subr.bf16.mxu0 0
          %7216 = vmatpush1.bf16.msra.mxu0 %v7169
          %7217 = vmatprep.subr.bf16.mxu0 0
          %7218 = vmatpush1.bf16.msra.mxu0 %v7170
          %7219 = vmatprep.mubr.bf16.mxu0 %v7051
          %7220 = vmatmul.mubr.bf16.gmra.mrb[0].mxu0 %v7050
          %v7221 = vpop.f32.mrb[0].mxu0
          %v7222 = vadd.f32 %v7089, %v7221
          %v7223 = vpop.f32.mrb[0].mxu0
          %v7224 = vpop.f32.mrb[0].mxu0
          %v7225 = vpop.f32.mrb[0].mxu0
          %7226 = vdwg.mxu0
          %v7227 = vmax.f32 %v7222, 0.0
          %v7228 = vld [vmem:[%s7] sm:$0xff]
          %v7229 = vld [vmem:[%s7 + $0x8] sm:$0xff]
          %v7230 = vld [vmem:[%s7 + $0x10] sm:$0xff]
          %v7231 = vld [vmem:[%s7 + $0x18] sm:$0xff]
          %v7232 = vld [vmem:[%s7 + $0x20] sm:$0xff]
          %v7233 = vld [vmem:[%s7 + $0x28] sm:$0xff]
          %v7234 = vld [vmem:[%s7 + $0x30] sm:$0xff]
          %v7235 = vld [vmem:[%s7 + $0x38] sm:$0xff]
          %v7236 = vld [vmem:[%s7 + $0x40] sm:$0xff]
          %v7237 = vld [vmem:[%s7 + $0x48] sm:$0xff]
          %v7238 = vld [vmem:[%s7 + $0x50] sm:$0xff]
          %v7239 = vld [vmem:[%s7 + $0x58] sm:$0xff]
          %v7240 = vld [vmem:[%s7 + $0x60] sm:$0xff]
          %v7241 = vld [vmem:[%s7 + $0x68] sm:$0xff]
          %v7242 = vld [vmem:[%s7 + $0x70] sm:$0xff]
          %v7243 = vld [vmem:[%s7 + $0x78] sm:$0xff]
          %v7244 = vld [vmem:[#allocation3] sm:$0x1]
          %v7246 = vlaneseq
          %v7247 = vshrl.u32 %v7246, 7
          %v7248 = vsub.s32 0, %v7247
          %v7249 = vrot.slane %v7244, %v7248
          %7251 = vmatprep.subr.mxu0 0.0
          %7252 = vmatpush1.msra.mxu0 %v7228
          %7253 = vmatprep.subr.mxu0 0.0
          %7254 = vmatpush1.msra.mxu0 %v7229
          %7255 = vmatprep.subr.mxu0 0.0
          %7256 = vmatpush1.msra.mxu0 %v7230
          %7257 = vmatprep.subr.mxu0 0.0
          %7258 = vmatpush1.msra.mxu0 %v7231
          %7259 = vmatprep.subr.mxu0 0.0
          %7260 = vmatpush1.msra.mxu0 %v7232
          %7261 = vmatprep.subr.mxu0 0.0
          %7262 = vmatpush1.msra.mxu0 %v7233
          %7263 = vmatprep.subr.mxu0 0.0
          %7264 = vmatpush1.msra.mxu0 %v7234
          %7265 = vmatprep.subr.mxu0 0.0
          %7266 = vmatpush1.msra.mxu0 %v7235
          %7267 = vmatprep.subr.mxu0 0.0
          %7268 = vmatpush1.msra.mxu0 %v7236
          %7269 = vmatprep.subr.mxu0 0.0
          %7270 = vmatpush1.msra.mxu0 %v7237
          %7271 = vmatprep.subr.mxu0 0.0
          %7272 = vmatpush1.msra.mxu0 %v7238
          %7273 = vmatprep.subr.mxu0 0.0
          %7274 = vmatpush1.msra.mxu0 %v7239
          %7275 = vmatprep.subr.mxu0 0.0
          %7276 = vmatpush1.msra.mxu0 %v7240
          %7277 = vmatprep.subr.mxu0 0.0
          %7278 = vmatpush1.msra.mxu0 %v7241
          %7279 = vmatprep.subr.mxu0 0.0
          %7280 = vmatpush1.msra.mxu0 %v7242
          %7281 = vmatprep.subr.mxu0 0.0
          %7282 = vmatpush1.msra.mxu0 %v7243
          %7283 = vmatprep.subr.mxu0 0.0
          %7284 = vmatpush1.msra.mxu0 0.0
          %7285 = vmatprep.subr.mxu0 0.0
          %7286 = vmatpush1.msra.mxu0 0.0
          %7287 = vmatprep.subr.mxu0 0.0
          %7288 = vmatpush1.msra.mxu0 0.0
          %7289 = vmatprep.subr.mxu0 0.0
          %7290 = vmatpush1.msra.mxu0 0.0
          %7291 = vmatprep.subr.mxu0 0.0
          %7292 = vmatpush1.msra.mxu0 0.0
          %7293 = vmatprep.subr.mxu0 0.0
          %7294 = vmatpush1.msra.mxu0 0.0
          %7295 = vmatprep.subr.mxu0 0.0
          %7296 = vmatpush1.msra.mxu0 0.0
          %7297 = vmatprep.subr.mxu0 0.0
          %7298 = vmatpush1.msra.mxu0 0.0
          %7299 = vmatprep.subr.mxu0 0.0
          %7300 = vmatpush1.msra.mxu0 0.0
          %7301 = vmatprep.subr.mxu0 0.0
          %7302 = vmatpush1.msra.mxu0 0.0
          %7303 = vmatprep.subr.mxu0 0.0
          %7304 = vmatpush1.msra.mxu0 0.0
          %7305 = vmatprep.subr.mxu0 0.0
          %7306 = vmatpush1.msra.mxu0 0.0
          %7307 = vmatprep.subr.mxu0 0.0
          %7308 = vmatpush1.msra.mxu0 0.0
          %7309 = vmatprep.subr.mxu0 0.0
          %7310 = vmatpush1.msra.mxu0 0.0
          %7311 = vmatprep.subr.mxu0 0.0
          %7312 = vmatpush1.msra.mxu0 0.0
          %7313 = vmatprep.subr.mxu0 0.0
          %7314 = vmatpush1.msra.mxu0 0.0
          %7315 = vmatprep.mubr.f32.mxu0 0.0
          %7316 = vmatmul.mubr.f32.gmra.mrb[0].mxu0 %v7227
          %v7317 = vpop.f32.mrb[0].mxu0
          %v7318 = vadd.f32 %v7249, %v7317
          %v7319 = vpop.f32.mrb[0].mxu0
          %7320 = vdwg.mxu0
          %vm7321 = vcmask 1024
          %7322 = vst.msk [vmem:[%s9] sm:$0x3] %vm7321, %v7318
        $region88: #{net_forward.3} parent=55 // pred_fallthru
          _
        // Predicated region
        $region89: #{net_forward.3} parent=55 // pred_check
          %p7323 = pneg %p240
        $region90: #{net_forward.3} parent=55 // pred_check_branch
          %7325 = sbr.rel (%p7323) target = $region92
        $region91: #{net_forward.3} parent=55 // pred_region
          _
        $region92: #{net_forward.3} parent=55 // pred_fallthru
          _
        // Predicated region
        $region93: #{net_forward.3} parent=55 // pred_check
          %p7326 = pneg %p240
        $region94: #{net_forward.3} parent=55 // pred_check_branch
          %7328 = sbr.rel (%p7326) target = $region96
        $region95: #{net_forward.3} parent=55 // pred_region
          _
        $region96: #{net_forward.3} parent=55 // pred_fallthru
          _
      $region56: #{net_forward.3} parent=5 // pred_fallthru
        _
      %p7329 = scmp.le.s32.totalorder 2, %s23
      // Predicated region
      $region97: #{net_forward.3} parent=5 // pred_check
        %p7330 = pneg %p7329
      $region98: #{net_forward.3} parent=5 // pred_check_branch
        %7332 = sbr.rel (%p7330) target = $region100
      $region99: #{net_forward.3} parent=5 // pred_region
        %s7333 = ssub.s32 %s23, 2
      $region100: #{net_forward.3} parent=5 // pred_fallthru
        _
    $region6: #{net_forward.3} parent=1 // loop_footer
      %s27 = sadd.s32 1, %s23
    $region7: #{net_forward.3} parent=1 // loop_footer_branch
      %22 = sbr.rel target = $region3
    $region8: #{net_forward.3} parent=1 // loop_exit
      _
    %7334 = vsyncpa [#allocation5], 1
    %s7335 = scalar_lea.sflag [#allocation5], 1
    %7336 = vsyncpa %s7335, 1
    %7337 = vsyncpa [#allocation7], 1
    %7338 = vsyncpa [#allocation10], 1
    %7339 = vsyncpa [#allocation13], 1

</llo_original>
